<compile_context>
chip_gen: v6e
topology: v6e:2x2x1
jax: 0.10.0
libtpu: 0.0.40
codegen_flags: <defaults>
</compile_context>

<pallas_src>
import functools

import numpy as np
import jax
import jax.numpy as jnp
from jax import lax
from jax.experimental import pallas as pl
from jax.experimental.pallas import tpu as pltpu

BN_EPS = 1e-5
BOARD = 16          # input spatial size
IN_CH = 2           # input channels
ROW_PITCH = 32      # per-batch-element row pitch in every buffer (mult. of 16)
LANE_W = 256        # common packed lane width of weight / scale-shift buffers

# ---------------------------------------------------------------------------
# Static network description.
# TENSORS[name] = (H, W, C, stored_pad): activation size and the zero padding
# it is *stored* with in VMEM (max padding any consumer needs).
# ---------------------------------------------------------------------------
TENSORS = {
    "x":     (16, 16, 2, 0),
    "d1a":   (14, 14, 8, 0),
    "down1": (12, 12, 8, 2),    # consumed by d2a (pad 1) and up1 skip (pad 2)
    "d2a":   (12, 12, 16, 0),
    "down2": (10, 10, 16, 2),   # consumed by same (pad 1) and up2 skip (pad 2)
    "same":  (10, 10, 16, 2),
    "u2a":   (12, 12, 16, 1),
    "u2b":   (12, 12, 16, 2),
    "u1a":   (16, 16, 8, 2),
    "u1b":   (18, 18, 8, 0),
    "out":   (16, 16, 1, 0),    # network output (classify)
}
INTERMEDIATES = ["d1a", "down1", "d2a", "down2", "same", "u2a", "u2b", "u1a", "u1b"]

# LAYERS[i] = (name, k, pad, relu, [source tensors], Cout, dst)
# Multiple sources == torch.cat([...], dim=1) handled as split-K accumulation.
LAYERS = [
    ("d1a",  3, 0, True,  ["x"],             8,  "d1a"),
    ("d1b",  3, 0, True,  ["d1a"],           8,  "down1"),
    ("d2a",  3, 1, True,  ["down1"],         16, "d2a"),
    ("d2b",  3, 0, True,  ["d2a"],           16, "down2"),
    ("same", 3, 1, True,  ["down2"],         16, "same"),
    ("u2a",  3, 2, True,  ["down2", "same"], 16, "u2a"),
    ("u2b",  3, 1, True,  ["u2a"],           16, "u2b"),
    ("u1a",  1, 2, True,  ["down1", "u2b"],  8,  "u1a"),   # 1x1 conv, pad 2
    ("u1b",  3, 2, True,  ["u1a"],           8,  "u1b"),
    ("cls",  3, 0, False, ["u1b"],           1,  "out"),
]


def _stored(name):
    h, w, c, ps = TENSORS[name]
    return h, w, c, ps, h + 2 * ps, (w + 2 * ps) * c   # h, w, c, ps, Hs, row width


# ---------------------------------------------------------------------------
# Parameters (eval-mode BatchNorm folded to per-channel scale/shift)
# ---------------------------------------------------------------------------
def init_params(key):
    raw = {}
    for (name, k, pad, relu, srcs, co, dst) in LAYERS:
        ci = sum(TENSORS[s][2] for s in srcs)
        key, k_w, k_g, k_b, k_m, k_v = jax.random.split(key, 6)
        w = 0.1 * jax.random.normal(k_w, (co, ci, k, k), jnp.float32)   # OIHW
        if name == "cls":
            scale = jnp.ones((co,), jnp.float32)
            shift = 0.1 * jax.random.normal(k_b, (co,), jnp.float32)    # conv bias
        else:
            gamma = 1.0 + 0.1 * jax.random.normal(k_g, (co,), jnp.float32)
            beta = 0.1 * jax.random.normal(k_b, (co,), jnp.float32)
            mean = 0.05 * jax.random.normal(k_m, (co,), jnp.float32)
            var = 1.0 + 0.1 * jax.random.uniform(k_v, (co,), jnp.float32)
            scale = gamma / jnp.sqrt(var + BN_EPS)
            shift = beta - mean * scale
        raw[name] = dict(w=w, scale=scale, shift=shift)
    return raw


# ---------------------------------------------------------------------------
# Host-side packing: ONE bf16 weight buffer + ONE f32 scale/shift buffer.
# Weight layout: for each (layer, concat-source), k consecutive row-blocks
# (one per dy) of shape (Ws_src*Ci, LANE_W); only the first Ws_dst*Co columns
# are non-zero.  Row offsets are multiples of 16 (bf16 sublane tile).
# ---------------------------------------------------------------------------
def pack_operands(raw):
    meta, w_blocks = [], []
    row_off = 0
    for (name, k, p, relu, srcs, co, dst) in LAYERS:
        h0, w0 = TENSORS[srcs[0]][0], TENSORS[srcs[0]][1]
        ho, wo = h0 + 2 * p - k + 1, w0 + 2 * p - k + 1
        hd, wd, cd, ps_d, _, n_cols = _stored(dst)
        assert (ho, wo, co) == (hd, wd, cd) and n_cols <= LANE_W
        w_full = np.asarray(raw[name]["w"], np.float32)        # (Co, Ci_total, k, k)

        src_meta, ci_off = [], 0
        for s in srcs:
            _, _, cs, ps_s, _, kwidth = _stored(s)             # K = Ws_src * Ci
            wsub = w_full[:, ci_off:ci_off + cs]
            ci_off += cs
            blk = np.zeros((k, kwidth, LANE_W), np.float32)
            for dy in range(k):
                for x_out in range(wo):
                    xd = ps_d + x_out                          # stored dst column
                    for dx in range(k):
                        xs = ps_s - p + x_out + dx             # stored src column
                        blk[dy, xs * cs:(xs + 1) * cs,
                            xd * co:(xd + 1) * co] = wsub[:, :, dy, dx].T
            assert kwidth % 16 == 0                            # aligned row offsets
            src_meta.append((s, row_off, kwidth))
            w_blocks.append(blk.reshape(k * kwidth, LANE_W))
            row_off += k * kwidth

        # Scale/shift tiled over stored output columns; zeros on the border
        # columns so the full-width store writes exact zeros into the padding.
        sc = np.zeros((LANE_W,), np.float32)
        sh = np.zeros((LANE_W,), np.float32)
        scale = np.asarray(raw[name]["scale"], np.float32)
        shift = np.asarray(raw[name]["shift"], np.float32)
        for x_out in range(wo):
            xd = ps_d + x_out
            sc[xd * co:(xd + 1) * co] = scale
            sh[xd * co:(xd + 1) * co] = shift
        meta.append(dict(name=name, k=k, p=p, relu=relu, dst=dst,
                         ho=ho, n_cols=n_cols, ps_d=ps_d,
                         srcs=src_meta, scale_row=sc, shift_row=sh))

    w_buf = jnp.asarray(np.concatenate(w_blocks, axis=0), dtype=jnp.bfloat16)
    ss = np.stack([m["scale_row"] for m in meta] + [m["shift_row"] for m in meta])
    ss_buf = jnp.asarray(ss, dtype=jnp.float32)                # (2*n_layers, LANE_W)
    return w_buf, ss_buf, meta


# ---------------------------------------------------------------------------
# The single fused Pallas kernel.  All activations live in bf16 VMEM scratch,
# every batch element occupies a ROW_PITCH-row block inside every buffer, so
# each conv is k accumulating MXU matmuls over dy-shifted full-width slabs
# with M = (bs-1)*ROW_PITCH + H_out (batch folded into M).
# ---------------------------------------------------------------------------
def _make_kernel(meta, bs):
    NL = len(meta)
    P = ROW_PITCH

    def kernel(x_ref, w_ref, ss_ref, out_ref, *scratch_refs):
        scratch = dict(zip(INTERMEDIATES, scratch_refs))

        def src_rows(name, r0, nrows):
            if name == "x":
                return x_ref[0, r0:r0 + nrows, :]
            return scratch[name][r0:r0 + nrows, :]

        for li, m in enumerate(meta):
            k, p, ho = m["k"], m["p"], m["ho"]
            n, ps_d = m["n_cols"], m["ps_d"]
            M = (bs - 1) * P + ho

            acc = None
            for (s, roff, K) in m["srcs"]:                 # split-K over concat halves
                r0 = TENSORS[s][3] - p                     # stored pad minus needed pad
                for dy in range(k):                        # shifted-slab conv rows
                    lhs = src_rows(s, r0 + dy, M)          # (M, Ws_src*Ci) bf16
                    rhs = w_ref[roff + dy * K: roff + (dy + 1) * K, 0:n]
                    t = jnp.dot(lhs, rhs, preferred_element_type=jnp.float32)
                    acc = t if acc is None else acc + t

            # Folded eval-mode BatchNorm / bias (zeroed on border columns).
            y = acc * ss_ref[li:li + 1, 0:n] + ss_ref[NL + li:NL + li + 1, 0:n]
            if m["relu"]:
                y = jnp.maximum(y, 0.0)

            if m["dst"] == "out":
                # Narrow (16-lane) masked store is acceptable here (tiny output).
                out_ref[0, :, :] = y
            else:
                dref = scratch[m["dst"]]
                yb = y.astype(jnp.bfloat16)                # single cast per layer
                zer = (jnp.zeros((ps_d, n), jnp.bfloat16) if ps_d > 0 else None)
                for b in range(bs):
                    if ps_d > 0:
                        # zero only the stored top/bottom padding rows
                        dref[b * P: b * P + ps_d, :] = zer
                        dref[b * P + ps_d + ho: b * P + 2 * ps_d + ho, :] = zer
                    # lane-dense full-width interior slab store
                    dref[b * P + ps_d: b * P + ps_d + ho, :] = yb[b * P: b * P + ho, :]

    return kernel


def build_forward(raw, batch, steps=1):
    """steps=1 folds the whole batch into M (best on single-TC v5e/v6e).
    On v7x with larger batches, steps=2 splits grid steps across TensorCores
    while still folding batch/2 elements into M per core."""
    assert batch % steps == 0
    bs = batch // steps
    P = ROW_PITCH
    w_buf, ss_buf, meta = pack_operands(raw)
    kernel = _make_kernel(meta, bs)

    rows_in = bs * P
    out_rows = (bs - 1) * P + BOARD

    scratch_shapes = [
        pltpu.VMEM((bs * P, _stored(t)[5]), jnp.bfloat16) for t in INTERMEDIATES
    ]

    fused = pl.pallas_call(
        kernel,
        out_shape=jax.ShapeDtypeStruct((steps, out_rows, BOARD), jnp.float32),
        grid=(steps,),
        in_specs=[
            pl.BlockSpec((1, rows_in, BOARD * IN_CH), lambda i: (i, 0, 0)),
            pl.BlockSpec(w_buf.shape, lambda i: (0, 0)),   # grid-invariant weights
            pl.BlockSpec(ss_buf.shape, lambda i: (0, 0)),  # grid-invariant scale/shift
        ],
        out_specs=pl.BlockSpec((1, out_rows, BOARD), lambda i: (i, 0, 0)),
        scratch_shapes=scratch_shapes,
        compiler_params=pltpu.CompilerParams(
            dimension_semantics=("parallel",),
            vmem_limit_bytes=16 * 1024 * 1024,             # actual need ~6 MiB
        ),
    )

    def forward(x_nchw):
        # NCHW -> (steps, bs*P, W*C) bf16, each batch element at row pitch P.
        x_nhwc = jnp.transpose(x_nchw, (0, 2, 3, 1)).astype(jnp.bfloat16)
        x_rows = x_nhwc.reshape(batch, BOARD, BOARD * IN_CH)
        x_rows = jnp.pad(x_rows, ((0, 0), (0, P - BOARD), (0, 0)))
        x_rows = x_rows.reshape(steps, bs * P, BOARD * IN_CH)
        y = fused(x_rows, w_buf, ss_buf)                   # (steps, out_rows, 16)
        logits = jnp.stack(
            [y[b // bs, (b % bs) * P:(b % bs) * P + BOARD, :] for b in range(batch)])
        return logits[:, None, :, :]                       # NCHW (N, 1, 16, 16)

    return forward


# ---------------------------------------------------------------------------
# Pure-JAX reference (lax.conv) mirroring the kernel's bf16 MXU operands
# ---------------------------------------------------------------------------
def ref_forward(x_nchw, raw):
    acts = {"x": jnp.transpose(x_nchw, (0, 2, 3, 1)).astype(jnp.float32)}
    out = None
    for (name, k, pad, relu, srcs, co, dst) in LAYERS:
        inp = acts[srcs[0]] if len(srcs) == 1 else jnp.concatenate(
            [acts[s] for s in srcs], axis=-1)
        w_hwio = jnp.transpose(raw[name]["w"], (2, 3, 1, 0)).astype(jnp.bfloat16)
        y = lax.conv_general_dilated(
            inp.astype(jnp.bfloat16), w_hwio, (1, 1), [(pad, pad), (pad, pad)],
            dimension_numbers=("NHWC", "HWIO", "NHWC"),
            preferred_element_type=jnp.float32)
        y = y * raw[name]["scale"] + raw[name]["shift"]
        if relu:
            y = jnp.maximum(y, 0.0)
        if dst == "out":
            out = y
        else:
            acts[dst] = y
    return jnp.transpose(out, (0, 3, 1, 2))


if __name__ == "__main__":
    key = jax.random.PRNGKey(0)
    pkey, xkey = jax.random.split(key)
    raw = init_params(pkey)

    batch = 2
    x = jax.random.normal(xkey, (batch, IN_CH, BOARD, BOARD), jnp.float32)

    fwd = jax.jit(build_forward(raw, batch, steps=1))
    out = jax.block_until_ready(fwd(x))
    assert out.shape == (batch, 1, BOARD, BOARD), out.shape
    assert bool(jnp.all(jnp.isfinite(out)))

    ref = jax.block_until_ready(
        jax.jit(functools.partial(ref_forward, raw=raw))(x))
    np.testing.assert_allclose(np.asarray(out), np.asarray(ref),
                               rtol=2e-2, atol=2e-2)

    print("KERNEL_OK")
</pallas_src>

<mosaic_0001>
module attributes {stable_mosaic.version = 11 : i64} {
  func.func @kernel(%arg0: i32, %arg1: memref<1x64x32xbf16, #tpu.memory_space<vmem>>, %arg2: memref<5376x256xbf16, #tpu.memory_space<vmem>>, %arg3: memref<20x256xf32, #tpu.memory_space<vmem>>, %arg4: memref<1x48x16xf32, #tpu.memory_space<vmem>>, %arg5: memref<64x112xbf16, #tpu.memory_space<vmem>>, %arg6: memref<64x128xbf16, #tpu.memory_space<vmem>>, %arg7: memref<64x192xbf16, #tpu.memory_space<vmem>>, %arg8: memref<64x224xbf16, #tpu.memory_space<vmem>>, %arg9: memref<64x224xbf16, #tpu.memory_space<vmem>>, %arg10: memref<64x224xbf16, #tpu.memory_space<vmem>>, %arg11: memref<64x256xbf16, #tpu.memory_space<vmem>>, %arg12: memref<64x160xbf16, #tpu.memory_space<vmem>>, %arg13: memref<64x144xbf16, #tpu.memory_space<vmem>>) attributes {dimension_semantics = [#tpu.dimension_semantics<parallel>], iteration_bounds = array<i64: 1>, scalar_prefetch = 0 : i64, scratch_operands = 9 : i64, tpu.core_type = #tpu.core_type<tc>, window_params = [{transform_indices = @transform_0, window_bounds = array<i64: 1, 64, 32>}, {pipeline_mode = #tpu.pipeline_mode<synchronous>, transform_indices = @transform_1, window_bounds = array<i64: 5376, 256>}, {pipeline_mode = #tpu.pipeline_mode<synchronous>, transform_indices = @transform_2, window_bounds = array<i64: 20, 256>}, {transform_indices = @transform_3, window_bounds = array<i64: 1, 48, 16>}]} {
    %c0 = arith.constant 0 : index
    %c0_0 = arith.constant 0 : index
    %c0_1 = arith.constant 0 : index
    %0 = vector.load %arg1[%c0, %c0_0, %c0_1] : memref<1x64x32xbf16, #tpu.memory_space<vmem>>, vector<1x46x32xbf16>
    %1 = vector.shape_cast %0 : vector<1x46x32xbf16> to vector<46x32xbf16>
    %c0_2 = arith.constant 0 : index
    %c0_3 = arith.constant 0 : index
    %2 = vector.load %arg2[%c0_2, %c0_3] : memref<5376x256xbf16, #tpu.memory_space<vmem>>, vector<32x112xbf16>
    %cst = arith.constant dense<0.000000e+00> : vector<46x112xf32>
    %3 = tpu.matmul %1, %2, %cst {dimension_numbers = #tpu.dot_dimension_numbers<[1], [0], [0], [1], [0, 0, 1, 1], [], []>} : vector<46x32xbf16>, vector<32x112xbf16>, vector<46x112xf32> -> vector<46x112xf32>
    %c0_4 = arith.constant 0 : index
    %c1 = arith.constant 1 : index
    %c0_5 = arith.constant 0 : index
    %4 = vector.load %arg1[%c0_4, %c1, %c0_5] : memref<1x64x32xbf16, #tpu.memory_space<vmem>>, vector<1x46x32xbf16>
    %5 = vector.shape_cast %4 : vector<1x46x32xbf16> to vector<46x32xbf16>
    %c32 = arith.constant 32 : index
    %c0_6 = arith.constant 0 : index
    %6 = vector.load %arg2[%c32, %c0_6] : memref<5376x256xbf16, #tpu.memory_space<vmem>>, vector<32x112xbf16>
    %cst_7 = arith.constant dense<0.000000e+00> : vector<46x112xf32>
    %7 = tpu.matmul %5, %6, %cst_7 {dimension_numbers = #tpu.dot_dimension_numbers<[1], [0], [0], [1], [0, 0, 1, 1], [], []>} : vector<46x32xbf16>, vector<32x112xbf16>, vector<46x112xf32> -> vector<46x112xf32>
    %8 = arith.addf %3, %7 : vector<46x112xf32>
    %c0_8 = arith.constant 0 : index
    %c2 = arith.constant 2 : index
    %c0_9 = arith.constant 0 : index
    %9 = vector.load %arg1[%c0_8, %c2, %c0_9] : memref<1x64x32xbf16, #tpu.memory_space<vmem>>, vector<1x46x32xbf16>
    %10 = vector.shape_cast %9 : vector<1x46x32xbf16> to vector<46x32xbf16>
    %c64 = arith.constant 64 : index
    %c0_10 = arith.constant 0 : index
    %11 = vector.load %arg2[%c64, %c0_10] : memref<5376x256xbf16, #tpu.memory_space<vmem>>, vector<32x112xbf16>
    %cst_11 = arith.constant dense<0.000000e+00> : vector<46x112xf32>
    %12 = tpu.matmul %10, %11, %cst_11 {dimension_numbers = #tpu.dot_dimension_numbers<[1], [0], [0], [1], [0, 0, 1, 1], [], []>} : vector<46x32xbf16>, vector<32x112xbf16>, vector<46x112xf32> -> vector<46x112xf32>
    %13 = arith.addf %8, %12 : vector<46x112xf32>
    %c0_12 = arith.constant 0 : index
    %c0_13 = arith.constant 0 : index
    %14 = vector.load %arg3[%c0_12, %c0_13] : memref<20x256xf32, #tpu.memory_space<vmem>>, vector<1x112xf32>
    %15 = vector.broadcast %14 : vector<1x112xf32> to vector<46x112xf32>
    %16 = arith.mulf %13, %15 : vector<46x112xf32>
    %c10 = arith.constant 10 : index
    %c0_14 = arith.constant 0 : index
    %17 = vector.load %arg3[%c10, %c0_14] : memref<20x256xf32, #tpu.memory_space<vmem>>, vector<1x112xf32>
    %18 = vector.broadcast %17 : vector<1x112xf32> to vector<46x112xf32>
    %19 = arith.addf %16, %18 : vector<46x112xf32>
    %cst_15 = arith.constant 0.000000e+00 : f32
    %20 = vector.broadcast %cst_15 : f32 to vector<46x112xf32>
    %21 = arith.maximumf %19, %20 : vector<46x112xf32>
    %22 = arith.truncf %21 : vector<46x112xf32> to vector<46x112xbf16>
    %23 = vector.extract_strided_slice %22 {offsets = [0, 0], sizes = [14, 112], strides = [1, 1]} : vector<46x112xbf16> to vector<14x112xbf16>
    %c0_16 = arith.constant 0 : index
    %c0_17 = arith.constant 0 : index
    %24 = vector.load %arg5[%c0_16, %c0_17] : memref<64x112xbf16, #tpu.memory_space<vmem>>, vector<14x112xbf16>
    tpu.vector_store %arg5[%c0_16, %c0_17], %23 {strides = array<i32>} : memref<64x112xbf16, #tpu.memory_space<vmem>>, vector<14x112xbf16>,
    %25 = vector.extract_strided_slice %22 {offsets = [32, 0], sizes = [14, 112], strides = [1, 1]} : vector<46x112xbf16> to vector<14x112xbf16>
    %c32_18 = arith.constant 32 : index
    %c0_19 = arith.constant 0 : index
    %26 = vector.load %arg5[%c32_18, %c0_19] : memref<64x112xbf16, #tpu.memory_space<vmem>>, vector<14x112xbf16>
    tpu.vector_store %arg5[%c32_18, %c0_19], %25 {strides = array<i32>} : memref<64x112xbf16, #tpu.memory_space<vmem>>, vector<14x112xbf16>,
    %c0_20 = arith.constant 0 : index
    %c0_21 = arith.constant 0 : index
    %27 = vector.load %arg5[%c0_20, %c0_21] : memref<64x112xbf16, #tpu.memory_space<vmem>>, vector<44x112xbf16>
    %c96 = arith.constant 96 : index
    %c0_22 = arith.constant 0 : index
    %28 = vector.load %arg2[%c96, %c0_22] : memref<5376x256xbf16, #tpu.memory_space<vmem>>, vector<112x128xbf16>
    %cst_23 = arith.constant dense<0.000000e+00> : vector<44x128xf32>
    %29 = tpu.matmul %27, %28, %cst_23 {dimension_numbers = #tpu.dot_dimension_numbers<[1], [0], [0], [1], [0, 0, 1, 1], [], []>} : vector<44x112xbf16>, vector<112x128xbf16>, vector<44x128xf32> -> vector<44x128xf32>
    %c1_24 = arith.constant 1 : index
    %c0_25 = arith.constant 0 : index
    %30 = vector.load %arg5[%c1_24, %c0_25] : memref<64x112xbf16, #tpu.memory_space<vmem>>, vector<44x112xbf16>
    %c208 = arith.constant 208 : index
    %c0_26 = arith.constant 0 : index
    %31 = vector.load %arg2[%c208, %c0_26] : memref<5376x256xbf16, #tpu.memory_space<vmem>>, vector<112x128xbf16>
    %cst_27 = arith.constant dense<0.000000e+00> : vector<44x128xf32>
    %32 = tpu.matmul %30, %31, %cst_27 {dimension_numbers = #tpu.dot_dimension_numbers<[1], [0], [0], [1], [0, 0, 1, 1], [], []>} : vector<44x112xbf16>, vector<112x128xbf16>, vector<44x128xf32> -> vector<44x128xf32>
    %33 = arith.addf %29, %32 : vector<44x128xf32>
    %c2_28 = arith.constant 2 : index
    %c0_29 = arith.constant 0 : index
    %34 = vector.load %arg5[%c2_28, %c0_29] : memref<64x112xbf16, #tpu.memory_space<vmem>>, vector<44x112xbf16>
    %c320 = arith.constant 320 : index
    %c0_30 = arith.constant 0 : index
    %35 = vector.load %arg2[%c320, %c0_30] : memref<5376x256xbf16, #tpu.memory_space<vmem>>, vector<112x128xbf16>
    %cst_31 = arith.constant dense<0.000000e+00> : vector<44x128xf32>
    %36 = tpu.matmul %34, %35, %cst_31 {dimension_numbers = #tpu.dot_dimension_numbers<[1], [0], [0], [1], [0, 0, 1, 1], [], []>} : vector<44x112xbf16>, vector<112x128xbf16>, vector<44x128xf32> -> vector<44x128xf32>
    %37 = arith.addf %33, %36 : vector<44x128xf32>
    %c1_32 = arith.constant 1 : index
    %c0_33 = arith.constant 0 : index
    %38 = vector.load %arg3[%c1_32, %c0_33] : memref<20x256xf32, #tpu.memory_space<vmem>>, vector<1x128xf32>
    %39 = vector.broadcast %38 : vector<1x128xf32> to vector<44x128xf32>
    %40 = arith.mulf %37, %39 : vector<44x128xf32>
    %c11 = arith.constant 11 : index
    %c0_34 = arith.constant 0 : index
    %41 = vector.load %arg3[%c11, %c0_34] : memref<20x256xf32, #tpu.memory_space<vmem>>, vector<1x128xf32>
    %42 = vector.broadcast %41 : vector<1x128xf32> to vector<44x128xf32>
    %43 = arith.addf %40, %42 : vector<44x128xf32>
    %cst_35 = arith.constant 0.000000e+00 : f32
    %44 = vector.broadcast %cst_35 : f32 to vector<44x128xf32>
    %45 = arith.maximumf %43, %44 : vector<44x128xf32>
    %46 = arith.truncf %45 : vector<44x128xf32> to vector<44x128xbf16>
    %cst_36 = arith.constant 0.000000e+00 : bf16
    %47 = vector.broadcast %cst_36 : bf16 to vector<2x128xbf16>
    %c0_37 = arith.constant 0 : index
    %c0_38 = arith.constant 0 : index
    %48 = vector.load %arg6[%c0_37, %c0_38] : memref<64x128xbf16, #tpu.memory_space<vmem>>, vector<2x128xbf16>
    tpu.vector_store %arg6[%c0_37, %c0_38], %47 {strides = array<i32>} : memref<64x128xbf16, #tpu.memory_space<vmem>>, vector<2x128xbf16>,
    %c14 = arith.constant 14 : index
    %c0_39 = arith.constant 0 : index
    %49 = vector.load %arg6[%c14, %c0_39] : memref<64x128xbf16, #tpu.memory_space<vmem>>, vector<2x128xbf16>
    tpu.vector_store %arg6[%c14, %c0_39], %47 {strides = array<i32>} : memref<64x128xbf16, #tpu.memory_space<vmem>>, vector<2x128xbf16>,
    %50 = vector.extract_strided_slice %46 {offsets = [0, 0], sizes = [12, 128], strides = [1, 1]} : vector<44x128xbf16> to vector<12x128xbf16>
    %c2_40 = arith.constant 2 : index
    %c0_41 = arith.constant 0 : index
    %51 = vector.load %arg6[%c2_40, %c0_41] : memref<64x128xbf16, #tpu.memory_space<vmem>>, vector<12x128xbf16>
    tpu.vector_store %arg6[%c2_40, %c0_41], %50 {strides = array<i32>} : memref<64x128xbf16, #tpu.memory_space<vmem>>, vector<12x128xbf16>,
    %c32_42 = arith.constant 32 : index
    %c0_43 = arith.constant 0 : index
    %52 = vector.load %arg6[%c32_42, %c0_43] : memref<64x128xbf16, #tpu.memory_space<vmem>>, vector<2x128xbf16>
    tpu.vector_store %arg6[%c32_42, %c0_43], %47 {strides = array<i32>} : memref<64x128xbf16, #tpu.memory_space<vmem>>, vector<2x128xbf16>,
    %c46 = arith.constant 46 : index
    %c0_44 = arith.constant 0 : index
    %53 = vector.load %arg6[%c46, %c0_44] : memref<64x128xbf16, #tpu.memory_space<vmem>>, vector<2x128xbf16>
    tpu.vector_store %arg6[%c46, %c0_44], %47 {strides = array<i32>} : memref<64x128xbf16, #tpu.memory_space<vmem>>, vector<2x128xbf16>,
    %54 = vector.extract_strided_slice %46 {offsets = [32, 0], sizes = [12, 128], strides = [1, 1]} : vector<44x128xbf16> to vector<12x128xbf16>
    %c34 = arith.constant 34 : index
    %c0_45 = arith.constant 0 : index
    %55 = vector.load %arg6[%c34, %c0_45] : memref<64x128xbf16, #tpu.memory_space<vmem>>, vector<12x128xbf16>
    tpu.vector_store %arg6[%c34, %c0_45], %54 {strides = array<i32>} : memref<64x128xbf16, #tpu.memory_space<vmem>>, vector<12x128xbf16>,
    %c1_46 = arith.constant 1 : index
    %c0_47 = arith.constant 0 : index
    %56 = vector.load %arg6[%c1_46, %c0_47] : memref<64x128xbf16, #tpu.memory_space<vmem>>, vector<44x128xbf16>
    %c432 = arith.constant 432 : index
    %c0_48 = arith.constant 0 : index
    %57 = vector.load %arg2[%c432, %c0_48] : memref<5376x256xbf16, #tpu.memory_space<vmem>>, vector<128x192xbf16>
    %cst_49 = arith.constant dense<0.000000e+00> : vector<44x192xf32>
    %58 = tpu.matmul %56, %57, %cst_49 {dimension_numbers = #tpu.dot_dimension_numbers<[1], [0], [0], [1], [0, 0, 1, 1], [], []>} : vector<44x128xbf16>, vector<128x192xbf16>, vector<44x192xf32> -> vector<44x192xf32>
    %c2_50 = arith.constant 2 : index
    %c0_51 = arith.constant 0 : index
    %59 = vector.load %arg6[%c2_50, %c0_51] : memref<64x128xbf16, #tpu.memory_space<vmem>>, vector<44x128xbf16>
    %c560 = arith.constant 560 : index
    %c0_52 = arith.constant 0 : index
    %60 = vector.load %arg2[%c560, %c0_52] : memref<5376x256xbf16, #tpu.memory_space<vmem>>, vector<128x192xbf16>
    %cst_53 = arith.constant dense<0.000000e+00> : vector<44x192xf32>
    %61 = tpu.matmul %59, %60, %cst_53 {dimension_numbers = #tpu.dot_dimension_numbers<[1], [0], [0], [1], [0, 0, 1, 1], [], []>} : vector<44x128xbf16>, vector<128x192xbf16>, vector<44x192xf32> -> vector<44x192xf32>
    %62 = arith.addf %58, %61 : vector<44x192xf32>
    %c3 = arith.constant 3 : index
    %c0_54 = arith.constant 0 : index
    %63 = vector.load %arg6[%c3, %c0_54] : memref<64x128xbf16, #tpu.memory_space<vmem>>, vector<44x128xbf16>
    %c688 = arith.constant 688 : index
    %c0_55 = arith.constant 0 : index
    %64 = vector.load %arg2[%c688, %c0_55] : memref<5376x256xbf16, #tpu.memory_space<vmem>>, vector<128x192xbf16>
    %cst_56 = arith.constant dense<0.000000e+00> : vector<44x192xf32>
    %65 = tpu.matmul %63, %64, %cst_56 {dimension_numbers = #tpu.dot_dimension_numbers<[1], [0], [0], [1], [0, 0, 1, 1], [], []>} : vector<44x128xbf16>, vector<128x192xbf16>, vector<44x192xf32> -> vector<44x192xf32>
    %66 = arith.addf %62, %65 : vector<44x192xf32>
    %c2_57 = arith.constant 2 : index
    %c0_58 = arith.constant 0 : index
    %67 = vector.load %arg3[%c2_57, %c0_58] : memref<20x256xf32, #tpu.memory_space<vmem>>, vector<1x192xf32>
    %68 = vector.broadcast %67 : vector<1x192xf32> to vector<44x192xf32>
    %69 = arith.mulf %66, %68 : vector<44x192xf32>
    %c12 = arith.constant 12 : index
    %c0_59 = arith.constant 0 : index
    %70 = vector.load %arg3[%c12, %c0_59] : memref<20x256xf32, #tpu.memory_space<vmem>>, vector<1x192xf32>
    %71 = vector.broadcast %70 : vector<1x192xf32> to vector<44x192xf32>
    %72 = arith.addf %69, %71 : vector<44x192xf32>
    %cst_60 = arith.constant 0.000000e+00 : f32
    %73 = vector.broadcast %cst_60 : f32 to vector<44x192xf32>
    %74 = arith.maximumf %72, %73 : vector<44x192xf32>
    %75 = arith.truncf %74 : vector<44x192xf32> to vector<44x192xbf16>
    %76 = vector.extract_strided_slice %75 {offsets = [0, 0], sizes = [12, 192], strides = [1, 1]} : vector<44x192xbf16> to vector<12x192xbf16>
    %c0_61 = arith.constant 0 : index
    %c0_62 = arith.constant 0 : index
    %77 = vector.load %arg7[%c0_61, %c0_62] : memref<64x192xbf16, #tpu.memory_space<vmem>>, vector<12x192xbf16>
    tpu.vector_store %arg7[%c0_61, %c0_62], %76 {strides = array<i32>} : memref<64x192xbf16, #tpu.memory_space<vmem>>, vector<12x192xbf16>,
    %78 = vector.extract_strided_slice %75 {offsets = [32, 0], sizes = [12, 192], strides = [1, 1]} : vector<44x192xbf16> to vector<12x192xbf16>
    %c32_63 = arith.constant 32 : index
    %c0_64 = arith.constant 0 : index
    %79 = vector.load %arg7[%c32_63, %c0_64] : memref<64x192xbf16, #tpu.memory_space<vmem>>, vector<12x192xbf16>
    tpu.vector_store %arg7[%c32_63, %c0_64], %78 {strides = array<i32>} : memref<64x192xbf16, #tpu.memory_space<vmem>>, vector<12x192xbf16>,
    %c0_65 = arith.constant 0 : index
    %c0_66 = arith.constant 0 : index
    %80 = vector.load %arg7[%c0_65, %c0_66] : memref<64x192xbf16, #tpu.memory_space<vmem>>, vector<42x192xbf16>
    %c816 = arith.constant 816 : index
    %c0_67 = arith.constant 0 : index
    %81 = vector.load %arg2[%c816, %c0_67] : memref<5376x256xbf16, #tpu.memory_space<vmem>>, vector<192x224xbf16>
    %cst_68 = arith.constant dense<0.000000e+00> : vector<42x224xf32>
    %82 = tpu.matmul %80, %81, %cst_68 {dimension_numbers = #tpu.dot_dimension_numbers<[1], [0], [0], [1], [0, 0, 1, 1], [], []>} : vector<42x192xbf16>, vector<192x224xbf16>, vector<42x224xf32> -> vector<42x224xf32>
    %c1_69 = arith.constant 1 : index
    %c0_70 = arith.constant 0 : index
    %83 = vector.load %arg7[%c1_69, %c0_70] : memref<64x192xbf16, #tpu.memory_space<vmem>>, vector<42x192xbf16>
    %c1008 = arith.constant 1008 : index
    %c0_71 = arith.constant 0 : index
    %84 = vector.load %arg2[%c1008, %c0_71] : memref<5376x256xbf16, #tpu.memory_space<vmem>>, vector<192x224xbf16>
    %cst_72 = arith.constant dense<0.000000e+00> : vector<42x224xf32>
    %85 = tpu.matmul %83, %84, %cst_72 {dimension_numbers = #tpu.dot_dimension_numbers<[1], [0], [0], [1], [0, 0, 1, 1], [], []>} : vector<42x192xbf16>, vector<192x224xbf16>, vector<42x224xf32> -> vector<42x224xf32>
    %86 = arith.addf %82, %85 : vector<42x224xf32>
    %c2_73 = arith.constant 2 : index
    %c0_74 = arith.constant 0 : index
    %87 = vector.load %arg7[%c2_73, %c0_74] : memref<64x192xbf16, #tpu.memory_space<vmem>>, vector<42x192xbf16>
    %c1200 = arith.constant 1200 : index
    %c0_75 = arith.constant 0 : index
    %88 = vector.load %arg2[%c1200, %c0_75] : memref<5376x256xbf16, #tpu.memory_space<vmem>>, vector<192x224xbf16>
    %cst_76 = arith.constant dense<0.000000e+00> : vector<42x224xf32>
    %89 = tpu.matmul %87, %88, %cst_76 {dimension_numbers = #tpu.dot_dimension_numbers<[1], [0], [0], [1], [0, 0, 1, 1], [], []>} : vector<42x192xbf16>, vector<192x224xbf16>, vector<42x224xf32> -> vector<42x224xf32>
    %90 = arith.addf %86, %89 : vector<42x224xf32>
    %c3_77 = arith.constant 3 : index
    %c0_78 = arith.constant 0 : index
    %91 = vector.load %arg3[%c3_77, %c0_78] : memref<20x256xf32, #tpu.memory_space<vmem>>, vector<1x224xf32>
    %92 = vector.broadcast %91 : vector<1x224xf32> to vector<42x224xf32>
    %93 = arith.mulf %90, %92 : vector<42x224xf32>
    %c13 = arith.constant 13 : index
    %c0_79 = arith.constant 0 : index
    %94 = vector.load %arg3[%c13, %c0_79] : memref<20x256xf32, #tpu.memory_space<vmem>>, vector<1x224xf32>
    %95 = vector.broadcast %94 : vector<1x224xf32> to vector<42x224xf32>
    %96 = arith.addf %93, %95 : vector<42x224xf32>
    %cst_80 = arith.constant 0.000000e+00 : f32
    %97 = vector.broadcast %cst_80 : f32 to vector<42x224xf32>
    %98 = arith.maximumf %96, %97 : vector<42x224xf32>
    %99 = arith.truncf %98 : vector<42x224xf32> to vector<42x224xbf16>
    %cst_81 = arith.constant 0.000000e+00 : bf16
    %100 = vector.broadcast %cst_81 : bf16 to vector<2x224xbf16>
    %c0_82 = arith.constant 0 : index
    %c0_83 = arith.constant 0 : index
    %101 = vector.load %arg8[%c0_82, %c0_83] : memref<64x224xbf16, #tpu.memory_space<vmem>>, vector<2x224xbf16>
    tpu.vector_store %arg8[%c0_82, %c0_83], %100 {strides = array<i32>} : memref<64x224xbf16, #tpu.memory_space<vmem>>, vector<2x224xbf16>,
    %c12_84 = arith.constant 12 : index
    %c0_85 = arith.constant 0 : index
    %102 = vector.load %arg8[%c12_84, %c0_85] : memref<64x224xbf16, #tpu.memory_space<vmem>>, vector<2x224xbf16>
    tpu.vector_store %arg8[%c12_84, %c0_85], %100 {strides = array<i32>} : memref<64x224xbf16, #tpu.memory_space<vmem>>, vector<2x224xbf16>,
    %103 = vector.extract_strided_slice %99 {offsets = [0, 0], sizes = [10, 224], strides = [1, 1]} : vector<42x224xbf16> to vector<10x224xbf16>
    %c2_86 = arith.constant 2 : index
    %c0_87 = arith.constant 0 : index
    %104 = vector.load %arg8[%c2_86, %c0_87] : memref<64x224xbf16, #tpu.memory_space<vmem>>, vector<10x224xbf16>
    tpu.vector_store %arg8[%c2_86, %c0_87], %103 {strides = array<i32>} : memref<64x224xbf16, #tpu.memory_space<vmem>>, vector<10x224xbf16>,
    %c32_88 = arith.constant 32 : index
    %c0_89 = arith.constant 0 : index
    %105 = vector.load %arg8[%c32_88, %c0_89] : memref<64x224xbf16, #tpu.memory_space<vmem>>, vector<2x224xbf16>
    tpu.vector_store %arg8[%c32_88, %c0_89], %100 {strides = array<i32>} : memref<64x224xbf16, #tpu.memory_space<vmem>>, vector<2x224xbf16>,
    %c44 = arith.constant 44 : index
    %c0_90 = arith.constant 0 : index
    %106 = vector.load %arg8[%c44, %c0_90] : memref<64x224xbf16, #tpu.memory_space<vmem>>, vector<2x224xbf16>
    tpu.vector_store %arg8[%c44, %c0_90], %100 {strides = array<i32>} : memref<64x224xbf16, #tpu.memory_space<vmem>>, vector<2x224xbf16>,
    %107 = vector.extract_strided_slice %99 {offsets = [32, 0], sizes = [10, 224], strides = [1, 1]} : vector<42x224xbf16> to vector<10x224xbf16>
    %c34_91 = arith.constant 34 : index
    %c0_92 = arith.constant 0 : index
    %108 = vector.load %arg8[%c34_91, %c0_92] : memref<64x224xbf16, #tpu.memory_space<vmem>>, vector<10x224xbf16>
    tpu.vector_store %arg8[%c34_91, %c0_92], %107 {strides = array<i32>} : memref<64x224xbf16, #tpu.memory_space<vmem>>, vector<10x224xbf16>,
    %c1_93 = arith.constant 1 : index
    %c0_94 = arith.constant 0 : index
    %109 = vector.load %arg8[%c1_93, %c0_94] : memref<64x224xbf16, #tpu.memory_space<vmem>>, vector<42x224xbf16>
    %c1392 = arith.constant 1392 : index
    %c0_95 = arith.constant 0 : index
    %110 = vector.load %arg2[%c1392, %c0_95] : memref<5376x256xbf16, #tpu.memory_space<vmem>>, vector<224x224xbf16>
    %cst_96 = arith.constant dense<0.000000e+00> : vector<42x224xf32>
    %111 = tpu.matmul %109, %110, %cst_96 {dimension_numbers = #tpu.dot_dimension_numbers<[1], [0], [0], [1], [0, 0, 1, 1], [], []>} : vector<42x224xbf16>, vector<224x224xbf16>, vector<42x224xf32> -> vector<42x224xf32>
    %c2_97 = arith.constant 2 : index
    %c0_98 = arith.constant 0 : index
    %112 = vector.load %arg8[%c2_97, %c0_98] : memref<64x224xbf16, #tpu.memory_space<vmem>>, vector<42x224xbf16>
    %c1616 = arith.constant 1616 : index
    %c0_99 = arith.constant 0 : index
    %113 = vector.load %arg2[%c1616, %c0_99] : memref<5376x256xbf16, #tpu.memory_space<vmem>>, vector<224x224xbf16>
    %cst_100 = arith.constant dense<0.000000e+00> : vector<42x224xf32>
    %114 = tpu.matmul %112, %113, %cst_100 {dimension_numbers = #tpu.dot_dimension_numbers<[1], [0], [0], [1], [0, 0, 1, 1], [], []>} : vector<42x224xbf16>, vector<224x224xbf16>, vector<42x224xf32> -> vector<42x224xf32>
    %115 = arith.addf %111, %114 : vector<42x224xf32>
    %c3_101 = arith.constant 3 : index
    %c0_102 = arith.constant 0 : index
    %116 = vector.load %arg8[%c3_101, %c0_102] : memref<64x224xbf16, #tpu.memory_space<vmem>>, vector<42x224xbf16>
    %c1840 = arith.constant 1840 : index
    %c0_103 = arith.constant 0 : index
    %117 = vector.load %arg2[%c1840, %c0_103] : memref<5376x256xbf16, #tpu.memory_space<vmem>>, vector<224x224xbf16>
    %cst_104 = arith.constant dense<0.000000e+00> : vector<42x224xf32>
    %118 = tpu.matmul %116, %117, %cst_104 {dimension_numbers = #tpu.dot_dimension_numbers<[1], [0], [0], [1], [0, 0, 1, 1], [], []>} : vector<42x224xbf16>, vector<224x224xbf16>, vector<42x224xf32> -> vector<42x224xf32>
    %119 = arith.addf %115, %118 : vector<42x224xf32>
    %c4 = arith.constant 4 : index
    %c0_105 = arith.constant 0 : index
    %120 = vector.load %arg3[%c4, %c0_105] : memref<20x256xf32, #tpu.memory_space<vmem>>, vector<1x224xf32>
    %121 = vector.broadcast %120 : vector<1x224xf32> to vector<42x224xf32>
    %122 = arith.mulf %119, %121 : vector<42x224xf32>
    %c14_106 = arith.constant 14 : index
    %c0_107 = arith.constant 0 : index
    %123 = vector.load %arg3[%c14_106, %c0_107] : memref<20x256xf32, #tpu.memory_space<vmem>>, vector<1x224xf32>
    %124 = vector.broadcast %123 : vector<1x224xf32> to vector<42x224xf32>
    %125 = arith.addf %122, %124 : vector<42x224xf32>
    %cst_108 = arith.constant 0.000000e+00 : f32
    %126 = vector.broadcast %cst_108 : f32 to vector<42x224xf32>
    %127 = arith.maximumf %125, %126 : vector<42x224xf32>
    %128 = arith.truncf %127 : vector<42x224xf32> to vector<42x224xbf16>
    %cst_109 = arith.constant 0.000000e+00 : bf16
    %129 = vector.broadcast %cst_109 : bf16 to vector<2x224xbf16>
    %c0_110 = arith.constant 0 : index
    %c0_111 = arith.constant 0 : index
    %130 = vector.load %arg9[%c0_110, %c0_111] : memref<64x224xbf16, #tpu.memory_space<vmem>>, vector<2x224xbf16>
    tpu.vector_store %arg9[%c0_110, %c0_111], %129 {strides = array<i32>} : memref<64x224xbf16, #tpu.memory_space<vmem>>, vector<2x224xbf16>,
    %c12_112 = arith.constant 12 : index
    %c0_113 = arith.constant 0 : index
    %131 = vector.load %arg9[%c12_112, %c0_113] : memref<64x224xbf16, #tpu.memory_space<vmem>>, vector<2x224xbf16>
    tpu.vector_store %arg9[%c12_112, %c0_113], %129 {strides = array<i32>} : memref<64x224xbf16, #tpu.memory_space<vmem>>, vector<2x224xbf16>,
    %132 = vector.extract_strided_slice %128 {offsets = [0, 0], sizes = [10, 224], strides = [1, 1]} : vector<42x224xbf16> to vector<10x224xbf16>
    %c2_114 = arith.constant 2 : index
    %c0_115 = arith.constant 0 : index
    %133 = vector.load %arg9[%c2_114, %c0_115] : memref<64x224xbf16, #tpu.memory_space<vmem>>, vector<10x224xbf16>
    tpu.vector_store %arg9[%c2_114, %c0_115], %132 {strides = array<i32>} : memref<64x224xbf16, #tpu.memory_space<vmem>>, vector<10x224xbf16>,
    %c32_116 = arith.constant 32 : index
    %c0_117 = arith.constant 0 : index
    %134 = vector.load %arg9[%c32_116, %c0_117] : memref<64x224xbf16, #tpu.memory_space<vmem>>, vector<2x224xbf16>
    tpu.vector_store %arg9[%c32_116, %c0_117], %129 {strides = array<i32>} : memref<64x224xbf16, #tpu.memory_space<vmem>>, vector<2x224xbf16>,
    %c44_118 = arith.constant 44 : index
    %c0_119 = arith.constant 0 : index
    %135 = vector.load %arg9[%c44_118, %c0_119] : memref<64x224xbf16, #tpu.memory_space<vmem>>, vector<2x224xbf16>
    tpu.vector_store %arg9[%c44_118, %c0_119], %129 {strides = array<i32>} : memref<64x224xbf16, #tpu.memory_space<vmem>>, vector<2x224xbf16>,
    %136 = vector.extract_strided_slice %128 {offsets = [32, 0], sizes = [10, 224], strides = [1, 1]} : vector<42x224xbf16> to vector<10x224xbf16>
    %c34_120 = arith.constant 34 : index
    %c0_121 = arith.constant 0 : index
    %137 = vector.load %arg9[%c34_120, %c0_121] : memref<64x224xbf16, #tpu.memory_space<vmem>>, vector<10x224xbf16>
    tpu.vector_store %arg9[%c34_120, %c0_121], %136 {strides = array<i32>} : memref<64x224xbf16, #tpu.memory_space<vmem>>, vector<10x224xbf16>,
    %c0_122 = arith.constant 0 : index
    %c0_123 = arith.constant 0 : index
    %138 = vector.load %arg8[%c0_122, %c0_123] : memref<64x224xbf16, #tpu.memory_space<vmem>>, vector<44x224xbf16>
    %c2064 = arith.constant 2064 : index
    %c0_124 = arith.constant 0 : index
    %139 = vector.load %arg2[%c2064, %c0_124] : memref<5376x256xbf16, #tpu.memory_space<vmem>>, vector<224x224xbf16>
    %cst_125 = arith.constant dense<0.000000e+00> : vector<44x224xf32>
    %140 = tpu.matmul %138, %139, %cst_125 {dimension_numbers = #tpu.dot_dimension_numbers<[1], [0], [0], [1], [0, 0, 1, 1], [], []>} : vector<44x224xbf16>, vector<224x224xbf16>, vector<44x224xf32> -> vector<44x224xf32>
    %c1_126 = arith.constant 1 : index
    %c0_127 = arith.constant 0 : index
    %141 = vector.load %arg8[%c1_126, %c0_127] : memref<64x224xbf16, #tpu.memory_space<vmem>>, vector<44x224xbf16>
    %c2288 = arith.constant 2288 : index
    %c0_128 = arith.constant 0 : index
    %142 = vector.load %arg2[%c2288, %c0_128] : memref<5376x256xbf16, #tpu.memory_space<vmem>>, vector<224x224xbf16>
    %cst_129 = arith.constant dense<0.000000e+00> : vector<44x224xf32>
    %143 = tpu.matmul %141, %142, %cst_129 {dimension_numbers = #tpu.dot_dimension_numbers<[1], [0], [0], [1], [0, 0, 1, 1], [], []>} : vector<44x224xbf16>, vector<224x224xbf16>, vector<44x224xf32> -> vector<44x224xf32>
    %144 = arith.addf %140, %143 : vector<44x224xf32>
    %c2_130 = arith.constant 2 : index
    %c0_131 = arith.constant 0 : index
    %145 = vector.load %arg8[%c2_130, %c0_131] : memref<64x224xbf16, #tpu.memory_space<vmem>>, vector<44x224xbf16>
    %c2512 = arith.constant 2512 : index
    %c0_132 = arith.constant 0 : index
    %146 = vector.load %arg2[%c2512, %c0_132] : memref<5376x256xbf16, #tpu.memory_space<vmem>>, vector<224x224xbf16>
    %cst_133 = arith.constant dense<0.000000e+00> : vector<44x224xf32>
    %147 = tpu.matmul %145, %146, %cst_133 {dimension_numbers = #tpu.dot_dimension_numbers<[1], [0], [0], [1], [0, 0, 1, 1], [], []>} : vector<44x224xbf16>, vector<224x224xbf16>, vector<44x224xf32> -> vector<44x224xf32>
    %148 = arith.addf %144, %147 : vector<44x224xf32>
    %c0_134 = arith.constant 0 : index
    %c0_135 = arith.constant 0 : index
    %149 = vector.load %arg9[%c0_134, %c0_135] : memref<64x224xbf16, #tpu.memory_space<vmem>>, vector<44x224xbf16>
    %c2736 = arith.constant 2736 : index
    %c0_136 = arith.constant 0 : index
    %150 = vector.load %arg2[%c2736, %c0_136] : memref<5376x256xbf16, #tpu.memory_space<vmem>>, vector<224x224xbf16>
    %cst_137 = arith.constant dense<0.000000e+00> : vector<44x224xf32>
    %151 = tpu.matmul %149, %150, %cst_137 {dimension_numbers = #tpu.dot_dimension_numbers<[1], [0], [0], [1], [0, 0, 1, 1], [], []>} : vector<44x224xbf16>, vector<224x224xbf16>, vector<44x224xf32> -> vector<44x224xf32>
    %152 = arith.addf %148, %151 : vector<44x224xf32>
    %c1_138 = arith.constant 1 : index
    %c0_139 = arith.constant 0 : index
    %153 = vector.load %arg9[%c1_138, %c0_139] : memref<64x224xbf16, #tpu.memory_space<vmem>>, vector<44x224xbf16>
    %c2960 = arith.constant 2960 : index
    %c0_140 = arith.constant 0 : index
    %154 = vector.load %arg2[%c2960, %c0_140] : memref<5376x256xbf16, #tpu.memory_space<vmem>>, vector<224x224xbf16>
    %cst_141 = arith.constant dense<0.000000e+00> : vector<44x224xf32>
    %155 = tpu.matmul %153, %154, %cst_141 {dimension_numbers = #tpu.dot_dimension_numbers<[1], [0], [0], [1], [0, 0, 1, 1], [], []>} : vector<44x224xbf16>, vector<224x224xbf16>, vector<44x224xf32> -> vector<44x224xf32>
    %156 = arith.addf %152, %155 : vector<44x224xf32>
    %c2_142 = arith.constant 2 : index
    %c0_143 = arith.constant 0 : index
    %157 = vector.load %arg9[%c2_142, %c0_143] : memref<64x224xbf16, #tpu.memory_space<vmem>>, vector<44x224xbf16>
    %c3184 = arith.constant 3184 : index
    %c0_144 = arith.constant 0 : index
    %158 = vector.load %arg2[%c3184, %c0_144] : memref<5376x256xbf16, #tpu.memory_space<vmem>>, vector<224x224xbf16>
    %cst_145 = arith.constant dense<0.000000e+00> : vector<44x224xf32>
    %159 = tpu.matmul %157, %158, %cst_145 {dimension_numbers = #tpu.dot_dimension_numbers<[1], [0], [0], [1], [0, 0, 1, 1], [], []>} : vector<44x224xbf16>, vector<224x224xbf16>, vector<44x224xf32> -> vector<44x224xf32>
    %160 = arith.addf %156, %159 : vector<44x224xf32>
    %c5 = arith.constant 5 : index
    %c0_146 = arith.constant 0 : index
    %161 = vector.load %arg3[%c5, %c0_146] : memref<20x256xf32, #tpu.memory_space<vmem>>, vector<1x224xf32>
    %162 = vector.broadcast %161 : vector<1x224xf32> to vector<44x224xf32>
    %163 = arith.mulf %160, %162 : vector<44x224xf32>
    %c15 = arith.constant 15 : index
    %c0_147 = arith.constant 0 : index
    %164 = vector.load %arg3[%c15, %c0_147] : memref<20x256xf32, #tpu.memory_space<vmem>>, vector<1x224xf32>
    %165 = vector.broadcast %164 : vector<1x224xf32> to vector<44x224xf32>
    %166 = arith.addf %163, %165 : vector<44x224xf32>
    %cst_148 = arith.constant 0.000000e+00 : f32
    %167 = vector.broadcast %cst_148 : f32 to vector<44x224xf32>
    %168 = arith.maximumf %166, %167 : vector<44x224xf32>
    %169 = arith.truncf %168 : vector<44x224xf32> to vector<44x224xbf16>
    %cst_149 = arith.constant 0.000000e+00 : bf16
    %170 = vector.broadcast %cst_149 : bf16 to vector<1x224xbf16>
    %c0_150 = arith.constant 0 : index
    %c0_151 = arith.constant 0 : index
    %171 = vector.load %arg10[%c0_150, %c0_151] : memref<64x224xbf16, #tpu.memory_space<vmem>>, vector<1x224xbf16>
    tpu.vector_store %arg10[%c0_150, %c0_151], %170 {strides = array<i32>} : memref<64x224xbf16, #tpu.memory_space<vmem>>, vector<1x224xbf16>,
    %c13_152 = arith.constant 13 : index
    %c0_153 = arith.constant 0 : index
    %172 = vector.load %arg10[%c13_152, %c0_153] : memref<64x224xbf16, #tpu.memory_space<vmem>>, vector<1x224xbf16>
    tpu.vector_store %arg10[%c13_152, %c0_153], %170 {strides = array<i32>} : memref<64x224xbf16, #tpu.memory_space<vmem>>, vector<1x224xbf16>,
    %173 = vector.extract_strided_slice %169 {offsets = [0, 0], sizes = [12, 224], strides = [1, 1]} : vector<44x224xbf16> to vector<12x224xbf16>
    %c1_154 = arith.constant 1 : index
    %c0_155 = arith.constant 0 : index
    %174 = vector.load %arg10[%c1_154, %c0_155] : memref<64x224xbf16, #tpu.memory_space<vmem>>, vector<12x224xbf16>
    tpu.vector_store %arg10[%c1_154, %c0_155], %173 {strides = array<i32>} : memref<64x224xbf16, #tpu.memory_space<vmem>>, vector<12x224xbf16>,
    %c32_156 = arith.constant 32 : index
    %c0_157 = arith.constant 0 : index
    %175 = vector.load %arg10[%c32_156, %c0_157] : memref<64x224xbf16, #tpu.memory_space<vmem>>, vector<1x224xbf16>
    tpu.vector_store %arg10[%c32_156, %c0_157], %170 {strides = array<i32>} : memref<64x224xbf16, #tpu.memory_space<vmem>>, vector<1x224xbf16>,
    %c45 = arith.constant 45 : index
    %c0_158 = arith.constant 0 : index
    %176 = vector.load %arg10[%c45, %c0_158] : memref<64x224xbf16, #tpu.memory_space<vmem>>, vector<1x224xbf16>
    tpu.vector_store %arg10[%c45, %c0_158], %170 {strides = array<i32>} : memref<64x224xbf16, #tpu.memory_space<vmem>>, vector<1x224xbf16>,
    %177 = vector.extract_strided_slice %169 {offsets = [32, 0], sizes = [12, 224], strides = [1, 1]} : vector<44x224xbf16> to vector<12x224xbf16>
    %c33 = arith.constant 33 : index
    %c0_159 = arith.constant 0 : index
    %178 = vector.load %arg10[%c33, %c0_159] : memref<64x224xbf16, #tpu.memory_space<vmem>>, vector<12x224xbf16>
    tpu.vector_store %arg10[%c33, %c0_159], %177 {strides = array<i32>} : memref<64x224xbf16, #tpu.memory_space<vmem>>, vector<12x224xbf16>,
    %c0_160 = arith.constant 0 : index
    %c0_161 = arith.constant 0 : index
    %179 = vector.load %arg10[%c0_160, %c0_161] : memref<64x224xbf16, #tpu.memory_space<vmem>>, vector<44x224xbf16>
    %c3408 = arith.constant 3408 : index
    %c0_162 = arith.constant 0 : index
    %180 = vector.load %arg2[%c3408, %c0_162] : memref<5376x256xbf16, #tpu.memory_space<vmem>>, vector<224x256xbf16>
    %cst_163 = arith.constant dense<0.000000e+00> : vector<44x256xf32>
    %181 = tpu.matmul %179, %180, %cst_163 {dimension_numbers = #tpu.dot_dimension_numbers<[1], [0], [0], [1], [0, 0, 1, 1], [], []>} : vector<44x224xbf16>, vector<224x256xbf16>, vector<44x256xf32> -> vector<44x256xf32>
    %c1_164 = arith.constant 1 : index
    %c0_165 = arith.constant 0 : index
    %182 = vector.load %arg10[%c1_164, %c0_165] : memref<64x224xbf16, #tpu.memory_space<vmem>>, vector<44x224xbf16>
    %c3632 = arith.constant 3632 : index
    %c0_166 = arith.constant 0 : index
    %183 = vector.load %arg2[%c3632, %c0_166] : memref<5376x256xbf16, #tpu.memory_space<vmem>>, vector<224x256xbf16>
    %cst_167 = arith.constant dense<0.000000e+00> : vector<44x256xf32>
    %184 = tpu.matmul %182, %183, %cst_167 {dimension_numbers = #tpu.dot_dimension_numbers<[1], [0], [0], [1], [0, 0, 1, 1], [], []>} : vector<44x224xbf16>, vector<224x256xbf16>, vector<44x256xf32> -> vector<44x256xf32>
    %185 = arith.addf %181, %184 : vector<44x256xf32>
    %c2_168 = arith.constant 2 : index
    %c0_169 = arith.constant 0 : index
    %186 = vector.load %arg10[%c2_168, %c0_169] : memref<64x224xbf16, #tpu.memory_space<vmem>>, vector<44x224xbf16>
    %c3856 = arith.constant 3856 : index
    %c0_170 = arith.constant 0 : index
    %187 = vector.load %arg2[%c3856, %c0_170] : memref<5376x256xbf16, #tpu.memory_space<vmem>>, vector<224x256xbf16>
    %cst_171 = arith.constant dense<0.000000e+00> : vector<44x256xf32>
    %188 = tpu.matmul %186, %187, %cst_171 {dimension_numbers = #tpu.dot_dimension_numbers<[1], [0], [0], [1], [0, 0, 1, 1], [], []>} : vector<44x224xbf16>, vector<224x256xbf16>, vector<44x256xf32> -> vector<44x256xf32>
    %189 = arith.addf %185, %188 : vector<44x256xf32>
    %c6 = arith.constant 6 : index
    %c0_172 = arith.constant 0 : index
    %190 = vector.load %arg3[%c6, %c0_172] : memref<20x256xf32, #tpu.memory_space<vmem>>, vector<1x256xf32>
    %191 = vector.broadcast %190 : vector<1x256xf32> to vector<44x256xf32>
    %192 = arith.mulf %189, %191 : vector<44x256xf32>
    %c16 = arith.constant 16 : index
    %c0_173 = arith.constant 0 : index
    %193 = vector.load %arg3[%c16, %c0_173] : memref<20x256xf32, #tpu.memory_space<vmem>>, vector<1x256xf32>
    %194 = vector.broadcast %193 : vector<1x256xf32> to vector<44x256xf32>
    %195 = arith.addf %192, %194 : vector<44x256xf32>
    %cst_174 = arith.constant 0.000000e+00 : f32
    %196 = vector.broadcast %cst_174 : f32 to vector<44x256xf32>
    %197 = arith.maximumf %195, %196 : vector<44x256xf32>
    %198 = arith.truncf %197 : vector<44x256xf32> to vector<44x256xbf16>
    %cst_175 = arith.constant 0.000000e+00 : bf16
    %199 = vector.broadcast %cst_175 : bf16 to vector<2x256xbf16>
    %c0_176 = arith.constant 0 : index
    %c0_177 = arith.constant 0 : index
    %200 = vector.load %arg11[%c0_176, %c0_177] : memref<64x256xbf16, #tpu.memory_space<vmem>>, vector<2x256xbf16>
    tpu.vector_store %arg11[%c0_176, %c0_177], %199 {strides = array<i32>} : memref<64x256xbf16, #tpu.memory_space<vmem>>, vector<2x256xbf16>,
    %c14_178 = arith.constant 14 : index
    %c0_179 = arith.constant 0 : index
    %201 = vector.load %arg11[%c14_178, %c0_179] : memref<64x256xbf16, #tpu.memory_space<vmem>>, vector<2x256xbf16>
    tpu.vector_store %arg11[%c14_178, %c0_179], %199 {strides = array<i32>} : memref<64x256xbf16, #tpu.memory_space<vmem>>, vector<2x256xbf16>,
    %202 = vector.extract_strided_slice %198 {offsets = [0, 0], sizes = [12, 256], strides = [1, 1]} : vector<44x256xbf16> to vector<12x256xbf16>
    %c2_180 = arith.constant 2 : index
    %c0_181 = arith.constant 0 : index
    %203 = vector.load %arg11[%c2_180, %c0_181] : memref<64x256xbf16, #tpu.memory_space<vmem>>, vector<12x256xbf16>
    tpu.vector_store %arg11[%c2_180, %c0_181], %202 {strides = array<i32>} : memref<64x256xbf16, #tpu.memory_space<vmem>>, vector<12x256xbf16>,
    %c32_182 = arith.constant 32 : index
    %c0_183 = arith.constant 0 : index
    %204 = vector.load %arg11[%c32_182, %c0_183] : memref<64x256xbf16, #tpu.memory_space<vmem>>, vector<2x256xbf16>
    tpu.vector_store %arg11[%c32_182, %c0_183], %199 {strides = array<i32>} : memref<64x256xbf16, #tpu.memory_space<vmem>>, vector<2x256xbf16>,
    %c46_184 = arith.constant 46 : index
    %c0_185 = arith.constant 0 : index
    %205 = vector.load %arg11[%c46_184, %c0_185] : memref<64x256xbf16, #tpu.memory_space<vmem>>, vector<2x256xbf16>
    tpu.vector_store %arg11[%c46_184, %c0_185], %199 {strides = array<i32>} : memref<64x256xbf16, #tpu.memory_space<vmem>>, vector<2x256xbf16>,
    %206 = vector.extract_strided_slice %198 {offsets = [32, 0], sizes = [12, 256], strides = [1, 1]} : vector<44x256xbf16> to vector<12x256xbf16>
    %c34_186 = arith.constant 34 : index
    %c0_187 = arith.constant 0 : index
    %207 = vector.load %arg11[%c34_186, %c0_187] : memref<64x256xbf16, #tpu.memory_space<vmem>>, vector<12x256xbf16>
    tpu.vector_store %arg11[%c34_186, %c0_187], %206 {strides = array<i32>} : memref<64x256xbf16, #tpu.memory_space<vmem>>, vector<12x256xbf16>,
    %c0_188 = arith.constant 0 : index
    %c0_189 = arith.constant 0 : index
    %208 = vector.load %arg6[%c0_188, %c0_189] : memref<64x128xbf16, #tpu.memory_space<vmem>>, vector<48x128xbf16>
    %c4080 = arith.constant 4080 : index
    %c0_190 = arith.constant 0 : index
    %209 = vector.load %arg2[%c4080, %c0_190] : memref<5376x256xbf16, #tpu.memory_space<vmem>>, vector<128x160xbf16>
    %cst_191 = arith.constant dense<0.000000e+00> : vector<48x160xf32>
    %210 = tpu.matmul %208, %209, %cst_191 {dimension_numbers = #tpu.dot_dimension_numbers<[1], [0], [0], [1], [0, 0, 1, 1], [], []>} : vector<48x128xbf16>, vector<128x160xbf16>, vector<48x160xf32> -> vector<48x160xf32>
    %c0_192 = arith.constant 0 : index
    %c0_193 = arith.constant 0 : index
    %211 = vector.load %arg11[%c0_192, %c0_193] : memref<64x256xbf16, #tpu.memory_space<vmem>>, vector<48x256xbf16>
    %c4208 = arith.constant 4208 : index
    %c0_194 = arith.constant 0 : index
    %212 = vector.load %arg2[%c4208, %c0_194] : memref<5376x256xbf16, #tpu.memory_space<vmem>>, vector<256x160xbf16>
    %cst_195 = arith.constant dense<0.000000e+00> : vector<48x160xf32>
    %213 = tpu.matmul %211, %212, %cst_195 {dimension_numbers = #tpu.dot_dimension_numbers<[1], [0], [0], [1], [0, 0, 1, 1], [], []>} : vector<48x256xbf16>, vector<256x160xbf16>, vector<48x160xf32> -> vector<48x160xf32>
    %214 = arith.addf %210, %213 : vector<48x160xf32>
    %c7 = arith.constant 7 : index
    %c0_196 = arith.constant 0 : index
    %215 = vector.load %arg3[%c7, %c0_196] : memref<20x256xf32, #tpu.memory_space<vmem>>, vector<1x160xf32>
    %216 = vector.broadcast %215 : vector<1x160xf32> to vector<48x160xf32>
    %217 = arith.mulf %214, %216 : vector<48x160xf32>
    %c17 = arith.constant 17 : index
    %c0_197 = arith.constant 0 : index
    %218 = vector.load %arg3[%c17, %c0_197] : memref<20x256xf32, #tpu.memory_space<vmem>>, vector<1x160xf32>
    %219 = vector.broadcast %218 : vector<1x160xf32> to vector<48x160xf32>
    %220 = arith.addf %217, %219 : vector<48x160xf32>
    %cst_198 = arith.constant 0.000000e+00 : f32
    %221 = vector.broadcast %cst_198 : f32 to vector<48x160xf32>
    %222 = arith.maximumf %220, %221 : vector<48x160xf32>
    %223 = arith.truncf %222 : vector<48x160xf32> to vector<48x160xbf16>
    %cst_199 = arith.constant 0.000000e+00 : bf16
    %224 = vector.broadcast %cst_199 : bf16 to vector<2x160xbf16>
    %c0_200 = arith.constant 0 : index
    %c0_201 = arith.constant 0 : index
    %225 = vector.load %arg12[%c0_200, %c0_201] : memref<64x160xbf16, #tpu.memory_space<vmem>>, vector<2x160xbf16>
    tpu.vector_store %arg12[%c0_200, %c0_201], %224 {strides = array<i32>} : memref<64x160xbf16, #tpu.memory_space<vmem>>, vector<2x160xbf16>,
    %c18 = arith.constant 18 : index
    %c0_202 = arith.constant 0 : index
    %226 = vector.load %arg12[%c18, %c0_202] : memref<64x160xbf16, #tpu.memory_space<vmem>>, vector<2x160xbf16>
    tpu.vector_store %arg12[%c18, %c0_202], %224 {strides = array<i32>} : memref<64x160xbf16, #tpu.memory_space<vmem>>, vector<2x160xbf16>,
    %227 = vector.extract_strided_slice %223 {offsets = [0, 0], sizes = [16, 160], strides = [1, 1]} : vector<48x160xbf16> to vector<16x160xbf16>
    %c2_203 = arith.constant 2 : index
    %c0_204 = arith.constant 0 : index
    %228 = vector.load %arg12[%c2_203, %c0_204] : memref<64x160xbf16, #tpu.memory_space<vmem>>, vector<16x160xbf16>
    tpu.vector_store %arg12[%c2_203, %c0_204], %227 {strides = array<i32>} : memref<64x160xbf16, #tpu.memory_space<vmem>>, vector<16x160xbf16>,
    %c32_205 = arith.constant 32 : index
    %c0_206 = arith.constant 0 : index
    %229 = vector.load %arg12[%c32_205, %c0_206] : memref<64x160xbf16, #tpu.memory_space<vmem>>, vector<2x160xbf16>
    tpu.vector_store %arg12[%c32_205, %c0_206], %224 {strides = array<i32>} : memref<64x160xbf16, #tpu.memory_space<vmem>>, vector<2x160xbf16>,
    %c50 = arith.constant 50 : index
    %c0_207 = arith.constant 0 : index
    %230 = vector.load %arg12[%c50, %c0_207] : memref<64x160xbf16, #tpu.memory_space<vmem>>, vector<2x160xbf16>
    tpu.vector_store %arg12[%c50, %c0_207], %224 {strides = array<i32>} : memref<64x160xbf16, #tpu.memory_space<vmem>>, vector<2x160xbf16>,
    %231 = vector.extract_strided_slice %223 {offsets = [32, 0], sizes = [16, 160], strides = [1, 1]} : vector<48x160xbf16> to vector<16x160xbf16>
    %c34_208 = arith.constant 34 : index
    %c0_209 = arith.constant 0 : index
    %232 = vector.load %arg12[%c34_208, %c0_209] : memref<64x160xbf16, #tpu.memory_space<vmem>>, vector<16x160xbf16>
    tpu.vector_store %arg12[%c34_208, %c0_209], %231 {strides = array<i32>} : memref<64x160xbf16, #tpu.memory_space<vmem>>, vector<16x160xbf16>,
    %c0_210 = arith.constant 0 : index
    %c0_211 = arith.constant 0 : index
    %233 = vector.load %arg12[%c0_210, %c0_211] : memref<64x160xbf16, #tpu.memory_space<vmem>>, vector<50x160xbf16>
    %c4464 = arith.constant 4464 : index
    %c0_212 = arith.constant 0 : index
    %234 = vector.load %arg2[%c4464, %c0_212] : memref<5376x256xbf16, #tpu.memory_space<vmem>>, vector<160x144xbf16>
    %cst_213 = arith.constant dense<0.000000e+00> : vector<50x144xf32>
    %235 = tpu.matmul %233, %234, %cst_213 {dimension_numbers = #tpu.dot_dimension_numbers<[1], [0], [0], [1], [0, 0, 1, 1], [], []>} : vector<50x160xbf16>, vector<160x144xbf16>, vector<50x144xf32> -> vector<50x144xf32>
    %c1_214 = arith.constant 1 : index
    %c0_215 = arith.constant 0 : index
    %236 = vector.load %arg12[%c1_214, %c0_215] : memref<64x160xbf16, #tpu.memory_space<vmem>>, vector<50x160xbf16>
    %c4624 = arith.constant 4624 : index
    %c0_216 = arith.constant 0 : index
    %237 = vector.load %arg2[%c4624, %c0_216] : memref<5376x256xbf16, #tpu.memory_space<vmem>>, vector<160x144xbf16>
    %cst_217 = arith.constant dense<0.000000e+00> : vector<50x144xf32>
    %238 = tpu.matmul %236, %237, %cst_217 {dimension_numbers = #tpu.dot_dimension_numbers<[1], [0], [0], [1], [0, 0, 1, 1], [], []>} : vector<50x160xbf16>, vector<160x144xbf16>, vector<50x144xf32> -> vector<50x144xf32>
    %239 = arith.addf %235, %238 : vector<50x144xf32>
    %c2_218 = arith.constant 2 : index
    %c0_219 = arith.constant 0 : index
    %240 = vector.load %arg12[%c2_218, %c0_219] : memref<64x160xbf16, #tpu.memory_space<vmem>>, vector<50x160xbf16>
    %c4784 = arith.constant 4784 : index
    %c0_220 = arith.constant 0 : index
    %241 = vector.load %arg2[%c4784, %c0_220] : memref<5376x256xbf16, #tpu.memory_space<vmem>>, vector<160x144xbf16>
    %cst_221 = arith.constant dense<0.000000e+00> : vector<50x144xf32>
    %242 = tpu.matmul %240, %241, %cst_221 {dimension_numbers = #tpu.dot_dimension_numbers<[1], [0], [0], [1], [0, 0, 1, 1], [], []>} : vector<50x160xbf16>, vector<160x144xbf16>, vector<50x144xf32> -> vector<50x144xf32>
    %243 = arith.addf %239, %242 : vector<50x144xf32>
    %c8 = arith.constant 8 : index
    %c0_222 = arith.constant 0 : index
    %244 = vector.load %arg3[%c8, %c0_222] : memref<20x256xf32, #tpu.memory_space<vmem>>, vector<1x144xf32>
    %245 = vector.broadcast %244 : vector<1x144xf32> to vector<50x144xf32>
    %246 = arith.mulf %243, %245 : vector<50x144xf32>
    %c18_223 = arith.constant 18 : index
    %c0_224 = arith.constant 0 : index
    %247 = vector.load %arg3[%c18_223, %c0_224] : memref<20x256xf32, #tpu.memory_space<vmem>>, vector<1x144xf32>
    %248 = vector.broadcast %247 : vector<1x144xf32> to vector<50x144xf32>
    %249 = arith.addf %246, %248 : vector<50x144xf32>
    %cst_225 = arith.constant 0.000000e+00 : f32
    %250 = vector.broadcast %cst_225 : f32 to vector<50x144xf32>
    %251 = arith.maximumf %249, %250 : vector<50x144xf32>
    %252 = arith.truncf %251 : vector<50x144xf32> to vector<50x144xbf16>
    %253 = vector.extract_strided_slice %252 {offsets = [0, 0], sizes = [18, 144], strides = [1, 1]} : vector<50x144xbf16> to vector<18x144xbf16>
    %c0_226 = arith.constant 0 : index
    %c0_227 = arith.constant 0 : index
    %254 = vector.load %arg13[%c0_226, %c0_227] : memref<64x144xbf16, #tpu.memory_space<vmem>>, vector<18x144xbf16>
    tpu.vector_store %arg13[%c0_226, %c0_227], %253 {strides = array<i32>} : memref<64x144xbf16, #tpu.memory_space<vmem>>, vector<18x144xbf16>,
    %255 = vector.extract_strided_slice %252 {offsets = [32, 0], sizes = [18, 144], strides = [1, 1]} : vector<50x144xbf16> to vector<18x144xbf16>
    %c32_228 = arith.constant 32 : index
    %c0_229 = arith.constant 0 : index
    %256 = vector.load %arg13[%c32_228, %c0_229] : memref<64x144xbf16, #tpu.memory_space<vmem>>, vector<18x144xbf16>
    tpu.vector_store %arg13[%c32_228, %c0_229], %255 {strides = array<i32>} : memref<64x144xbf16, #tpu.memory_space<vmem>>, vector<18x144xbf16>,
    %c0_230 = arith.constant 0 : index
    %c0_231 = arith.constant 0 : index
    %257 = vector.load %arg13[%c0_230, %c0_231] : memref<64x144xbf16, #tpu.memory_space<vmem>>, vector<48x144xbf16>
    %c4944 = arith.constant 4944 : index
    %c0_232 = arith.constant 0 : index
    %258 = vector.load %arg2[%c4944, %c0_232] : memref<5376x256xbf16, #tpu.memory_space<vmem>>, vector<144x16xbf16>
    %cst_233 = arith.constant dense<0.000000e+00> : vector<48x16xf32>
    %259 = tpu.matmul %257, %258, %cst_233 {dimension_numbers = #tpu.dot_dimension_numbers<[1], [0], [0], [1], [0, 0, 1, 1], [], []>} : vector<48x144xbf16>, vector<144x16xbf16>, vector<48x16xf32> -> vector<48x16xf32>
    %c1_234 = arith.constant 1 : index
    %c0_235 = arith.constant 0 : index
    %260 = vector.load %arg13[%c1_234, %c0_235] : memref<64x144xbf16, #tpu.memory_space<vmem>>, vector<48x144xbf16>
    %c5088 = arith.constant 5088 : index
    %c0_236 = arith.constant 0 : index
    %261 = vector.load %arg2[%c5088, %c0_236] : memref<5376x256xbf16, #tpu.memory_space<vmem>>, vector<144x16xbf16>
    %cst_237 = arith.constant dense<0.000000e+00> : vector<48x16xf32>
    %262 = tpu.matmul %260, %261, %cst_237 {dimension_numbers = #tpu.dot_dimension_numbers<[1], [0], [0], [1], [0, 0, 1, 1], [], []>} : vector<48x144xbf16>, vector<144x16xbf16>, vector<48x16xf32> -> vector<48x16xf32>
    %263 = arith.addf %259, %262 : vector<48x16xf32>
    %c2_238 = arith.constant 2 : index
    %c0_239 = arith.constant 0 : index
    %264 = vector.load %arg13[%c2_238, %c0_239] : memref<64x144xbf16, #tpu.memory_space<vmem>>, vector<48x144xbf16>
    %c5232 = arith.constant 5232 : index
    %c0_240 = arith.constant 0 : index
    %265 = vector.load %arg2[%c5232, %c0_240] : memref<5376x256xbf16, #tpu.memory_space<vmem>>, vector<144x16xbf16>
    %cst_241 = arith.constant dense<0.000000e+00> : vector<48x16xf32>
    %266 = tpu.matmul %264, %265, %cst_241 {dimension_numbers = #tpu.dot_dimension_numbers<[1], [0], [0], [1], [0, 0, 1, 1], [], []>} : vector<48x144xbf16>, vector<144x16xbf16>, vector<48x16xf32> -> vector<48x16xf32>
    %267 = arith.addf %263, %266 : vector<48x16xf32>
    %c9 = arith.constant 9 : index
    %c0_242 = arith.constant 0 : index
    %268 = vector.load %arg3[%c9, %c0_242] : memref<20x256xf32, #tpu.memory_space<vmem>>, vector<1x16xf32>
    %269 = vector.broadcast %268 : vector<1x16xf32> to vector<48x16xf32>
    %270 = arith.mulf %267, %269 : vector<48x16xf32>
    %c19 = arith.constant 19 : index
    %c0_243 = arith.constant 0 : index
    %271 = vector.load %arg3[%c19, %c0_243] : memref<20x256xf32, #tpu.memory_space<vmem>>, vector<1x16xf32>
    %272 = vector.broadcast %271 : vector<1x16xf32> to vector<48x16xf32>
    %273 = arith.addf %270, %272 : vector<48x16xf32>
    %c0_244 = arith.constant 0 : index
    %c0_245 = arith.constant 0 : index
    %c0_246 = arith.constant 0 : index
    %274 = vector.load %arg4[%c0_244, %c0_245, %c0_246] : memref<1x48x16xf32, #tpu.memory_space<vmem>>, vector<1x48x16xf32>
    %275 = vector.shape_cast %274 : vector<1x48x16xf32> to vector<48x16xf32>
    %276 = vector.shape_cast %273 : vector<48x16xf32> to vector<1x48x16xf32>
    tpu.vector_store %arg4[%c0_244, %c0_245, %c0_246], %276 {strides = array<i32>} : memref<1x48x16xf32, #tpu.memory_space<vmem>>, vector<1x48x16xf32>,
    return
  }
  func.func @transform_0(%arg0: i32) -> (i32, i32, i32) {
    %c0_i32 = arith.constant 0 : i32
    %c0_i32_0 = arith.constant 0 : i32
    %c0_i32_1 = arith.constant 0 : i32
    return %arg0, %c0_i32, %c0_i32_0 : i32, i32, i32
  }
  func.func @transform_1(%arg0: i32) -> (i32, i32) {
    %c0_i32 = arith.constant 0 : i32
    %c0_i32_0 = arith.constant 0 : i32
    %c0_i32_1 = arith.constant 0 : i32
    return %c0_i32, %c0_i32_0 : i32, i32
  }
  func.func @transform_2(%arg0: i32) -> (i32, i32) {
    %c0_i32 = arith.constant 0 : i32
    %c0_i32_0 = arith.constant 0 : i32
    %c0_i32_1 = arith.constant 0 : i32
    return %c0_i32, %c0_i32_0 : i32, i32
  }
  func.func @transform_3(%arg0: i32) -> (i32, i32, i32) {
    %c0_i32 = arith.constant 0 : i32
    %c0_i32_0 = arith.constant 0 : i32
    %c0_i32_1 = arith.constant 0 : i32
    return %arg0, %c0_i32, %c0_i32_0 : i32, i32, i32
  }
}

</mosaic_0001>

<llo_original>
// kernel: forward.1
$region0: #{forward.1}
  #allocation0 [shape = 'u32[]', space=smem, size = 0x4, offset = 0x4, fixed_abs, tag = 'smem constant byte address 0x4 - core index']
  #allocation1 [shape = 'u32[144,128]{1,0:T(1,128)}', space=vmem, size = 0x12000, scoped, tag = 'internal scratch']
  #allocation2 [shape = 'bf16[64,112]{1,0:T(8,128)(2,1)}', space=vmem, size = 0x4000, scoped, tag = 'scratch operand']
  #allocation3 [shape = 'bf16[64,128]{1,0:T(8,128)(2,1)}', space=vmem, size = 0x4000, scoped, tag = 'scratch operand']
  #allocation4 [shape = 'bf16[64,192]{1,0:T(8,128)(2,1)}', space=vmem, size = 0x8000, scoped, tag = 'scratch operand']
  #allocation5 [shape = 'bf16[64,224]{1,0:T(8,128)(2,1)}', space=vmem, size = 0x8000, scoped, tag = 'scratch operand']
  #allocation6 [shape = 'bf16[64,224]{1,0:T(8,128)(2,1)}', space=vmem, size = 0x8000, scoped, tag = 'scratch operand']
  #allocation7 [shape = 'bf16[64,224]{1,0:T(8,128)(2,1)}', space=vmem, size = 0x8000, scoped, tag = 'scratch operand']
  #allocation8 [shape = 'bf16[64,256]{1,0:T(8,128)(2,1)}', space=vmem, size = 0x8000, scoped, tag = 'scratch operand']
  #allocation9 [shape = 'bf16[64,160]{1,0:T(8,128)(2,1)}', space=vmem, size = 0x8000, scoped, tag = 'scratch operand']
  #allocation10 [shape = 'bf16[64,144]{1,0:T(8,128)(2,1)}', space=vmem, size = 0x8000, scoped, tag = 'scratch operand']
  %s0 = inlined_call_operand.vmem [shape: bf16[1,64,32], index: 0, kind: input, shape index: {}]
  %s1 = inlined_call_operand.hbm [shape: bf16[5376,256], index: 1, kind: input, shape index: {}]
  %s2 = inlined_call_operand.hbm [shape: f32[20,256], index: 2, kind: input, shape index: {}]
  %s3 = inlined_call_operand.vmem [shape: f32[1,48,16], index: 3, kind: output, shape index: {}]
  %s4 = sld [smem:[#allocation0]]
  $region30: #{forward.1} parent=0
    _
  %s6 = ssub.s32 1, %s4
  %s7 = scalar_select 0, %s6, %s4
  $region1: #{forward.1} parent=0
    #allocation11 [shape = 'u8[2752512]{0}', space=vmem, size = 0x2a0000, scoped, tag = 'input window, operand 1, single buffered']
    #allocation12 [shape = 's32[1]{0}', space=sflag, size = 0x4, scoped, tag = 'scoped memory for forward.1']
    #allocation13 [shape = 'u8[24576]{0}', space=vmem, size = 0x6000, scoped, tag = 'input window, operand 2, single buffered']
    #allocation14 [shape = 's32[1]{0}', space=sflag, size = 0x4, scoped, tag = 'scoped memory for forward.1']
    %8 = vsyncpa [#allocation12], 0
    %9 = vsyncpa [#allocation14], 0
    // Predicated region
    $region2: #{forward.1} parent=1 // pred_check
      _
    $region3: #{forward.1} parent=1 // pred_check_branch
      %11 = sbr.rel (0) target = $region5
    $region4: #{forward.1} parent=1 // pred_region
      _
    $region5: #{forward.1} parent=1 // pred_fallthru
      _
    // Predicated region
    $region6: #{forward.1} parent=1 // pred_check
      _
    $region7: #{forward.1} parent=1 // pred_check_branch
      %13 = sbr.rel (0) target = $region9
    $region8: #{forward.1} parent=1 // pred_region
      %s15 = ssub.s32 86016, 86016
      %16 = vsyncadd [#allocation12], %s15
      %s17 = sshll.u32 [#allocation11], 4
      %s18 = int_to_ptr.vmem [resolvable:$true] %s17
      %23 = dma.hbm_to_vmem [thread:$0]  %s1, 86016, %s18, [#allocation12], 128, 128, 8
    $region9: #{forward.1} parent=1 // pred_fallthru
      _
    // Predicated region
    $region10: #{forward.1} parent=1 // pred_check
      _
    $region11: #{forward.1} parent=1 // pred_check_branch
      %25 = sbr.rel (0) target = $region13
    $region12: #{forward.1} parent=1 // pred_region
      %s27 = ssub.s32 768, 768
      %28 = vsyncadd [#allocation14], %s27
      %s29 = sshll.u32 [#allocation13], 4
      %s30 = int_to_ptr.vmem [resolvable:$true] %s29
      %35 = dma.hbm_to_vmem [thread:$0]  %s2, 768, %s30, [#allocation14], 256, 256, 16
    $region13: #{forward.1} parent=1 // pred_fallthru
      _
    // Predicated region
    $region14: #{forward.1} parent=1 // pred_check
      _
    $region15: #{forward.1} parent=1 // pred_check_branch
      %37 = sbr.rel (0) target = $region17
    $region16: #{forward.1} parent=1 // pred_region
      %38 = dma.done [#allocation12], 86016
    $region17: #{forward.1} parent=1 // pred_fallthru
      _
    // Predicated region
    $region18: #{forward.1} parent=1 // pred_check
      _
    $region19: #{forward.1} parent=1 // pred_check_branch
      %40 = sbr.rel (0) target = $region21
    $region20: #{forward.1} parent=1 // pred_region
      %41 = dma.done [#allocation14], 768
    $region21: #{forward.1} parent=1 // pred_fallthru
      _
    %v43 = vld [vmem:[%s0] sm:$0xf]
    %v44 = vld [vmem:[%s0 + $0x4] sm:$0xf]
    %v45 = vld [vmem:[%s0 + $0x8] sm:$0xf]
    %v46 = vld [vmem:[%s0 + $0xc] sm:$0xf]
    %v47 = vld [vmem:[%s0 + $0x10] sm:$0xf]
    %v48 = vld [vmem:[%s0 + $0x14] sm:$0x7]
    %v49 = vld [vmem:[#allocation11] sm:$0xf]
    %v50 = vld [vmem:[#allocation11 + $0x8] sm:$0xf]
    %v51 = vld [vmem:[#allocation11 + $0x10] sm:$0xf]
    %v52 = vld [vmem:[#allocation11 + $0x18] sm:$0xf]
    %v53 = vld [vmem:[%s0 + $0x14] sm:$0xf]
    %v54 = vld [vmem:[#allocation11 + $0x20] sm:$0xf]
    %v55 = vld [vmem:[#allocation11 + $0x28] sm:$0xf]
    %v56 = vld [vmem:[#allocation11 + $0x30] sm:$0xf]
    %v57 = vld [vmem:[#allocation11 + $0x38] sm:$0xf]
    %v64 = vunpack.c.l.b16 %v43
    %v65 = vunpack.c.l.b16 %v44
    %v66 = vunpack.c.l.b16 %v45
    %v67 = vunpack.c.l.b16 %v46
    %v68 = vunpack.c.l.b16 %v47
    %v69 = vunpack.c.l.b16 %v53
    %v70 = vpack.c.b16 %v65, %v64
    %v71 = vpack.c.b16 %v67, %v66
    %v72 = vpack.c.b16 %v69, %v68
    %vm73 = vsmask.f32 7424
    %v75 = vshrl.u32 %v70, 16
    %v77 = vshll.u32 %v70, 16
    %v79 = vrot.slane %v77, 1
    %v80 = vor.u32 %v75, %v79
    %v82 = vshll.u32 %v71, 16
    %v84 = vrot.slane %v82, 1
    %v85 = vsel %vm73, %v80, %v84
    %v86 = vshrl.u32 %v71, 16
    %v88 = vor.u32 %v86, %v84
    %v90 = vshll.u32 %v72, 16
    %v92 = vrot.slane %v90, 1
    %v93 = vsel %vm73, %v88, %v92
    %v94 = vshrl.u32 %v72, 16
    %v96 = vor.u32 %v94, %v92
    %v101 = vunpack.c.l.b16 %v54
    %v102 = vunpack.c.l.b16 %v55
    %v103 = vunpack.c.l.b16 %v56
    %v104 = vunpack.c.l.b16 %v57
    %v105 = vpack.c.b16 %v102, %v101
    %v106 = vpack.c.b16 %v104, %v103
    %vm109 = vcmask 261120
    %v111 = vsel %vm109, %v85, 0
    %v114 = vsel %vm109, %v93, 0
    %v117 = vsel %vm109, %v96, 0
    %119 = vmatprep.subr.bf16.mxu0 0
    %120 = vmatpush1.bf16.msra.mxu0 0
    %121 = vmatprep.subr.bf16.mxu0 0
    %122 = vmatpush1.bf16.msra.mxu0 0
    %123 = vmatprep.subr.bf16.mxu0 0
    %124 = vmatpush1.bf16.msra.mxu0 0
    %125 = vmatprep.subr.bf16.mxu0 0
    %126 = vmatpush1.bf16.msra.mxu0 0
    %127 = vmatprep.subr.bf16.mxu0 0
    %128 = vmatpush1.bf16.msra.mxu0 0
    %129 = vmatprep.subr.bf16.mxu0 0
    %130 = vmatpush1.bf16.msra.mxu0 0
    %131 = vmatprep.subr.bf16.mxu0 0
    %132 = vmatpush1.bf16.msra.mxu0 %v106
    %133 = vmatprep.subr.bf16.mxu0 0
    %134 = vmatpush1.bf16.msra.mxu0 %v105
    %135 = vmatprep.subr.bf16.mxu0 0
    %136 = vmatpush2.bf16.msra.mxu0 0
    %137 = vmatprep.subr.bf16.mxu0 0
    %138 = vmatpush2.bf16.msra.mxu0 0
    %139 = vmatprep.subr.bf16.mxu0 0
    %140 = vmatpush2.bf16.msra.mxu0 0
    %141 = vmatprep.subr.bf16.mxu0 0
    %142 = vmatpush2.bf16.msra.mxu0 0
    %143 = vmatprep.subr.bf16.mxu0 0
    %144 = vmatpush2.bf16.msra.mxu0 0
    %145 = vmatprep.subr.bf16.mxu0 0
    %146 = vmatpush2.bf16.msra.mxu0 0
    %147 = vmatprep.subr.bf16.mxu0 0
    %148 = vmatpush2.bf16.msra.mxu0 0
    %149 = vmatprep.subr.bf16.mxu0 0
    %150 = vmatpush2.bf16.msra.mxu0 0
    %151 = vmatprep.mubr.bf16.mxu0 0
    %152 = vmatmul.mubr.bf16.gmra.mxu0 %v111
    %v153 = vpop.f32.mrf.mxu0
    %v154 = vadd.f32 0.0, %v153
    %v155 = vpop.f32.mrf.mxu0
    %v156 = vpop.f32.mrf.mxu0
    %v157 = vadd.f32 0.0, %v156
    %v158 = vpop.f32.mrf.mxu0
    %159 = vmatprep.mubr.bf16.mxu0 0
    %160 = vmatmul.mubr.bf16.gmra.mxu0 %v114
    %v161 = vpop.f32.mrf.mxu0
    %v162 = vpop.f32.mrf.mxu0
    %v163 = vpop.f32.mrf.mxu0
    %v164 = vpop.f32.mrf.mxu0
    %165 = vmatprep.mubr.bf16.mxu0 0
    %166 = vmatmul.mubr.bf16.gmra.mxu0 %v117
    %v167 = vpop.f32.mrf.mxu0
    %v168 = vadd.f32 0.0, %v167
    %v169 = vpop.f32.mrf.mxu0
    %v170 = vpop.f32.mrf.mxu0
    %v171 = vadd.f32 0.0, %v170
    %v172 = vpop.f32.mrf.mxu0
    %173 = vdwg.mxu0
    %v175 = vunpack.c.l.b16 %v48
    %v176 = vpack.c.b16 %v175, %v68
    %v181 = vunpack.c.l.b16 %v49
    %v182 = vunpack.c.l.b16 %v50
    %v183 = vunpack.c.l.b16 %v51
    %v184 = vunpack.c.l.b16 %v52
    %v185 = vpack.c.b16 %v182, %v181
    %v186 = vpack.c.b16 %v184, %v183
    %v189 = vsel %vm109, %v70, 0
    %v191 = vsel %vm109, %v71, 0
    %v194 = vsel %vm109, %v176, 0
    %196 = vmatprep.subr.bf16.mxu0 0
    %197 = vmatpush1.bf16.msra.mxu0 0
    %198 = vmatprep.subr.bf16.mxu0 0
    %199 = vmatpush1.bf16.msra.mxu0 0
    %200 = vmatprep.subr.bf16.mxu0 0
    %201 = vmatpush1.bf16.msra.mxu0 0
    %202 = vmatprep.subr.bf16.mxu0 0
    %203 = vmatpush1.bf16.msra.mxu0 0
    %204 = vmatprep.subr.bf16.mxu0 0
    %205 = vmatpush1.bf16.msra.mxu0 0
    %206 = vmatprep.subr.bf16.mxu0 0
    %207 = vmatpush1.bf16.msra.mxu0 0
    %208 = vmatprep.subr.bf16.mxu0 0
    %209 = vmatpush1.bf16.msra.mxu0 %v186
    %210 = vmatprep.subr.bf16.mxu0 0
    %211 = vmatpush1.bf16.msra.mxu0 %v185
    %212 = vmatprep.subr.bf16.mxu0 0
    %213 = vmatpush2.bf16.msra.mxu0 0
    %214 = vmatprep.subr.bf16.mxu0 0
    %215 = vmatpush2.bf16.msra.mxu0 0
    %216 = vmatprep.subr.bf16.mxu0 0
    %217 = vmatpush2.bf16.msra.mxu0 0
    %218 = vmatprep.subr.bf16.mxu0 0
    %219 = vmatpush2.bf16.msra.mxu0 0
    %220 = vmatprep.subr.bf16.mxu0 0
    %221 = vmatpush2.bf16.msra.mxu0 0
    %222 = vmatprep.subr.bf16.mxu0 0
    %223 = vmatpush2.bf16.msra.mxu0 0
    %224 = vmatprep.subr.bf16.mxu0 0
    %225 = vmatpush2.bf16.msra.mxu0 0
    %226 = vmatprep.subr.bf16.mxu0 0
    %227 = vmatpush2.bf16.msra.mxu0 0
    %228 = vmatprep.mubr.bf16.mxu0 0
    %229 = vmatmul.mubr.bf16.gmra.mxu0 %v189
    %v230 = vpop.f32.mrf.mxu0
    %v231 = vadd.f32 %v154, %v230
    %v232 = vpop.f32.mrf.mxu0
    %v233 = vpop.f32.mrf.mxu0
    %v234 = vadd.f32 %v157, %v233
    %v235 = vpop.f32.mrf.mxu0
    %236 = vmatprep.mubr.bf16.mxu0 0
    %237 = vmatmul.mubr.bf16.gmra.mxu0 %v191
    %v238 = vpop.f32.mrf.mxu0
    %v239 = vpop.f32.mrf.mxu0
    %v240 = vpop.f32.mrf.mxu0
    %v241 = vpop.f32.mrf.mxu0
    %242 = vmatprep.mubr.bf16.mxu0 0
    %243 = vmatmul.mubr.bf16.gmra.mxu0 %v194
    %v244 = vpop.f32.mrf.mxu0
    %v245 = vadd.f32 %v168, %v244
    %v246 = vpop.f32.mrf.mxu0
    %v247 = vpop.f32.mrf.mxu0
    %v248 = vadd.f32 %v171, %v247
    %v249 = vpop.f32.mrf.mxu0
    %250 = vdwg.mxu0
    %v251 = vld [vmem:[%s0] sm:$0xe]
    %v252 = vld [vmem:[#allocation11 + $0x40] sm:$0xf]
    %v253 = vld [vmem:[#allocation11 + $0x48] sm:$0xf]
    %v254 = vld [vmem:[#allocation11 + $0x50] sm:$0xf]
    %v255 = vld [vmem:[#allocation11 + $0x58] sm:$0xf]
    %v257 = vunpack.c.l.b16 %v251
    %v258 = vpack.c.b16 %v65, %v257
    %vm259 = vcmask 1046528
    %v260 = vrot.slane %v258, 1
    %v261 = vrot.slane %v71, 1
    %v262 = vsel %vm259, %v260, %v261
    %v263 = vrot.slane %v72, 1
    %v264 = vsel %vm259, %v261, %v263
    %v269 = vunpack.c.l.b16 %v252
    %v270 = vunpack.c.l.b16 %v253
    %v271 = vunpack.c.l.b16 %v254
    %v272 = vunpack.c.l.b16 %v255
    %v273 = vpack.c.b16 %v270, %v269
    %v274 = vpack.c.b16 %v272, %v271
    %v278 = vsel %vm109, %v262, 0
    %v281 = vsel %vm109, %v264, 0
    %v284 = vsel %vm109, %v263, 0
    %286 = vmatprep.subr.bf16.mxu0 0
    %287 = vmatpush1.bf16.msra.mxu0 0
    %288 = vmatprep.subr.bf16.mxu0 0
    %289 = vmatpush1.bf16.msra.mxu0 0
    %290 = vmatprep.subr.bf16.mxu0 0
    %291 = vmatpush1.bf16.msra.mxu0 0
    %292 = vmatprep.subr.bf16.mxu0 0
    %293 = vmatpush1.bf16.msra.mxu0 0
    %294 = vmatprep.subr.bf16.mxu0 0
    %295 = vmatpush1.bf16.msra.mxu0 0
    %296 = vmatprep.subr.bf16.mxu0 0
    %297 = vmatpush1.bf16.msra.mxu0 0
    %298 = vmatprep.subr.bf16.mxu0 0
    %299 = vmatpush1.bf16.msra.mxu0 %v274
    %300 = vmatprep.subr.bf16.mxu0 0
    %301 = vmatpush1.bf16.msra.mxu0 %v273
    %302 = vmatprep.subr.bf16.mxu0 0
    %303 = vmatpush2.bf16.msra.mxu0 0
    %304 = vmatprep.subr.bf16.mxu0 0
    %305 = vmatpush2.bf16.msra.mxu0 0
    %306 = vmatprep.subr.bf16.mxu0 0
    %307 = vmatpush2.bf16.msra.mxu0 0
    %308 = vmatprep.subr.bf16.mxu0 0
    %309 = vmatpush2.bf16.msra.mxu0 0
    %310 = vmatprep.subr.bf16.mxu0 0
    %311 = vmatpush2.bf16.msra.mxu0 0
    %312 = vmatprep.subr.bf16.mxu0 0
    %313 = vmatpush2.bf16.msra.mxu0 0
    %314 = vmatprep.subr.bf16.mxu0 0
    %315 = vmatpush2.bf16.msra.mxu0 0
    %316 = vmatprep.subr.bf16.mxu0 0
    %317 = vmatpush2.bf16.msra.mxu0 0
    %318 = vmatprep.mubr.bf16.mxu0 0
    %319 = vmatmul.mubr.bf16.gmra.mxu0 %v278
    %v320 = vpop.f32.mrf.mxu0
    %v321 = vadd.f32 0.0, %v320
    %v322 = vpop.f32.mrf.mxu0
    %v323 = vpop.f32.mrf.mxu0
    %v324 = vadd.f32 0.0, %v323
    %v325 = vpop.f32.mrf.mxu0
    %326 = vmatprep.mubr.bf16.mxu0 0
    %327 = vmatmul.mubr.bf16.gmra.mxu0 %v281
    %v328 = vpop.f32.mrf.mxu0
    %v329 = vpop.f32.mrf.mxu0
    %v330 = vpop.f32.mrf.mxu0
    %v331 = vpop.f32.mrf.mxu0
    %332 = vmatprep.mubr.bf16.mxu0 0
    %333 = vmatmul.mubr.bf16.gmra.mxu0 %v284
    %v334 = vpop.f32.mrf.mxu0
    %v335 = vadd.f32 0.0, %v334
    %v336 = vpop.f32.mrf.mxu0
    %v337 = vpop.f32.mrf.mxu0
    %v338 = vadd.f32 0.0, %v337
    %v339 = vpop.f32.mrf.mxu0
    %340 = vdwg.mxu0
    %v341 = vadd.f32 %v231, %v321
    %v342 = vadd.f32 %v234, %v324
    %v343 = vadd.f32 %v245, %v335
    %v344 = vadd.f32 %v248, %v338
    %v345 = vld [vmem:[#allocation13] ss:$0 sm:$0xff]
    %v346 = vmul.f32 %v341, %v345
    %v347 = vmul.f32 %v342, %v345
    %v348 = vmul.f32 %v343, %v345
    %v349 = vmul.f32 %v344, %v345
    %v350 = vld [vmem:[#allocation13 + $0x12] ss:$0 sm:$0xff]
    %v351 = vadd.f32 %v346, %v350
    %v352 = vadd.f32 %v347, %v350
    %v353 = vadd.f32 %v348, %v350
    %v354 = vadd.f32 %v349, %v350
    %v355 = vmax.f32 %v351, 0.0
    %v356 = vmax.f32 %v352, 0.0
    %v357 = vmax.f32 %v353, 0.0
    %v358 = vmax.f32 %v354, 0.0
    %v359 = vpack.c.bf16 %v356, %v355
    %v360 = vpack.c.bf16 %v358, %v357
    %v362 = vunpack.c.l.b16 %v359
    %v363 = vunpack.c.h.b16 %v359
    %v364 = vpack.c.b16 %v362, %v362
    %v365 = vpack.c.b16 %v363, %v363
    %vm368 = vcmask 912384
    %369 = vst.msk [vmem:[#allocation2] sm:$0xf] %vm368, %v364
    %vm370 = vcmask 911360
    %371 = vst.msk [vmem:[#allocation2 + $0x4] sm:$0x7] %vm370, %v365
    %v373 = vunpack.c.l.b16 %v360
    %v374 = vunpack.c.h.b16 %v360
    %v375 = vpack.c.b16 %v373, %v373
    %v376 = vpack.c.b16 %v374, %v374
    %379 = vst.msk [vmem:[#allocation2 + $0x10] sm:$0xf] %vm368, %v375
    %380 = vst.msk [vmem:[#allocation2 + $0x14] sm:$0x7] %vm370, %v376
    %v381 = vld [vmem:[#allocation2] sm:$0xf]
    %v382 = vld [vmem:[#allocation2 + $0x4] sm:$0xf]
    %v383 = vld [vmem:[#allocation2 + $0x8] sm:$0xf]
    %v384 = vld [vmem:[#allocation2 + $0xc] sm:$0xf]
    %v385 = vld [vmem:[#allocation2 + $0x10] sm:$0xf]
    %v386 = vld [vmem:[#allocation2 + $0x14] sm:$0x3]
    %v387 = vld [vmem:[#allocation11 + $0x60] sm:$0xf]
    %v388 = vld [vmem:[#allocation11 + $0x68] sm:$0xf]
    %v389 = vld [vmem:[#allocation11 + $0x70] sm:$0xf]
    %v390 = vld [vmem:[#allocation11 + $0x78] sm:$0xf]
    %v391 = vld [vmem:[#allocation11 + $0x80] sm:$0xf]
    %v392 = vld [vmem:[#allocation11 + $0x88] sm:$0xf]
    %v393 = vld [vmem:[#allocation11 + $0x90] sm:$0xf]
    %v394 = vld [vmem:[#allocation11 + $0x98] sm:$0xf]
    %v395 = vld [vmem:[#allocation11 + $0xa0] sm:$0xf]
    %v396 = vld [vmem:[#allocation11 + $0xa8] sm:$0xf]
    %v397 = vld [vmem:[#allocation11 + $0xb0] sm:$0xf]
    %v398 = vld [vmem:[#allocation11 + $0xb8] sm:$0xf]
    %v399 = vld [vmem:[#allocation11 + $0xc0] sm:$0xf]
    %v400 = vld [vmem:[#allocation11 + $0xc8] sm:$0xf]
    %v401 = vld [vmem:[#allocation2 + $0x14] sm:$0x7]
    %v402 = vld [vmem:[#allocation11 + $0xd0] sm:$0xf]
    %v403 = vld [vmem:[#allocation11 + $0xd8] sm:$0xf]
    %v404 = vld [vmem:[#allocation11 + $0xe0] sm:$0xf]
    %v405 = vld [vmem:[#allocation11 + $0xe8] sm:$0xf]
    %v406 = vld [vmem:[#allocation11 + $0xf0] sm:$0xf]
    %v407 = vld [vmem:[#allocation11 + $0xf8] sm:$0xf]
    %v408 = vld [vmem:[#allocation11 + $0x100] sm:$0xf]
    %v409 = vld [vmem:[#allocation11 + $0x108] sm:$0xf]
    %v410 = vld [vmem:[#allocation11 + $0x110] sm:$0xf]
    %v411 = vld [vmem:[#allocation11 + $0x118] sm:$0xf]
    %v412 = vld [vmem:[#allocation11 + $0x120] sm:$0xf]
    %v413 = vld [vmem:[#allocation11 + $0x128] sm:$0xf]
    %v414 = vld [vmem:[#allocation11 + $0x130] sm:$0xf]
    %v415 = vld [vmem:[#allocation11 + $0x138] sm:$0xf]
    %v422 = vunpack.c.l.b16 %v381
    %v423 = vunpack.c.l.b16 %v382
    %v424 = vunpack.c.l.b16 %v383
    %v425 = vunpack.c.l.b16 %v384
    %v426 = vunpack.c.l.b16 %v385
    %v427 = vunpack.c.l.b16 %v401
    %v428 = vpack.c.b16 %v423, %v422
    %v429 = vpack.c.b16 %v425, %v424
    %v430 = vpack.c.b16 %v427, %v426
    %v432 = vshrl.u32 %v428, 16
    %v434 = vshll.u32 %v428, 16
    %v436 = vrot.slane %v434, 1
    %v437 = vor.u32 %v432, %v436
    %v439 = vshll.u32 %v429, 16
    %v441 = vrot.slane %v439, 1
    %v442 = vsel %vm73, %v437, %v441
    %v443 = vshrl.u32 %v429, 16
    %v445 = vor.u32 %v443, %v441
    %v447 = vshll.u32 %v430, 16
    %v449 = vrot.slane %v447, 1
    %v450 = vsel %vm73, %v445, %v449
    %v451 = vshrl.u32 %v430, 16
    %v453 = vor.u32 %v451, %v449
    %v468 = vunpack.c.l.b16 %v402
    %v469 = vunpack.c.l.b16 %v403
    %v470 = vunpack.c.l.b16 %v404
    %v471 = vunpack.c.l.b16 %v405
    %v472 = vunpack.c.l.b16 %v406
    %v473 = vunpack.c.l.b16 %v407
    %v474 = vunpack.c.l.b16 %v408
    %v475 = vunpack.c.l.b16 %v409
    %v476 = vunpack.c.l.b16 %v410
    %v477 = vunpack.c.l.b16 %v411
    %v478 = vunpack.c.l.b16 %v412
    %v479 = vunpack.c.l.b16 %v413
    %v480 = vunpack.c.l.b16 %v414
    %v481 = vunpack.c.l.b16 %v415
    %v482 = vpack.c.b16 %v469, %v468
    %v483 = vpack.c.b16 %v471, %v470
    %v484 = vpack.c.b16 %v473, %v472
    %v485 = vpack.c.b16 %v475, %v474
    %v486 = vpack.c.b16 %v477, %v476
    %v487 = vpack.c.b16 %v479, %v478
    %v488 = vpack.c.b16 %v481, %v480
    %vm496 = vcmask 916480
    %v498 = vsel %vm496, %v442, 0
    %v501 = vsel %vm496, %v450, 0
    %v504 = vsel %vm496, %v453, 0
    %506 = vmatprep.subr.bf16.mxu0 0
    %507 = vmatpush1.bf16.msra.mxu0 0
    %508 = vmatprep.subr.bf16.mxu0 0
    %509 = vmatpush1.bf16.msra.mxu0 %v488
    %510 = vmatprep.subr.bf16.mxu0 0
    %511 = vmatpush1.bf16.msra.mxu0 %v487
    %512 = vmatprep.subr.bf16.mxu0 0
    %513 = vmatpush1.bf16.msra.mxu0 %v486
    %514 = vmatprep.subr.bf16.mxu0 0
    %515 = vmatpush1.bf16.msra.mxu0 %v485
    %516 = vmatprep.subr.bf16.mxu0 0
    %517 = vmatpush1.bf16.msra.mxu0 %v484
    %518 = vmatprep.subr.bf16.mxu0 0
    %519 = vmatpush1.bf16.msra.mxu0 %v483
    %520 = vmatprep.subr.bf16.mxu0 0
    %521 = vmatpush1.bf16.msra.mxu0 %v482
    %522 = vmatprep.subr.bf16.mxu0 0
    %523 = vmatpush2.bf16.msra.mxu0 0
    %524 = vmatprep.subr.bf16.mxu0 0
    %525 = vmatpush2.bf16.msra.mxu0 0
    %526 = vmatprep.subr.bf16.mxu0 0
    %527 = vmatpush2.bf16.msra.mxu0 0
    %528 = vmatprep.subr.bf16.mxu0 0
    %529 = vmatpush2.bf16.msra.mxu0 0
    %530 = vmatprep.subr.bf16.mxu0 0
    %531 = vmatpush2.bf16.msra.mxu0 0
    %532 = vmatprep.subr.bf16.mxu0 0
    %533 = vmatpush2.bf16.msra.mxu0 0
    %534 = vmatprep.subr.bf16.mxu0 0
    %535 = vmatpush2.bf16.msra.mxu0 0
    %536 = vmatprep.subr.bf16.mxu0 0
    %537 = vmatpush2.bf16.msra.mxu0 0
    %538 = vmatprep.mubr.bf16.mxu0 0
    %539 = vmatmul.mubr.bf16.gmra.mxu0 %v498
    %v540 = vpop.f32.mrf.mxu0
    %v541 = vadd.f32 0.0, %v540
    %v542 = vpop.f32.mrf.mxu0
    %v543 = vpop.f32.mrf.mxu0
    %v544 = vadd.f32 0.0, %v543
    %v545 = vpop.f32.mrf.mxu0
    %546 = vmatprep.mubr.bf16.mxu0 0
    %547 = vmatmul.mubr.bf16.gmra.mxu0 %v501
    %v548 = vpop.f32.mrf.mxu0
    %v549 = vpop.f32.mrf.mxu0
    %v550 = vpop.f32.mrf.mxu0
    %v551 = vpop.f32.mrf.mxu0
    %552 = vmatprep.mubr.bf16.mxu0 0
    %553 = vmatmul.mubr.bf16.gmra.mxu0 %v504
    %v554 = vpop.f32.mrf.mxu0
    %v555 = vadd.f32 0.0, %v554
    %v556 = vpop.f32.mrf.mxu0
    %v557 = vpop.f32.mrf.mxu0
    %v558 = vadd.f32 0.0, %v557
    %v559 = vpop.f32.mrf.mxu0
    %560 = vdwg.mxu0
    %v562 = vunpack.c.l.b16 %v386
    %v563 = vpack.c.b16 %v562, %v426
    %v578 = vunpack.c.l.b16 %v387
    %v579 = vunpack.c.l.b16 %v388
    %v580 = vunpack.c.l.b16 %v389
    %v581 = vunpack.c.l.b16 %v390
    %v582 = vunpack.c.l.b16 %v391
    %v583 = vunpack.c.l.b16 %v392
    %v584 = vunpack.c.l.b16 %v393
    %v585 = vunpack.c.l.b16 %v394
    %v586 = vunpack.c.l.b16 %v395
    %v587 = vunpack.c.l.b16 %v396
    %v588 = vunpack.c.l.b16 %v397
    %v589 = vunpack.c.l.b16 %v398
    %v590 = vunpack.c.l.b16 %v399
    %v591 = vunpack.c.l.b16 %v400
    %v592 = vpack.c.b16 %v579, %v578
    %v593 = vpack.c.b16 %v581, %v580
    %v594 = vpack.c.b16 %v583, %v582
    %v595 = vpack.c.b16 %v585, %v584
    %v596 = vpack.c.b16 %v587, %v586
    %v597 = vpack.c.b16 %v589, %v588
    %v598 = vpack.c.b16 %v591, %v590
    %v606 = vsel %vm496, %v428, 0
    %v608 = vsel %vm496, %v429, 0
    %v611 = vsel %vm496, %v563, 0
    %613 = vmatprep.subr.bf16.mxu0 0
    %614 = vmatpush1.bf16.msra.mxu0 0
    %615 = vmatprep.subr.bf16.mxu0 0
    %616 = vmatpush1.bf16.msra.mxu0 %v598
    %617 = vmatprep.subr.bf16.mxu0 0
    %618 = vmatpush1.bf16.msra.mxu0 %v597
    %619 = vmatprep.subr.bf16.mxu0 0
    %620 = vmatpush1.bf16.msra.mxu0 %v596
    %621 = vmatprep.subr.bf16.mxu0 0
    %622 = vmatpush1.bf16.msra.mxu0 %v595
    %623 = vmatprep.subr.bf16.mxu0 0
    %624 = vmatpush1.bf16.msra.mxu0 %v594
    %625 = vmatprep.subr.bf16.mxu0 0
    %626 = vmatpush1.bf16.msra.mxu0 %v593
    %627 = vmatprep.subr.bf16.mxu0 0
    %628 = vmatpush1.bf16.msra.mxu0 %v592
    %629 = vmatprep.subr.bf16.mxu0 0
    %630 = vmatpush2.bf16.msra.mxu0 0
    %631 = vmatprep.subr.bf16.mxu0 0
    %632 = vmatpush2.bf16.msra.mxu0 0
    %633 = vmatprep.subr.bf16.mxu0 0
    %634 = vmatpush2.bf16.msra.mxu0 0
    %635 = vmatprep.subr.bf16.mxu0 0
    %636 = vmatpush2.bf16.msra.mxu0 0
    %637 = vmatprep.subr.bf16.mxu0 0
    %638 = vmatpush2.bf16.msra.mxu0 0
    %639 = vmatprep.subr.bf16.mxu0 0
    %640 = vmatpush2.bf16.msra.mxu0 0
    %641 = vmatprep.subr.bf16.mxu0 0
    %642 = vmatpush2.bf16.msra.mxu0 0
    %643 = vmatprep.subr.bf16.mxu0 0
    %644 = vmatpush2.bf16.msra.mxu0 0
    %645 = vmatprep.mubr.bf16.mxu0 0
    %646 = vmatmul.mubr.bf16.gmra.mxu0 %v606
    %v647 = vpop.f32.mrf.mxu0
    %v648 = vadd.f32 %v541, %v647
    %v649 = vpop.f32.mrf.mxu0
    %v650 = vpop.f32.mrf.mxu0
    %v651 = vadd.f32 %v544, %v650
    %v652 = vpop.f32.mrf.mxu0
    %653 = vmatprep.mubr.bf16.mxu0 0
    %654 = vmatmul.mubr.bf16.gmra.mxu0 %v608
    %v655 = vpop.f32.mrf.mxu0
    %v656 = vpop.f32.mrf.mxu0
    %v657 = vpop.f32.mrf.mxu0
    %v658 = vpop.f32.mrf.mxu0
    %659 = vmatprep.mubr.bf16.mxu0 0
    %660 = vmatmul.mubr.bf16.gmra.mxu0 %v611
    %v661 = vpop.f32.mrf.mxu0
    %v662 = vadd.f32 %v555, %v661
    %v663 = vpop.f32.mrf.mxu0
    %v664 = vpop.f32.mrf.mxu0
    %v665 = vadd.f32 %v558, %v664
    %v666 = vpop.f32.mrf.mxu0
    %667 = vdwg.mxu0
    %v668 = vld [vmem:[#allocation2] sm:$0xe]
    %v669 = vld [vmem:[#allocation11 + $0x140] sm:$0xf]
    %v670 = vld [vmem:[#allocation11 + $0x148] sm:$0xf]
    %v671 = vld [vmem:[#allocation11 + $0x150] sm:$0xf]
    %v672 = vld [vmem:[#allocation11 + $0x158] sm:$0xf]
    %v673 = vld [vmem:[#allocation11 + $0x160] sm:$0xf]
    %v674 = vld [vmem:[#allocation11 + $0x168] sm:$0xf]
    %v675 = vld [vmem:[#allocation11 + $0x170] sm:$0xf]
    %v676 = vld [vmem:[#allocation11 + $0x178] sm:$0xf]
    %v677 = vld [vmem:[#allocation11 + $0x180] sm:$0xf]
    %v678 = vld [vmem:[#allocation11 + $0x188] sm:$0xf]
    %v679 = vld [vmem:[#allocation11 + $0x190] sm:$0xf]
    %v680 = vld [vmem:[#allocation11 + $0x198] sm:$0xf]
    %v681 = vld [vmem:[#allocation11 + $0x1a0] sm:$0xf]
    %v682 = vld [vmem:[#allocation11 + $0x1a8] sm:$0xf]
    %v684 = vunpack.c.l.b16 %v668
    %v685 = vpack.c.b16 %v423, %v684
    %v686 = vrot.slane %v685, 1
    %v687 = vrot.slane %v429, 1
    %v688 = vsel %vm259, %v686, %v687
    %v689 = vrot.slane %v430, 1
    %v690 = vsel %vm259, %v687, %v689
    %v705 = vunpack.c.l.b16 %v669
    %v706 = vunpack.c.l.b16 %v670
    %v707 = vunpack.c.l.b16 %v671
    %v708 = vunpack.c.l.b16 %v672
    %v709 = vunpack.c.l.b16 %v673
    %v710 = vunpack.c.l.b16 %v674
    %v711 = vunpack.c.l.b16 %v675
    %v712 = vunpack.c.l.b16 %v676
    %v713 = vunpack.c.l.b16 %v677
    %v714 = vunpack.c.l.b16 %v678
    %v715 = vunpack.c.l.b16 %v679
    %v716 = vunpack.c.l.b16 %v680
    %v717 = vunpack.c.l.b16 %v681
    %v718 = vunpack.c.l.b16 %v682
    %v719 = vpack.c.b16 %v706, %v705
    %v720 = vpack.c.b16 %v708, %v707
    %v721 = vpack.c.b16 %v710, %v709
    %v722 = vpack.c.b16 %v712, %v711
    %v723 = vpack.c.b16 %v714, %v713
    %v724 = vpack.c.b16 %v716, %v715
    %v725 = vpack.c.b16 %v718, %v717
    %v734 = vsel %vm496, %v688, 0
    %v737 = vsel %vm496, %v690, 0
    %v740 = vsel %vm496, %v689, 0
    %742 = vmatprep.subr.bf16.mxu0 0
    %743 = vmatpush1.bf16.msra.mxu0 0
    %744 = vmatprep.subr.bf16.mxu0 0
    %745 = vmatpush1.bf16.msra.mxu0 %v725
    %746 = vmatprep.subr.bf16.mxu0 0
    %747 = vmatpush1.bf16.msra.mxu0 %v724
    %748 = vmatprep.subr.bf16.mxu0 0
    %749 = vmatpush1.bf16.msra.mxu0 %v723
    %750 = vmatprep.subr.bf16.mxu0 0
    %751 = vmatpush1.bf16.msra.mxu0 %v722
    %752 = vmatprep.subr.bf16.mxu0 0
    %753 = vmatpush1.bf16.msra.mxu0 %v721
    %754 = vmatprep.subr.bf16.mxu0 0
    %755 = vmatpush1.bf16.msra.mxu0 %v720
    %756 = vmatprep.subr.bf16.mxu0 0
    %757 = vmatpush1.bf16.msra.mxu0 %v719
    %758 = vmatprep.subr.bf16.mxu0 0
    %759 = vmatpush2.bf16.msra.mxu0 0
    %760 = vmatprep.subr.bf16.mxu0 0
    %761 = vmatpush2.bf16.msra.mxu0 0
    %762 = vmatprep.subr.bf16.mxu0 0
    %763 = vmatpush2.bf16.msra.mxu0 0
    %764 = vmatprep.subr.bf16.mxu0 0
    %765 = vmatpush2.bf16.msra.mxu0 0
    %766 = vmatprep.subr.bf16.mxu0 0
    %767 = vmatpush2.bf16.msra.mxu0 0
    %768 = vmatprep.subr.bf16.mxu0 0
    %769 = vmatpush2.bf16.msra.mxu0 0
    %770 = vmatprep.subr.bf16.mxu0 0
    %771 = vmatpush2.bf16.msra.mxu0 0
    %772 = vmatprep.subr.bf16.mxu0 0
    %773 = vmatpush2.bf16.msra.mxu0 0
    %774 = vmatprep.mubr.bf16.mxu0 0
    %775 = vmatmul.mubr.bf16.gmra.mxu0 %v734
    %v776 = vpop.f32.mrf.mxu0
    %v777 = vadd.f32 0.0, %v776
    %v778 = vpop.f32.mrf.mxu0
    %v779 = vpop.f32.mrf.mxu0
    %v780 = vadd.f32 0.0, %v779
    %v781 = vpop.f32.mrf.mxu0
    %782 = vmatprep.mubr.bf16.mxu0 0
    %783 = vmatmul.mubr.bf16.gmra.mxu0 %v737
    %v784 = vpop.f32.mrf.mxu0
    %v785 = vpop.f32.mrf.mxu0
    %v786 = vpop.f32.mrf.mxu0
    %v787 = vpop.f32.mrf.mxu0
    %788 = vmatprep.mubr.bf16.mxu0 0
    %789 = vmatmul.mubr.bf16.gmra.mxu0 %v740
    %v790 = vpop.f32.mrf.mxu0
    %v791 = vadd.f32 0.0, %v790
    %v792 = vpop.f32.mrf.mxu0
    %v793 = vpop.f32.mrf.mxu0
    %v794 = vadd.f32 0.0, %v793
    %v795 = vpop.f32.mrf.mxu0
    %796 = vdwg.mxu0
    %v797 = vadd.f32 %v648, %v777
    %v798 = vadd.f32 %v651, %v780
    %v799 = vadd.f32 %v662, %v791
    %v800 = vadd.f32 %v665, %v794
    %v801 = vld [vmem:[#allocation13 + $0x1] ss:$0 sm:$0xff]
    %v802 = vmul.f32 %v797, %v801
    %v803 = vmul.f32 %v798, %v801
    %v804 = vmul.f32 %v799, %v801
    %v805 = vmul.f32 %v800, %v801
    %v806 = vld [vmem:[#allocation13 + $0x13] ss:$0 sm:$0xff]
    %v807 = vadd.f32 %v802, %v806
    %v808 = vadd.f32 %v803, %v806
    %v809 = vadd.f32 %v804, %v806
    %v810 = vadd.f32 %v805, %v806
    %v811 = vmax.f32 %v807, 0.0
    %v812 = vmax.f32 %v808, 0.0
    %v813 = vmax.f32 %v809, 0.0
    %v814 = vmax.f32 %v810, 0.0
    %v815 = vpack.c.bf16 %v812, %v811
    %v816 = vpack.c.bf16 %v814, %v813
    %817 = vst [vmem:[#allocation3] sm:$0x1] 0
    %818 = vst [vmem:[#allocation3 + $0x4] sm:$0x8] 0
    %v820 = vunpack.c.l.b16 %v815
    %v821 = vunpack.c.h.b16 %v815
    %v822 = vpack.c.b16 %v820, %v820
    %v823 = vpack.c.b16 %v821, %v821
    %vm824 = vcmask 1040384
    %vm825 = vcmask 1044484
    %vm826 = vmor %vm824, %vm825
    %v827 = vrot.slane %v822, 7
    %v828 = vrot.slane %v827, 4
    %v829 = vrot.slane %v823, 7
    %v830 = vsel %vm826, %v828, %v829
    %833 = vst [vmem:[#allocation3] sm:$0xe] %v827
    %834 = vst [vmem:[#allocation3 + $0x4] sm:$0x7] %v830
    %835 = vst [vmem:[#allocation3 + $0x10] sm:$0x1] 0
    %836 = vst [vmem:[#allocation3 + $0x14] sm:$0x8] 0
    %v838 = vunpack.c.l.b16 %v816
    %v839 = vunpack.c.h.b16 %v816
    %v840 = vpack.c.b16 %v838, %v838
    %v841 = vpack.c.b16 %v839, %v839
    %v842 = vrot.slane %v840, 7
    %v843 = vrot.slane %v842, 4
    %v844 = vrot.slane %v841, 7
    %v845 = vsel %vm826, %v843, %v844
    %848 = vst [vmem:[#allocation3 + $0x10] sm:$0xe] %v842
    %849 = vst [vmem:[#allocation3 + $0x14] sm:$0x7] %v845
    %v850 = vld [vmem:[#allocation3] sm:$0xf]
    %v851 = vld [vmem:[#allocation3 + $0x4] sm:$0xf]
    %v852 = vld [vmem:[#allocation3 + $0x8] sm:$0xf]
    %v853 = vld [vmem:[#allocation3 + $0xc] sm:$0xf]
    %v854 = vld [vmem:[#allocation3 + $0x10] sm:$0xf]
    %v855 = vld [vmem:[#allocation3 + $0x14] sm:$0x7]
    %v856 = vld [vmem:[#allocation11 + $0x1b0] sm:$0xff]
    %v857 = vld [vmem:[#allocation11 + $0x1b8] sm:$0xff]
    %v858 = vld [vmem:[#allocation11 + $0x1c0] sm:$0xff]
    %v859 = vld [vmem:[#allocation11 + $0x1c8] sm:$0xff]
    %v860 = vld [vmem:[#allocation11 + $0x1d0] sm:$0xff]
    %v861 = vld [vmem:[#allocation11 + $0x1d8] sm:$0xff]
    %v862 = vld [vmem:[#allocation11 + $0x1e0] sm:$0xff]
    %v863 = vld [vmem:[#allocation11 + $0x1e8] sm:$0xff]
    %v864 = vld [vmem:[#allocation11 + $0x1f0] sm:$0xff]
    %v865 = vld [vmem:[#allocation11 + $0x1f8] sm:$0xff]
    %v866 = vld [vmem:[#allocation11 + $0x200] sm:$0xff]
    %v867 = vld [vmem:[#allocation11 + $0x208] sm:$0xff]
    %v868 = vld [vmem:[#allocation11 + $0x210] sm:$0xff]
    %v869 = vld [vmem:[#allocation11 + $0x218] sm:$0xff]
    %v870 = vld [vmem:[#allocation11 + $0x220] sm:$0xff]
    %v871 = vld [vmem:[#allocation11 + $0x228] sm:$0xff]
    %v872 = vld [vmem:[#allocation3] sm:$0xe]
    %v873 = vld [vmem:[#allocation11 + $0x230] sm:$0xff]
    %v874 = vld [vmem:[#allocation11 + $0x238] sm:$0xff]
    %v875 = vld [vmem:[#allocation11 + $0x240] sm:$0xff]
    %v876 = vld [vmem:[#allocation11 + $0x248] sm:$0xff]
    %v877 = vld [vmem:[#allocation11 + $0x250] sm:$0xff]
    %v878 = vld [vmem:[#allocation11 + $0x258] sm:$0xff]
    %v879 = vld [vmem:[#allocation11 + $0x260] sm:$0xff]
    %v880 = vld [vmem:[#allocation11 + $0x268] sm:$0xff]
    %v881 = vld [vmem:[#allocation11 + $0x270] sm:$0xff]
    %v882 = vld [vmem:[#allocation11 + $0x278] sm:$0xff]
    %v883 = vld [vmem:[#allocation11 + $0x280] sm:$0xff]
    %v884 = vld [vmem:[#allocation11 + $0x288] sm:$0xff]
    %v885 = vld [vmem:[#allocation11 + $0x290] sm:$0xff]
    %v886 = vld [vmem:[#allocation11 + $0x298] sm:$0xff]
    %v887 = vld [vmem:[#allocation11 + $0x2a0] sm:$0xff]
    %v888 = vld [vmem:[#allocation11 + $0x2a8] sm:$0xff]
    %v895 = vunpack.c.l.b16 %v872
    %v896 = vunpack.c.l.b16 %v851
    %v897 = vunpack.c.l.b16 %v852
    %v898 = vunpack.c.l.b16 %v853
    %v899 = vunpack.c.l.b16 %v854
    %v900 = vunpack.c.l.b16 %v855
    %v901 = vpack.c.b16 %v896, %v895
    %v902 = vpack.c.b16 %v898, %v897
    %v903 = vpack.c.b16 %v900, %v899
    %v904 = vrot.slane %v901, 1
    %v905 = vrot.slane %v902, 1
    %v906 = vsel %vm259, %v904, %v905
    %v907 = vrot.slane %v903, 1
    %v908 = vsel %vm259, %v905, %v907
    %v928 = vunpack.c.l.b16 %v873
    %v929 = vunpack.c.h.b16 %v873
    %v930 = vunpack.c.l.b16 %v874
    %v931 = vunpack.c.h.b16 %v874
    %v932 = vunpack.c.l.b16 %v875
    %v933 = vunpack.c.h.b16 %v875
    %v934 = vunpack.c.l.b16 %v876
    %v935 = vunpack.c.h.b16 %v876
    %v936 = vunpack.c.l.b16 %v877
    %v937 = vunpack.c.h.b16 %v877
    %v938 = vunpack.c.l.b16 %v878
    %v939 = vunpack.c.h.b16 %v878
    %v940 = vunpack.c.l.b16 %v879
    %v941 = vunpack.c.h.b16 %v879
    %v942 = vunpack.c.l.b16 %v880
    %v943 = vunpack.c.h.b16 %v880
    %v944 = vunpack.c.l.b16 %v881
    %v945 = vunpack.c.h.b16 %v881
    %v946 = vunpack.c.l.b16 %v882
    %v947 = vunpack.c.h.b16 %v882
    %v948 = vunpack.c.l.b16 %v883
    %v949 = vunpack.c.h.b16 %v883
    %v950 = vunpack.c.l.b16 %v884
    %v951 = vunpack.c.h.b16 %v884
    %v952 = vunpack.c.l.b16 %v885
    %v953 = vunpack.c.h.b16 %v885
    %v954 = vunpack.c.l.b16 %v886
    %v955 = vunpack.c.h.b16 %v886
    %v956 = vunpack.c.l.b16 %v887
    %v957 = vunpack.c.h.b16 %v887
    %v958 = vunpack.c.l.b16 %v888
    %v959 = vunpack.c.h.b16 %v888
    %v960 = vpack.c.b16 %v930, %v928
    %v961 = vpack.c.b16 %v931, %v929
    %v962 = vpack.c.b16 %v934, %v932
    %v963 = vpack.c.b16 %v935, %v933
    %v964 = vpack.c.b16 %v938, %v936
    %v965 = vpack.c.b16 %v939, %v937
    %v966 = vpack.c.b16 %v942, %v940
    %v967 = vpack.c.b16 %v943, %v941
    %v968 = vpack.c.b16 %v946, %v944
    %v969 = vpack.c.b16 %v947, %v945
    %v970 = vpack.c.b16 %v950, %v948
    %v971 = vpack.c.b16 %v951, %v949
    %v972 = vpack.c.b16 %v954, %v952
    %v973 = vpack.c.b16 %v955, %v953
    %v974 = vpack.c.b16 %v958, %v956
    %v975 = vpack.c.b16 %v959, %v957
    %992 = vmatprep.subr.bf16.mxu0 %v975
    %993 = vmatpush1.bf16.msra.mxu0 %v974
    %994 = vmatprep.subr.bf16.mxu0 %v973
    %995 = vmatpush1.bf16.msra.mxu0 %v972
    %996 = vmatprep.subr.bf16.mxu0 %v971
    %997 = vmatpush1.bf16.msra.mxu0 %v970
    %998 = vmatprep.subr.bf16.mxu0 %v969
    %999 = vmatpush1.bf16.msra.mxu0 %v968
    %1000 = vmatprep.subr.bf16.mxu0 %v967
    %1001 = vmatpush1.bf16.msra.mxu0 %v966
    %1002 = vmatprep.subr.bf16.mxu0 %v965
    %1003 = vmatpush1.bf16.msra.mxu0 %v964
    %1004 = vmatprep.subr.bf16.mxu0 %v963
    %1005 = vmatpush1.bf16.msra.mxu0 %v962
    %1006 = vmatprep.subr.bf16.mxu0 %v961
    %1007 = vmatpush1.bf16.msra.mxu0 %v960
    %1008 = vmatprep.subr.bf16.mxu0 0
    %1009 = vmatpush2.bf16.msra.mxu0 0
    %1010 = vmatprep.subr.bf16.mxu0 0
    %1011 = vmatpush2.bf16.msra.mxu0 0
    %1012 = vmatprep.subr.bf16.mxu0 0
    %1013 = vmatpush2.bf16.msra.mxu0 0
    %1014 = vmatprep.subr.bf16.mxu0 0
    %1015 = vmatpush2.bf16.msra.mxu0 0
    %1016 = vmatprep.subr.bf16.mxu0 0
    %1017 = vmatpush2.bf16.msra.mxu0 0
    %1018 = vmatprep.subr.bf16.mxu0 0
    %1019 = vmatpush2.bf16.msra.mxu0 0
    %1020 = vmatprep.subr.bf16.mxu0 0
    %1021 = vmatpush2.bf16.msra.mxu0 0
    %1022 = vmatprep.subr.bf16.mxu0 0
    %1023 = vmatpush2.bf16.msra.mxu0 0
    %1024 = vmatprep.mubr.bf16.mxu0 0
    %1025 = vmatmul.mubr.bf16.gmra.mxu0 %v906
    %v1026 = vpop.f32.mrf.mxu0
    %v1027 = vadd.f32 0.0, %v1026
    %v1028 = vpop.f32.mrf.mxu0
    %v1029 = vadd.f32 0.0, %v1028
    %v1030 = vpop.f32.mrf.mxu0
    %v1031 = vadd.f32 0.0, %v1030
    %v1032 = vpop.f32.mrf.mxu0
    %v1033 = vadd.f32 0.0, %v1032
    %1034 = vmatprep.mubr.bf16.mxu0 0
    %1035 = vmatmul.mubr.bf16.gmra.mxu0 %v908
    %v1036 = vpop.f32.mrf.mxu0
    %v1037 = vpop.f32.mrf.mxu0
    %v1038 = vpop.f32.mrf.mxu0
    %v1039 = vpop.f32.mrf.mxu0
    %1040 = vmatprep.mubr.bf16.mxu0 0
    %1041 = vmatmul.mubr.bf16.gmra.mxu0 %v907
    %v1042 = vpop.f32.mrf.mxu0
    %v1043 = vadd.f32 0.0, %v1042
    %v1044 = vpop.f32.mrf.mxu0
    %v1045 = vadd.f32 0.0, %v1044
    %v1046 = vpop.f32.mrf.mxu0
    %v1047 = vadd.f32 0.0, %v1046
    %v1048 = vpop.f32.mrf.mxu0
    %v1049 = vadd.f32 0.0, %v1048
    %1050 = vdwg.mxu0
    %v1052 = vunpack.c.l.b16 %v850
    %v1053 = vpack.c.b16 %v896, %v1052
    %v1055 = vshrl.u32 %v1053, 16
    %v1057 = vshll.u32 %v1053, 16
    %v1059 = vrot.slane %v1057, 1
    %v1060 = vor.u32 %v1055, %v1059
    %v1062 = vshll.u32 %v902, 16
    %v1064 = vrot.slane %v1062, 1
    %v1065 = vsel %vm73, %v1060, %v1064
    %v1066 = vshrl.u32 %v902, 16
    %v1068 = vor.u32 %v1066, %v1064
    %v1070 = vshll.u32 %v903, 16
    %v1072 = vrot.slane %v1070, 1
    %v1073 = vsel %vm73, %v1068, %v1072
    %v1074 = vshrl.u32 %v903, 16
    %v1076 = vor.u32 %v1074, %v1072
    %v1096 = vunpack.c.l.b16 %v856
    %v1097 = vunpack.c.h.b16 %v856
    %v1098 = vunpack.c.l.b16 %v857
    %v1099 = vunpack.c.h.b16 %v857
    %v1100 = vunpack.c.l.b16 %v858
    %v1101 = vunpack.c.h.b16 %v858
    %v1102 = vunpack.c.l.b16 %v859
    %v1103 = vunpack.c.h.b16 %v859
    %v1104 = vunpack.c.l.b16 %v860
    %v1105 = vunpack.c.h.b16 %v860
    %v1106 = vunpack.c.l.b16 %v861
    %v1107 = vunpack.c.h.b16 %v861
    %v1108 = vunpack.c.l.b16 %v862
    %v1109 = vunpack.c.h.b16 %v862
    %v1110 = vunpack.c.l.b16 %v863
    %v1111 = vunpack.c.h.b16 %v863
    %v1112 = vunpack.c.l.b16 %v864
    %v1113 = vunpack.c.h.b16 %v864
    %v1114 = vunpack.c.l.b16 %v865
    %v1115 = vunpack.c.h.b16 %v865
    %v1116 = vunpack.c.l.b16 %v866
    %v1117 = vunpack.c.h.b16 %v866
    %v1118 = vunpack.c.l.b16 %v867
    %v1119 = vunpack.c.h.b16 %v867
    %v1120 = vunpack.c.l.b16 %v868
    %v1121 = vunpack.c.h.b16 %v868
    %v1122 = vunpack.c.l.b16 %v869
    %v1123 = vunpack.c.h.b16 %v869
    %v1124 = vunpack.c.l.b16 %v870
    %v1125 = vunpack.c.h.b16 %v870
    %v1126 = vunpack.c.l.b16 %v871
    %v1127 = vunpack.c.h.b16 %v871
    %v1128 = vpack.c.b16 %v1098, %v1096
    %v1129 = vpack.c.b16 %v1099, %v1097
    %v1130 = vpack.c.b16 %v1102, %v1100
    %v1131 = vpack.c.b16 %v1103, %v1101
    %v1132 = vpack.c.b16 %v1106, %v1104
    %v1133 = vpack.c.b16 %v1107, %v1105
    %v1134 = vpack.c.b16 %v1110, %v1108
    %v1135 = vpack.c.b16 %v1111, %v1109
    %v1136 = vpack.c.b16 %v1114, %v1112
    %v1137 = vpack.c.b16 %v1115, %v1113
    %v1138 = vpack.c.b16 %v1118, %v1116
    %v1139 = vpack.c.b16 %v1119, %v1117
    %v1140 = vpack.c.b16 %v1122, %v1120
    %v1141 = vpack.c.b16 %v1123, %v1121
    %v1142 = vpack.c.b16 %v1126, %v1124
    %v1143 = vpack.c.b16 %v1127, %v1125
    %1160 = vmatprep.subr.bf16.mxu0 %v1143
    %1161 = vmatpush1.bf16.msra.mxu0 %v1142
    %1162 = vmatprep.subr.bf16.mxu0 %v1141
    %1163 = vmatpush1.bf16.msra.mxu0 %v1140
    %1164 = vmatprep.subr.bf16.mxu0 %v1139
    %1165 = vmatpush1.bf16.msra.mxu0 %v1138
    %1166 = vmatprep.subr.bf16.mxu0 %v1137
    %1167 = vmatpush1.bf16.msra.mxu0 %v1136
    %1168 = vmatprep.subr.bf16.mxu0 %v1135
    %1169 = vmatpush1.bf16.msra.mxu0 %v1134
    %1170 = vmatprep.subr.bf16.mxu0 %v1133
    %1171 = vmatpush1.bf16.msra.mxu0 %v1132
    %1172 = vmatprep.subr.bf16.mxu0 %v1131
    %1173 = vmatpush1.bf16.msra.mxu0 %v1130
    %1174 = vmatprep.subr.bf16.mxu0 %v1129
    %1175 = vmatpush1.bf16.msra.mxu0 %v1128
    %1176 = vmatprep.subr.bf16.mxu0 0
    %1177 = vmatpush2.bf16.msra.mxu0 0
    %1178 = vmatprep.subr.bf16.mxu0 0
    %1179 = vmatpush2.bf16.msra.mxu0 0
    %1180 = vmatprep.subr.bf16.mxu0 0
    %1181 = vmatpush2.bf16.msra.mxu0 0
    %1182 = vmatprep.subr.bf16.mxu0 0
    %1183 = vmatpush2.bf16.msra.mxu0 0
    %1184 = vmatprep.subr.bf16.mxu0 0
    %1185 = vmatpush2.bf16.msra.mxu0 0
    %1186 = vmatprep.subr.bf16.mxu0 0
    %1187 = vmatpush2.bf16.msra.mxu0 0
    %1188 = vmatprep.subr.bf16.mxu0 0
    %1189 = vmatpush2.bf16.msra.mxu0 0
    %1190 = vmatprep.subr.bf16.mxu0 0
    %1191 = vmatpush2.bf16.msra.mxu0 0
    %1192 = vmatprep.mubr.bf16.mxu0 0
    %1193 = vmatmul.mubr.bf16.gmra.mxu0 %v1065
    %v1194 = vpop.f32.mrf.mxu0
    %v1195 = vadd.f32 %v1027, %v1194
    %v1196 = vpop.f32.mrf.mxu0
    %v1197 = vadd.f32 %v1029, %v1196
    %v1198 = vpop.f32.mrf.mxu0
    %v1199 = vadd.f32 %v1031, %v1198
    %v1200 = vpop.f32.mrf.mxu0
    %v1201 = vadd.f32 %v1033, %v1200
    %1202 = vmatprep.mubr.bf16.mxu0 0
    %1203 = vmatmul.mubr.bf16.gmra.mxu0 %v1073
    %v1204 = vpop.f32.mrf.mxu0
    %v1205 = vpop.f32.mrf.mxu0
    %v1206 = vpop.f32.mrf.mxu0
    %v1207 = vpop.f32.mrf.mxu0
    %1208 = vmatprep.mubr.bf16.mxu0 0
    %1209 = vmatmul.mubr.bf16.gmra.mxu0 %v1076
    %v1210 = vpop.f32.mrf.mxu0
    %v1211 = vadd.f32 %v1043, %v1210
    %v1212 = vpop.f32.mrf.mxu0
    %v1213 = vadd.f32 %v1045, %v1212
    %v1214 = vpop.f32.mrf.mxu0
    %v1215 = vadd.f32 %v1047, %v1214
    %v1216 = vpop.f32.mrf.mxu0
    %v1217 = vadd.f32 %v1049, %v1216
    %1218 = vdwg.mxu0
    %v1219 = vld [vmem:[#allocation3 + $0x14] sm:$0xf]
    %v1220 = vld [vmem:[#allocation11 + $0x2b0] sm:$0xff]
    %v1221 = vld [vmem:[#allocation11 + $0x2b8] sm:$0xff]
    %v1222 = vld [vmem:[#allocation11 + $0x2c0] sm:$0xff]
    %v1223 = vld [vmem:[#allocation11 + $0x2c8] sm:$0xff]
    %v1224 = vld [vmem:[#allocation11 + $0x2d0] sm:$0xff]
    %v1225 = vld [vmem:[#allocation11 + $0x2d8] sm:$0xff]
    %v1226 = vld [vmem:[#allocation11 + $0x2e0] sm:$0xff]
    %v1227 = vld [vmem:[#allocation11 + $0x2e8] sm:$0xff]
    %v1228 = vld [vmem:[#allocation11 + $0x2f0] sm:$0xff]
    %v1229 = vld [vmem:[#allocation11 + $0x2f8] sm:$0xff]
    %v1230 = vld [vmem:[#allocation11 + $0x300] sm:$0xff]
    %v1231 = vld [vmem:[#allocation11 + $0x308] sm:$0xff]
    %v1232 = vld [vmem:[#allocation11 + $0x310] sm:$0xff]
    %v1233 = vld [vmem:[#allocation11 + $0x318] sm:$0xff]
    %v1234 = vld [vmem:[#allocation11 + $0x320] sm:$0xff]
    %v1235 = vld [vmem:[#allocation11 + $0x328] sm:$0xff]
    %v1237 = vunpack.c.l.b16 %v1219
    %v1238 = vpack.c.b16 %v1237, %v899
    %vm1239 = vsmask.f32 6400
    %v1241 = vshrl.u32 %v901, 16
    %v1243 = vrot.slane %v1241, 1
    %v1244 = vshll.u32 %v901, 16
    %v1246 = vrot.slane %v1244, 2
    %v1247 = vor.u32 %v1243, %v1246
    %v1248 = vrot.slane %v1066, 1
    %v1249 = vrot.slane %v1062, 2
    %v1250 = vor.u32 %v1248, %v1249
    %v1251 = vsel %vm1239, %v1247, %v1250
    %v1253 = vshrl.u32 %v1238, 16
    %v1255 = vrot.slane %v1253, 1
    %v1256 = vshll.u32 %v1238, 16
    %v1258 = vrot.slane %v1256, 2
    %v1259 = vor.u32 %v1255, %v1258
    %v1260 = vsel %vm1239, %v1250, %v1259
    %v1280 = vunpack.c.l.b16 %v1220
    %v1281 = vunpack.c.h.b16 %v1220
    %v1282 = vunpack.c.l.b16 %v1221
    %v1283 = vunpack.c.h.b16 %v1221
    %v1284 = vunpack.c.l.b16 %v1222
    %v1285 = vunpack.c.h.b16 %v1222
    %v1286 = vunpack.c.l.b16 %v1223
    %v1287 = vunpack.c.h.b16 %v1223
    %v1288 = vunpack.c.l.b16 %v1224
    %v1289 = vunpack.c.h.b16 %v1224
    %v1290 = vunpack.c.l.b16 %v1225
    %v1291 = vunpack.c.h.b16 %v1225
    %v1292 = vunpack.c.l.b16 %v1226
    %v1293 = vunpack.c.h.b16 %v1226
    %v1294 = vunpack.c.l.b16 %v1227
    %v1295 = vunpack.c.h.b16 %v1227
    %v1296 = vunpack.c.l.b16 %v1228
    %v1297 = vunpack.c.h.b16 %v1228
    %v1298 = vunpack.c.l.b16 %v1229
    %v1299 = vunpack.c.h.b16 %v1229
    %v1300 = vunpack.c.l.b16 %v1230
    %v1301 = vunpack.c.h.b16 %v1230
    %v1302 = vunpack.c.l.b16 %v1231
    %v1303 = vunpack.c.h.b16 %v1231
    %v1304 = vunpack.c.l.b16 %v1232
    %v1305 = vunpack.c.h.b16 %v1232
    %v1306 = vunpack.c.l.b16 %v1233
    %v1307 = vunpack.c.h.b16 %v1233
    %v1308 = vunpack.c.l.b16 %v1234
    %v1309 = vunpack.c.h.b16 %v1234
    %v1310 = vunpack.c.l.b16 %v1235
    %v1311 = vunpack.c.h.b16 %v1235
    %v1312 = vpack.c.b16 %v1282, %v1280
    %v1313 = vpack.c.b16 %v1283, %v1281
    %v1314 = vpack.c.b16 %v1286, %v1284
    %v1315 = vpack.c.b16 %v1287, %v1285
    %v1316 = vpack.c.b16 %v1290, %v1288
    %v1317 = vpack.c.b16 %v1291, %v1289
    %v1318 = vpack.c.b16 %v1294, %v1292
    %v1319 = vpack.c.b16 %v1295, %v1293
    %v1320 = vpack.c.b16 %v1298, %v1296
    %v1321 = vpack.c.b16 %v1299, %v1297
    %v1322 = vpack.c.b16 %v1302, %v1300
    %v1323 = vpack.c.b16 %v1303, %v1301
    %v1324 = vpack.c.b16 %v1306, %v1304
    %v1325 = vpack.c.b16 %v1307, %v1305
    %v1326 = vpack.c.b16 %v1310, %v1308
    %v1327 = vpack.c.b16 %v1311, %v1309
    %1344 = vmatprep.subr.bf16.mxu0 %v1327
    %1345 = vmatpush1.bf16.msra.mxu0 %v1326
    %1346 = vmatprep.subr.bf16.mxu0 %v1325
    %1347 = vmatpush1.bf16.msra.mxu0 %v1324
    %1348 = vmatprep.subr.bf16.mxu0 %v1323
    %1349 = vmatpush1.bf16.msra.mxu0 %v1322
    %1350 = vmatprep.subr.bf16.mxu0 %v1321
    %1351 = vmatpush1.bf16.msra.mxu0 %v1320
    %1352 = vmatprep.subr.bf16.mxu0 %v1319
    %1353 = vmatpush1.bf16.msra.mxu0 %v1318
    %1354 = vmatprep.subr.bf16.mxu0 %v1317
    %1355 = vmatpush1.bf16.msra.mxu0 %v1316
    %1356 = vmatprep.subr.bf16.mxu0 %v1315
    %1357 = vmatpush1.bf16.msra.mxu0 %v1314
    %1358 = vmatprep.subr.bf16.mxu0 %v1313
    %1359 = vmatpush1.bf16.msra.mxu0 %v1312
    %1360 = vmatprep.subr.bf16.mxu0 0
    %1361 = vmatpush2.bf16.msra.mxu0 0
    %1362 = vmatprep.subr.bf16.mxu0 0
    %1363 = vmatpush2.bf16.msra.mxu0 0
    %1364 = vmatprep.subr.bf16.mxu0 0
    %1365 = vmatpush2.bf16.msra.mxu0 0
    %1366 = vmatprep.subr.bf16.mxu0 0
    %1367 = vmatpush2.bf16.msra.mxu0 0
    %1368 = vmatprep.subr.bf16.mxu0 0
    %1369 = vmatpush2.bf16.msra.mxu0 0
    %1370 = vmatprep.subr.bf16.mxu0 0
    %1371 = vmatpush2.bf16.msra.mxu0 0
    %1372 = vmatprep.subr.bf16.mxu0 0
    %1373 = vmatpush2.bf16.msra.mxu0 0
    %1374 = vmatprep.subr.bf16.mxu0 0
    %1375 = vmatpush2.bf16.msra.mxu0 0
    %1376 = vmatprep.mubr.bf16.mxu0 0
    %1377 = vmatmul.mubr.bf16.gmra.mxu0 %v1251
    %v1378 = vpop.f32.mrf.mxu0
    %v1379 = vadd.f32 0.0, %v1378
    %v1380 = vpop.f32.mrf.mxu0
    %v1381 = vadd.f32 0.0, %v1380
    %v1382 = vpop.f32.mrf.mxu0
    %v1383 = vadd.f32 0.0, %v1382
    %v1384 = vpop.f32.mrf.mxu0
    %v1385 = vadd.f32 0.0, %v1384
    %1386 = vmatprep.mubr.bf16.mxu0 0
    %1387 = vmatmul.mubr.bf16.gmra.mxu0 %v1260
    %v1388 = vpop.f32.mrf.mxu0
    %v1389 = vpop.f32.mrf.mxu0
    %v1390 = vpop.f32.mrf.mxu0
    %v1391 = vpop.f32.mrf.mxu0
    %1392 = vmatprep.mubr.bf16.mxu0 0
    %1393 = vmatmul.mubr.bf16.gmra.mxu0 %v1259
    %v1394 = vpop.f32.mrf.mxu0
    %v1395 = vadd.f32 0.0, %v1394
    %v1396 = vpop.f32.mrf.mxu0
    %v1397 = vadd.f32 0.0, %v1396
    %v1398 = vpop.f32.mrf.mxu0
    %v1399 = vadd.f32 0.0, %v1398
    %v1400 = vpop.f32.mrf.mxu0
    %v1401 = vadd.f32 0.0, %v1400
    %1402 = vdwg.mxu0
    %v1403 = vadd.f32 %v1195, %v1379
    %v1404 = vadd.f32 %v1197, %v1381
    %v1405 = vadd.f32 %v1199, %v1383
    %v1406 = vadd.f32 %v1201, %v1385
    %v1407 = vadd.f32 %v1211, %v1395
    %v1408 = vadd.f32 %v1213, %v1397
    %v1409 = vadd.f32 %v1215, %v1399
    %v1410 = vadd.f32 %v1217, %v1401
    %s1411 = scalar_lea.vmem [#allocation13], 2
    %v1412 = vld [vmem:[%s1411] ss:$8 sm:$0x3]
    %v1414 = vlaneseq
    %v1415 = vshrl.u32 %v1414, 7
    %v1416 = vsub.s32 0, %v1415
    %v1417 = vrot.slane %v1412, %v1416
    %v1418 = vlaneseq
    %v1419 = vshrl.u32 %v1418, 7
    %v1420 = vsub.s32 1, %v1419
    %v1421 = vrot.slane %v1412, %v1420
    %v1424 = vmul.f32 %v1403, %v1417
    %v1425 = vmul.f32 %v1404, %v1421
    %v1426 = vmul.f32 %v1405, %v1417
    %v1427 = vmul.f32 %v1406, %v1421
    %v1428 = vmul.f32 %v1407, %v1417
    %v1429 = vmul.f32 %v1408, %v1421
    %v1430 = vmul.f32 %v1409, %v1417
    %v1431 = vmul.f32 %v1410, %v1421
    %s1432 = scalar_lea.vmem [#allocation13], 20
    %v1433 = vld [vmem:[%s1432] ss:$8 sm:$0x3]
    %v1435 = vlaneseq
    %v1436 = vshrl.u32 %v1435, 7
    %v1437 = vsub.s32 0, %v1436
    %v1438 = vrot.slane %v1433, %v1437
    %v1439 = vlaneseq
    %v1440 = vshrl.u32 %v1439, 7
    %v1441 = vsub.s32 1, %v1440
    %v1442 = vrot.slane %v1433, %v1441
    %v1445 = vadd.f32 %v1424, %v1438
    %v1446 = vadd.f32 %v1425, %v1442
    %v1447 = vadd.f32 %v1426, %v1438
    %v1448 = vadd.f32 %v1427, %v1442
    %v1449 = vadd.f32 %v1428, %v1438
    %v1450 = vadd.f32 %v1429, %v1442
    %v1451 = vadd.f32 %v1430, %v1438
    %v1452 = vadd.f32 %v1431, %v1442
    %v1453 = vmax.f32 %v1445, 0.0
    %v1454 = vmax.f32 %v1446, 0.0
    %v1455 = vmax.f32 %v1447, 0.0
    %v1456 = vmax.f32 %v1448, 0.0
    %v1457 = vmax.f32 %v1449, 0.0
    %v1458 = vmax.f32 %v1450, 0.0
    %v1459 = vmax.f32 %v1451, 0.0
    %v1460 = vmax.f32 %v1452, 0.0
    %v1461 = vpack.c.bf16 %v1455, %v1453
    %v1462 = vpack.c.bf16 %v1456, %v1454
    %v1463 = vpack.c.bf16 %v1459, %v1457
    %v1464 = vpack.c.bf16 %v1460, %v1458
    %v1467 = vunpack.c.l.b16 %v1461
    %v1468 = vunpack.c.l.b16 %v1462
    %v1469 = vunpack.c.h.b16 %v1461
    %v1470 = vunpack.c.h.b16 %v1462
    %v1471 = vpack.c.b16 %v1468, %v1467
    %v1472 = vpack.c.b16 %v1470, %v1469
    %vm1475 = vcmask 1043456
    %vm1476 = vcmask 523268
    %vm1477 = vmor %vm1476, %vm1475
    %1478 = vst.msk [vmem:[#allocation4] sm:$0xff] %vm1477, %v1471
    %vm1479 = vcmask 1041408
    %vm1480 = vcmask 521220
    %vm1481 = vmor %vm1480, %vm1479
    %1482 = vst.msk [vmem:[#allocation4 + $0x8] sm:$0x33] %vm1481, %v1472
    %v1485 = vunpack.c.l.b16 %v1463
    %v1486 = vunpack.c.l.b16 %v1464
    %v1487 = vunpack.c.h.b16 %v1463
    %v1488 = vunpack.c.h.b16 %v1464
    %v1489 = vpack.c.b16 %v1486, %v1485
    %v1490 = vpack.c.b16 %v1488, %v1487
    %1493 = vst.msk [vmem:[#allocation4 + $0x20] sm:$0xff] %vm1477, %v1489
    %1494 = vst.msk [vmem:[#allocation4 + $0x28] sm:$0x33] %vm1481, %v1490
    %v1495 = vld [vmem:[#allocation4] sm:$0xff]
    %v1496 = vld [vmem:[#allocation4 + $0x8] sm:$0xff]
    %v1497 = vld [vmem:[#allocation4 + $0x10] sm:$0xff]
    %v1498 = vld [vmem:[#allocation4 + $0x18] sm:$0xff]
    %v1499 = vld [vmem:[#allocation4 + $0x20] sm:$0xff]
    %v1500 = vld [vmem:[#allocation4 + $0x28] sm:$0x11]
    %v1501 = vld [vmem:[#allocation11 + $0x330] sm:$0xff]
    %v1502 = vld [vmem:[#allocation11 + $0x338] sm:$0xff]
    %v1503 = vld [vmem:[#allocation11 + $0x340] sm:$0xff]
    %v1504 = vld [vmem:[#allocation11 + $0x348] sm:$0xff]
    %v1505 = vld [vmem:[#allocation11 + $0x350] sm:$0xff]
    %v1506 = vld [vmem:[#allocation11 + $0x358] sm:$0xff]
    %v1507 = vld [vmem:[#allocation11 + $0x360] sm:$0xff]
    %v1508 = vld [vmem:[#allocation11 + $0x368] sm:$0xff]
    %v1509 = vld [vmem:[#allocation11 + $0x370] sm:$0xff]
    %v1510 = vld [vmem:[#allocation11 + $0x378] sm:$0xff]
    %v1511 = vld [vmem:[#allocation11 + $0x380] sm:$0xff]
    %v1512 = vld [vmem:[#allocation11 + $0x388] sm:$0xff]
    %v1513 = vld [vmem:[#allocation11 + $0x390] sm:$0xff]
    %v1514 = vld [vmem:[#allocation11 + $0x398] sm:$0xff]
    %v1515 = vld [vmem:[#allocation11 + $0x3a0] sm:$0xff]
    %v1516 = vld [vmem:[#allocation11 + $0x3a8] sm:$0xff]
    %v1517 = vld [vmem:[#allocation11 + $0x3b0] sm:$0xff]
    %v1518 = vld [vmem:[#allocation11 + $0x3b8] sm:$0xff]
    %v1519 = vld [vmem:[#allocation11 + $0x3c0] sm:$0xff]
    %v1520 = vld [vmem:[#allocation11 + $0x3c8] sm:$0xff]
    %v1521 = vld [vmem:[#allocation11 + $0x3d0] sm:$0xff]
    %v1522 = vld [vmem:[#allocation11 + $0x3d8] sm:$0xff]
    %v1523 = vld [vmem:[#allocation11 + $0x3e0] sm:$0xff]
    %v1524 = vld [vmem:[#allocation11 + $0x3e8] sm:$0xff]
    %v1525 = vld [vmem:[#allocation4 + $0x28] sm:$0x33]
    %v1526 = vld [vmem:[#allocation11 + $0x3f0] sm:$0xff]
    %v1527 = vld [vmem:[#allocation11 + $0x3f8] sm:$0xff]
    %v1528 = vld [vmem:[#allocation11 + $0x400] sm:$0xff]
    %v1529 = vld [vmem:[#allocation11 + $0x408] sm:$0xff]
    %v1530 = vld [vmem:[#allocation11 + $0x410] sm:$0xff]
    %v1531 = vld [vmem:[#allocation11 + $0x418] sm:$0xff]
    %v1532 = vld [vmem:[#allocation11 + $0x420] sm:$0xff]
    %v1533 = vld [vmem:[#allocation11 + $0x428] sm:$0xff]
    %v1534 = vld [vmem:[#allocation11 + $0x430] sm:$0xff]
    %v1535 = vld [vmem:[#allocation11 + $0x438] sm:$0xff]
    %v1536 = vld [vmem:[#allocation11 + $0x440] sm:$0xff]
    %v1537 = vld [vmem:[#allocation11 + $0x448] sm:$0xff]
    %v1538 = vld [vmem:[#allocation11 + $0x450] sm:$0xff]
    %v1539 = vld [vmem:[#allocation11 + $0x458] sm:$0xff]
    %v1540 = vld [vmem:[#allocation11 + $0x460] sm:$0xff]
    %v1541 = vld [vmem:[#allocation11 + $0x468] sm:$0xff]
    %v1542 = vld [vmem:[#allocation11 + $0x470] sm:$0xff]
    %v1543 = vld [vmem:[#allocation11 + $0x478] sm:$0xff]
    %v1544 = vld [vmem:[#allocation11 + $0x480] sm:$0xff]
    %v1545 = vld [vmem:[#allocation11 + $0x488] sm:$0xff]
    %v1546 = vld [vmem:[#allocation11 + $0x490] sm:$0xff]
    %v1547 = vld [vmem:[#allocation11 + $0x498] sm:$0xff]
    %v1548 = vld [vmem:[#allocation11 + $0x4a0] sm:$0xff]
    %v1549 = vld [vmem:[#allocation11 + $0x4a8] sm:$0xff]
    %v1556 = vunpack.c.l.b16 %v1495
    %v1557 = vunpack.c.h.b16 %v1495
    %v1558 = vunpack.c.l.b16 %v1496
    %v1559 = vunpack.c.h.b16 %v1496
    %v1560 = vunpack.c.l.b16 %v1497
    %v1561 = vunpack.c.h.b16 %v1497
    %v1562 = vunpack.c.l.b16 %v1498
    %v1563 = vunpack.c.h.b16 %v1498
    %v1564 = vunpack.c.l.b16 %v1499
    %v1565 = vunpack.c.h.b16 %v1499
    %v1566 = vunpack.c.l.b16 %v1525
    %v1567 = vunpack.c.h.b16 %v1525
    %v1568 = vpack.c.b16 %v1558, %v1556
    %v1569 = vpack.c.b16 %v1559, %v1557
    %v1570 = vpack.c.b16 %v1562, %v1560
    %v1571 = vpack.c.b16 %v1563, %v1561
    %v1572 = vpack.c.b16 %v1566, %v1564
    %v1573 = vpack.c.b16 %v1567, %v1565
    %v1575 = vshrl.u32 %v1568, 16
    %v1577 = vshll.u32 %v1568, 16
    %v1579 = vrot.slane %v1577, 1
    %v1580 = vor.u32 %v1575, %v1579
    %v1582 = vshll.u32 %v1570, 16
    %v1584 = vrot.slane %v1582, 1
    %v1585 = vsel %vm73, %v1580, %v1584
    %v1587 = vshrl.u32 %v1569, 16
    %v1589 = vshll.u32 %v1569, 16
    %v1591 = vrot.slane %v1589, 1
    %v1592 = vor.u32 %v1587, %v1591
    %v1594 = vshll.u32 %v1571, 16
    %v1596 = vrot.slane %v1594, 1
    %v1597 = vsel %vm73, %v1592, %v1596
    %v1598 = vshrl.u32 %v1570, 16
    %v1600 = vor.u32 %v1598, %v1584
    %v1602 = vshll.u32 %v1572, 16
    %v1604 = vrot.slane %v1602, 1
    %v1605 = vsel %vm73, %v1600, %v1604
    %v1606 = vshrl.u32 %v1571, 16
    %v1608 = vor.u32 %v1606, %v1596
    %v1610 = vshll.u32 %v1573, 16
    %v1612 = vrot.slane %v1610, 1
    %v1613 = vsel %vm73, %v1608, %v1612
    %v1614 = vshrl.u32 %v1572, 16
    %v1616 = vor.u32 %v1614, %v1604
    %v1617 = vshrl.u32 %v1573, 16
    %v1619 = vor.u32 %v1617, %v1612
    %v1647 = vunpack.c.l.b16 %v1526
    %v1648 = vunpack.c.h.b16 %v1526
    %v1649 = vunpack.c.l.b16 %v1527
    %v1650 = vunpack.c.h.b16 %v1527
    %v1651 = vunpack.c.l.b16 %v1528
    %v1652 = vunpack.c.h.b16 %v1528
    %v1653 = vunpack.c.l.b16 %v1529
    %v1654 = vunpack.c.h.b16 %v1529
    %v1655 = vunpack.c.l.b16 %v1530
    %v1656 = vunpack.c.h.b16 %v1530
    %v1657 = vunpack.c.l.b16 %v1531
    %v1658 = vunpack.c.h.b16 %v1531
    %v1659 = vunpack.c.l.b16 %v1532
    %v1660 = vunpack.c.h.b16 %v1532
    %v1661 = vunpack.c.l.b16 %v1533
    %v1662 = vunpack.c.h.b16 %v1533
    %v1663 = vunpack.c.l.b16 %v1534
    %v1664 = vunpack.c.h.b16 %v1534
    %v1665 = vunpack.c.l.b16 %v1535
    %v1666 = vunpack.c.h.b16 %v1535
    %v1667 = vunpack.c.l.b16 %v1536
    %v1668 = vunpack.c.h.b16 %v1536
    %v1669 = vunpack.c.l.b16 %v1537
    %v1670 = vunpack.c.h.b16 %v1537
    %v1671 = vunpack.c.l.b16 %v1538
    %v1672 = vunpack.c.h.b16 %v1538
    %v1673 = vunpack.c.l.b16 %v1539
    %v1674 = vunpack.c.h.b16 %v1539
    %v1675 = vunpack.c.l.b16 %v1540
    %v1676 = vunpack.c.h.b16 %v1540
    %v1677 = vunpack.c.l.b16 %v1541
    %v1678 = vunpack.c.h.b16 %v1541
    %v1679 = vunpack.c.l.b16 %v1542
    %v1680 = vunpack.c.h.b16 %v1542
    %v1681 = vunpack.c.l.b16 %v1543
    %v1682 = vunpack.c.h.b16 %v1543
    %v1683 = vunpack.c.l.b16 %v1544
    %v1684 = vunpack.c.h.b16 %v1544
    %v1685 = vunpack.c.l.b16 %v1545
    %v1686 = vunpack.c.h.b16 %v1545
    %v1687 = vunpack.c.l.b16 %v1546
    %v1688 = vunpack.c.h.b16 %v1546
    %v1689 = vunpack.c.l.b16 %v1547
    %v1690 = vunpack.c.h.b16 %v1547
    %v1691 = vunpack.c.l.b16 %v1548
    %v1692 = vunpack.c.h.b16 %v1548
    %v1693 = vunpack.c.l.b16 %v1549
    %v1694 = vunpack.c.h.b16 %v1549
    %v1695 = vpack.c.b16 %v1649, %v1647
    %v1696 = vpack.c.b16 %v1650, %v1648
    %v1697 = vpack.c.b16 %v1653, %v1651
    %v1698 = vpack.c.b16 %v1654, %v1652
    %v1699 = vpack.c.b16 %v1657, %v1655
    %v1700 = vpack.c.b16 %v1658, %v1656
    %v1701 = vpack.c.b16 %v1661, %v1659
    %v1702 = vpack.c.b16 %v1662, %v1660
    %v1703 = vpack.c.b16 %v1665, %v1663
    %v1704 = vpack.c.b16 %v1666, %v1664
    %v1705 = vpack.c.b16 %v1669, %v1667
    %v1706 = vpack.c.b16 %v1670, %v1668
    %v1707 = vpack.c.b16 %v1673, %v1671
    %v1708 = vpack.c.b16 %v1674, %v1672
    %v1709 = vpack.c.b16 %v1677, %v1675
    %v1710 = vpack.c.b16 %v1678, %v1676
    %v1711 = vpack.c.b16 %v1681, %v1679
    %v1712 = vpack.c.b16 %v1682, %v1680
    %v1713 = vpack.c.b16 %v1685, %v1683
    %v1714 = vpack.c.b16 %v1686, %v1684
    %v1715 = vpack.c.b16 %v1689, %v1687
    %v1716 = vpack.c.b16 %v1690, %v1688
    %v1717 = vpack.c.b16 %v1693, %v1691
    %v1718 = vpack.c.b16 %v1694, %v1692
    %vm1743 = vcmask 523264
    %v1745 = vsel %vm1743, %v1597, 0
    %v1748 = vsel %vm1743, %v1613, 0
    %v1751 = vsel %vm1743, %v1619, 0
    %1753 = vmatprep.subr.bf16.mxu0 %v1710
    %1754 = vmatpush1.bf16.msra.mxu0 %v1709
    %1755 = vmatprep.subr.bf16.mxu0 %v1708
    %1756 = vmatpush1.bf16.msra.mxu0 %v1707
    %1757 = vmatprep.subr.bf16.mxu0 %v1706
    %1758 = vmatpush1.bf16.msra.mxu0 %v1705
    %1759 = vmatprep.subr.bf16.mxu0 %v1704
    %1760 = vmatpush1.bf16.msra.mxu0 %v1703
    %1761 = vmatprep.subr.bf16.mxu0 %v1702
    %1762 = vmatpush1.bf16.msra.mxu0 %v1701
    %1763 = vmatprep.subr.bf16.mxu0 %v1700
    %1764 = vmatpush1.bf16.msra.mxu0 %v1699
    %1765 = vmatprep.subr.bf16.mxu0 %v1698
    %1766 = vmatpush1.bf16.msra.mxu0 %v1697
    %1767 = vmatprep.subr.bf16.mxu0 %v1696
    %1768 = vmatpush1.bf16.msra.mxu0 %v1695
    %1769 = vmatprep.subr.bf16.mxu0 0
    %1770 = vmatpush2.bf16.msra.mxu0 0
    %1771 = vmatprep.subr.bf16.mxu0 0
    %1772 = vmatpush2.bf16.msra.mxu0 0
    %1773 = vmatprep.subr.bf16.mxu0 0
    %1774 = vmatpush2.bf16.msra.mxu0 0
    %1775 = vmatprep.subr.bf16.mxu0 0
    %1776 = vmatpush2.bf16.msra.mxu0 0
    %1777 = vmatprep.subr.bf16.mxu0 %v1718
    %1778 = vmatpush2.bf16.msra.mxu0 %v1717
    %1779 = vmatprep.subr.bf16.mxu0 %v1716
    %1780 = vmatpush2.bf16.msra.mxu0 %v1715
    %1781 = vmatprep.subr.bf16.mxu0 %v1714
    %1782 = vmatpush2.bf16.msra.mxu0 %v1713
    %1783 = vmatprep.subr.bf16.mxu0 %v1712
    %1784 = vmatpush2.bf16.msra.mxu0 %v1711
    %1785 = vmatprep.mubr.bf16.mxu0 %v1745
    %1786 = vmatmul.mubr.bf16.gmra.mxu0 %v1585
    %v1787 = vpop.f32.mrf.mxu0
    %v1788 = vadd.f32 0.0, %v1787
    %v1789 = vpop.f32.mrf.mxu0
    %v1790 = vadd.f32 0.0, %v1789
    %v1791 = vpop.f32.mrf.mxu0
    %v1792 = vadd.f32 0.0, %v1791
    %v1793 = vpop.f32.mrf.mxu0
    %v1794 = vadd.f32 0.0, %v1793
    %1795 = vmatprep.mubr.bf16.mxu0 %v1748
    %1796 = vmatmul.mubr.bf16.gmra.mxu0 %v1605
    %v1797 = vpop.f32.mrf.mxu0
    %v1798 = vpop.f32.mrf.mxu0
    %v1799 = vpop.f32.mrf.mxu0
    %v1800 = vpop.f32.mrf.mxu0
    %1801 = vmatprep.mubr.bf16.mxu0 %v1751
    %1802 = vmatmul.mubr.bf16.gmra.mxu0 %v1616
    %v1803 = vpop.f32.mrf.mxu0
    %v1804 = vadd.f32 0.0, %v1803
    %v1805 = vpop.f32.mrf.mxu0
    %v1806 = vadd.f32 0.0, %v1805
    %v1807 = vpop.f32.mrf.mxu0
    %v1808 = vadd.f32 0.0, %v1807
    %v1809 = vpop.f32.mrf.mxu0
    %v1810 = vadd.f32 0.0, %v1809
    %1811 = vdwg.mxu0
    %v1813 = vunpack.c.l.b16 %v1500
    %v1814 = vunpack.c.h.b16 %v1500
    %v1815 = vpack.c.b16 %v1813, %v1564
    %v1816 = vpack.c.b16 %v1814, %v1565
    %v1844 = vunpack.c.l.b16 %v1501
    %v1845 = vunpack.c.h.b16 %v1501
    %v1846 = vunpack.c.l.b16 %v1502
    %v1847 = vunpack.c.h.b16 %v1502
    %v1848 = vunpack.c.l.b16 %v1503
    %v1849 = vunpack.c.h.b16 %v1503
    %v1850 = vunpack.c.l.b16 %v1504
    %v1851 = vunpack.c.h.b16 %v1504
    %v1852 = vunpack.c.l.b16 %v1505
    %v1853 = vunpack.c.h.b16 %v1505
    %v1854 = vunpack.c.l.b16 %v1506
    %v1855 = vunpack.c.h.b16 %v1506
    %v1856 = vunpack.c.l.b16 %v1507
    %v1857 = vunpack.c.h.b16 %v1507
    %v1858 = vunpack.c.l.b16 %v1508
    %v1859 = vunpack.c.h.b16 %v1508
    %v1860 = vunpack.c.l.b16 %v1509
    %v1861 = vunpack.c.h.b16 %v1509
    %v1862 = vunpack.c.l.b16 %v1510
    %v1863 = vunpack.c.h.b16 %v1510
    %v1864 = vunpack.c.l.b16 %v1511
    %v1865 = vunpack.c.h.b16 %v1511
    %v1866 = vunpack.c.l.b16 %v1512
    %v1867 = vunpack.c.h.b16 %v1512
    %v1868 = vunpack.c.l.b16 %v1513
    %v1869 = vunpack.c.h.b16 %v1513
    %v1870 = vunpack.c.l.b16 %v1514
    %v1871 = vunpack.c.h.b16 %v1514
    %v1872 = vunpack.c.l.b16 %v1515
    %v1873 = vunpack.c.h.b16 %v1515
    %v1874 = vunpack.c.l.b16 %v1516
    %v1875 = vunpack.c.h.b16 %v1516
    %v1876 = vunpack.c.l.b16 %v1517
    %v1877 = vunpack.c.h.b16 %v1517
    %v1878 = vunpack.c.l.b16 %v1518
    %v1879 = vunpack.c.h.b16 %v1518
    %v1880 = vunpack.c.l.b16 %v1519
    %v1881 = vunpack.c.h.b16 %v1519
    %v1882 = vunpack.c.l.b16 %v1520
    %v1883 = vunpack.c.h.b16 %v1520
    %v1884 = vunpack.c.l.b16 %v1521
    %v1885 = vunpack.c.h.b16 %v1521
    %v1886 = vunpack.c.l.b16 %v1522
    %v1887 = vunpack.c.h.b16 %v1522
    %v1888 = vunpack.c.l.b16 %v1523
    %v1889 = vunpack.c.h.b16 %v1523
    %v1890 = vunpack.c.l.b16 %v1524
    %v1891 = vunpack.c.h.b16 %v1524
    %v1892 = vpack.c.b16 %v1846, %v1844
    %v1893 = vpack.c.b16 %v1847, %v1845
    %v1894 = vpack.c.b16 %v1850, %v1848
    %v1895 = vpack.c.b16 %v1851, %v1849
    %v1896 = vpack.c.b16 %v1854, %v1852
    %v1897 = vpack.c.b16 %v1855, %v1853
    %v1898 = vpack.c.b16 %v1858, %v1856
    %v1899 = vpack.c.b16 %v1859, %v1857
    %v1900 = vpack.c.b16 %v1862, %v1860
    %v1901 = vpack.c.b16 %v1863, %v1861
    %v1902 = vpack.c.b16 %v1866, %v1864
    %v1903 = vpack.c.b16 %v1867, %v1865
    %v1904 = vpack.c.b16 %v1870, %v1868
    %v1905 = vpack.c.b16 %v1871, %v1869
    %v1906 = vpack.c.b16 %v1874, %v1872
    %v1907 = vpack.c.b16 %v1875, %v1873
    %v1908 = vpack.c.b16 %v1878, %v1876
    %v1909 = vpack.c.b16 %v1879, %v1877
    %v1910 = vpack.c.b16 %v1882, %v1880
    %v1911 = vpack.c.b16 %v1883, %v1881
    %v1912 = vpack.c.b16 %v1886, %v1884
    %v1913 = vpack.c.b16 %v1887, %v1885
    %v1914 = vpack.c.b16 %v1890, %v1888
    %v1915 = vpack.c.b16 %v1891, %v1889
    %v1940 = vsel %vm1743, %v1569, 0
    %v1942 = vsel %vm1743, %v1571, 0
    %v1945 = vsel %vm1743, %v1816, 0
    %1947 = vmatprep.subr.bf16.mxu0 %v1907
    %1948 = vmatpush1.bf16.msra.mxu0 %v1906
    %1949 = vmatprep.subr.bf16.mxu0 %v1905
    %1950 = vmatpush1.bf16.msra.mxu0 %v1904
    %1951 = vmatprep.subr.bf16.mxu0 %v1903
    %1952 = vmatpush1.bf16.msra.mxu0 %v1902
    %1953 = vmatprep.subr.bf16.mxu0 %v1901
    %1954 = vmatpush1.bf16.msra.mxu0 %v1900
    %1955 = vmatprep.subr.bf16.mxu0 %v1899
    %1956 = vmatpush1.bf16.msra.mxu0 %v1898
    %1957 = vmatprep.subr.bf16.mxu0 %v1897
    %1958 = vmatpush1.bf16.msra.mxu0 %v1896
    %1959 = vmatprep.subr.bf16.mxu0 %v1895
    %1960 = vmatpush1.bf16.msra.mxu0 %v1894
    %1961 = vmatprep.subr.bf16.mxu0 %v1893
    %1962 = vmatpush1.bf16.msra.mxu0 %v1892
    %1963 = vmatprep.subr.bf16.mxu0 0
    %1964 = vmatpush2.bf16.msra.mxu0 0
    %1965 = vmatprep.subr.bf16.mxu0 0
    %1966 = vmatpush2.bf16.msra.mxu0 0
    %1967 = vmatprep.subr.bf16.mxu0 0
    %1968 = vmatpush2.bf16.msra.mxu0 0
    %1969 = vmatprep.subr.bf16.mxu0 0
    %1970 = vmatpush2.bf16.msra.mxu0 0
    %1971 = vmatprep.subr.bf16.mxu0 %v1915
    %1972 = vmatpush2.bf16.msra.mxu0 %v1914
    %1973 = vmatprep.subr.bf16.mxu0 %v1913
    %1974 = vmatpush2.bf16.msra.mxu0 %v1912
    %1975 = vmatprep.subr.bf16.mxu0 %v1911
    %1976 = vmatpush2.bf16.msra.mxu0 %v1910
    %1977 = vmatprep.subr.bf16.mxu0 %v1909
    %1978 = vmatpush2.bf16.msra.mxu0 %v1908
    %1979 = vmatprep.mubr.bf16.mxu0 %v1940
    %1980 = vmatmul.mubr.bf16.gmra.mxu0 %v1568
    %v1981 = vpop.f32.mrf.mxu0
    %v1982 = vadd.f32 %v1788, %v1981
    %v1983 = vpop.f32.mrf.mxu0
    %v1984 = vadd.f32 %v1790, %v1983
    %v1985 = vpop.f32.mrf.mxu0
    %v1986 = vadd.f32 %v1792, %v1985
    %v1987 = vpop.f32.mrf.mxu0
    %v1988 = vadd.f32 %v1794, %v1987
    %1989 = vmatprep.mubr.bf16.mxu0 %v1942
    %1990 = vmatmul.mubr.bf16.gmra.mxu0 %v1570
    %v1991 = vpop.f32.mrf.mxu0
    %v1992 = vpop.f32.mrf.mxu0
    %v1993 = vpop.f32.mrf.mxu0
    %v1994 = vpop.f32.mrf.mxu0
    %1995 = vmatprep.mubr.bf16.mxu0 %v1945
    %1996 = vmatmul.mubr.bf16.gmra.mxu0 %v1815
    %v1997 = vpop.f32.mrf.mxu0
    %v1998 = vadd.f32 %v1804, %v1997
    %v1999 = vpop.f32.mrf.mxu0
    %v2000 = vadd.f32 %v1806, %v1999
    %v2001 = vpop.f32.mrf.mxu0
    %v2002 = vadd.f32 %v1808, %v2001
    %v2003 = vpop.f32.mrf.mxu0
    %v2004 = vadd.f32 %v1810, %v2003
    %2005 = vdwg.mxu0
    %v2006 = vld [vmem:[#allocation4] sm:$0xee]
    %v2007 = vld [vmem:[#allocation11 + $0x4b0] sm:$0xff]
    %v2008 = vld [vmem:[#allocation11 + $0x4b8] sm:$0xff]
    %v2009 = vld [vmem:[#allocation11 + $0x4c0] sm:$0xff]
    %v2010 = vld [vmem:[#allocation11 + $0x4c8] sm:$0xff]
    %v2011 = vld [vmem:[#allocation11 + $0x4d0] sm:$0xff]
    %v2012 = vld [vmem:[#allocation11 + $0x4d8] sm:$0xff]
    %v2013 = vld [vmem:[#allocation11 + $0x4e0] sm:$0xff]
    %v2014 = vld [vmem:[#allocation11 + $0x4e8] sm:$0xff]
    %v2015 = vld [vmem:[#allocation11 + $0x4f0] sm:$0xff]
    %v2016 = vld [vmem:[#allocation11 + $0x4f8] sm:$0xff]
    %v2017 = vld [vmem:[#allocation11 + $0x500] sm:$0xff]
    %v2018 = vld [vmem:[#allocation11 + $0x508] sm:$0xff]
    %v2019 = vld [vmem:[#allocation11 + $0x510] sm:$0xff]
    %v2020 = vld [vmem:[#allocation11 + $0x518] sm:$0xff]
    %v2021 = vld [vmem:[#allocation11 + $0x520] sm:$0xff]
    %v2022 = vld [vmem:[#allocation11 + $0x528] sm:$0xff]
    %v2023 = vld [vmem:[#allocation11 + $0x530] sm:$0xff]
    %v2024 = vld [vmem:[#allocation11 + $0x538] sm:$0xff]
    %v2025 = vld [vmem:[#allocation11 + $0x540] sm:$0xff]
    %v2026 = vld [vmem:[#allocation11 + $0x548] sm:$0xff]
    %v2027 = vld [vmem:[#allocation11 + $0x550] sm:$0xff]
    %v2028 = vld [vmem:[#allocation11 + $0x558] sm:$0xff]
    %v2029 = vld [vmem:[#allocation11 + $0x560] sm:$0xff]
    %v2030 = vld [vmem:[#allocation11 + $0x568] sm:$0xff]
    %v2032 = vunpack.c.l.b16 %v2006
    %v2033 = vunpack.c.h.b16 %v2006
    %v2034 = vpack.c.b16 %v1558, %v2032
    %v2035 = vpack.c.b16 %v1559, %v2033
    %v2036 = vrot.slane %v2034, 1
    %v2037 = vrot.slane %v1570, 1
    %v2038 = vsel %vm259, %v2036, %v2037
    %v2039 = vrot.slane %v2035, 1
    %v2040 = vrot.slane %v1571, 1
    %v2041 = vsel %vm259, %v2039, %v2040
    %v2042 = vrot.slane %v1572, 1
    %v2043 = vsel %vm259, %v2037, %v2042
    %v2044 = vrot.slane %v1573, 1
    %v2045 = vsel %vm259, %v2040, %v2044
    %v2073 = vunpack.c.l.b16 %v2007
    %v2074 = vunpack.c.h.b16 %v2007
    %v2075 = vunpack.c.l.b16 %v2008
    %v2076 = vunpack.c.h.b16 %v2008
    %v2077 = vunpack.c.l.b16 %v2009
    %v2078 = vunpack.c.h.b16 %v2009
    %v2079 = vunpack.c.l.b16 %v2010
    %v2080 = vunpack.c.h.b16 %v2010
    %v2081 = vunpack.c.l.b16 %v2011
    %v2082 = vunpack.c.h.b16 %v2011
    %v2083 = vunpack.c.l.b16 %v2012
    %v2084 = vunpack.c.h.b16 %v2012
    %v2085 = vunpack.c.l.b16 %v2013
    %v2086 = vunpack.c.h.b16 %v2013
    %v2087 = vunpack.c.l.b16 %v2014
    %v2088 = vunpack.c.h.b16 %v2014
    %v2089 = vunpack.c.l.b16 %v2015
    %v2090 = vunpack.c.h.b16 %v2015
    %v2091 = vunpack.c.l.b16 %v2016
    %v2092 = vunpack.c.h.b16 %v2016
    %v2093 = vunpack.c.l.b16 %v2017
    %v2094 = vunpack.c.h.b16 %v2017
    %v2095 = vunpack.c.l.b16 %v2018
    %v2096 = vunpack.c.h.b16 %v2018
    %v2097 = vunpack.c.l.b16 %v2019
    %v2098 = vunpack.c.h.b16 %v2019
    %v2099 = vunpack.c.l.b16 %v2020
    %v2100 = vunpack.c.h.b16 %v2020
    %v2101 = vunpack.c.l.b16 %v2021
    %v2102 = vunpack.c.h.b16 %v2021
    %v2103 = vunpack.c.l.b16 %v2022
    %v2104 = vunpack.c.h.b16 %v2022
    %v2105 = vunpack.c.l.b16 %v2023
    %v2106 = vunpack.c.h.b16 %v2023
    %v2107 = vunpack.c.l.b16 %v2024
    %v2108 = vunpack.c.h.b16 %v2024
    %v2109 = vunpack.c.l.b16 %v2025
    %v2110 = vunpack.c.h.b16 %v2025
    %v2111 = vunpack.c.l.b16 %v2026
    %v2112 = vunpack.c.h.b16 %v2026
    %v2113 = vunpack.c.l.b16 %v2027
    %v2114 = vunpack.c.h.b16 %v2027
    %v2115 = vunpack.c.l.b16 %v2028
    %v2116 = vunpack.c.h.b16 %v2028
    %v2117 = vunpack.c.l.b16 %v2029
    %v2118 = vunpack.c.h.b16 %v2029
    %v2119 = vunpack.c.l.b16 %v2030
    %v2120 = vunpack.c.h.b16 %v2030
    %v2121 = vpack.c.b16 %v2075, %v2073
    %v2122 = vpack.c.b16 %v2076, %v2074
    %v2123 = vpack.c.b16 %v2079, %v2077
    %v2124 = vpack.c.b16 %v2080, %v2078
    %v2125 = vpack.c.b16 %v2083, %v2081
    %v2126 = vpack.c.b16 %v2084, %v2082
    %v2127 = vpack.c.b16 %v2087, %v2085
    %v2128 = vpack.c.b16 %v2088, %v2086
    %v2129 = vpack.c.b16 %v2091, %v2089
    %v2130 = vpack.c.b16 %v2092, %v2090
    %v2131 = vpack.c.b16 %v2095, %v2093
    %v2132 = vpack.c.b16 %v2096, %v2094
    %v2133 = vpack.c.b16 %v2099, %v2097
    %v2134 = vpack.c.b16 %v2100, %v2098
    %v2135 = vpack.c.b16 %v2103, %v2101
    %v2136 = vpack.c.b16 %v2104, %v2102
    %v2137 = vpack.c.b16 %v2107, %v2105
    %v2138 = vpack.c.b16 %v2108, %v2106
    %v2139 = vpack.c.b16 %v2111, %v2109
    %v2140 = vpack.c.b16 %v2112, %v2110
    %v2141 = vpack.c.b16 %v2115, %v2113
    %v2142 = vpack.c.b16 %v2116, %v2114
    %v2143 = vpack.c.b16 %v2119, %v2117
    %v2144 = vpack.c.b16 %v2120, %v2118
    %v2170 = vsel %vm1743, %v2041, 0
    %v2173 = vsel %vm1743, %v2045, 0
    %v2176 = vsel %vm1743, %v2044, 0
    %2178 = vmatprep.subr.bf16.mxu0 %v2136
    %2179 = vmatpush1.bf16.msra.mxu0 %v2135
    %2180 = vmatprep.subr.bf16.mxu0 %v2134
    %2181 = vmatpush1.bf16.msra.mxu0 %v2133
    %2182 = vmatprep.subr.bf16.mxu0 %v2132
    %2183 = vmatpush1.bf16.msra.mxu0 %v2131
    %2184 = vmatprep.subr.bf16.mxu0 %v2130
    %2185 = vmatpush1.bf16.msra.mxu0 %v2129
    %2186 = vmatprep.subr.bf16.mxu0 %v2128
    %2187 = vmatpush1.bf16.msra.mxu0 %v2127
    %2188 = vmatprep.subr.bf16.mxu0 %v2126
    %2189 = vmatpush1.bf16.msra.mxu0 %v2125
    %2190 = vmatprep.subr.bf16.mxu0 %v2124
    %2191 = vmatpush1.bf16.msra.mxu0 %v2123
    %2192 = vmatprep.subr.bf16.mxu0 %v2122
    %2193 = vmatpush1.bf16.msra.mxu0 %v2121
    %2194 = vmatprep.subr.bf16.mxu0 0
    %2195 = vmatpush2.bf16.msra.mxu0 0
    %2196 = vmatprep.subr.bf16.mxu0 0
    %2197 = vmatpush2.bf16.msra.mxu0 0
    %2198 = vmatprep.subr.bf16.mxu0 0
    %2199 = vmatpush2.bf16.msra.mxu0 0
    %2200 = vmatprep.subr.bf16.mxu0 0
    %2201 = vmatpush2.bf16.msra.mxu0 0
    %2202 = vmatprep.subr.bf16.mxu0 %v2144
    %2203 = vmatpush2.bf16.msra.mxu0 %v2143
    %2204 = vmatprep.subr.bf16.mxu0 %v2142
    %2205 = vmatpush2.bf16.msra.mxu0 %v2141
    %2206 = vmatprep.subr.bf16.mxu0 %v2140
    %2207 = vmatpush2.bf16.msra.mxu0 %v2139
    %2208 = vmatprep.subr.bf16.mxu0 %v2138
    %2209 = vmatpush2.bf16.msra.mxu0 %v2137
    %2210 = vmatprep.mubr.bf16.mxu0 %v2170
    %2211 = vmatmul.mubr.bf16.gmra.mxu0 %v2038
    %v2212 = vpop.f32.mrf.mxu0
    %v2213 = vadd.f32 0.0, %v2212
    %v2214 = vpop.f32.mrf.mxu0
    %v2215 = vadd.f32 0.0, %v2214
    %v2216 = vpop.f32.mrf.mxu0
    %v2217 = vadd.f32 0.0, %v2216
    %v2218 = vpop.f32.mrf.mxu0
    %v2219 = vadd.f32 0.0, %v2218
    %2220 = vmatprep.mubr.bf16.mxu0 %v2173
    %2221 = vmatmul.mubr.bf16.gmra.mxu0 %v2043
    %v2222 = vpop.f32.mrf.mxu0
    %v2223 = vpop.f32.mrf.mxu0
    %v2224 = vpop.f32.mrf.mxu0
    %v2225 = vpop.f32.mrf.mxu0
    %2226 = vmatprep.mubr.bf16.mxu0 %v2176
    %2227 = vmatmul.mubr.bf16.gmra.mxu0 %v2042
    %v2228 = vpop.f32.mrf.mxu0
    %v2229 = vadd.f32 0.0, %v2228
    %v2230 = vpop.f32.mrf.mxu0
    %v2231 = vadd.f32 0.0, %v2230
    %v2232 = vpop.f32.mrf.mxu0
    %v2233 = vadd.f32 0.0, %v2232
    %v2234 = vpop.f32.mrf.mxu0
    %v2235 = vadd.f32 0.0, %v2234
    %2236 = vdwg.mxu0
    %v2237 = vadd.f32 %v1982, %v2213
    %v2238 = vadd.f32 %v1984, %v2215
    %v2239 = vadd.f32 %v1986, %v2217
    %v2240 = vadd.f32 %v1988, %v2219
    %v2241 = vadd.f32 %v1998, %v2229
    %v2242 = vadd.f32 %v2000, %v2231
    %v2243 = vadd.f32 %v2002, %v2233
    %v2244 = vadd.f32 %v2004, %v2235
    %s2245 = scalar_lea.vmem [#allocation13], 3
    %v2246 = vld [vmem:[%s2245] ss:$8 sm:$0x3]
    %v2248 = vlaneseq
    %v2249 = vshrl.u32 %v2248, 7
    %v2250 = vsub.s32 0, %v2249
    %v2251 = vrot.slane %v2246, %v2250
    %v2252 = vlaneseq
    %v2253 = vshrl.u32 %v2252, 7
    %v2254 = vsub.s32 1, %v2253
    %v2255 = vrot.slane %v2246, %v2254
    %v2258 = vmul.f32 %v2237, %v2251
    %v2259 = vmul.f32 %v2238, %v2255
    %v2260 = vmul.f32 %v2239, %v2251
    %v2261 = vmul.f32 %v2240, %v2255
    %v2262 = vmul.f32 %v2241, %v2251
    %v2263 = vmul.f32 %v2242, %v2255
    %v2264 = vmul.f32 %v2243, %v2251
    %v2265 = vmul.f32 %v2244, %v2255
    %s2266 = scalar_lea.vmem [#allocation13], 21
    %v2267 = vld [vmem:[%s2266] ss:$8 sm:$0x3]
    %v2269 = vlaneseq
    %v2270 = vshrl.u32 %v2269, 7
    %v2271 = vsub.s32 0, %v2270
    %v2272 = vrot.slane %v2267, %v2271
    %v2273 = vlaneseq
    %v2274 = vshrl.u32 %v2273, 7
    %v2275 = vsub.s32 1, %v2274
    %v2276 = vrot.slane %v2267, %v2275
    %v2279 = vadd.f32 %v2258, %v2272
    %v2280 = vadd.f32 %v2259, %v2276
    %v2281 = vadd.f32 %v2260, %v2272
    %v2282 = vadd.f32 %v2261, %v2276
    %v2283 = vadd.f32 %v2262, %v2272
    %v2284 = vadd.f32 %v2263, %v2276
    %v2285 = vadd.f32 %v2264, %v2272
    %v2286 = vadd.f32 %v2265, %v2276
    %v2287 = vmax.f32 %v2279, 0.0
    %v2288 = vmax.f32 %v2280, 0.0
    %v2289 = vmax.f32 %v2281, 0.0
    %v2290 = vmax.f32 %v2282, 0.0
    %v2291 = vmax.f32 %v2283, 0.0
    %v2292 = vmax.f32 %v2284, 0.0
    %v2293 = vmax.f32 %v2285, 0.0
    %v2294 = vmax.f32 %v2286, 0.0
    %v2295 = vpack.c.bf16 %v2289, %v2287
    %v2296 = vpack.c.bf16 %v2290, %v2288
    %v2297 = vpack.c.bf16 %v2293, %v2291
    %v2298 = vpack.c.bf16 %v2294, %v2292
    %vm2299 = vcmask 1040384
    %vm2300 = vcmask 782340
    %vm2301 = vmor %vm2300, %vm2299
    %2302 = vst.msk [vmem:[#allocation5] sm:$0x11] %vm2301, 0
    %vm2303 = vcmask 1042434
    %vm2304 = vcmask 784390
    %vm2305 = vmor %vm2304, %vm2303
    %2306 = vst.msk [vmem:[#allocation5 + $0x8] sm:$0x44] %vm2305, 0
    %v2309 = vunpack.c.l.b16 %v2295
    %v2310 = vunpack.c.l.b16 %v2296
    %v2311 = vunpack.c.h.b16 %v2295
    %v2312 = vunpack.c.h.b16 %v2296
    %v2313 = vpack.c.b16 %v2310, %v2309
    %v2314 = vpack.c.b16 %v2312, %v2311
    %v2315 = vrot.slane %v2313, 7
    %v2316 = vrot.slane %v2315, 4
    %v2317 = vrot.slane %v2314, 7
    %v2318 = vsel %vm826, %v2316, %v2317
    %vm2321 = vcmask 1043457
    %vm2322 = vcmask 785413
    %vm2323 = vmor %vm2322, %vm2321
    %2324 = vst.msk [vmem:[#allocation5] sm:$0xee] %vm2323, %v2315
    %vm2325 = vcmask 783364
    %vm2326 = vmor %vm2325, %vm1479
    %2327 = vst.msk [vmem:[#allocation5 + $0x8] sm:$0x33] %vm2326, %v2318
    %2328 = vst.msk [vmem:[#allocation5 + $0x20] sm:$0x11] %vm2301, 0
    %2329 = vst.msk [vmem:[#allocation5 + $0x28] sm:$0x44] %vm2305, 0
    %v2332 = vunpack.c.l.b16 %v2297
    %v2333 = vunpack.c.l.b16 %v2298
    %v2334 = vunpack.c.h.b16 %v2297
    %v2335 = vunpack.c.h.b16 %v2298
    %v2336 = vpack.c.b16 %v2333, %v2332
    %v2337 = vpack.c.b16 %v2335, %v2334
    %v2338 = vrot.slane %v2336, 7
    %v2339 = vrot.slane %v2338, 4
    %v2340 = vrot.slane %v2337, 7
    %v2341 = vsel %vm826, %v2339, %v2340
    %2344 = vst.msk [vmem:[#allocation5 + $0x20] sm:$0xee] %vm2323, %v2338
    %2345 = vst.msk [vmem:[#allocation5 + $0x28] sm:$0x33] %vm2326, %v2341
    %v2346 = vld [vmem:[#allocation5] sm:$0xff]
    %v2347 = vld [vmem:[#allocation5 + $0x8] sm:$0xff]
    %v2348 = vld [vmem:[#allocation5 + $0x10] sm:$0xff]
    %v2349 = vld [vmem:[#allocation5 + $0x18] sm:$0xff]
    %v2350 = vld [vmem:[#allocation5 + $0x20] sm:$0xff]
    %v2351 = vld [vmem:[#allocation5 + $0x28] sm:$0x33]
    %v2352 = vld [vmem:[#allocation11 + $0x570] sm:$0xff]
    %v2353 = vld [vmem:[#allocation11 + $0x578] sm:$0xff]
    %v2354 = vld [vmem:[#allocation11 + $0x580] sm:$0xff]
    %v2355 = vld [vmem:[#allocation11 + $0x588] sm:$0xff]
    %v2356 = vld [vmem:[#allocation11 + $0x590] sm:$0xff]
    %v2357 = vld [vmem:[#allocation11 + $0x598] sm:$0xff]
    %v2358 = vld [vmem:[#allocation11 + $0x5a0] sm:$0xff]
    %v2359 = vld [vmem:[#allocation11 + $0x5a8] sm:$0xff]
    %v2360 = vld [vmem:[#allocation11 + $0x5b0] sm:$0xff]
    %v2361 = vld [vmem:[#allocation11 + $0x5b8] sm:$0xff]
    %v2362 = vld [vmem:[#allocation11 + $0x5c0] sm:$0xff]
    %v2363 = vld [vmem:[#allocation11 + $0x5c8] sm:$0xff]
    %v2364 = vld [vmem:[#allocation11 + $0x5d0] sm:$0xff]
    %v2365 = vld [vmem:[#allocation11 + $0x5d8] sm:$0xff]
    %v2366 = vld [vmem:[#allocation11 + $0x5e0] sm:$0xff]
    %v2367 = vld [vmem:[#allocation11 + $0x5e8] sm:$0xff]
    %v2368 = vld [vmem:[#allocation11 + $0x5f0] sm:$0xff]
    %v2369 = vld [vmem:[#allocation11 + $0x5f8] sm:$0xff]
    %v2370 = vld [vmem:[#allocation11 + $0x600] sm:$0xff]
    %v2371 = vld [vmem:[#allocation11 + $0x608] sm:$0xff]
    %v2372 = vld [vmem:[#allocation11 + $0x610] sm:$0xff]
    %v2373 = vld [vmem:[#allocation11 + $0x618] sm:$0xff]
    %v2374 = vld [vmem:[#allocation11 + $0x620] sm:$0xff]
    %v2375 = vld [vmem:[#allocation11 + $0x628] sm:$0xff]
    %v2376 = vld [vmem:[#allocation11 + $0x630] sm:$0xff]
    %v2377 = vld [vmem:[#allocation11 + $0x638] sm:$0xff]
    %v2378 = vld [vmem:[#allocation11 + $0x640] sm:$0xff]
    %v2379 = vld [vmem:[#allocation11 + $0x648] sm:$0xff]
    %v2380 = vld [vmem:[#allocation5] sm:$0xee]
    %v2381 = vld [vmem:[#allocation11 + $0x650] sm:$0xff]
    %v2382 = vld [vmem:[#allocation11 + $0x658] sm:$0xff]
    %v2383 = vld [vmem:[#allocation11 + $0x660] sm:$0xff]
    %v2384 = vld [vmem:[#allocation11 + $0x668] sm:$0xff]
    %v2385 = vld [vmem:[#allocation11 + $0x670] sm:$0xff]
    %v2386 = vld [vmem:[#allocation11 + $0x678] sm:$0xff]
    %v2387 = vld [vmem:[#allocation11 + $0x680] sm:$0xff]
    %v2388 = vld [vmem:[#allocation11 + $0x688] sm:$0xff]
    %v2389 = vld [vmem:[#allocation11 + $0x690] sm:$0xff]
    %v2390 = vld [vmem:[#allocation11 + $0x698] sm:$0xff]
    %v2391 = vld [vmem:[#allocation11 + $0x6a0] sm:$0xff]
    %v2392 = vld [vmem:[#allocation11 + $0x6a8] sm:$0xff]
    %v2393 = vld [vmem:[#allocation11 + $0x6b0] sm:$0xff]
    %v2394 = vld [vmem:[#allocation11 + $0x6b8] sm:$0xff]
    %v2395 = vld [vmem:[#allocation11 + $0x6c0] sm:$0xff]
    %v2396 = vld [vmem:[#allocation11 + $0x6c8] sm:$0xff]
    %v2397 = vld [vmem:[#allocation11 + $0x6d0] sm:$0xff]
    %v2398 = vld [vmem:[#allocation11 + $0x6d8] sm:$0xff]
    %v2399 = vld [vmem:[#allocation11 + $0x6e0] sm:$0xff]
    %v2400 = vld [vmem:[#allocation11 + $0x6e8] sm:$0xff]
    %v2401 = vld [vmem:[#allocation11 + $0x6f0] sm:$0xff]
    %v2402 = vld [vmem:[#allocation11 + $0x6f8] sm:$0xff]
    %v2403 = vld [vmem:[#allocation11 + $0x700] sm:$0xff]
    %v2404 = vld [vmem:[#allocation11 + $0x708] sm:$0xff]
    %v2405 = vld [vmem:[#allocation11 + $0x710] sm:$0xff]
    %v2406 = vld [vmem:[#allocation11 + $0x718] sm:$0xff]
    %v2407 = vld [vmem:[#allocation11 + $0x720] sm:$0xff]
    %v2408 = vld [vmem:[#allocation11 + $0x728] sm:$0xff]
    %v2415 = vunpack.c.l.b16 %v2380
    %v2416 = vunpack.c.h.b16 %v2380
    %v2417 = vunpack.c.l.b16 %v2347
    %v2418 = vunpack.c.h.b16 %v2347
    %v2419 = vunpack.c.l.b16 %v2348
    %v2420 = vunpack.c.h.b16 %v2348
    %v2421 = vunpack.c.l.b16 %v2349
    %v2422 = vunpack.c.h.b16 %v2349
    %v2423 = vunpack.c.l.b16 %v2350
    %v2424 = vunpack.c.h.b16 %v2350
    %v2425 = vunpack.c.l.b16 %v2351
    %v2426 = vunpack.c.h.b16 %v2351
    %v2427 = vpack.c.b16 %v2417, %v2415
    %v2428 = vpack.c.b16 %v2418, %v2416
    %v2429 = vpack.c.b16 %v2421, %v2419
    %v2430 = vpack.c.b16 %v2422, %v2420
    %v2431 = vpack.c.b16 %v2425, %v2423
    %v2432 = vpack.c.b16 %v2426, %v2424
    %v2433 = vrot.slane %v2427, 1
    %v2434 = vrot.slane %v2429, 1
    %v2435 = vsel %vm259, %v2433, %v2434
    %v2436 = vrot.slane %v2428, 1
    %v2437 = vrot.slane %v2430, 1
    %v2438 = vsel %vm259, %v2436, %v2437
    %v2439 = vrot.slane %v2431, 1
    %v2440 = vsel %vm259, %v2434, %v2439
    %v2441 = vrot.slane %v2432, 1
    %v2442 = vsel %vm259, %v2437, %v2441
    %v2474 = vunpack.c.l.b16 %v2381
    %v2475 = vunpack.c.h.b16 %v2381
    %v2476 = vunpack.c.l.b16 %v2382
    %v2477 = vunpack.c.h.b16 %v2382
    %v2478 = vunpack.c.l.b16 %v2383
    %v2479 = vunpack.c.h.b16 %v2383
    %v2480 = vunpack.c.l.b16 %v2384
    %v2481 = vunpack.c.h.b16 %v2384
    %v2482 = vunpack.c.l.b16 %v2385
    %v2483 = vunpack.c.h.b16 %v2385
    %v2484 = vunpack.c.l.b16 %v2386
    %v2485 = vunpack.c.h.b16 %v2386
    %v2486 = vunpack.c.l.b16 %v2387
    %v2487 = vunpack.c.h.b16 %v2387
    %v2488 = vunpack.c.l.b16 %v2388
    %v2489 = vunpack.c.h.b16 %v2388
    %v2490 = vunpack.c.l.b16 %v2389
    %v2491 = vunpack.c.h.b16 %v2389
    %v2492 = vunpack.c.l.b16 %v2390
    %v2493 = vunpack.c.h.b16 %v2390
    %v2494 = vunpack.c.l.b16 %v2391
    %v2495 = vunpack.c.h.b16 %v2391
    %v2496 = vunpack.c.l.b16 %v2392
    %v2497 = vunpack.c.h.b16 %v2392
    %v2498 = vunpack.c.l.b16 %v2393
    %v2499 = vunpack.c.h.b16 %v2393
    %v2500 = vunpack.c.l.b16 %v2394
    %v2501 = vunpack.c.h.b16 %v2394
    %v2502 = vunpack.c.l.b16 %v2395
    %v2503 = vunpack.c.h.b16 %v2395
    %v2504 = vunpack.c.l.b16 %v2396
    %v2505 = vunpack.c.h.b16 %v2396
    %v2506 = vunpack.c.l.b16 %v2397
    %v2507 = vunpack.c.h.b16 %v2397
    %v2508 = vunpack.c.l.b16 %v2398
    %v2509 = vunpack.c.h.b16 %v2398
    %v2510 = vunpack.c.l.b16 %v2399
    %v2511 = vunpack.c.h.b16 %v2399
    %v2512 = vunpack.c.l.b16 %v2400
    %v2513 = vunpack.c.h.b16 %v2400
    %v2514 = vunpack.c.l.b16 %v2401
    %v2515 = vunpack.c.h.b16 %v2401
    %v2516 = vunpack.c.l.b16 %v2402
    %v2517 = vunpack.c.h.b16 %v2402
    %v2518 = vunpack.c.l.b16 %v2403
    %v2519 = vunpack.c.h.b16 %v2403
    %v2520 = vunpack.c.l.b16 %v2404
    %v2521 = vunpack.c.h.b16 %v2404
    %v2522 = vunpack.c.l.b16 %v2405
    %v2523 = vunpack.c.h.b16 %v2405
    %v2524 = vunpack.c.l.b16 %v2406
    %v2525 = vunpack.c.h.b16 %v2406
    %v2526 = vunpack.c.l.b16 %v2407
    %v2527 = vunpack.c.h.b16 %v2407
    %v2528 = vunpack.c.l.b16 %v2408
    %v2529 = vunpack.c.h.b16 %v2408
    %v2530 = vpack.c.b16 %v2476, %v2474
    %v2531 = vpack.c.b16 %v2477, %v2475
    %v2532 = vpack.c.b16 %v2480, %v2478
    %v2533 = vpack.c.b16 %v2481, %v2479
    %v2534 = vpack.c.b16 %v2484, %v2482
    %v2535 = vpack.c.b16 %v2485, %v2483
    %v2536 = vpack.c.b16 %v2488, %v2486
    %v2537 = vpack.c.b16 %v2489, %v2487
    %v2538 = vpack.c.b16 %v2492, %v2490
    %v2539 = vpack.c.b16 %v2493, %v2491
    %v2540 = vpack.c.b16 %v2496, %v2494
    %v2541 = vpack.c.b16 %v2497, %v2495
    %v2542 = vpack.c.b16 %v2500, %v2498
    %v2543 = vpack.c.b16 %v2501, %v2499
    %v2544 = vpack.c.b16 %v2504, %v2502
    %v2545 = vpack.c.b16 %v2505, %v2503
    %v2546 = vpack.c.b16 %v2508, %v2506
    %v2547 = vpack.c.b16 %v2509, %v2507
    %v2548 = vpack.c.b16 %v2512, %v2510
    %v2549 = vpack.c.b16 %v2513, %v2511
    %v2550 = vpack.c.b16 %v2516, %v2514
    %v2551 = vpack.c.b16 %v2517, %v2515
    %v2552 = vpack.c.b16 %v2520, %v2518
    %v2553 = vpack.c.b16 %v2521, %v2519
    %v2554 = vpack.c.b16 %v2524, %v2522
    %v2555 = vpack.c.b16 %v2525, %v2523
    %v2556 = vpack.c.b16 %v2528, %v2526
    %v2557 = vpack.c.b16 %v2529, %v2527
    %vm2586 = vcmask 785408
    %v2588 = vsel %vm2586, %v2438, 0
    %v2591 = vsel %vm2586, %v2442, 0
    %v2594 = vsel %vm2586, %v2441, 0
    %2596 = vmatprep.subr.bf16.mxu0 %v2545
    %2597 = vmatpush1.bf16.msra.mxu0 %v2544
    %2598 = vmatprep.subr.bf16.mxu0 %v2543
    %2599 = vmatpush1.bf16.msra.mxu0 %v2542
    %2600 = vmatprep.subr.bf16.mxu0 %v2541
    %2601 = vmatpush1.bf16.msra.mxu0 %v2540
    %2602 = vmatprep.subr.bf16.mxu0 %v2539
    %2603 = vmatpush1.bf16.msra.mxu0 %v2538
    %2604 = vmatprep.subr.bf16.mxu0 %v2537
    %2605 = vmatpush1.bf16.msra.mxu0 %v2536
    %2606 = vmatprep.subr.bf16.mxu0 %v2535
    %2607 = vmatpush1.bf16.msra.mxu0 %v2534
    %2608 = vmatprep.subr.bf16.mxu0 %v2533
    %2609 = vmatpush1.bf16.msra.mxu0 %v2532
    %2610 = vmatprep.subr.bf16.mxu0 %v2531
    %2611 = vmatpush1.bf16.msra.mxu0 %v2530
    %2612 = vmatprep.subr.bf16.mxu0 0
    %2613 = vmatpush2.bf16.msra.mxu0 0
    %2614 = vmatprep.subr.bf16.mxu0 0
    %2615 = vmatpush2.bf16.msra.mxu0 0
    %2616 = vmatprep.subr.bf16.mxu0 %v2557
    %2617 = vmatpush2.bf16.msra.mxu0 %v2556
    %2618 = vmatprep.subr.bf16.mxu0 %v2555
    %2619 = vmatpush2.bf16.msra.mxu0 %v2554
    %2620 = vmatprep.subr.bf16.mxu0 %v2553
    %2621 = vmatpush2.bf16.msra.mxu0 %v2552
    %2622 = vmatprep.subr.bf16.mxu0 %v2551
    %2623 = vmatpush2.bf16.msra.mxu0 %v2550
    %2624 = vmatprep.subr.bf16.mxu0 %v2549
    %2625 = vmatpush2.bf16.msra.mxu0 %v2548
    %2626 = vmatprep.subr.bf16.mxu0 %v2547
    %2627 = vmatpush2.bf16.msra.mxu0 %v2546
    %2628 = vmatprep.mubr.bf16.mxu0 %v2588
    %2629 = vmatmul.mubr.bf16.gmra.mxu0 %v2435
    %v2630 = vpop.f32.mrf.mxu0
    %v2631 = vadd.f32 0.0, %v2630
    %v2632 = vpop.f32.mrf.mxu0
    %v2633 = vadd.f32 0.0, %v2632
    %v2634 = vpop.f32.mrf.mxu0
    %v2635 = vadd.f32 0.0, %v2634
    %v2636 = vpop.f32.mrf.mxu0
    %v2637 = vadd.f32 0.0, %v2636
    %2638 = vmatprep.mubr.bf16.mxu0 %v2591
    %2639 = vmatmul.mubr.bf16.gmra.mxu0 %v2440
    %v2640 = vpop.f32.mrf.mxu0
    %v2641 = vpop.f32.mrf.mxu0
    %v2642 = vpop.f32.mrf.mxu0
    %v2643 = vpop.f32.mrf.mxu0
    %2644 = vmatprep.mubr.bf16.mxu0 %v2594
    %2645 = vmatmul.mubr.bf16.gmra.mxu0 %v2439
    %v2646 = vpop.f32.mrf.mxu0
    %v2647 = vadd.f32 0.0, %v2646
    %v2648 = vpop.f32.mrf.mxu0
    %v2649 = vadd.f32 0.0, %v2648
    %v2650 = vpop.f32.mrf.mxu0
    %v2651 = vadd.f32 0.0, %v2650
    %v2652 = vpop.f32.mrf.mxu0
    %v2653 = vadd.f32 0.0, %v2652
    %2654 = vdwg.mxu0
    %v2656 = vunpack.c.l.b16 %v2346
    %v2657 = vunpack.c.h.b16 %v2346
    %v2658 = vpack.c.b16 %v2417, %v2656
    %v2659 = vpack.c.b16 %v2418, %v2657
    %v2661 = vshrl.u32 %v2658, 16
    %v2663 = vshll.u32 %v2658, 16
    %v2665 = vrot.slane %v2663, 1
    %v2666 = vor.u32 %v2661, %v2665
    %v2668 = vshll.u32 %v2429, 16
    %v2670 = vrot.slane %v2668, 1
    %v2671 = vsel %vm73, %v2666, %v2670
    %v2673 = vshrl.u32 %v2659, 16
    %v2675 = vshll.u32 %v2659, 16
    %v2677 = vrot.slane %v2675, 1
    %v2678 = vor.u32 %v2673, %v2677
    %v2680 = vshll.u32 %v2430, 16
    %v2682 = vrot.slane %v2680, 1
    %v2683 = vsel %vm73, %v2678, %v2682
    %v2684 = vshrl.u32 %v2429, 16
    %v2686 = vor.u32 %v2684, %v2670
    %v2688 = vshll.u32 %v2431, 16
    %v2690 = vrot.slane %v2688, 1
    %v2691 = vsel %vm73, %v2686, %v2690
    %v2692 = vshrl.u32 %v2430, 16
    %v2694 = vor.u32 %v2692, %v2682
    %v2696 = vshll.u32 %v2432, 16
    %v2698 = vrot.slane %v2696, 1
    %v2699 = vsel %vm73, %v2694, %v2698
    %v2700 = vshrl.u32 %v2431, 16
    %v2702 = vor.u32 %v2700, %v2690
    %v2703 = vshrl.u32 %v2432, 16
    %v2705 = vor.u32 %v2703, %v2698
    %v2737 = vunpack.c.l.b16 %v2352
    %v2738 = vunpack.c.h.b16 %v2352
    %v2739 = vunpack.c.l.b16 %v2353
    %v2740 = vunpack.c.h.b16 %v2353
    %v2741 = vunpack.c.l.b16 %v2354
    %v2742 = vunpack.c.h.b16 %v2354
    %v2743 = vunpack.c.l.b16 %v2355
    %v2744 = vunpack.c.h.b16 %v2355
    %v2745 = vunpack.c.l.b16 %v2356
    %v2746 = vunpack.c.h.b16 %v2356
    %v2747 = vunpack.c.l.b16 %v2357
    %v2748 = vunpack.c.h.b16 %v2357
    %v2749 = vunpack.c.l.b16 %v2358
    %v2750 = vunpack.c.h.b16 %v2358
    %v2751 = vunpack.c.l.b16 %v2359
    %v2752 = vunpack.c.h.b16 %v2359
    %v2753 = vunpack.c.l.b16 %v2360
    %v2754 = vunpack.c.h.b16 %v2360
    %v2755 = vunpack.c.l.b16 %v2361
    %v2756 = vunpack.c.h.b16 %v2361
    %v2757 = vunpack.c.l.b16 %v2362
    %v2758 = vunpack.c.h.b16 %v2362
    %v2759 = vunpack.c.l.b16 %v2363
    %v2760 = vunpack.c.h.b16 %v2363
    %v2761 = vunpack.c.l.b16 %v2364
    %v2762 = vunpack.c.h.b16 %v2364
    %v2763 = vunpack.c.l.b16 %v2365
    %v2764 = vunpack.c.h.b16 %v2365
    %v2765 = vunpack.c.l.b16 %v2366
    %v2766 = vunpack.c.h.b16 %v2366
    %v2767 = vunpack.c.l.b16 %v2367
    %v2768 = vunpack.c.h.b16 %v2367
    %v2769 = vunpack.c.l.b16 %v2368
    %v2770 = vunpack.c.h.b16 %v2368
    %v2771 = vunpack.c.l.b16 %v2369
    %v2772 = vunpack.c.h.b16 %v2369
    %v2773 = vunpack.c.l.b16 %v2370
    %v2774 = vunpack.c.h.b16 %v2370
    %v2775 = vunpack.c.l.b16 %v2371
    %v2776 = vunpack.c.h.b16 %v2371
    %v2777 = vunpack.c.l.b16 %v2372
    %v2778 = vunpack.c.h.b16 %v2372
    %v2779 = vunpack.c.l.b16 %v2373
    %v2780 = vunpack.c.h.b16 %v2373
    %v2781 = vunpack.c.l.b16 %v2374
    %v2782 = vunpack.c.h.b16 %v2374
    %v2783 = vunpack.c.l.b16 %v2375
    %v2784 = vunpack.c.h.b16 %v2375
    %v2785 = vunpack.c.l.b16 %v2376
    %v2786 = vunpack.c.h.b16 %v2376
    %v2787 = vunpack.c.l.b16 %v2377
    %v2788 = vunpack.c.h.b16 %v2377
    %v2789 = vunpack.c.l.b16 %v2378
    %v2790 = vunpack.c.h.b16 %v2378
    %v2791 = vunpack.c.l.b16 %v2379
    %v2792 = vunpack.c.h.b16 %v2379
    %v2793 = vpack.c.b16 %v2739, %v2737
    %v2794 = vpack.c.b16 %v2740, %v2738
    %v2795 = vpack.c.b16 %v2743, %v2741
    %v2796 = vpack.c.b16 %v2744, %v2742
    %v2797 = vpack.c.b16 %v2747, %v2745
    %v2798 = vpack.c.b16 %v2748, %v2746
    %v2799 = vpack.c.b16 %v2751, %v2749
    %v2800 = vpack.c.b16 %v2752, %v2750
    %v2801 = vpack.c.b16 %v2755, %v2753
    %v2802 = vpack.c.b16 %v2756, %v2754
    %v2803 = vpack.c.b16 %v2759, %v2757
    %v2804 = vpack.c.b16 %v2760, %v2758
    %v2805 = vpack.c.b16 %v2763, %v2761
    %v2806 = vpack.c.b16 %v2764, %v2762
    %v2807 = vpack.c.b16 %v2767, %v2765
    %v2808 = vpack.c.b16 %v2768, %v2766
    %v2809 = vpack.c.b16 %v2771, %v2769
    %v2810 = vpack.c.b16 %v2772, %v2770
    %v2811 = vpack.c.b16 %v2775, %v2773
    %v2812 = vpack.c.b16 %v2776, %v2774
    %v2813 = vpack.c.b16 %v2779, %v2777
    %v2814 = vpack.c.b16 %v2780, %v2778
    %v2815 = vpack.c.b16 %v2783, %v2781
    %v2816 = vpack.c.b16 %v2784, %v2782
    %v2817 = vpack.c.b16 %v2787, %v2785
    %v2818 = vpack.c.b16 %v2788, %v2786
    %v2819 = vpack.c.b16 %v2791, %v2789
    %v2820 = vpack.c.b16 %v2792, %v2790
    %v2850 = vsel %vm2586, %v2683, 0
    %v2853 = vsel %vm2586, %v2699, 0
    %v2856 = vsel %vm2586, %v2705, 0
    %2858 = vmatprep.subr.bf16.mxu0 %v2808
    %2859 = vmatpush1.bf16.msra.mxu0 %v2807
    %2860 = vmatprep.subr.bf16.mxu0 %v2806
    %2861 = vmatpush1.bf16.msra.mxu0 %v2805
    %2862 = vmatprep.subr.bf16.mxu0 %v2804
    %2863 = vmatpush1.bf16.msra.mxu0 %v2803
    %2864 = vmatprep.subr.bf16.mxu0 %v2802
    %2865 = vmatpush1.bf16.msra.mxu0 %v2801
    %2866 = vmatprep.subr.bf16.mxu0 %v2800
    %2867 = vmatpush1.bf16.msra.mxu0 %v2799
    %2868 = vmatprep.subr.bf16.mxu0 %v2798
    %2869 = vmatpush1.bf16.msra.mxu0 %v2797
    %2870 = vmatprep.subr.bf16.mxu0 %v2796
    %2871 = vmatpush1.bf16.msra.mxu0 %v2795
    %2872 = vmatprep.subr.bf16.mxu0 %v2794
    %2873 = vmatpush1.bf16.msra.mxu0 %v2793
    %2874 = vmatprep.subr.bf16.mxu0 0
    %2875 = vmatpush2.bf16.msra.mxu0 0
    %2876 = vmatprep.subr.bf16.mxu0 0
    %2877 = vmatpush2.bf16.msra.mxu0 0
    %2878 = vmatprep.subr.bf16.mxu0 %v2820
    %2879 = vmatpush2.bf16.msra.mxu0 %v2819
    %2880 = vmatprep.subr.bf16.mxu0 %v2818
    %2881 = vmatpush2.bf16.msra.mxu0 %v2817
    %2882 = vmatprep.subr.bf16.mxu0 %v2816
    %2883 = vmatpush2.bf16.msra.mxu0 %v2815
    %2884 = vmatprep.subr.bf16.mxu0 %v2814
    %2885 = vmatpush2.bf16.msra.mxu0 %v2813
    %2886 = vmatprep.subr.bf16.mxu0 %v2812
    %2887 = vmatpush2.bf16.msra.mxu0 %v2811
    %2888 = vmatprep.subr.bf16.mxu0 %v2810
    %2889 = vmatpush2.bf16.msra.mxu0 %v2809
    %2890 = vmatprep.mubr.bf16.mxu0 %v2850
    %2891 = vmatmul.mubr.bf16.gmra.mxu0 %v2671
    %v2892 = vpop.f32.mrf.mxu0
    %v2893 = vadd.f32 %v2631, %v2892
    %v2894 = vpop.f32.mrf.mxu0
    %v2895 = vadd.f32 %v2633, %v2894
    %v2896 = vpop.f32.mrf.mxu0
    %v2897 = vadd.f32 %v2635, %v2896
    %v2898 = vpop.f32.mrf.mxu0
    %v2899 = vadd.f32 %v2637, %v2898
    %2900 = vmatprep.mubr.bf16.mxu0 %v2853
    %2901 = vmatmul.mubr.bf16.gmra.mxu0 %v2691
    %v2902 = vpop.f32.mrf.mxu0
    %v2903 = vpop.f32.mrf.mxu0
    %v2904 = vpop.f32.mrf.mxu0
    %v2905 = vpop.f32.mrf.mxu0
    %2906 = vmatprep.mubr.bf16.mxu0 %v2856
    %2907 = vmatmul.mubr.bf16.gmra.mxu0 %v2702
    %v2908 = vpop.f32.mrf.mxu0
    %v2909 = vadd.f32 %v2647, %v2908
    %v2910 = vpop.f32.mrf.mxu0
    %v2911 = vadd.f32 %v2649, %v2910
    %v2912 = vpop.f32.mrf.mxu0
    %v2913 = vadd.f32 %v2651, %v2912
    %v2914 = vpop.f32.mrf.mxu0
    %v2915 = vadd.f32 %v2653, %v2914
    %2916 = vdwg.mxu0
    %v2917 = vld [vmem:[#allocation5 + $0x28] sm:$0x77]
    %v2918 = vld [vmem:[#allocation11 + $0x730] sm:$0xff]
    %v2919 = vld [vmem:[#allocation11 + $0x738] sm:$0xff]
    %v2920 = vld [vmem:[#allocation11 + $0x740] sm:$0xff]
    %v2921 = vld [vmem:[#allocation11 + $0x748] sm:$0xff]
    %v2922 = vld [vmem:[#allocation11 + $0x750] sm:$0xff]
    %v2923 = vld [vmem:[#allocation11 + $0x758] sm:$0xff]
    %v2924 = vld [vmem:[#allocation11 + $0x760] sm:$0xff]
    %v2925 = vld [vmem:[#allocation11 + $0x768] sm:$0xff]
    %v2926 = vld [vmem:[#allocation11 + $0x770] sm:$0xff]
    %v2927 = vld [vmem:[#allocation11 + $0x778] sm:$0xff]
    %v2928 = vld [vmem:[#allocation11 + $0x780] sm:$0xff]
    %v2929 = vld [vmem:[#allocation11 + $0x788] sm:$0xff]
    %v2930 = vld [vmem:[#allocation11 + $0x790] sm:$0xff]
    %v2931 = vld [vmem:[#allocation11 + $0x798] sm:$0xff]
    %v2932 = vld [vmem:[#allocation11 + $0x7a0] sm:$0xff]
    %v2933 = vld [vmem:[#allocation11 + $0x7a8] sm:$0xff]
    %v2934 = vld [vmem:[#allocation11 + $0x7b0] sm:$0xff]
    %v2935 = vld [vmem:[#allocation11 + $0x7b8] sm:$0xff]
    %v2936 = vld [vmem:[#allocation11 + $0x7c0] sm:$0xff]
    %v2937 = vld [vmem:[#allocation11 + $0x7c8] sm:$0xff]
    %v2938 = vld [vmem:[#allocation11 + $0x7d0] sm:$0xff]
    %v2939 = vld [vmem:[#allocation11 + $0x7d8] sm:$0xff]
    %v2940 = vld [vmem:[#allocation11 + $0x7e0] sm:$0xff]
    %v2941 = vld [vmem:[#allocation11 + $0x7e8] sm:$0xff]
    %v2942 = vld [vmem:[#allocation11 + $0x7f0] sm:$0xff]
    %v2943 = vld [vmem:[#allocation11 + $0x7f8] sm:$0xff]
    %v2944 = vld [vmem:[#allocation11 + $0x800] sm:$0xff]
    %v2945 = vld [vmem:[#allocation11 + $0x808] sm:$0xff]
    %v2947 = vunpack.c.l.b16 %v2917
    %v2948 = vunpack.c.h.b16 %v2917
    %v2949 = vpack.c.b16 %v2947, %v2423
    %v2950 = vpack.c.b16 %v2948, %v2424
    %v2952 = vshrl.u32 %v2427, 16
    %v2954 = vrot.slane %v2952, 1
    %v2955 = vshll.u32 %v2427, 16
    %v2957 = vrot.slane %v2955, 2
    %v2958 = vor.u32 %v2954, %v2957
    %v2959 = vrot.slane %v2684, 1
    %v2960 = vrot.slane %v2668, 2
    %v2961 = vor.u32 %v2959, %v2960
    %v2962 = vsel %vm1239, %v2958, %v2961
    %v2964 = vshrl.u32 %v2428, 16
    %v2966 = vrot.slane %v2964, 1
    %v2967 = vshll.u32 %v2428, 16
    %v2969 = vrot.slane %v2967, 2
    %v2970 = vor.u32 %v2966, %v2969
    %v2971 = vrot.slane %v2692, 1
    %v2972 = vrot.slane %v2680, 2
    %v2973 = vor.u32 %v2971, %v2972
    %v2974 = vsel %vm1239, %v2970, %v2973
    %v2976 = vshrl.u32 %v2949, 16
    %v2978 = vrot.slane %v2976, 1
    %v2979 = vshll.u32 %v2949, 16
    %v2981 = vrot.slane %v2979, 2
    %v2982 = vor.u32 %v2978, %v2981
    %v2983 = vsel %vm1239, %v2961, %v2982
    %v2985 = vshrl.u32 %v2950, 16
    %v2987 = vrot.slane %v2985, 1
    %v2988 = vshll.u32 %v2950, 16
    %v2990 = vrot.slane %v2988, 2
    %v2991 = vor.u32 %v2987, %v2990
    %v2992 = vsel %vm1239, %v2973, %v2991
    %v3024 = vunpack.c.l.b16 %v2918
    %v3025 = vunpack.c.h.b16 %v2918
    %v3026 = vunpack.c.l.b16 %v2919
    %v3027 = vunpack.c.h.b16 %v2919
    %v3028 = vunpack.c.l.b16 %v2920
    %v3029 = vunpack.c.h.b16 %v2920
    %v3030 = vunpack.c.l.b16 %v2921
    %v3031 = vunpack.c.h.b16 %v2921
    %v3032 = vunpack.c.l.b16 %v2922
    %v3033 = vunpack.c.h.b16 %v2922
    %v3034 = vunpack.c.l.b16 %v2923
    %v3035 = vunpack.c.h.b16 %v2923
    %v3036 = vunpack.c.l.b16 %v2924
    %v3037 = vunpack.c.h.b16 %v2924
    %v3038 = vunpack.c.l.b16 %v2925
    %v3039 = vunpack.c.h.b16 %v2925
    %v3040 = vunpack.c.l.b16 %v2926
    %v3041 = vunpack.c.h.b16 %v2926
    %v3042 = vunpack.c.l.b16 %v2927
    %v3043 = vunpack.c.h.b16 %v2927
    %v3044 = vunpack.c.l.b16 %v2928
    %v3045 = vunpack.c.h.b16 %v2928
    %v3046 = vunpack.c.l.b16 %v2929
    %v3047 = vunpack.c.h.b16 %v2929
    %v3048 = vunpack.c.l.b16 %v2930
    %v3049 = vunpack.c.h.b16 %v2930
    %v3050 = vunpack.c.l.b16 %v2931
    %v3051 = vunpack.c.h.b16 %v2931
    %v3052 = vunpack.c.l.b16 %v2932
    %v3053 = vunpack.c.h.b16 %v2932
    %v3054 = vunpack.c.l.b16 %v2933
    %v3055 = vunpack.c.h.b16 %v2933
    %v3056 = vunpack.c.l.b16 %v2934
    %v3057 = vunpack.c.h.b16 %v2934
    %v3058 = vunpack.c.l.b16 %v2935
    %v3059 = vunpack.c.h.b16 %v2935
    %v3060 = vunpack.c.l.b16 %v2936
    %v3061 = vunpack.c.h.b16 %v2936
    %v3062 = vunpack.c.l.b16 %v2937
    %v3063 = vunpack.c.h.b16 %v2937
    %v3064 = vunpack.c.l.b16 %v2938
    %v3065 = vunpack.c.h.b16 %v2938
    %v3066 = vunpack.c.l.b16 %v2939
    %v3067 = vunpack.c.h.b16 %v2939
    %v3068 = vunpack.c.l.b16 %v2940
    %v3069 = vunpack.c.h.b16 %v2940
    %v3070 = vunpack.c.l.b16 %v2941
    %v3071 = vunpack.c.h.b16 %v2941
    %v3072 = vunpack.c.l.b16 %v2942
    %v3073 = vunpack.c.h.b16 %v2942
    %v3074 = vunpack.c.l.b16 %v2943
    %v3075 = vunpack.c.h.b16 %v2943
    %v3076 = vunpack.c.l.b16 %v2944
    %v3077 = vunpack.c.h.b16 %v2944
    %v3078 = vunpack.c.l.b16 %v2945
    %v3079 = vunpack.c.h.b16 %v2945
    %v3080 = vpack.c.b16 %v3026, %v3024
    %v3081 = vpack.c.b16 %v3027, %v3025
    %v3082 = vpack.c.b16 %v3030, %v3028
    %v3083 = vpack.c.b16 %v3031, %v3029
    %v3084 = vpack.c.b16 %v3034, %v3032
    %v3085 = vpack.c.b16 %v3035, %v3033
    %v3086 = vpack.c.b16 %v3038, %v3036
    %v3087 = vpack.c.b16 %v3039, %v3037
    %v3088 = vpack.c.b16 %v3042, %v3040
    %v3089 = vpack.c.b16 %v3043, %v3041
    %v3090 = vpack.c.b16 %v3046, %v3044
    %v3091 = vpack.c.b16 %v3047, %v3045
    %v3092 = vpack.c.b16 %v3050, %v3048
    %v3093 = vpack.c.b16 %v3051, %v3049
    %v3094 = vpack.c.b16 %v3054, %v3052
    %v3095 = vpack.c.b16 %v3055, %v3053
    %v3096 = vpack.c.b16 %v3058, %v3056
    %v3097 = vpack.c.b16 %v3059, %v3057
    %v3098 = vpack.c.b16 %v3062, %v3060
    %v3099 = vpack.c.b16 %v3063, %v3061
    %v3100 = vpack.c.b16 %v3066, %v3064
    %v3101 = vpack.c.b16 %v3067, %v3065
    %v3102 = vpack.c.b16 %v3070, %v3068
    %v3103 = vpack.c.b16 %v3071, %v3069
    %v3104 = vpack.c.b16 %v3074, %v3072
    %v3105 = vpack.c.b16 %v3075, %v3073
    %v3106 = vpack.c.b16 %v3078, %v3076
    %v3107 = vpack.c.b16 %v3079, %v3077
    %v3137 = vsel %vm2586, %v2974, 0
    %v3140 = vsel %vm2586, %v2992, 0
    %v3143 = vsel %vm2586, %v2991, 0
    %3145 = vmatprep.subr.bf16.mxu0 %v3095
    %3146 = vmatpush1.bf16.msra.mxu0 %v3094
    %3147 = vmatprep.subr.bf16.mxu0 %v3093
    %3148 = vmatpush1.bf16.msra.mxu0 %v3092
    %3149 = vmatprep.subr.bf16.mxu0 %v3091
    %3150 = vmatpush1.bf16.msra.mxu0 %v3090
    %3151 = vmatprep.subr.bf16.mxu0 %v3089
    %3152 = vmatpush1.bf16.msra.mxu0 %v3088
    %3153 = vmatprep.subr.bf16.mxu0 %v3087
    %3154 = vmatpush1.bf16.msra.mxu0 %v3086
    %3155 = vmatprep.subr.bf16.mxu0 %v3085
    %3156 = vmatpush1.bf16.msra.mxu0 %v3084
    %3157 = vmatprep.subr.bf16.mxu0 %v3083
    %3158 = vmatpush1.bf16.msra.mxu0 %v3082
    %3159 = vmatprep.subr.bf16.mxu0 %v3081
    %3160 = vmatpush1.bf16.msra.mxu0 %v3080
    %3161 = vmatprep.subr.bf16.mxu0 0
    %3162 = vmatpush2.bf16.msra.mxu0 0
    %3163 = vmatprep.subr.bf16.mxu0 0
    %3164 = vmatpush2.bf16.msra.mxu0 0
    %3165 = vmatprep.subr.bf16.mxu0 %v3107
    %3166 = vmatpush2.bf16.msra.mxu0 %v3106
    %3167 = vmatprep.subr.bf16.mxu0 %v3105
    %3168 = vmatpush2.bf16.msra.mxu0 %v3104
    %3169 = vmatprep.subr.bf16.mxu0 %v3103
    %3170 = vmatpush2.bf16.msra.mxu0 %v3102
    %3171 = vmatprep.subr.bf16.mxu0 %v3101
    %3172 = vmatpush2.bf16.msra.mxu0 %v3100
    %3173 = vmatprep.subr.bf16.mxu0 %v3099
    %3174 = vmatpush2.bf16.msra.mxu0 %v3098
    %3175 = vmatprep.subr.bf16.mxu0 %v3097
    %3176 = vmatpush2.bf16.msra.mxu0 %v3096
    %3177 = vmatprep.mubr.bf16.mxu0 %v3137
    %3178 = vmatmul.mubr.bf16.gmra.mxu0 %v2962
    %v3179 = vpop.f32.mrf.mxu0
    %v3180 = vadd.f32 0.0, %v3179
    %v3181 = vpop.f32.mrf.mxu0
    %v3182 = vadd.f32 0.0, %v3181
    %v3183 = vpop.f32.mrf.mxu0
    %v3184 = vadd.f32 0.0, %v3183
    %v3185 = vpop.f32.mrf.mxu0
    %v3186 = vadd.f32 0.0, %v3185
    %3187 = vmatprep.mubr.bf16.mxu0 %v3140
    %3188 = vmatmul.mubr.bf16.gmra.mxu0 %v2983
    %v3189 = vpop.f32.mrf.mxu0
    %v3190 = vpop.f32.mrf.mxu0
    %v3191 = vpop.f32.mrf.mxu0
    %v3192 = vpop.f32.mrf.mxu0
    %3193 = vmatprep.mubr.bf16.mxu0 %v3143
    %3194 = vmatmul.mubr.bf16.gmra.mxu0 %v2982
    %v3195 = vpop.f32.mrf.mxu0
    %v3196 = vadd.f32 0.0, %v3195
    %v3197 = vpop.f32.mrf.mxu0
    %v3198 = vadd.f32 0.0, %v3197
    %v3199 = vpop.f32.mrf.mxu0
    %v3200 = vadd.f32 0.0, %v3199
    %v3201 = vpop.f32.mrf.mxu0
    %v3202 = vadd.f32 0.0, %v3201
    %3203 = vdwg.mxu0
    %v3204 = vadd.f32 %v2893, %v3180
    %v3205 = vadd.f32 %v2895, %v3182
    %v3206 = vadd.f32 %v2897, %v3184
    %v3207 = vadd.f32 %v2899, %v3186
    %v3208 = vadd.f32 %v2909, %v3196
    %v3209 = vadd.f32 %v2911, %v3198
    %v3210 = vadd.f32 %v2913, %v3200
    %v3211 = vadd.f32 %v2915, %v3202
    %s3212 = scalar_lea.vmem [#allocation13], 4
    %v3213 = vld [vmem:[%s3212] ss:$8 sm:$0x3]
    %v3215 = vlaneseq
    %v3216 = vshrl.u32 %v3215, 7
    %v3217 = vsub.s32 0, %v3216
    %v3218 = vrot.slane %v3213, %v3217
    %v3219 = vlaneseq
    %v3220 = vshrl.u32 %v3219, 7
    %v3221 = vsub.s32 1, %v3220
    %v3222 = vrot.slane %v3213, %v3221
    %v3225 = vmul.f32 %v3204, %v3218
    %v3226 = vmul.f32 %v3205, %v3222
    %v3227 = vmul.f32 %v3206, %v3218
    %v3228 = vmul.f32 %v3207, %v3222
    %v3229 = vmul.f32 %v3208, %v3218
    %v3230 = vmul.f32 %v3209, %v3222
    %v3231 = vmul.f32 %v3210, %v3218
    %v3232 = vmul.f32 %v3211, %v3222
    %s3233 = scalar_lea.vmem [#allocation13], 22
    %v3234 = vld [vmem:[%s3233] ss:$8 sm:$0x3]
    %v3236 = vlaneseq
    %v3237 = vshrl.u32 %v3236, 7
    %v3238 = vsub.s32 0, %v3237
    %v3239 = vrot.slane %v3234, %v3238
    %v3240 = vlaneseq
    %v3241 = vshrl.u32 %v3240, 7
    %v3242 = vsub.s32 1, %v3241
    %v3243 = vrot.slane %v3234, %v3242
    %v3246 = vadd.f32 %v3225, %v3239
    %v3247 = vadd.f32 %v3226, %v3243
    %v3248 = vadd.f32 %v3227, %v3239
    %v3249 = vadd.f32 %v3228, %v3243
    %v3250 = vadd.f32 %v3229, %v3239
    %v3251 = vadd.f32 %v3230, %v3243
    %v3252 = vadd.f32 %v3231, %v3239
    %v3253 = vadd.f32 %v3232, %v3243
    %v3254 = vmax.f32 %v3246, 0.0
    %v3255 = vmax.f32 %v3247, 0.0
    %v3256 = vmax.f32 %v3248, 0.0
    %v3257 = vmax.f32 %v3249, 0.0
    %v3258 = vmax.f32 %v3250, 0.0
    %v3259 = vmax.f32 %v3251, 0.0
    %v3260 = vmax.f32 %v3252, 0.0
    %v3261 = vmax.f32 %v3253, 0.0
    %v3262 = vpack.c.bf16 %v3256, %v3254
    %v3263 = vpack.c.bf16 %v3257, %v3255
    %v3264 = vpack.c.bf16 %v3260, %v3258
    %v3265 = vpack.c.bf16 %v3261, %v3259
    %3266 = vst.msk [vmem:[#allocation6] sm:$0x11] %vm2301, 0
    %3267 = vst.msk [vmem:[#allocation6 + $0x8] sm:$0x44] %vm2305, 0
    %v3270 = vunpack.c.l.b16 %v3262
    %v3271 = vunpack.c.l.b16 %v3263
    %v3272 = vunpack.c.h.b16 %v3262
    %v3273 = vunpack.c.h.b16 %v3263
    %v3274 = vpack.c.b16 %v3271, %v3270
    %v3275 = vpack.c.b16 %v3273, %v3272
    %v3276 = vrot.slane %v3274, 7
    %v3277 = vrot.slane %v3276, 4
    %v3278 = vrot.slane %v3275, 7
    %v3279 = vsel %vm826, %v3277, %v3278
    %3282 = vst.msk [vmem:[#allocation6] sm:$0xee] %vm2323, %v3276
    %3283 = vst.msk [vmem:[#allocation6 + $0x8] sm:$0x33] %vm2326, %v3279
    %3284 = vst.msk [vmem:[#allocation6 + $0x20] sm:$0x11] %vm2301, 0
    %3285 = vst.msk [vmem:[#allocation6 + $0x28] sm:$0x44] %vm2305, 0
    %v3288 = vunpack.c.l.b16 %v3264
    %v3289 = vunpack.c.l.b16 %v3265
    %v3290 = vunpack.c.h.b16 %v3264
    %v3291 = vunpack.c.h.b16 %v3265
    %v3292 = vpack.c.b16 %v3289, %v3288
    %v3293 = vpack.c.b16 %v3291, %v3290
    %v3294 = vrot.slane %v3292, 7
    %v3295 = vrot.slane %v3294, 4
    %v3296 = vrot.slane %v3293, 7
    %v3297 = vsel %vm826, %v3295, %v3296
    %3300 = vst.msk [vmem:[#allocation6 + $0x20] sm:$0xee] %vm2323, %v3294
    %3301 = vst.msk [vmem:[#allocation6 + $0x28] sm:$0x33] %vm2326, %v3297
    %v3302 = vld [vmem:[#allocation5] sm:$0xff]
    %v3303 = vld [vmem:[#allocation5 + $0x8] sm:$0xff]
    %v3304 = vld [vmem:[#allocation5 + $0x10] sm:$0xff]
    %v3305 = vld [vmem:[#allocation5 + $0x18] sm:$0xff]
    %v3306 = vld [vmem:[#allocation5 + $0x20] sm:$0xff]
    %v3307 = vld [vmem:[#allocation5 + $0x28] sm:$0x33]
    %v3308 = vld [vmem:[#allocation11 + $0x810] sm:$0xff]
    %v3309 = vld [vmem:[#allocation11 + $0x818] sm:$0xff]
    %v3310 = vld [vmem:[#allocation11 + $0x820] sm:$0xff]
    %v3311 = vld [vmem:[#allocation11 + $0x828] sm:$0xff]
    %v3312 = vld [vmem:[#allocation11 + $0x830] sm:$0xff]
    %v3313 = vld [vmem:[#allocation11 + $0x838] sm:$0xff]
    %v3314 = vld [vmem:[#allocation11 + $0x840] sm:$0xff]
    %v3315 = vld [vmem:[#allocation11 + $0x848] sm:$0xff]
    %v3316 = vld [vmem:[#allocation11 + $0x850] sm:$0xff]
    %v3317 = vld [vmem:[#allocation11 + $0x858] sm:$0xff]
    %v3318 = vld [vmem:[#allocation11 + $0x860] sm:$0xff]
    %v3319 = vld [vmem:[#allocation11 + $0x868] sm:$0xff]
    %v3320 = vld [vmem:[#allocation11 + $0x870] sm:$0xff]
    %v3321 = vld [vmem:[#allocation11 + $0x878] sm:$0xff]
    %v3322 = vld [vmem:[#allocation11 + $0x880] sm:$0xff]
    %v3323 = vld [vmem:[#allocation11 + $0x888] sm:$0xff]
    %v3324 = vld [vmem:[#allocation11 + $0x890] sm:$0xff]
    %v3325 = vld [vmem:[#allocation11 + $0x898] sm:$0xff]
    %v3326 = vld [vmem:[#allocation11 + $0x8a0] sm:$0xff]
    %v3327 = vld [vmem:[#allocation11 + $0x8a8] sm:$0xff]
    %v3328 = vld [vmem:[#allocation11 + $0x8b0] sm:$0xff]
    %v3329 = vld [vmem:[#allocation11 + $0x8b8] sm:$0xff]
    %v3330 = vld [vmem:[#allocation11 + $0x8c0] sm:$0xff]
    %v3331 = vld [vmem:[#allocation11 + $0x8c8] sm:$0xff]
    %v3332 = vld [vmem:[#allocation11 + $0x8d0] sm:$0xff]
    %v3333 = vld [vmem:[#allocation11 + $0x8d8] sm:$0xff]
    %v3334 = vld [vmem:[#allocation11 + $0x8e0] sm:$0xff]
    %v3335 = vld [vmem:[#allocation11 + $0x8e8] sm:$0xff]
    %v3336 = vld [vmem:[#allocation5 + $0x28] sm:$0x77]
    %v3337 = vld [vmem:[#allocation11 + $0x8f0] sm:$0xff]
    %v3338 = vld [vmem:[#allocation11 + $0x8f8] sm:$0xff]
    %v3339 = vld [vmem:[#allocation11 + $0x900] sm:$0xff]
    %v3340 = vld [vmem:[#allocation11 + $0x908] sm:$0xff]
    %v3341 = vld [vmem:[#allocation11 + $0x910] sm:$0xff]
    %v3342 = vld [vmem:[#allocation11 + $0x918] sm:$0xff]
    %v3343 = vld [vmem:[#allocation11 + $0x920] sm:$0xff]
    %v3344 = vld [vmem:[#allocation11 + $0x928] sm:$0xff]
    %v3345 = vld [vmem:[#allocation11 + $0x930] sm:$0xff]
    %v3346 = vld [vmem:[#allocation11 + $0x938] sm:$0xff]
    %v3347 = vld [vmem:[#allocation11 + $0x940] sm:$0xff]
    %v3348 = vld [vmem:[#allocation11 + $0x948] sm:$0xff]
    %v3349 = vld [vmem:[#allocation11 + $0x950] sm:$0xff]
    %v3350 = vld [vmem:[#allocation11 + $0x958] sm:$0xff]
    %v3351 = vld [vmem:[#allocation11 + $0x960] sm:$0xff]
    %v3352 = vld [vmem:[#allocation11 + $0x968] sm:$0xff]
    %v3353 = vld [vmem:[#allocation11 + $0x970] sm:$0xff]
    %v3354 = vld [vmem:[#allocation11 + $0x978] sm:$0xff]
    %v3355 = vld [vmem:[#allocation11 + $0x980] sm:$0xff]
    %v3356 = vld [vmem:[#allocation11 + $0x988] sm:$0xff]
    %v3357 = vld [vmem:[#allocation11 + $0x990] sm:$0xff]
    %v3358 = vld [vmem:[#allocation11 + $0x998] sm:$0xff]
    %v3359 = vld [vmem:[#allocation11 + $0x9a0] sm:$0xff]
    %v3360 = vld [vmem:[#allocation11 + $0x9a8] sm:$0xff]
    %v3361 = vld [vmem:[#allocation11 + $0x9b0] sm:$0xff]
    %v3362 = vld [vmem:[#allocation11 + $0x9b8] sm:$0xff]
    %v3363 = vld [vmem:[#allocation11 + $0x9c0] sm:$0xff]
    %v3364 = vld [vmem:[#allocation11 + $0x9c8] sm:$0xff]
    %v3371 = vunpack.c.l.b16 %v3302
    %v3372 = vunpack.c.h.b16 %v3302
    %v3373 = vunpack.c.l.b16 %v3303
    %v3374 = vunpack.c.h.b16 %v3303
    %v3375 = vunpack.c.l.b16 %v3304
    %v3376 = vunpack.c.h.b16 %v3304
    %v3377 = vunpack.c.l.b16 %v3305
    %v3378 = vunpack.c.h.b16 %v3305
    %v3379 = vunpack.c.l.b16 %v3306
    %v3380 = vunpack.c.h.b16 %v3306
    %v3381 = vunpack.c.l.b16 %v3336
    %v3382 = vunpack.c.h.b16 %v3336
    %v3383 = vpack.c.b16 %v3373, %v3371
    %v3384 = vpack.c.b16 %v3374, %v3372
    %v3385 = vpack.c.b16 %v3377, %v3375
    %v3386 = vpack.c.b16 %v3378, %v3376
    %v3387 = vpack.c.b16 %v3381, %v3379
    %v3388 = vpack.c.b16 %v3382, %v3380
    %v3390 = vshrl.u32 %v3383, 16
    %v3392 = vshll.u32 %v3383, 16
    %v3394 = vrot.slane %v3392, 1
    %v3395 = vor.u32 %v3390, %v3394
    %v3397 = vshll.u32 %v3385, 16
    %v3399 = vrot.slane %v3397, 1
    %v3400 = vsel %vm73, %v3395, %v3399
    %v3402 = vshrl.u32 %v3384, 16
    %v3404 = vshll.u32 %v3384, 16
    %v3406 = vrot.slane %v3404, 1
    %v3407 = vor.u32 %v3402, %v3406
    %v3409 = vshll.u32 %v3386, 16
    %v3411 = vrot.slane %v3409, 1
    %v3412 = vsel %vm73, %v3407, %v3411
    %v3413 = vshrl.u32 %v3385, 16
    %v3415 = vor.u32 %v3413, %v3399
    %v3417 = vshll.u32 %v3387, 16
    %v3419 = vrot.slane %v3417, 1
    %v3420 = vsel %vm73, %v3415, %v3419
    %v3421 = vshrl.u32 %v3386, 16
    %v3423 = vor.u32 %v3421, %v3411
    %v3425 = vshll.u32 %v3388, 16
    %v3427 = vrot.slane %v3425, 1
    %v3428 = vsel %vm73, %v3423, %v3427
    %v3429 = vshrl.u32 %v3387, 16
    %v3431 = vor.u32 %v3429, %v3419
    %v3432 = vshrl.u32 %v3388, 16
    %v3434 = vor.u32 %v3432, %v3427
    %v3466 = vunpack.c.l.b16 %v3337
    %v3467 = vunpack.c.h.b16 %v3337
    %v3468 = vunpack.c.l.b16 %v3338
    %v3469 = vunpack.c.h.b16 %v3338
    %v3470 = vunpack.c.l.b16 %v3339
    %v3471 = vunpack.c.h.b16 %v3339
    %v3472 = vunpack.c.l.b16 %v3340
    %v3473 = vunpack.c.h.b16 %v3340
    %v3474 = vunpack.c.l.b16 %v3341
    %v3475 = vunpack.c.h.b16 %v3341
    %v3476 = vunpack.c.l.b16 %v3342
    %v3477 = vunpack.c.h.b16 %v3342
    %v3478 = vunpack.c.l.b16 %v3343
    %v3479 = vunpack.c.h.b16 %v3343
    %v3480 = vunpack.c.l.b16 %v3344
    %v3481 = vunpack.c.h.b16 %v3344
    %v3482 = vunpack.c.l.b16 %v3345
    %v3483 = vunpack.c.h.b16 %v3345
    %v3484 = vunpack.c.l.b16 %v3346
    %v3485 = vunpack.c.h.b16 %v3346
    %v3486 = vunpack.c.l.b16 %v3347
    %v3487 = vunpack.c.h.b16 %v3347
    %v3488 = vunpack.c.l.b16 %v3348
    %v3489 = vunpack.c.h.b16 %v3348
    %v3490 = vunpack.c.l.b16 %v3349
    %v3491 = vunpack.c.h.b16 %v3349
    %v3492 = vunpack.c.l.b16 %v3350
    %v3493 = vunpack.c.h.b16 %v3350
    %v3494 = vunpack.c.l.b16 %v3351
    %v3495 = vunpack.c.h.b16 %v3351
    %v3496 = vunpack.c.l.b16 %v3352
    %v3497 = vunpack.c.h.b16 %v3352
    %v3498 = vunpack.c.l.b16 %v3353
    %v3499 = vunpack.c.h.b16 %v3353
    %v3500 = vunpack.c.l.b16 %v3354
    %v3501 = vunpack.c.h.b16 %v3354
    %v3502 = vunpack.c.l.b16 %v3355
    %v3503 = vunpack.c.h.b16 %v3355
    %v3504 = vunpack.c.l.b16 %v3356
    %v3505 = vunpack.c.h.b16 %v3356
    %v3506 = vunpack.c.l.b16 %v3357
    %v3507 = vunpack.c.h.b16 %v3357
    %v3508 = vunpack.c.l.b16 %v3358
    %v3509 = vunpack.c.h.b16 %v3358
    %v3510 = vunpack.c.l.b16 %v3359
    %v3511 = vunpack.c.h.b16 %v3359
    %v3512 = vunpack.c.l.b16 %v3360
    %v3513 = vunpack.c.h.b16 %v3360
    %v3514 = vunpack.c.l.b16 %v3361
    %v3515 = vunpack.c.h.b16 %v3361
    %v3516 = vunpack.c.l.b16 %v3362
    %v3517 = vunpack.c.h.b16 %v3362
    %v3518 = vunpack.c.l.b16 %v3363
    %v3519 = vunpack.c.h.b16 %v3363
    %v3520 = vunpack.c.l.b16 %v3364
    %v3521 = vunpack.c.h.b16 %v3364
    %v3522 = vpack.c.b16 %v3468, %v3466
    %v3523 = vpack.c.b16 %v3469, %v3467
    %v3524 = vpack.c.b16 %v3472, %v3470
    %v3525 = vpack.c.b16 %v3473, %v3471
    %v3526 = vpack.c.b16 %v3476, %v3474
    %v3527 = vpack.c.b16 %v3477, %v3475
    %v3528 = vpack.c.b16 %v3480, %v3478
    %v3529 = vpack.c.b16 %v3481, %v3479
    %v3530 = vpack.c.b16 %v3484, %v3482
    %v3531 = vpack.c.b16 %v3485, %v3483
    %v3532 = vpack.c.b16 %v3488, %v3486
    %v3533 = vpack.c.b16 %v3489, %v3487
    %v3534 = vpack.c.b16 %v3492, %v3490
    %v3535 = vpack.c.b16 %v3493, %v3491
    %v3536 = vpack.c.b16 %v3496, %v3494
    %v3537 = vpack.c.b16 %v3497, %v3495
    %v3538 = vpack.c.b16 %v3500, %v3498
    %v3539 = vpack.c.b16 %v3501, %v3499
    %v3540 = vpack.c.b16 %v3504, %v3502
    %v3541 = vpack.c.b16 %v3505, %v3503
    %v3542 = vpack.c.b16 %v3508, %v3506
    %v3543 = vpack.c.b16 %v3509, %v3507
    %v3544 = vpack.c.b16 %v3512, %v3510
    %v3545 = vpack.c.b16 %v3513, %v3511
    %v3546 = vpack.c.b16 %v3516, %v3514
    %v3547 = vpack.c.b16 %v3517, %v3515
    %v3548 = vpack.c.b16 %v3520, %v3518
    %v3549 = vpack.c.b16 %v3521, %v3519
    %v3579 = vsel %vm2586, %v3412, 0
    %v3582 = vsel %vm2586, %v3428, 0
    %v3585 = vsel %vm2586, %v3434, 0
    %3587 = vmatprep.subr.bf16.mxu0 %v3537
    %3588 = vmatpush1.bf16.msra.mxu0 %v3536
    %3589 = vmatprep.subr.bf16.mxu0 %v3535
    %3590 = vmatpush1.bf16.msra.mxu0 %v3534
    %3591 = vmatprep.subr.bf16.mxu0 %v3533
    %3592 = vmatpush1.bf16.msra.mxu0 %v3532
    %3593 = vmatprep.subr.bf16.mxu0 %v3531
    %3594 = vmatpush1.bf16.msra.mxu0 %v3530
    %3595 = vmatprep.subr.bf16.mxu0 %v3529
    %3596 = vmatpush1.bf16.msra.mxu0 %v3528
    %3597 = vmatprep.subr.bf16.mxu0 %v3527
    %3598 = vmatpush1.bf16.msra.mxu0 %v3526
    %3599 = vmatprep.subr.bf16.mxu0 %v3525
    %3600 = vmatpush1.bf16.msra.mxu0 %v3524
    %3601 = vmatprep.subr.bf16.mxu0 %v3523
    %3602 = vmatpush1.bf16.msra.mxu0 %v3522
    %3603 = vmatprep.subr.bf16.mxu0 0
    %3604 = vmatpush2.bf16.msra.mxu0 0
    %3605 = vmatprep.subr.bf16.mxu0 0
    %3606 = vmatpush2.bf16.msra.mxu0 0
    %3607 = vmatprep.subr.bf16.mxu0 %v3549
    %3608 = vmatpush2.bf16.msra.mxu0 %v3548
    %3609 = vmatprep.subr.bf16.mxu0 %v3547
    %3610 = vmatpush2.bf16.msra.mxu0 %v3546
    %3611 = vmatprep.subr.bf16.mxu0 %v3545
    %3612 = vmatpush2.bf16.msra.mxu0 %v3544
    %3613 = vmatprep.subr.bf16.mxu0 %v3543
    %3614 = vmatpush2.bf16.msra.mxu0 %v3542
    %3615 = vmatprep.subr.bf16.mxu0 %v3541
    %3616 = vmatpush2.bf16.msra.mxu0 %v3540
    %3617 = vmatprep.subr.bf16.mxu0 %v3539
    %3618 = vmatpush2.bf16.msra.mxu0 %v3538
    %3619 = vmatprep.mubr.bf16.mxu0 %v3579
    %3620 = vmatmul.mubr.bf16.gmra.mxu0 %v3400
    %v3621 = vpop.f32.mrf.mxu0
    %v3622 = vadd.f32 0.0, %v3621
    %v3623 = vpop.f32.mrf.mxu0
    %v3624 = vadd.f32 0.0, %v3623
    %v3625 = vpop.f32.mrf.mxu0
    %v3626 = vadd.f32 0.0, %v3625
    %v3627 = vpop.f32.mrf.mxu0
    %v3628 = vadd.f32 0.0, %v3627
    %3629 = vmatprep.mubr.bf16.mxu0 %v3582
    %3630 = vmatmul.mubr.bf16.gmra.mxu0 %v3420
    %v3631 = vpop.f32.mrf.mxu0
    %v3632 = vpop.f32.mrf.mxu0
    %v3633 = vpop.f32.mrf.mxu0
    %v3634 = vpop.f32.mrf.mxu0
    %3635 = vmatprep.mubr.bf16.mxu0 %v3585
    %3636 = vmatmul.mubr.bf16.gmra.mxu0 %v3431
    %v3637 = vpop.f32.mrf.mxu0
    %v3638 = vadd.f32 0.0, %v3637
    %v3639 = vpop.f32.mrf.mxu0
    %v3640 = vadd.f32 0.0, %v3639
    %v3641 = vpop.f32.mrf.mxu0
    %v3642 = vadd.f32 0.0, %v3641
    %v3643 = vpop.f32.mrf.mxu0
    %v3644 = vadd.f32 0.0, %v3643
    %3645 = vdwg.mxu0
    %v3647 = vunpack.c.l.b16 %v3307
    %v3648 = vunpack.c.h.b16 %v3307
    %v3649 = vpack.c.b16 %v3647, %v3379
    %v3650 = vpack.c.b16 %v3648, %v3380
    %v3682 = vunpack.c.l.b16 %v3308
    %v3683 = vunpack.c.h.b16 %v3308
    %v3684 = vunpack.c.l.b16 %v3309
    %v3685 = vunpack.c.h.b16 %v3309
    %v3686 = vunpack.c.l.b16 %v3310
    %v3687 = vunpack.c.h.b16 %v3310
    %v3688 = vunpack.c.l.b16 %v3311
    %v3689 = vunpack.c.h.b16 %v3311
    %v3690 = vunpack.c.l.b16 %v3312
    %v3691 = vunpack.c.h.b16 %v3312
    %v3692 = vunpack.c.l.b16 %v3313
    %v3693 = vunpack.c.h.b16 %v3313
    %v3694 = vunpack.c.l.b16 %v3314
    %v3695 = vunpack.c.h.b16 %v3314
    %v3696 = vunpack.c.l.b16 %v3315
    %v3697 = vunpack.c.h.b16 %v3315
    %v3698 = vunpack.c.l.b16 %v3316
    %v3699 = vunpack.c.h.b16 %v3316
    %v3700 = vunpack.c.l.b16 %v3317
    %v3701 = vunpack.c.h.b16 %v3317
    %v3702 = vunpack.c.l.b16 %v3318
    %v3703 = vunpack.c.h.b16 %v3318
    %v3704 = vunpack.c.l.b16 %v3319
    %v3705 = vunpack.c.h.b16 %v3319
    %v3706 = vunpack.c.l.b16 %v3320
    %v3707 = vunpack.c.h.b16 %v3320
    %v3708 = vunpack.c.l.b16 %v3321
    %v3709 = vunpack.c.h.b16 %v3321
    %v3710 = vunpack.c.l.b16 %v3322
    %v3711 = vunpack.c.h.b16 %v3322
    %v3712 = vunpack.c.l.b16 %v3323
    %v3713 = vunpack.c.h.b16 %v3323
    %v3714 = vunpack.c.l.b16 %v3324
    %v3715 = vunpack.c.h.b16 %v3324
    %v3716 = vunpack.c.l.b16 %v3325
    %v3717 = vunpack.c.h.b16 %v3325
    %v3718 = vunpack.c.l.b16 %v3326
    %v3719 = vunpack.c.h.b16 %v3326
    %v3720 = vunpack.c.l.b16 %v3327
    %v3721 = vunpack.c.h.b16 %v3327
    %v3722 = vunpack.c.l.b16 %v3328
    %v3723 = vunpack.c.h.b16 %v3328
    %v3724 = vunpack.c.l.b16 %v3329
    %v3725 = vunpack.c.h.b16 %v3329
    %v3726 = vunpack.c.l.b16 %v3330
    %v3727 = vunpack.c.h.b16 %v3330
    %v3728 = vunpack.c.l.b16 %v3331
    %v3729 = vunpack.c.h.b16 %v3331
    %v3730 = vunpack.c.l.b16 %v3332
    %v3731 = vunpack.c.h.b16 %v3332
    %v3732 = vunpack.c.l.b16 %v3333
    %v3733 = vunpack.c.h.b16 %v3333
    %v3734 = vunpack.c.l.b16 %v3334
    %v3735 = vunpack.c.h.b16 %v3334
    %v3736 = vunpack.c.l.b16 %v3335
    %v3737 = vunpack.c.h.b16 %v3335
    %v3738 = vpack.c.b16 %v3684, %v3682
    %v3739 = vpack.c.b16 %v3685, %v3683
    %v3740 = vpack.c.b16 %v3688, %v3686
    %v3741 = vpack.c.b16 %v3689, %v3687
    %v3742 = vpack.c.b16 %v3692, %v3690
    %v3743 = vpack.c.b16 %v3693, %v3691
    %v3744 = vpack.c.b16 %v3696, %v3694
    %v3745 = vpack.c.b16 %v3697, %v3695
    %v3746 = vpack.c.b16 %v3700, %v3698
    %v3747 = vpack.c.b16 %v3701, %v3699
    %v3748 = vpack.c.b16 %v3704, %v3702
    %v3749 = vpack.c.b16 %v3705, %v3703
    %v3750 = vpack.c.b16 %v3708, %v3706
    %v3751 = vpack.c.b16 %v3709, %v3707
    %v3752 = vpack.c.b16 %v3712, %v3710
    %v3753 = vpack.c.b16 %v3713, %v3711
    %v3754 = vpack.c.b16 %v3716, %v3714
    %v3755 = vpack.c.b16 %v3717, %v3715
    %v3756 = vpack.c.b16 %v3720, %v3718
    %v3757 = vpack.c.b16 %v3721, %v3719
    %v3758 = vpack.c.b16 %v3724, %v3722
    %v3759 = vpack.c.b16 %v3725, %v3723
    %v3760 = vpack.c.b16 %v3728, %v3726
    %v3761 = vpack.c.b16 %v3729, %v3727
    %v3762 = vpack.c.b16 %v3732, %v3730
    %v3763 = vpack.c.b16 %v3733, %v3731
    %v3764 = vpack.c.b16 %v3736, %v3734
    %v3765 = vpack.c.b16 %v3737, %v3735
    %v3794 = vsel %vm2586, %v3384, 0
    %v3796 = vsel %vm2586, %v3386, 0
    %v3799 = vsel %vm2586, %v3650, 0
    %3801 = vmatprep.subr.bf16.mxu0 %v3753
    %3802 = vmatpush1.bf16.msra.mxu0 %v3752
    %3803 = vmatprep.subr.bf16.mxu0 %v3751
    %3804 = vmatpush1.bf16.msra.mxu0 %v3750
    %3805 = vmatprep.subr.bf16.mxu0 %v3749
    %3806 = vmatpush1.bf16.msra.mxu0 %v3748
    %3807 = vmatprep.subr.bf16.mxu0 %v3747
    %3808 = vmatpush1.bf16.msra.mxu0 %v3746
    %3809 = vmatprep.subr.bf16.mxu0 %v3745
    %3810 = vmatpush1.bf16.msra.mxu0 %v3744
    %3811 = vmatprep.subr.bf16.mxu0 %v3743
    %3812 = vmatpush1.bf16.msra.mxu0 %v3742
    %3813 = vmatprep.subr.bf16.mxu0 %v3741
    %3814 = vmatpush1.bf16.msra.mxu0 %v3740
    %3815 = vmatprep.subr.bf16.mxu0 %v3739
    %3816 = vmatpush1.bf16.msra.mxu0 %v3738
    %3817 = vmatprep.subr.bf16.mxu0 0
    %3818 = vmatpush2.bf16.msra.mxu0 0
    %3819 = vmatprep.subr.bf16.mxu0 0
    %3820 = vmatpush2.bf16.msra.mxu0 0
    %3821 = vmatprep.subr.bf16.mxu0 %v3765
    %3822 = vmatpush2.bf16.msra.mxu0 %v3764
    %3823 = vmatprep.subr.bf16.mxu0 %v3763
    %3824 = vmatpush2.bf16.msra.mxu0 %v3762
    %3825 = vmatprep.subr.bf16.mxu0 %v3761
    %3826 = vmatpush2.bf16.msra.mxu0 %v3760
    %3827 = vmatprep.subr.bf16.mxu0 %v3759
    %3828 = vmatpush2.bf16.msra.mxu0 %v3758
    %3829 = vmatprep.subr.bf16.mxu0 %v3757
    %3830 = vmatpush2.bf16.msra.mxu0 %v3756
    %3831 = vmatprep.subr.bf16.mxu0 %v3755
    %3832 = vmatpush2.bf16.msra.mxu0 %v3754
    %3833 = vmatprep.mubr.bf16.mxu0 %v3794
    %3834 = vmatmul.mubr.bf16.gmra.mxu0 %v3383
    %v3835 = vpop.f32.mrf.mxu0
    %v3836 = vadd.f32 %v3622, %v3835
    %v3837 = vpop.f32.mrf.mxu0
    %v3838 = vadd.f32 %v3624, %v3837
    %v3839 = vpop.f32.mrf.mxu0
    %v3840 = vadd.f32 %v3626, %v3839
    %v3841 = vpop.f32.mrf.mxu0
    %v3842 = vadd.f32 %v3628, %v3841
    %3843 = vmatprep.mubr.bf16.mxu0 %v3796
    %3844 = vmatmul.mubr.bf16.gmra.mxu0 %v3385
    %v3845 = vpop.f32.mrf.mxu0
    %v3846 = vpop.f32.mrf.mxu0
    %v3847 = vpop.f32.mrf.mxu0
    %v3848 = vpop.f32.mrf.mxu0
    %3849 = vmatprep.mubr.bf16.mxu0 %v3799
    %3850 = vmatmul.mubr.bf16.gmra.mxu0 %v3649
    %v3851 = vpop.f32.mrf.mxu0
    %v3852 = vadd.f32 %v3638, %v3851
    %v3853 = vpop.f32.mrf.mxu0
    %v3854 = vadd.f32 %v3640, %v3853
    %v3855 = vpop.f32.mrf.mxu0
    %v3856 = vadd.f32 %v3642, %v3855
    %v3857 = vpop.f32.mrf.mxu0
    %v3858 = vadd.f32 %v3644, %v3857
    %3859 = vdwg.mxu0
    %v3860 = vld [vmem:[#allocation5] sm:$0xee]
    %v3861 = vld [vmem:[#allocation11 + $0x9d0] sm:$0xff]
    %v3862 = vld [vmem:[#allocation11 + $0x9d8] sm:$0xff]
    %v3863 = vld [vmem:[#allocation11 + $0x9e0] sm:$0xff]
    %v3864 = vld [vmem:[#allocation11 + $0x9e8] sm:$0xff]
    %v3865 = vld [vmem:[#allocation11 + $0x9f0] sm:$0xff]
    %v3866 = vld [vmem:[#allocation11 + $0x9f8] sm:$0xff]
    %v3867 = vld [vmem:[#allocation11 + $0xa00] sm:$0xff]
    %v3868 = vld [vmem:[#allocation11 + $0xa08] sm:$0xff]
    %v3869 = vld [vmem:[#allocation11 + $0xa10] sm:$0xff]
    %v3870 = vld [vmem:[#allocation11 + $0xa18] sm:$0xff]
    %v3871 = vld [vmem:[#allocation11 + $0xa20] sm:$0xff]
    %v3872 = vld [vmem:[#allocation11 + $0xa28] sm:$0xff]
    %v3873 = vld [vmem:[#allocation11 + $0xa30] sm:$0xff]
    %v3874 = vld [vmem:[#allocation11 + $0xa38] sm:$0xff]
    %v3875 = vld [vmem:[#allocation11 + $0xa40] sm:$0xff]
    %v3876 = vld [vmem:[#allocation11 + $0xa48] sm:$0xff]
    %v3877 = vld [vmem:[#allocation11 + $0xa50] sm:$0xff]
    %v3878 = vld [vmem:[#allocation11 + $0xa58] sm:$0xff]
    %v3879 = vld [vmem:[#allocation11 + $0xa60] sm:$0xff]
    %v3880 = vld [vmem:[#allocation11 + $0xa68] sm:$0xff]
    %v3881 = vld [vmem:[#allocation11 + $0xa70] sm:$0xff]
    %v3882 = vld [vmem:[#allocation11 + $0xa78] sm:$0xff]
    %v3883 = vld [vmem:[#allocation11 + $0xa80] sm:$0xff]
    %v3884 = vld [vmem:[#allocation11 + $0xa88] sm:$0xff]
    %v3885 = vld [vmem:[#allocation11 + $0xa90] sm:$0xff]
    %v3886 = vld [vmem:[#allocation11 + $0xa98] sm:$0xff]
    %v3887 = vld [vmem:[#allocation11 + $0xaa0] sm:$0xff]
    %v3888 = vld [vmem:[#allocation11 + $0xaa8] sm:$0xff]
    %v3890 = vunpack.c.l.b16 %v3860
    %v3891 = vunpack.c.h.b16 %v3860
    %v3892 = vpack.c.b16 %v3373, %v3890
    %v3893 = vpack.c.b16 %v3374, %v3891
    %v3894 = vrot.slane %v3892, 1
    %v3895 = vrot.slane %v3385, 1
    %v3896 = vsel %vm259, %v3894, %v3895
    %v3897 = vrot.slane %v3893, 1
    %v3898 = vrot.slane %v3386, 1
    %v3899 = vsel %vm259, %v3897, %v3898
    %v3900 = vrot.slane %v3387, 1
    %v3901 = vsel %vm259, %v3895, %v3900
    %v3902 = vrot.slane %v3388, 1
    %v3903 = vsel %vm259, %v3898, %v3902
    %v3935 = vunpack.c.l.b16 %v3861
    %v3936 = vunpack.c.h.b16 %v3861
    %v3937 = vunpack.c.l.b16 %v3862
    %v3938 = vunpack.c.h.b16 %v3862
    %v3939 = vunpack.c.l.b16 %v3863
    %v3940 = vunpack.c.h.b16 %v3863
    %v3941 = vunpack.c.l.b16 %v3864
    %v3942 = vunpack.c.h.b16 %v3864
    %v3943 = vunpack.c.l.b16 %v3865
    %v3944 = vunpack.c.h.b16 %v3865
    %v3945 = vunpack.c.l.b16 %v3866
    %v3946 = vunpack.c.h.b16 %v3866
    %v3947 = vunpack.c.l.b16 %v3867
    %v3948 = vunpack.c.h.b16 %v3867
    %v3949 = vunpack.c.l.b16 %v3868
    %v3950 = vunpack.c.h.b16 %v3868
    %v3951 = vunpack.c.l.b16 %v3869
    %v3952 = vunpack.c.h.b16 %v3869
    %v3953 = vunpack.c.l.b16 %v3870
    %v3954 = vunpack.c.h.b16 %v3870
    %v3955 = vunpack.c.l.b16 %v3871
    %v3956 = vunpack.c.h.b16 %v3871
    %v3957 = vunpack.c.l.b16 %v3872
    %v3958 = vunpack.c.h.b16 %v3872
    %v3959 = vunpack.c.l.b16 %v3873
    %v3960 = vunpack.c.h.b16 %v3873
    %v3961 = vunpack.c.l.b16 %v3874
    %v3962 = vunpack.c.h.b16 %v3874
    %v3963 = vunpack.c.l.b16 %v3875
    %v3964 = vunpack.c.h.b16 %v3875
    %v3965 = vunpack.c.l.b16 %v3876
    %v3966 = vunpack.c.h.b16 %v3876
    %v3967 = vunpack.c.l.b16 %v3877
    %v3968 = vunpack.c.h.b16 %v3877
    %v3969 = vunpack.c.l.b16 %v3878
    %v3970 = vunpack.c.h.b16 %v3878
    %v3971 = vunpack.c.l.b16 %v3879
    %v3972 = vunpack.c.h.b16 %v3879
    %v3973 = vunpack.c.l.b16 %v3880
    %v3974 = vunpack.c.h.b16 %v3880
    %v3975 = vunpack.c.l.b16 %v3881
    %v3976 = vunpack.c.h.b16 %v3881
    %v3977 = vunpack.c.l.b16 %v3882
    %v3978 = vunpack.c.h.b16 %v3882
    %v3979 = vunpack.c.l.b16 %v3883
    %v3980 = vunpack.c.h.b16 %v3883
    %v3981 = vunpack.c.l.b16 %v3884
    %v3982 = vunpack.c.h.b16 %v3884
    %v3983 = vunpack.c.l.b16 %v3885
    %v3984 = vunpack.c.h.b16 %v3885
    %v3985 = vunpack.c.l.b16 %v3886
    %v3986 = vunpack.c.h.b16 %v3886
    %v3987 = vunpack.c.l.b16 %v3887
    %v3988 = vunpack.c.h.b16 %v3887
    %v3989 = vunpack.c.l.b16 %v3888
    %v3990 = vunpack.c.h.b16 %v3888
    %v3991 = vpack.c.b16 %v3937, %v3935
    %v3992 = vpack.c.b16 %v3938, %v3936
    %v3993 = vpack.c.b16 %v3941, %v3939
    %v3994 = vpack.c.b16 %v3942, %v3940
    %v3995 = vpack.c.b16 %v3945, %v3943
    %v3996 = vpack.c.b16 %v3946, %v3944
    %v3997 = vpack.c.b16 %v3949, %v3947
    %v3998 = vpack.c.b16 %v3950, %v3948
    %v3999 = vpack.c.b16 %v3953, %v3951
    %v4000 = vpack.c.b16 %v3954, %v3952
    %v4001 = vpack.c.b16 %v3957, %v3955
    %v4002 = vpack.c.b16 %v3958, %v3956
    %v4003 = vpack.c.b16 %v3961, %v3959
    %v4004 = vpack.c.b16 %v3962, %v3960
    %v4005 = vpack.c.b16 %v3965, %v3963
    %v4006 = vpack.c.b16 %v3966, %v3964
    %v4007 = vpack.c.b16 %v3969, %v3967
    %v4008 = vpack.c.b16 %v3970, %v3968
    %v4009 = vpack.c.b16 %v3973, %v3971
    %v4010 = vpack.c.b16 %v3974, %v3972
    %v4011 = vpack.c.b16 %v3977, %v3975
    %v4012 = vpack.c.b16 %v3978, %v3976
    %v4013 = vpack.c.b16 %v3981, %v3979
    %v4014 = vpack.c.b16 %v3982, %v3980
    %v4015 = vpack.c.b16 %v3985, %v3983
    %v4016 = vpack.c.b16 %v3986, %v3984
    %v4017 = vpack.c.b16 %v3989, %v3987
    %v4018 = vpack.c.b16 %v3990, %v3988
    %v4048 = vsel %vm2586, %v3899, 0
    %v4051 = vsel %vm2586, %v3903, 0
    %v4054 = vsel %vm2586, %v3902, 0
    %4056 = vmatprep.subr.bf16.mxu0 %v4006
    %4057 = vmatpush1.bf16.msra.mxu0 %v4005
    %4058 = vmatprep.subr.bf16.mxu0 %v4004
    %4059 = vmatpush1.bf16.msra.mxu0 %v4003
    %4060 = vmatprep.subr.bf16.mxu0 %v4002
    %4061 = vmatpush1.bf16.msra.mxu0 %v4001
    %4062 = vmatprep.subr.bf16.mxu0 %v4000
    %4063 = vmatpush1.bf16.msra.mxu0 %v3999
    %4064 = vmatprep.subr.bf16.mxu0 %v3998
    %4065 = vmatpush1.bf16.msra.mxu0 %v3997
    %4066 = vmatprep.subr.bf16.mxu0 %v3996
    %4067 = vmatpush1.bf16.msra.mxu0 %v3995
    %4068 = vmatprep.subr.bf16.mxu0 %v3994
    %4069 = vmatpush1.bf16.msra.mxu0 %v3993
    %4070 = vmatprep.subr.bf16.mxu0 %v3992
    %4071 = vmatpush1.bf16.msra.mxu0 %v3991
    %4072 = vmatprep.subr.bf16.mxu0 0
    %4073 = vmatpush2.bf16.msra.mxu0 0
    %4074 = vmatprep.subr.bf16.mxu0 0
    %4075 = vmatpush2.bf16.msra.mxu0 0
    %4076 = vmatprep.subr.bf16.mxu0 %v4018
    %4077 = vmatpush2.bf16.msra.mxu0 %v4017
    %4078 = vmatprep.subr.bf16.mxu0 %v4016
    %4079 = vmatpush2.bf16.msra.mxu0 %v4015
    %4080 = vmatprep.subr.bf16.mxu0 %v4014
    %4081 = vmatpush2.bf16.msra.mxu0 %v4013
    %4082 = vmatprep.subr.bf16.mxu0 %v4012
    %4083 = vmatpush2.bf16.msra.mxu0 %v4011
    %4084 = vmatprep.subr.bf16.mxu0 %v4010
    %4085 = vmatpush2.bf16.msra.mxu0 %v4009
    %4086 = vmatprep.subr.bf16.mxu0 %v4008
    %4087 = vmatpush2.bf16.msra.mxu0 %v4007
    %4088 = vmatprep.mubr.bf16.mxu0 %v4048
    %4089 = vmatmul.mubr.bf16.gmra.mxu0 %v3896
    %v4090 = vpop.f32.mrf.mxu0
    %v4091 = vadd.f32 0.0, %v4090
    %v4092 = vpop.f32.mrf.mxu0
    %v4093 = vadd.f32 0.0, %v4092
    %v4094 = vpop.f32.mrf.mxu0
    %v4095 = vadd.f32 0.0, %v4094
    %v4096 = vpop.f32.mrf.mxu0
    %v4097 = vadd.f32 0.0, %v4096
    %4098 = vmatprep.mubr.bf16.mxu0 %v4051
    %4099 = vmatmul.mubr.bf16.gmra.mxu0 %v3901
    %v4100 = vpop.f32.mrf.mxu0
    %v4101 = vpop.f32.mrf.mxu0
    %v4102 = vpop.f32.mrf.mxu0
    %v4103 = vpop.f32.mrf.mxu0
    %4104 = vmatprep.mubr.bf16.mxu0 %v4054
    %4105 = vmatmul.mubr.bf16.gmra.mxu0 %v3900
    %v4106 = vpop.f32.mrf.mxu0
    %v4107 = vadd.f32 0.0, %v4106
    %v4108 = vpop.f32.mrf.mxu0
    %v4109 = vadd.f32 0.0, %v4108
    %v4110 = vpop.f32.mrf.mxu0
    %v4111 = vadd.f32 0.0, %v4110
    %v4112 = vpop.f32.mrf.mxu0
    %v4113 = vadd.f32 0.0, %v4112
    %4114 = vdwg.mxu0
    %v4115 = vadd.f32 %v3836, %v4091
    %v4116 = vadd.f32 %v3838, %v4093
    %v4117 = vadd.f32 %v3840, %v4095
    %v4118 = vadd.f32 %v3842, %v4097
    %v4119 = vadd.f32 %v3852, %v4107
    %v4120 = vadd.f32 %v3854, %v4109
    %v4121 = vadd.f32 %v3856, %v4111
    %v4122 = vadd.f32 %v3858, %v4113
    %v4123 = vld [vmem:[#allocation6] sm:$0xff]
    %v4124 = vld [vmem:[#allocation6 + $0x8] sm:$0xff]
    %v4125 = vld [vmem:[#allocation6 + $0x10] sm:$0xff]
    %v4126 = vld [vmem:[#allocation6 + $0x18] sm:$0xff]
    %v4127 = vld [vmem:[#allocation6 + $0x20] sm:$0xff]
    %v4128 = vld [vmem:[#allocation6 + $0x28] sm:$0x33]
    %v4129 = vld [vmem:[#allocation11 + $0xab0] sm:$0xff]
    %v4130 = vld [vmem:[#allocation11 + $0xab8] sm:$0xff]
    %v4131 = vld [vmem:[#allocation11 + $0xac0] sm:$0xff]
    %v4132 = vld [vmem:[#allocation11 + $0xac8] sm:$0xff]
    %v4133 = vld [vmem:[#allocation11 + $0xad0] sm:$0xff]
    %v4134 = vld [vmem:[#allocation11 + $0xad8] sm:$0xff]
    %v4135 = vld [vmem:[#allocation11 + $0xae0] sm:$0xff]
    %v4136 = vld [vmem:[#allocation11 + $0xae8] sm:$0xff]
    %v4137 = vld [vmem:[#allocation11 + $0xaf0] sm:$0xff]
    %v4138 = vld [vmem:[#allocation11 + $0xaf8] sm:$0xff]
    %v4139 = vld [vmem:[#allocation11 + $0xb00] sm:$0xff]
    %v4140 = vld [vmem:[#allocation11 + $0xb08] sm:$0xff]
    %v4141 = vld [vmem:[#allocation11 + $0xb10] sm:$0xff]
    %v4142 = vld [vmem:[#allocation11 + $0xb18] sm:$0xff]
    %v4143 = vld [vmem:[#allocation11 + $0xb20] sm:$0xff]
    %v4144 = vld [vmem:[#allocation11 + $0xb28] sm:$0xff]
    %v4145 = vld [vmem:[#allocation11 + $0xb30] sm:$0xff]
    %v4146 = vld [vmem:[#allocation11 + $0xb38] sm:$0xff]
    %v4147 = vld [vmem:[#allocation11 + $0xb40] sm:$0xff]
    %v4148 = vld [vmem:[#allocation11 + $0xb48] sm:$0xff]
    %v4149 = vld [vmem:[#allocation11 + $0xb50] sm:$0xff]
    %v4150 = vld [vmem:[#allocation11 + $0xb58] sm:$0xff]
    %v4151 = vld [vmem:[#allocation11 + $0xb60] sm:$0xff]
    %v4152 = vld [vmem:[#allocation11 + $0xb68] sm:$0xff]
    %v4153 = vld [vmem:[#allocation11 + $0xb70] sm:$0xff]
    %v4154 = vld [vmem:[#allocation11 + $0xb78] sm:$0xff]
    %v4155 = vld [vmem:[#allocation11 + $0xb80] sm:$0xff]
    %v4156 = vld [vmem:[#allocation11 + $0xb88] sm:$0xff]
    %v4163 = vunpack.c.l.b16 %v4123
    %v4164 = vunpack.c.h.b16 %v4123
    %v4165 = vunpack.c.l.b16 %v4124
    %v4166 = vunpack.c.h.b16 %v4124
    %v4167 = vunpack.c.l.b16 %v4125
    %v4168 = vunpack.c.h.b16 %v4125
    %v4169 = vunpack.c.l.b16 %v4126
    %v4170 = vunpack.c.h.b16 %v4126
    %v4171 = vunpack.c.l.b16 %v4127
    %v4172 = vunpack.c.h.b16 %v4127
    %v4173 = vunpack.c.l.b16 %v4128
    %v4174 = vunpack.c.h.b16 %v4128
    %v4175 = vpack.c.b16 %v4165, %v4163
    %v4176 = vpack.c.b16 %v4166, %v4164
    %v4177 = vpack.c.b16 %v4169, %v4167
    %v4178 = vpack.c.b16 %v4170, %v4168
    %v4179 = vpack.c.b16 %v4173, %v4171
    %v4180 = vpack.c.b16 %v4174, %v4172
    %v4212 = vunpack.c.l.b16 %v4129
    %v4213 = vunpack.c.h.b16 %v4129
    %v4214 = vunpack.c.l.b16 %v4130
    %v4215 = vunpack.c.h.b16 %v4130
    %v4216 = vunpack.c.l.b16 %v4131
    %v4217 = vunpack.c.h.b16 %v4131
    %v4218 = vunpack.c.l.b16 %v4132
    %v4219 = vunpack.c.h.b16 %v4132
    %v4220 = vunpack.c.l.b16 %v4133
    %v4221 = vunpack.c.h.b16 %v4133
    %v4222 = vunpack.c.l.b16 %v4134
    %v4223 = vunpack.c.h.b16 %v4134
    %v4224 = vunpack.c.l.b16 %v4135
    %v4225 = vunpack.c.h.b16 %v4135
    %v4226 = vunpack.c.l.b16 %v4136
    %v4227 = vunpack.c.h.b16 %v4136
    %v4228 = vunpack.c.l.b16 %v4137
    %v4229 = vunpack.c.h.b16 %v4137
    %v4230 = vunpack.c.l.b16 %v4138
    %v4231 = vunpack.c.h.b16 %v4138
    %v4232 = vunpack.c.l.b16 %v4139
    %v4233 = vunpack.c.h.b16 %v4139
    %v4234 = vunpack.c.l.b16 %v4140
    %v4235 = vunpack.c.h.b16 %v4140
    %v4236 = vunpack.c.l.b16 %v4141
    %v4237 = vunpack.c.h.b16 %v4141
    %v4238 = vunpack.c.l.b16 %v4142
    %v4239 = vunpack.c.h.b16 %v4142
    %v4240 = vunpack.c.l.b16 %v4143
    %v4241 = vunpack.c.h.b16 %v4143
    %v4242 = vunpack.c.l.b16 %v4144
    %v4243 = vunpack.c.h.b16 %v4144
    %v4244 = vunpack.c.l.b16 %v4145
    %v4245 = vunpack.c.h.b16 %v4145
    %v4246 = vunpack.c.l.b16 %v4146
    %v4247 = vunpack.c.h.b16 %v4146
    %v4248 = vunpack.c.l.b16 %v4147
    %v4249 = vunpack.c.h.b16 %v4147
    %v4250 = vunpack.c.l.b16 %v4148
    %v4251 = vunpack.c.h.b16 %v4148
    %v4252 = vunpack.c.l.b16 %v4149
    %v4253 = vunpack.c.h.b16 %v4149
    %v4254 = vunpack.c.l.b16 %v4150
    %v4255 = vunpack.c.h.b16 %v4150
    %v4256 = vunpack.c.l.b16 %v4151
    %v4257 = vunpack.c.h.b16 %v4151
    %v4258 = vunpack.c.l.b16 %v4152
    %v4259 = vunpack.c.h.b16 %v4152
    %v4260 = vunpack.c.l.b16 %v4153
    %v4261 = vunpack.c.h.b16 %v4153
    %v4262 = vunpack.c.l.b16 %v4154
    %v4263 = vunpack.c.h.b16 %v4154
    %v4264 = vunpack.c.l.b16 %v4155
    %v4265 = vunpack.c.h.b16 %v4155
    %v4266 = vunpack.c.l.b16 %v4156
    %v4267 = vunpack.c.h.b16 %v4156
    %v4268 = vpack.c.b16 %v4214, %v4212
    %v4269 = vpack.c.b16 %v4215, %v4213
    %v4270 = vpack.c.b16 %v4218, %v4216
    %v4271 = vpack.c.b16 %v4219, %v4217
    %v4272 = vpack.c.b16 %v4222, %v4220
    %v4273 = vpack.c.b16 %v4223, %v4221
    %v4274 = vpack.c.b16 %v4226, %v4224
    %v4275 = vpack.c.b16 %v4227, %v4225
    %v4276 = vpack.c.b16 %v4230, %v4228
    %v4277 = vpack.c.b16 %v4231, %v4229
    %v4278 = vpack.c.b16 %v4234, %v4232
    %v4279 = vpack.c.b16 %v4235, %v4233
    %v4280 = vpack.c.b16 %v4238, %v4236
    %v4281 = vpack.c.b16 %v4239, %v4237
    %v4282 = vpack.c.b16 %v4242, %v4240
    %v4283 = vpack.c.b16 %v4243, %v4241
    %v4284 = vpack.c.b16 %v4246, %v4244
    %v4285 = vpack.c.b16 %v4247, %v4245
    %v4286 = vpack.c.b16 %v4250, %v4248
    %v4287 = vpack.c.b16 %v4251, %v4249
    %v4288 = vpack.c.b16 %v4254, %v4252
    %v4289 = vpack.c.b16 %v4255, %v4253
    %v4290 = vpack.c.b16 %v4258, %v4256
    %v4291 = vpack.c.b16 %v4259, %v4257
    %v4292 = vpack.c.b16 %v4262, %v4260
    %v4293 = vpack.c.b16 %v4263, %v4261
    %v4294 = vpack.c.b16 %v4266, %v4264
    %v4295 = vpack.c.b16 %v4267, %v4265
    %v4325 = vsel %vm2586, %v4176, 0
    %v4328 = vsel %vm2586, %v4178, 0
    %v4331 = vsel %vm2586, %v4180, 0
    %4333 = vmatprep.subr.bf16.mxu0 %v4283
    %4334 = vmatpush1.bf16.msra.mxu0 %v4282
    %4335 = vmatprep.subr.bf16.mxu0 %v4281
    %4336 = vmatpush1.bf16.msra.mxu0 %v4280
    %4337 = vmatprep.subr.bf16.mxu0 %v4279
    %4338 = vmatpush1.bf16.msra.mxu0 %v4278
    %4339 = vmatprep.subr.bf16.mxu0 %v4277
    %4340 = vmatpush1.bf16.msra.mxu0 %v4276
    %4341 = vmatprep.subr.bf16.mxu0 %v4275
    %4342 = vmatpush1.bf16.msra.mxu0 %v4274
    %4343 = vmatprep.subr.bf16.mxu0 %v4273
    %4344 = vmatpush1.bf16.msra.mxu0 %v4272
    %4345 = vmatprep.subr.bf16.mxu0 %v4271
    %4346 = vmatpush1.bf16.msra.mxu0 %v4270
    %4347 = vmatprep.subr.bf16.mxu0 %v4269
    %4348 = vmatpush1.bf16.msra.mxu0 %v4268
    %4349 = vmatprep.subr.bf16.mxu0 0
    %4350 = vmatpush2.bf16.msra.mxu0 0
    %4351 = vmatprep.subr.bf16.mxu0 0
    %4352 = vmatpush2.bf16.msra.mxu0 0
    %4353 = vmatprep.subr.bf16.mxu0 %v4295
    %4354 = vmatpush2.bf16.msra.mxu0 %v4294
    %4355 = vmatprep.subr.bf16.mxu0 %v4293
    %4356 = vmatpush2.bf16.msra.mxu0 %v4292
    %4357 = vmatprep.subr.bf16.mxu0 %v4291
    %4358 = vmatpush2.bf16.msra.mxu0 %v4290
    %4359 = vmatprep.subr.bf16.mxu0 %v4289
    %4360 = vmatpush2.bf16.msra.mxu0 %v4288
    %4361 = vmatprep.subr.bf16.mxu0 %v4287
    %4362 = vmatpush2.bf16.msra.mxu0 %v4286
    %4363 = vmatprep.subr.bf16.mxu0 %v4285
    %4364 = vmatpush2.bf16.msra.mxu0 %v4284
    %4365 = vmatprep.mubr.bf16.mxu0 %v4325
    %4366 = vmatmul.mubr.bf16.gmra.mxu0 %v4175
    %v4367 = vpop.f32.mrf.mxu0
    %v4368 = vadd.f32 0.0, %v4367
    %v4369 = vpop.f32.mrf.mxu0
    %v4370 = vadd.f32 0.0, %v4369
    %v4371 = vpop.f32.mrf.mxu0
    %v4372 = vadd.f32 0.0, %v4371
    %v4373 = vpop.f32.mrf.mxu0
    %v4374 = vadd.f32 0.0, %v4373
    %4375 = vmatprep.mubr.bf16.mxu0 %v4328
    %4376 = vmatmul.mubr.bf16.gmra.mxu0 %v4177
    %v4377 = vpop.f32.mrf.mxu0
    %v4378 = vpop.f32.mrf.mxu0
    %v4379 = vpop.f32.mrf.mxu0
    %v4380 = vpop.f32.mrf.mxu0
    %4381 = vmatprep.mubr.bf16.mxu0 %v4331
    %4382 = vmatmul.mubr.bf16.gmra.mxu0 %v4179
    %v4383 = vpop.f32.mrf.mxu0
    %v4384 = vadd.f32 0.0, %v4383
    %v4385 = vpop.f32.mrf.mxu0
    %v4386 = vadd.f32 0.0, %v4385
    %v4387 = vpop.f32.mrf.mxu0
    %v4388 = vadd.f32 0.0, %v4387
    %v4389 = vpop.f32.mrf.mxu0
    %v4390 = vadd.f32 0.0, %v4389
    %4391 = vdwg.mxu0
    %v4392 = vadd.f32 %v4115, %v4368
    %v4393 = vadd.f32 %v4116, %v4370
    %v4394 = vadd.f32 %v4117, %v4372
    %v4395 = vadd.f32 %v4118, %v4374
    %v4396 = vadd.f32 %v4119, %v4384
    %v4397 = vadd.f32 %v4120, %v4386
    %v4398 = vadd.f32 %v4121, %v4388
    %v4399 = vadd.f32 %v4122, %v4390
    %v4400 = vld [vmem:[#allocation6 + $0x28] sm:$0x77]
    %v4401 = vld [vmem:[#allocation11 + $0xb90] sm:$0xff]
    %v4402 = vld [vmem:[#allocation11 + $0xb98] sm:$0xff]
    %v4403 = vld [vmem:[#allocation11 + $0xba0] sm:$0xff]
    %v4404 = vld [vmem:[#allocation11 + $0xba8] sm:$0xff]
    %v4405 = vld [vmem:[#allocation11 + $0xbb0] sm:$0xff]
    %v4406 = vld [vmem:[#allocation11 + $0xbb8] sm:$0xff]
    %v4407 = vld [vmem:[#allocation11 + $0xbc0] sm:$0xff]
    %v4408 = vld [vmem:[#allocation11 + $0xbc8] sm:$0xff]
    %v4409 = vld [vmem:[#allocation11 + $0xbd0] sm:$0xff]
    %v4410 = vld [vmem:[#allocation11 + $0xbd8] sm:$0xff]
    %v4411 = vld [vmem:[#allocation11 + $0xbe0] sm:$0xff]
    %v4412 = vld [vmem:[#allocation11 + $0xbe8] sm:$0xff]
    %v4413 = vld [vmem:[#allocation11 + $0xbf0] sm:$0xff]
    %v4414 = vld [vmem:[#allocation11 + $0xbf8] sm:$0xff]
    %v4415 = vld [vmem:[#allocation11 + $0xc00] sm:$0xff]
    %v4416 = vld [vmem:[#allocation11 + $0xc08] sm:$0xff]
    %v4417 = vld [vmem:[#allocation11 + $0xc10] sm:$0xff]
    %v4418 = vld [vmem:[#allocation11 + $0xc18] sm:$0xff]
    %v4419 = vld [vmem:[#allocation11 + $0xc20] sm:$0xff]
    %v4420 = vld [vmem:[#allocation11 + $0xc28] sm:$0xff]
    %v4421 = vld [vmem:[#allocation11 + $0xc30] sm:$0xff]
    %v4422 = vld [vmem:[#allocation11 + $0xc38] sm:$0xff]
    %v4423 = vld [vmem:[#allocation11 + $0xc40] sm:$0xff]
    %v4424 = vld [vmem:[#allocation11 + $0xc48] sm:$0xff]
    %v4425 = vld [vmem:[#allocation11 + $0xc50] sm:$0xff]
    %v4426 = vld [vmem:[#allocation11 + $0xc58] sm:$0xff]
    %v4427 = vld [vmem:[#allocation11 + $0xc60] sm:$0xff]
    %v4428 = vld [vmem:[#allocation11 + $0xc68] sm:$0xff]
    %v4430 = vunpack.c.l.b16 %v4400
    %v4431 = vunpack.c.h.b16 %v4400
    %v4432 = vpack.c.b16 %v4430, %v4171
    %v4433 = vpack.c.b16 %v4431, %v4172
    %v4435 = vshrl.u32 %v4175, 16
    %v4437 = vshll.u32 %v4175, 16
    %v4439 = vrot.slane %v4437, 1
    %v4440 = vor.u32 %v4435, %v4439
    %v4442 = vshll.u32 %v4177, 16
    %v4444 = vrot.slane %v4442, 1
    %v4445 = vsel %vm73, %v4440, %v4444
    %v4446 = vshrl.u32 %v4176, 16
    %v4448 = vshll.u32 %v4176, 16
    %v4450 = vrot.slane %v4448, 1
    %v4451 = vor.u32 %v4446, %v4450
    %v4452 = vshll.u32 %v4178, 16
    %v4454 = vrot.slane %v4452, 1
    %v4455 = vsel %vm73, %v4451, %v4454
    %v4456 = vshrl.u32 %v4177, 16
    %v4458 = vor.u32 %v4456, %v4444
    %v4460 = vshll.u32 %v4432, 16
    %v4462 = vrot.slane %v4460, 1
    %v4463 = vsel %vm73, %v4458, %v4462
    %v4464 = vshrl.u32 %v4178, 16
    %v4466 = vor.u32 %v4464, %v4454
    %v4468 = vshll.u32 %v4433, 16
    %v4470 = vrot.slane %v4468, 1
    %v4471 = vsel %vm73, %v4466, %v4470
    %v4472 = vshrl.u32 %v4432, 16
    %v4474 = vor.u32 %v4472, %v4462
    %v4475 = vshrl.u32 %v4433, 16
    %v4477 = vor.u32 %v4475, %v4470
    %v4509 = vunpack.c.l.b16 %v4401
    %v4510 = vunpack.c.h.b16 %v4401
    %v4511 = vunpack.c.l.b16 %v4402
    %v4512 = vunpack.c.h.b16 %v4402
    %v4513 = vunpack.c.l.b16 %v4403
    %v4514 = vunpack.c.h.b16 %v4403
    %v4515 = vunpack.c.l.b16 %v4404
    %v4516 = vunpack.c.h.b16 %v4404
    %v4517 = vunpack.c.l.b16 %v4405
    %v4518 = vunpack.c.h.b16 %v4405
    %v4519 = vunpack.c.l.b16 %v4406
    %v4520 = vunpack.c.h.b16 %v4406
    %v4521 = vunpack.c.l.b16 %v4407
    %v4522 = vunpack.c.h.b16 %v4407
    %v4523 = vunpack.c.l.b16 %v4408
    %v4524 = vunpack.c.h.b16 %v4408
    %v4525 = vunpack.c.l.b16 %v4409
    %v4526 = vunpack.c.h.b16 %v4409
    %v4527 = vunpack.c.l.b16 %v4410
    %v4528 = vunpack.c.h.b16 %v4410
    %v4529 = vunpack.c.l.b16 %v4411
    %v4530 = vunpack.c.h.b16 %v4411
    %v4531 = vunpack.c.l.b16 %v4412
    %v4532 = vunpack.c.h.b16 %v4412
    %v4533 = vunpack.c.l.b16 %v4413
    %v4534 = vunpack.c.h.b16 %v4413
    %v4535 = vunpack.c.l.b16 %v4414
    %v4536 = vunpack.c.h.b16 %v4414
    %v4537 = vunpack.c.l.b16 %v4415
    %v4538 = vunpack.c.h.b16 %v4415
    %v4539 = vunpack.c.l.b16 %v4416
    %v4540 = vunpack.c.h.b16 %v4416
    %v4541 = vunpack.c.l.b16 %v4417
    %v4542 = vunpack.c.h.b16 %v4417
    %v4543 = vunpack.c.l.b16 %v4418
    %v4544 = vunpack.c.h.b16 %v4418
    %v4545 = vunpack.c.l.b16 %v4419
    %v4546 = vunpack.c.h.b16 %v4419
    %v4547 = vunpack.c.l.b16 %v4420
    %v4548 = vunpack.c.h.b16 %v4420
    %v4549 = vunpack.c.l.b16 %v4421
    %v4550 = vunpack.c.h.b16 %v4421
    %v4551 = vunpack.c.l.b16 %v4422
    %v4552 = vunpack.c.h.b16 %v4422
    %v4553 = vunpack.c.l.b16 %v4423
    %v4554 = vunpack.c.h.b16 %v4423
    %v4555 = vunpack.c.l.b16 %v4424
    %v4556 = vunpack.c.h.b16 %v4424
    %v4557 = vunpack.c.l.b16 %v4425
    %v4558 = vunpack.c.h.b16 %v4425
    %v4559 = vunpack.c.l.b16 %v4426
    %v4560 = vunpack.c.h.b16 %v4426
    %v4561 = vunpack.c.l.b16 %v4427
    %v4562 = vunpack.c.h.b16 %v4427
    %v4563 = vunpack.c.l.b16 %v4428
    %v4564 = vunpack.c.h.b16 %v4428
    %v4565 = vpack.c.b16 %v4511, %v4509
    %v4566 = vpack.c.b16 %v4512, %v4510
    %v4567 = vpack.c.b16 %v4515, %v4513
    %v4568 = vpack.c.b16 %v4516, %v4514
    %v4569 = vpack.c.b16 %v4519, %v4517
    %v4570 = vpack.c.b16 %v4520, %v4518
    %v4571 = vpack.c.b16 %v4523, %v4521
    %v4572 = vpack.c.b16 %v4524, %v4522
    %v4573 = vpack.c.b16 %v4527, %v4525
    %v4574 = vpack.c.b16 %v4528, %v4526
    %v4575 = vpack.c.b16 %v4531, %v4529
    %v4576 = vpack.c.b16 %v4532, %v4530
    %v4577 = vpack.c.b16 %v4535, %v4533
    %v4578 = vpack.c.b16 %v4536, %v4534
    %v4579 = vpack.c.b16 %v4539, %v4537
    %v4580 = vpack.c.b16 %v4540, %v4538
    %v4581 = vpack.c.b16 %v4543, %v4541
    %v4582 = vpack.c.b16 %v4544, %v4542
    %v4583 = vpack.c.b16 %v4547, %v4545
    %v4584 = vpack.c.b16 %v4548, %v4546
    %v4585 = vpack.c.b16 %v4551, %v4549
    %v4586 = vpack.c.b16 %v4552, %v4550
    %v4587 = vpack.c.b16 %v4555, %v4553
    %v4588 = vpack.c.b16 %v4556, %v4554
    %v4589 = vpack.c.b16 %v4559, %v4557
    %v4590 = vpack.c.b16 %v4560, %v4558
    %v4591 = vpack.c.b16 %v4563, %v4561
    %v4592 = vpack.c.b16 %v4564, %v4562
    %v4622 = vsel %vm2586, %v4455, 0
    %v4625 = vsel %vm2586, %v4471, 0
    %v4628 = vsel %vm2586, %v4477, 0
    %4630 = vmatprep.subr.bf16.mxu0 %v4580
    %4631 = vmatpush1.bf16.msra.mxu0 %v4579
    %4632 = vmatprep.subr.bf16.mxu0 %v4578
    %4633 = vmatpush1.bf16.msra.mxu0 %v4577
    %4634 = vmatprep.subr.bf16.mxu0 %v4576
    %4635 = vmatpush1.bf16.msra.mxu0 %v4575
    %4636 = vmatprep.subr.bf16.mxu0 %v4574
    %4637 = vmatpush1.bf16.msra.mxu0 %v4573
    %4638 = vmatprep.subr.bf16.mxu0 %v4572
    %4639 = vmatpush1.bf16.msra.mxu0 %v4571
    %4640 = vmatprep.subr.bf16.mxu0 %v4570
    %4641 = vmatpush1.bf16.msra.mxu0 %v4569
    %4642 = vmatprep.subr.bf16.mxu0 %v4568
    %4643 = vmatpush1.bf16.msra.mxu0 %v4567
    %4644 = vmatprep.subr.bf16.mxu0 %v4566
    %4645 = vmatpush1.bf16.msra.mxu0 %v4565
    %4646 = vmatprep.subr.bf16.mxu0 0
    %4647 = vmatpush2.bf16.msra.mxu0 0
    %4648 = vmatprep.subr.bf16.mxu0 0
    %4649 = vmatpush2.bf16.msra.mxu0 0
    %4650 = vmatprep.subr.bf16.mxu0 %v4592
    %4651 = vmatpush2.bf16.msra.mxu0 %v4591
    %4652 = vmatprep.subr.bf16.mxu0 %v4590
    %4653 = vmatpush2.bf16.msra.mxu0 %v4589
    %4654 = vmatprep.subr.bf16.mxu0 %v4588
    %4655 = vmatpush2.bf16.msra.mxu0 %v4587
    %4656 = vmatprep.subr.bf16.mxu0 %v4586
    %4657 = vmatpush2.bf16.msra.mxu0 %v4585
    %4658 = vmatprep.subr.bf16.mxu0 %v4584
    %4659 = vmatpush2.bf16.msra.mxu0 %v4583
    %4660 = vmatprep.subr.bf16.mxu0 %v4582
    %4661 = vmatpush2.bf16.msra.mxu0 %v4581
    %4662 = vmatprep.mubr.bf16.mxu0 %v4622
    %4663 = vmatmul.mubr.bf16.gmra.mxu0 %v4445
    %v4664 = vpop.f32.mrf.mxu0
    %v4665 = vadd.f32 0.0, %v4664
    %v4666 = vpop.f32.mrf.mxu0
    %v4667 = vadd.f32 0.0, %v4666
    %v4668 = vpop.f32.mrf.mxu0
    %v4669 = vadd.f32 0.0, %v4668
    %v4670 = vpop.f32.mrf.mxu0
    %v4671 = vadd.f32 0.0, %v4670
    %4672 = vmatprep.mubr.bf16.mxu0 %v4625
    %4673 = vmatmul.mubr.bf16.gmra.mxu0 %v4463
    %v4674 = vpop.f32.mrf.mxu0
    %v4675 = vpop.f32.mrf.mxu0
    %v4676 = vpop.f32.mrf.mxu0
    %v4677 = vpop.f32.mrf.mxu0
    %4678 = vmatprep.mubr.bf16.mxu0 %v4628
    %4679 = vmatmul.mubr.bf16.gmra.mxu0 %v4474
    %v4680 = vpop.f32.mrf.mxu0
    %v4681 = vadd.f32 0.0, %v4680
    %v4682 = vpop.f32.mrf.mxu0
    %v4683 = vadd.f32 0.0, %v4682
    %v4684 = vpop.f32.mrf.mxu0
    %v4685 = vadd.f32 0.0, %v4684
    %v4686 = vpop.f32.mrf.mxu0
    %v4687 = vadd.f32 0.0, %v4686
    %4688 = vdwg.mxu0
    %v4689 = vadd.f32 %v4392, %v4665
    %v4690 = vadd.f32 %v4393, %v4667
    %v4691 = vadd.f32 %v4394, %v4669
    %v4692 = vadd.f32 %v4395, %v4671
    %v4693 = vadd.f32 %v4396, %v4681
    %v4694 = vadd.f32 %v4397, %v4683
    %v4695 = vadd.f32 %v4398, %v4685
    %v4696 = vadd.f32 %v4399, %v4687
    %v4697 = vld [vmem:[#allocation6] sm:$0xee]
    %v4698 = vld [vmem:[#allocation11 + $0xc70] sm:$0xff]
    %v4699 = vld [vmem:[#allocation11 + $0xc78] sm:$0xff]
    %v4700 = vld [vmem:[#allocation11 + $0xc80] sm:$0xff]
    %v4701 = vld [vmem:[#allocation11 + $0xc88] sm:$0xff]
    %v4702 = vld [vmem:[#allocation11 + $0xc90] sm:$0xff]
    %v4703 = vld [vmem:[#allocation11 + $0xc98] sm:$0xff]
    %v4704 = vld [vmem:[#allocation11 + $0xca0] sm:$0xff]
    %v4705 = vld [vmem:[#allocation11 + $0xca8] sm:$0xff]
    %v4706 = vld [vmem:[#allocation11 + $0xcb0] sm:$0xff]
    %v4707 = vld [vmem:[#allocation11 + $0xcb8] sm:$0xff]
    %v4708 = vld [vmem:[#allocation11 + $0xcc0] sm:$0xff]
    %v4709 = vld [vmem:[#allocation11 + $0xcc8] sm:$0xff]
    %v4710 = vld [vmem:[#allocation11 + $0xcd0] sm:$0xff]
    %v4711 = vld [vmem:[#allocation11 + $0xcd8] sm:$0xff]
    %v4712 = vld [vmem:[#allocation11 + $0xce0] sm:$0xff]
    %v4713 = vld [vmem:[#allocation11 + $0xce8] sm:$0xff]
    %v4714 = vld [vmem:[#allocation11 + $0xcf0] sm:$0xff]
    %v4715 = vld [vmem:[#allocation11 + $0xcf8] sm:$0xff]
    %v4716 = vld [vmem:[#allocation11 + $0xd00] sm:$0xff]
    %v4717 = vld [vmem:[#allocation11 + $0xd08] sm:$0xff]
    %v4718 = vld [vmem:[#allocation11 + $0xd10] sm:$0xff]
    %v4719 = vld [vmem:[#allocation11 + $0xd18] sm:$0xff]
    %v4720 = vld [vmem:[#allocation11 + $0xd20] sm:$0xff]
    %v4721 = vld [vmem:[#allocation11 + $0xd28] sm:$0xff]
    %v4722 = vld [vmem:[#allocation11 + $0xd30] sm:$0xff]
    %v4723 = vld [vmem:[#allocation11 + $0xd38] sm:$0xff]
    %v4724 = vld [vmem:[#allocation11 + $0xd40] sm:$0xff]
    %v4725 = vld [vmem:[#allocation11 + $0xd48] sm:$0xff]
    %v4727 = vunpack.c.l.b16 %v4697
    %v4728 = vunpack.c.h.b16 %v4697
    %v4729 = vpack.c.b16 %v4165, %v4727
    %v4730 = vpack.c.b16 %v4166, %v4728
    %v4731 = vrot.slane %v4729, 1
    %v4732 = vrot.slane %v4177, 1
    %v4733 = vsel %vm259, %v4731, %v4732
    %v4734 = vrot.slane %v4730, 1
    %v4735 = vrot.slane %v4178, 1
    %v4736 = vsel %vm259, %v4734, %v4735
    %v4737 = vrot.slane %v4432, 1
    %v4738 = vsel %vm259, %v4732, %v4737
    %v4739 = vrot.slane %v4433, 1
    %v4740 = vsel %vm259, %v4735, %v4739
    %v4772 = vunpack.c.l.b16 %v4698
    %v4773 = vunpack.c.h.b16 %v4698
    %v4774 = vunpack.c.l.b16 %v4699
    %v4775 = vunpack.c.h.b16 %v4699
    %v4776 = vunpack.c.l.b16 %v4700
    %v4777 = vunpack.c.h.b16 %v4700
    %v4778 = vunpack.c.l.b16 %v4701
    %v4779 = vunpack.c.h.b16 %v4701
    %v4780 = vunpack.c.l.b16 %v4702
    %v4781 = vunpack.c.h.b16 %v4702
    %v4782 = vunpack.c.l.b16 %v4703
    %v4783 = vunpack.c.h.b16 %v4703
    %v4784 = vunpack.c.l.b16 %v4704
    %v4785 = vunpack.c.h.b16 %v4704
    %v4786 = vunpack.c.l.b16 %v4705
    %v4787 = vunpack.c.h.b16 %v4705
    %v4788 = vunpack.c.l.b16 %v4706
    %v4789 = vunpack.c.h.b16 %v4706
    %v4790 = vunpack.c.l.b16 %v4707
    %v4791 = vunpack.c.h.b16 %v4707
    %v4792 = vunpack.c.l.b16 %v4708
    %v4793 = vunpack.c.h.b16 %v4708
    %v4794 = vunpack.c.l.b16 %v4709
    %v4795 = vunpack.c.h.b16 %v4709
    %v4796 = vunpack.c.l.b16 %v4710
    %v4797 = vunpack.c.h.b16 %v4710
    %v4798 = vunpack.c.l.b16 %v4711
    %v4799 = vunpack.c.h.b16 %v4711
    %v4800 = vunpack.c.l.b16 %v4712
    %v4801 = vunpack.c.h.b16 %v4712
    %v4802 = vunpack.c.l.b16 %v4713
    %v4803 = vunpack.c.h.b16 %v4713
    %v4804 = vunpack.c.l.b16 %v4714
    %v4805 = vunpack.c.h.b16 %v4714
    %v4806 = vunpack.c.l.b16 %v4715
    %v4807 = vunpack.c.h.b16 %v4715
    %v4808 = vunpack.c.l.b16 %v4716
    %v4809 = vunpack.c.h.b16 %v4716
    %v4810 = vunpack.c.l.b16 %v4717
    %v4811 = vunpack.c.h.b16 %v4717
    %v4812 = vunpack.c.l.b16 %v4718
    %v4813 = vunpack.c.h.b16 %v4718
    %v4814 = vunpack.c.l.b16 %v4719
    %v4815 = vunpack.c.h.b16 %v4719
    %v4816 = vunpack.c.l.b16 %v4720
    %v4817 = vunpack.c.h.b16 %v4720
    %v4818 = vunpack.c.l.b16 %v4721
    %v4819 = vunpack.c.h.b16 %v4721
    %v4820 = vunpack.c.l.b16 %v4722
    %v4821 = vunpack.c.h.b16 %v4722
    %v4822 = vunpack.c.l.b16 %v4723
    %v4823 = vunpack.c.h.b16 %v4723
    %v4824 = vunpack.c.l.b16 %v4724
    %v4825 = vunpack.c.h.b16 %v4724
    %v4826 = vunpack.c.l.b16 %v4725
    %v4827 = vunpack.c.h.b16 %v4725
    %v4828 = vpack.c.b16 %v4774, %v4772
    %v4829 = vpack.c.b16 %v4775, %v4773
    %v4830 = vpack.c.b16 %v4778, %v4776
    %v4831 = vpack.c.b16 %v4779, %v4777
    %v4832 = vpack.c.b16 %v4782, %v4780
    %v4833 = vpack.c.b16 %v4783, %v4781
    %v4834 = vpack.c.b16 %v4786, %v4784
    %v4835 = vpack.c.b16 %v4787, %v4785
    %v4836 = vpack.c.b16 %v4790, %v4788
    %v4837 = vpack.c.b16 %v4791, %v4789
    %v4838 = vpack.c.b16 %v4794, %v4792
    %v4839 = vpack.c.b16 %v4795, %v4793
    %v4840 = vpack.c.b16 %v4798, %v4796
    %v4841 = vpack.c.b16 %v4799, %v4797
    %v4842 = vpack.c.b16 %v4802, %v4800
    %v4843 = vpack.c.b16 %v4803, %v4801
    %v4844 = vpack.c.b16 %v4806, %v4804
    %v4845 = vpack.c.b16 %v4807, %v4805
    %v4846 = vpack.c.b16 %v4810, %v4808
    %v4847 = vpack.c.b16 %v4811, %v4809
    %v4848 = vpack.c.b16 %v4814, %v4812
    %v4849 = vpack.c.b16 %v4815, %v4813
    %v4850 = vpack.c.b16 %v4818, %v4816
    %v4851 = vpack.c.b16 %v4819, %v4817
    %v4852 = vpack.c.b16 %v4822, %v4820
    %v4853 = vpack.c.b16 %v4823, %v4821
    %v4854 = vpack.c.b16 %v4826, %v4824
    %v4855 = vpack.c.b16 %v4827, %v4825
    %v4885 = vsel %vm2586, %v4736, 0
    %v4888 = vsel %vm2586, %v4740, 0
    %v4891 = vsel %vm2586, %v4739, 0
    %4893 = vmatprep.subr.bf16.mxu0 %v4843
    %4894 = vmatpush1.bf16.msra.mxu0 %v4842
    %4895 = vmatprep.subr.bf16.mxu0 %v4841
    %4896 = vmatpush1.bf16.msra.mxu0 %v4840
    %4897 = vmatprep.subr.bf16.mxu0 %v4839
    %4898 = vmatpush1.bf16.msra.mxu0 %v4838
    %4899 = vmatprep.subr.bf16.mxu0 %v4837
    %4900 = vmatpush1.bf16.msra.mxu0 %v4836
    %4901 = vmatprep.subr.bf16.mxu0 %v4835
    %4902 = vmatpush1.bf16.msra.mxu0 %v4834
    %4903 = vmatprep.subr.bf16.mxu0 %v4833
    %4904 = vmatpush1.bf16.msra.mxu0 %v4832
    %4905 = vmatprep.subr.bf16.mxu0 %v4831
    %4906 = vmatpush1.bf16.msra.mxu0 %v4830
    %4907 = vmatprep.subr.bf16.mxu0 %v4829
    %4908 = vmatpush1.bf16.msra.mxu0 %v4828
    %4909 = vmatprep.subr.bf16.mxu0 0
    %4910 = vmatpush2.bf16.msra.mxu0 0
    %4911 = vmatprep.subr.bf16.mxu0 0
    %4912 = vmatpush2.bf16.msra.mxu0 0
    %4913 = vmatprep.subr.bf16.mxu0 %v4855
    %4914 = vmatpush2.bf16.msra.mxu0 %v4854
    %4915 = vmatprep.subr.bf16.mxu0 %v4853
    %4916 = vmatpush2.bf16.msra.mxu0 %v4852
    %4917 = vmatprep.subr.bf16.mxu0 %v4851
    %4918 = vmatpush2.bf16.msra.mxu0 %v4850
    %4919 = vmatprep.subr.bf16.mxu0 %v4849
    %4920 = vmatpush2.bf16.msra.mxu0 %v4848
    %4921 = vmatprep.subr.bf16.mxu0 %v4847
    %4922 = vmatpush2.bf16.msra.mxu0 %v4846
    %4923 = vmatprep.subr.bf16.mxu0 %v4845
    %4924 = vmatpush2.bf16.msra.mxu0 %v4844
    %4925 = vmatprep.mubr.bf16.mxu0 %v4885
    %4926 = vmatmul.mubr.bf16.gmra.mxu0 %v4733
    %v4927 = vpop.f32.mrf.mxu0
    %v4928 = vadd.f32 0.0, %v4927
    %v4929 = vpop.f32.mrf.mxu0
    %v4930 = vadd.f32 0.0, %v4929
    %v4931 = vpop.f32.mrf.mxu0
    %v4932 = vadd.f32 0.0, %v4931
    %v4933 = vpop.f32.mrf.mxu0
    %v4934 = vadd.f32 0.0, %v4933
    %4935 = vmatprep.mubr.bf16.mxu0 %v4888
    %4936 = vmatmul.mubr.bf16.gmra.mxu0 %v4738
    %v4937 = vpop.f32.mrf.mxu0
    %v4938 = vpop.f32.mrf.mxu0
    %v4939 = vpop.f32.mrf.mxu0
    %v4940 = vpop.f32.mrf.mxu0
    %4941 = vmatprep.mubr.bf16.mxu0 %v4891
    %4942 = vmatmul.mubr.bf16.gmra.mxu0 %v4737
    %v4943 = vpop.f32.mrf.mxu0
    %v4944 = vadd.f32 0.0, %v4943
    %v4945 = vpop.f32.mrf.mxu0
    %v4946 = vadd.f32 0.0, %v4945
    %v4947 = vpop.f32.mrf.mxu0
    %v4948 = vadd.f32 0.0, %v4947
    %v4949 = vpop.f32.mrf.mxu0
    %v4950 = vadd.f32 0.0, %v4949
    %4951 = vdwg.mxu0
    %v4952 = vadd.f32 %v4689, %v4928
    %v4953 = vadd.f32 %v4690, %v4930
    %v4954 = vadd.f32 %v4691, %v4932
    %v4955 = vadd.f32 %v4692, %v4934
    %v4956 = vadd.f32 %v4693, %v4944
    %v4957 = vadd.f32 %v4694, %v4946
    %v4958 = vadd.f32 %v4695, %v4948
    %v4959 = vadd.f32 %v4696, %v4950
    %s4960 = scalar_lea.vmem [#allocation13], 5
    %v4961 = vld [vmem:[%s4960] ss:$8 sm:$0x3]
    %v4963 = vlaneseq
    %v4964 = vshrl.u32 %v4963, 7
    %v4965 = vsub.s32 0, %v4964
    %v4966 = vrot.slane %v4961, %v4965
    %v4967 = vlaneseq
    %v4968 = vshrl.u32 %v4967, 7
    %v4969 = vsub.s32 1, %v4968
    %v4970 = vrot.slane %v4961, %v4969
    %v4973 = vmul.f32 %v4952, %v4966
    %v4974 = vmul.f32 %v4953, %v4970
    %v4975 = vmul.f32 %v4954, %v4966
    %v4976 = vmul.f32 %v4955, %v4970
    %v4977 = vmul.f32 %v4956, %v4966
    %v4978 = vmul.f32 %v4957, %v4970
    %v4979 = vmul.f32 %v4958, %v4966
    %v4980 = vmul.f32 %v4959, %v4970
    %s4981 = scalar_lea.vmem [#allocation13], 23
    %v4982 = vld [vmem:[%s4981] ss:$8 sm:$0x3]
    %v4984 = vlaneseq
    %v4985 = vshrl.u32 %v4984, 7
    %v4986 = vsub.s32 0, %v4985
    %v4987 = vrot.slane %v4982, %v4986
    %v4988 = vlaneseq
    %v4989 = vshrl.u32 %v4988, 7
    %v4990 = vsub.s32 1, %v4989
    %v4991 = vrot.slane %v4982, %v4990
    %v4994 = vadd.f32 %v4973, %v4987
    %v4995 = vadd.f32 %v4974, %v4991
    %v4996 = vadd.f32 %v4975, %v4987
    %v4997 = vadd.f32 %v4976, %v4991
    %v4998 = vadd.f32 %v4977, %v4987
    %v4999 = vadd.f32 %v4978, %v4991
    %v5000 = vadd.f32 %v4979, %v4987
    %v5001 = vadd.f32 %v4980, %v4991
    %v5002 = vmax.f32 %v4994, 0.0
    %v5003 = vmax.f32 %v4995, 0.0
    %v5004 = vmax.f32 %v4996, 0.0
    %v5005 = vmax.f32 %v4997, 0.0
    %v5006 = vmax.f32 %v4998, 0.0
    %v5007 = vmax.f32 %v4999, 0.0
    %v5008 = vmax.f32 %v5000, 0.0
    %v5009 = vmax.f32 %v5001, 0.0
    %v5010 = vpack.c.bf16 %v5004, %v5002
    %v5011 = vpack.c.bf16 %v5005, %v5003
    %v5012 = vpack.c.bf16 %v5008, %v5006
    %v5013 = vpack.c.bf16 %v5009, %v5007
    %vm5014 = vsmask.f32 256
    %vm5015 = vmand %vm824, %vm5014
    %vm5016 = vcmask 782340
    %vm5017 = vsmask.f32 4352
    %vm5018 = vmand %vm5016, %vm5017
    %vm5019 = vmor %vm5018, %vm5015
    %v5020 = vld [vmem:[#allocation7] sm:$0x11]
    %v5021 = vsel %vm5019, 0, %v5020
    %5022 = vst [vmem:[#allocation7] sm:$0x11] %v5021
    %vm5023 = vcmask 1042434
    %vm5024 = vsmask.f32 7946
    %vm5025 = vmand %vm5023, %vm5024
    %vm5026 = vcmask 784390
    %vm5027 = vsmask.f32 7962
    %vm5028 = vmand %vm5026, %vm5027
    %vm5029 = vmor %vm5028, %vm5025
    %v5030 = vld [vmem:[#allocation7 + $0x8] sm:$0x44]
    %v5031 = vsel %vm5029, 0, %v5030
    %5032 = vst [vmem:[#allocation7 + $0x8] sm:$0x44] %v5031
    %v5035 = vunpack.c.l.b16 %v5010
    %v5036 = vunpack.c.l.b16 %v5011
    %v5037 = vunpack.c.h.b16 %v5010
    %v5038 = vunpack.c.h.b16 %v5011
    %v5039 = vpack.c.b16 %v5036, %v5035
    %v5040 = vpack.c.b16 %v5038, %v5037
    %vm5041 = vsmask.f32 4368
    %vm5042 = vmor %vm5014, %vm5041
    %v5044 = vshrl.u32 %v5039, 16
    %v5046 = vrot.slane %v5044, 7
    %v5047 = vshll.u32 %v5039, 16
    %v5049 = vor.u32 %v5046, %v5047
    %v5050 = vrot.slane %v5046, 4
    %v5052 = vshrl.u32 %v5040, 16
    %v5054 = vrot.slane %v5052, 7
    %v5055 = vshll.u32 %v5040, 16
    %v5057 = vor.u32 %v5054, %v5055
    %v5058 = vsel %vm5042, %v5050, %v5057
    %vm5061 = vcmask 1043456
    %vm5062 = vsmask.f32 7938
    %vm5063 = vmand %vm5061, %vm5062
    %vm5064 = vcmask 785412
    %vm5065 = vsmask.f32 7954
    %vm5066 = vmand %vm5064, %vm5065
    %vm5067 = vmor %vm5066, %vm5063
    %v5068 = vld [vmem:[#allocation7] sm:$0xff]
    %v5069 = vsel %vm5067, %v5049, %v5068
    %5070 = vst [vmem:[#allocation7] sm:$0xff] %v5069
    %vm5071 = vcmask 1042432
    %vm5072 = vsmask.f32 2304
    %vm5073 = vmand %vm5071, %vm5072
    %vm5074 = vcmask 784388
    %vm5075 = vmand %vm5074, %vm1239
    %vm5076 = vmor %vm5075, %vm5073
    %v5077 = vld [vmem:[#allocation7 + $0x8] sm:$0x77]
    %v5078 = vsel %vm5076, %v5058, %v5077
    %5079 = vst [vmem:[#allocation7 + $0x8] sm:$0x77] %v5078
    %v5080 = vld [vmem:[#allocation7 + $0x20] sm:$0x11]
    %v5081 = vsel %vm5019, 0, %v5080
    %5082 = vst [vmem:[#allocation7 + $0x20] sm:$0x11] %v5081
    %v5083 = vld [vmem:[#allocation7 + $0x28] sm:$0x44]
    %v5084 = vsel %vm5029, 0, %v5083
    %5085 = vst [vmem:[#allocation7 + $0x28] sm:$0x44] %v5084
    %v5088 = vunpack.c.l.b16 %v5012
    %v5089 = vunpack.c.l.b16 %v5013
    %v5090 = vunpack.c.h.b16 %v5012
    %v5091 = vunpack.c.h.b16 %v5013
    %v5092 = vpack.c.b16 %v5089, %v5088
    %v5093 = vpack.c.b16 %v5091, %v5090
    %v5095 = vshrl.u32 %v5092, 16
    %v5097 = vrot.slane %v5095, 7
    %v5098 = vshll.u32 %v5092, 16
    %v5100 = vor.u32 %v5097, %v5098
    %v5101 = vrot.slane %v5097, 4
    %v5103 = vshrl.u32 %v5093, 16
    %v5105 = vrot.slane %v5103, 7
    %v5106 = vshll.u32 %v5093, 16
    %v5108 = vor.u32 %v5105, %v5106
    %v5109 = vsel %vm5042, %v5101, %v5108
    %v5112 = vld [vmem:[#allocation7 + $0x20] sm:$0xff]
    %v5113 = vsel %vm5067, %v5100, %v5112
    %5114 = vst [vmem:[#allocation7 + $0x20] sm:$0xff] %v5113
    %v5115 = vld [vmem:[#allocation7 + $0x28] sm:$0x77]
    %v5116 = vsel %vm5076, %v5109, %v5115
    %5117 = vst [vmem:[#allocation7 + $0x28] sm:$0x77] %v5116
    %v5118 = vld [vmem:[#allocation7] sm:$0xff]
    %v5119 = vld [vmem:[#allocation7 + $0x8] sm:$0xff]
    %v5120 = vld [vmem:[#allocation7 + $0x10] sm:$0xff]
    %v5121 = vld [vmem:[#allocation7 + $0x18] sm:$0xff]
    %v5122 = vld [vmem:[#allocation7 + $0x20] sm:$0xff]
    %v5123 = vld [vmem:[#allocation7 + $0x28] sm:$0x33]
    %v5124 = vld [vmem:[#allocation11 + $0xd50] sm:$0xff]
    %v5125 = vld [vmem:[#allocation11 + $0xd58] sm:$0xff]
    %v5126 = vld [vmem:[#allocation11 + $0xd60] sm:$0xff]
    %v5127 = vld [vmem:[#allocation11 + $0xd68] sm:$0xff]
    %v5128 = vld [vmem:[#allocation11 + $0xd70] sm:$0xff]
    %v5129 = vld [vmem:[#allocation11 + $0xd78] sm:$0xff]
    %v5130 = vld [vmem:[#allocation11 + $0xd80] sm:$0xff]
    %v5131 = vld [vmem:[#allocation11 + $0xd88] sm:$0xff]
    %v5132 = vld [vmem:[#allocation11 + $0xd90] sm:$0xff]
    %v5133 = vld [vmem:[#allocation11 + $0xd98] sm:$0xff]
    %v5134 = vld [vmem:[#allocation11 + $0xda0] sm:$0xff]
    %v5135 = vld [vmem:[#allocation11 + $0xda8] sm:$0xff]
    %v5136 = vld [vmem:[#allocation11 + $0xdb0] sm:$0xff]
    %v5137 = vld [vmem:[#allocation11 + $0xdb8] sm:$0xff]
    %v5138 = vld [vmem:[#allocation11 + $0xdc0] sm:$0xff]
    %v5139 = vld [vmem:[#allocation11 + $0xdc8] sm:$0xff]
    %v5140 = vld [vmem:[#allocation11 + $0xdd0] sm:$0xff]
    %v5141 = vld [vmem:[#allocation11 + $0xdd8] sm:$0xff]
    %v5142 = vld [vmem:[#allocation11 + $0xde0] sm:$0xff]
    %v5143 = vld [vmem:[#allocation11 + $0xde8] sm:$0xff]
    %v5144 = vld [vmem:[#allocation11 + $0xdf0] sm:$0xff]
    %v5145 = vld [vmem:[#allocation11 + $0xdf8] sm:$0xff]
    %v5146 = vld [vmem:[#allocation11 + $0xe00] sm:$0xff]
    %v5147 = vld [vmem:[#allocation11 + $0xe08] sm:$0xff]
    %v5148 = vld [vmem:[#allocation11 + $0xe10] sm:$0xff]
    %v5149 = vld [vmem:[#allocation11 + $0xe18] sm:$0xff]
    %v5150 = vld [vmem:[#allocation11 + $0xe20] sm:$0xff]
    %v5151 = vld [vmem:[#allocation11 + $0xe28] sm:$0xff]
    %v5152 = vld [vmem:[#allocation7 + $0x28] sm:$0x77]
    %v5153 = vld [vmem:[#allocation11 + $0xe30] sm:$0xff]
    %v5154 = vld [vmem:[#allocation11 + $0xe38] sm:$0xff]
    %v5155 = vld [vmem:[#allocation11 + $0xe40] sm:$0xff]
    %v5156 = vld [vmem:[#allocation11 + $0xe48] sm:$0xff]
    %v5157 = vld [vmem:[#allocation11 + $0xe50] sm:$0xff]
    %v5158 = vld [vmem:[#allocation11 + $0xe58] sm:$0xff]
    %v5159 = vld [vmem:[#allocation11 + $0xe60] sm:$0xff]
    %v5160 = vld [vmem:[#allocation11 + $0xe68] sm:$0xff]
    %v5161 = vld [vmem:[#allocation11 + $0xe70] sm:$0xff]
    %v5162 = vld [vmem:[#allocation11 + $0xe78] sm:$0xff]
    %v5163 = vld [vmem:[#allocation11 + $0xe80] sm:$0xff]
    %v5164 = vld [vmem:[#allocation11 + $0xe88] sm:$0xff]
    %v5165 = vld [vmem:[#allocation11 + $0xe90] sm:$0xff]
    %v5166 = vld [vmem:[#allocation11 + $0xe98] sm:$0xff]
    %v5167 = vld [vmem:[#allocation11 + $0xea0] sm:$0xff]
    %v5168 = vld [vmem:[#allocation11 + $0xea8] sm:$0xff]
    %v5169 = vld [vmem:[#allocation11 + $0xeb0] sm:$0xff]
    %v5170 = vld [vmem:[#allocation11 + $0xeb8] sm:$0xff]
    %v5171 = vld [vmem:[#allocation11 + $0xec0] sm:$0xff]
    %v5172 = vld [vmem:[#allocation11 + $0xec8] sm:$0xff]
    %v5173 = vld [vmem:[#allocation11 + $0xed0] sm:$0xff]
    %v5174 = vld [vmem:[#allocation11 + $0xed8] sm:$0xff]
    %v5175 = vld [vmem:[#allocation11 + $0xee0] sm:$0xff]
    %v5176 = vld [vmem:[#allocation11 + $0xee8] sm:$0xff]
    %v5177 = vld [vmem:[#allocation11 + $0xef0] sm:$0xff]
    %v5178 = vld [vmem:[#allocation11 + $0xef8] sm:$0xff]
    %v5179 = vld [vmem:[#allocation11 + $0xf00] sm:$0xff]
    %v5180 = vld [vmem:[#allocation11 + $0xf08] sm:$0xff]
    %v5187 = vunpack.c.l.b16 %v5118
    %v5188 = vunpack.c.h.b16 %v5118
    %v5189 = vunpack.c.l.b16 %v5119
    %v5190 = vunpack.c.h.b16 %v5119
    %v5191 = vunpack.c.l.b16 %v5120
    %v5192 = vunpack.c.h.b16 %v5120
    %v5193 = vunpack.c.l.b16 %v5121
    %v5194 = vunpack.c.h.b16 %v5121
    %v5195 = vunpack.c.l.b16 %v5122
    %v5196 = vunpack.c.h.b16 %v5122
    %v5197 = vunpack.c.l.b16 %v5152
    %v5198 = vunpack.c.h.b16 %v5152
    %v5199 = vpack.c.b16 %v5189, %v5187
    %v5200 = vpack.c.b16 %v5190, %v5188
    %v5201 = vpack.c.b16 %v5193, %v5191
    %v5202 = vpack.c.b16 %v5194, %v5192
    %v5203 = vpack.c.b16 %v5197, %v5195
    %v5204 = vpack.c.b16 %v5198, %v5196
    %v5206 = vshrl.u32 %v5199, 16
    %v5208 = vshll.u32 %v5199, 16
    %v5210 = vrot.slane %v5208, 1
    %v5211 = vor.u32 %v5206, %v5210
    %v5213 = vshll.u32 %v5201, 16
    %v5215 = vrot.slane %v5213, 1
    %v5216 = vsel %vm73, %v5211, %v5215
    %v5218 = vshrl.u32 %v5200, 16
    %v5220 = vshll.u32 %v5200, 16
    %v5222 = vrot.slane %v5220, 1
    %v5223 = vor.u32 %v5218, %v5222
    %v5225 = vshll.u32 %v5202, 16
    %v5227 = vrot.slane %v5225, 1
    %v5228 = vsel %vm73, %v5223, %v5227
    %v5229 = vshrl.u32 %v5201, 16
    %v5231 = vor.u32 %v5229, %v5215
    %v5233 = vshll.u32 %v5203, 16
    %v5235 = vrot.slane %v5233, 1
    %v5236 = vsel %vm73, %v5231, %v5235
    %v5237 = vshrl.u32 %v5202, 16
    %v5239 = vor.u32 %v5237, %v5227
    %v5241 = vshll.u32 %v5204, 16
    %v5243 = vrot.slane %v5241, 1
    %v5244 = vsel %vm73, %v5239, %v5243
    %v5245 = vshrl.u32 %v5203, 16
    %v5247 = vor.u32 %v5245, %v5235
    %v5248 = vshrl.u32 %v5204, 16
    %v5250 = vor.u32 %v5248, %v5243
    %v5282 = vunpack.c.l.b16 %v5153
    %v5283 = vunpack.c.h.b16 %v5153
    %v5284 = vunpack.c.l.b16 %v5154
    %v5285 = vunpack.c.h.b16 %v5154
    %v5286 = vunpack.c.l.b16 %v5155
    %v5287 = vunpack.c.h.b16 %v5155
    %v5288 = vunpack.c.l.b16 %v5156
    %v5289 = vunpack.c.h.b16 %v5156
    %v5290 = vunpack.c.l.b16 %v5157
    %v5291 = vunpack.c.h.b16 %v5157
    %v5292 = vunpack.c.l.b16 %v5158
    %v5293 = vunpack.c.h.b16 %v5158
    %v5294 = vunpack.c.l.b16 %v5159
    %v5295 = vunpack.c.h.b16 %v5159
    %v5296 = vunpack.c.l.b16 %v5160
    %v5297 = vunpack.c.h.b16 %v5160
    %v5298 = vunpack.c.l.b16 %v5161
    %v5299 = vunpack.c.h.b16 %v5161
    %v5300 = vunpack.c.l.b16 %v5162
    %v5301 = vunpack.c.h.b16 %v5162
    %v5302 = vunpack.c.l.b16 %v5163
    %v5303 = vunpack.c.h.b16 %v5163
    %v5304 = vunpack.c.l.b16 %v5164
    %v5305 = vunpack.c.h.b16 %v5164
    %v5306 = vunpack.c.l.b16 %v5165
    %v5307 = vunpack.c.h.b16 %v5165
    %v5308 = vunpack.c.l.b16 %v5166
    %v5309 = vunpack.c.h.b16 %v5166
    %v5310 = vunpack.c.l.b16 %v5167
    %v5311 = vunpack.c.h.b16 %v5167
    %v5312 = vunpack.c.l.b16 %v5168
    %v5313 = vunpack.c.h.b16 %v5168
    %v5314 = vunpack.c.l.b16 %v5169
    %v5315 = vunpack.c.h.b16 %v5169
    %v5316 = vunpack.c.l.b16 %v5170
    %v5317 = vunpack.c.h.b16 %v5170
    %v5318 = vunpack.c.l.b16 %v5171
    %v5319 = vunpack.c.h.b16 %v5171
    %v5320 = vunpack.c.l.b16 %v5172
    %v5321 = vunpack.c.h.b16 %v5172
    %v5322 = vunpack.c.l.b16 %v5173
    %v5323 = vunpack.c.h.b16 %v5173
    %v5324 = vunpack.c.l.b16 %v5174
    %v5325 = vunpack.c.h.b16 %v5174
    %v5326 = vunpack.c.l.b16 %v5175
    %v5327 = vunpack.c.h.b16 %v5175
    %v5328 = vunpack.c.l.b16 %v5176
    %v5329 = vunpack.c.h.b16 %v5176
    %v5330 = vunpack.c.l.b16 %v5177
    %v5331 = vunpack.c.h.b16 %v5177
    %v5332 = vunpack.c.l.b16 %v5178
    %v5333 = vunpack.c.h.b16 %v5178
    %v5334 = vunpack.c.l.b16 %v5179
    %v5335 = vunpack.c.h.b16 %v5179
    %v5336 = vunpack.c.l.b16 %v5180
    %v5337 = vunpack.c.h.b16 %v5180
    %v5338 = vpack.c.b16 %v5284, %v5282
    %v5339 = vpack.c.b16 %v5285, %v5283
    %v5340 = vpack.c.b16 %v5288, %v5286
    %v5341 = vpack.c.b16 %v5289, %v5287
    %v5342 = vpack.c.b16 %v5292, %v5290
    %v5343 = vpack.c.b16 %v5293, %v5291
    %v5344 = vpack.c.b16 %v5296, %v5294
    %v5345 = vpack.c.b16 %v5297, %v5295
    %v5346 = vpack.c.b16 %v5300, %v5298
    %v5347 = vpack.c.b16 %v5301, %v5299
    %v5348 = vpack.c.b16 %v5304, %v5302
    %v5349 = vpack.c.b16 %v5305, %v5303
    %v5350 = vpack.c.b16 %v5308, %v5306
    %v5351 = vpack.c.b16 %v5309, %v5307
    %v5352 = vpack.c.b16 %v5312, %v5310
    %v5353 = vpack.c.b16 %v5313, %v5311
    %v5354 = vpack.c.b16 %v5316, %v5314
    %v5355 = vpack.c.b16 %v5317, %v5315
    %v5356 = vpack.c.b16 %v5320, %v5318
    %v5357 = vpack.c.b16 %v5321, %v5319
    %v5358 = vpack.c.b16 %v5324, %v5322
    %v5359 = vpack.c.b16 %v5325, %v5323
    %v5360 = vpack.c.b16 %v5328, %v5326
    %v5361 = vpack.c.b16 %v5329, %v5327
    %v5362 = vpack.c.b16 %v5332, %v5330
    %v5363 = vpack.c.b16 %v5333, %v5331
    %v5364 = vpack.c.b16 %v5336, %v5334
    %v5365 = vpack.c.b16 %v5337, %v5335
    %v5395 = vsel %vm2586, %v5228, 0
    %v5398 = vsel %vm2586, %v5244, 0
    %v5401 = vsel %vm2586, %v5250, 0
    %5403 = vmatprep.subr.bf16.mxu0 %v5353
    %5404 = vmatpush1.bf16.msra.mxu0 %v5352
    %5405 = vmatprep.subr.bf16.mxu0 %v5351
    %5406 = vmatpush1.bf16.msra.mxu0 %v5350
    %5407 = vmatprep.subr.bf16.mxu0 %v5349
    %5408 = vmatpush1.bf16.msra.mxu0 %v5348
    %5409 = vmatprep.subr.bf16.mxu0 %v5347
    %5410 = vmatpush1.bf16.msra.mxu0 %v5346
    %5411 = vmatprep.subr.bf16.mxu0 %v5345
    %5412 = vmatpush1.bf16.msra.mxu0 %v5344
    %5413 = vmatprep.subr.bf16.mxu0 %v5343
    %5414 = vmatpush1.bf16.msra.mxu0 %v5342
    %5415 = vmatprep.subr.bf16.mxu0 %v5341
    %5416 = vmatpush1.bf16.msra.mxu0 %v5340
    %5417 = vmatprep.subr.bf16.mxu0 %v5339
    %5418 = vmatpush1.bf16.msra.mxu0 %v5338
    %5419 = vmatprep.subr.bf16.mxu0 0
    %5420 = vmatpush2.bf16.msra.mxu0 0
    %5421 = vmatprep.subr.bf16.mxu0 0
    %5422 = vmatpush2.bf16.msra.mxu0 0
    %5423 = vmatprep.subr.bf16.mxu0 %v5365
    %5424 = vmatpush2.bf16.msra.mxu0 %v5364
    %5425 = vmatprep.subr.bf16.mxu0 %v5363
    %5426 = vmatpush2.bf16.msra.mxu0 %v5362
    %5427 = vmatprep.subr.bf16.mxu0 %v5361
    %5428 = vmatpush2.bf16.msra.mxu0 %v5360
    %5429 = vmatprep.subr.bf16.mxu0 %v5359
    %5430 = vmatpush2.bf16.msra.mxu0 %v5358
    %5431 = vmatprep.subr.bf16.mxu0 %v5357
    %5432 = vmatpush2.bf16.msra.mxu0 %v5356
    %5433 = vmatprep.subr.bf16.mxu0 %v5355
    %5434 = vmatpush2.bf16.msra.mxu0 %v5354
    %5435 = vmatprep.mubr.bf16.mxu0 %v5395
    %5436 = vmatmul.mubr.bf16.gmra.mxu0 %v5216
    %v5437 = vpop.f32.mrf.mxu0
    %v5438 = vadd.f32 0.0, %v5437
    %v5439 = vpop.f32.mrf.mxu0
    %v5440 = vadd.f32 0.0, %v5439
    %v5441 = vpop.f32.mrf.mxu0
    %v5442 = vadd.f32 0.0, %v5441
    %v5443 = vpop.f32.mrf.mxu0
    %v5444 = vadd.f32 0.0, %v5443
    %5445 = vmatprep.mubr.bf16.mxu0 %v5398
    %5446 = vmatmul.mubr.bf16.gmra.mxu0 %v5236
    %v5447 = vpop.f32.mrf.mxu0
    %v5448 = vpop.f32.mrf.mxu0
    %v5449 = vpop.f32.mrf.mxu0
    %v5450 = vpop.f32.mrf.mxu0
    %5451 = vmatprep.mubr.bf16.mxu0 %v5401
    %5452 = vmatmul.mubr.bf16.gmra.mxu0 %v5247
    %v5453 = vpop.f32.mrf.mxu0
    %v5454 = vadd.f32 0.0, %v5453
    %v5455 = vpop.f32.mrf.mxu0
    %v5456 = vadd.f32 0.0, %v5455
    %v5457 = vpop.f32.mrf.mxu0
    %v5458 = vadd.f32 0.0, %v5457
    %v5459 = vpop.f32.mrf.mxu0
    %v5460 = vadd.f32 0.0, %v5459
    %5461 = vdwg.mxu0
    %v5463 = vunpack.c.l.b16 %v5123
    %v5464 = vunpack.c.h.b16 %v5123
    %v5465 = vpack.c.b16 %v5463, %v5195
    %v5466 = vpack.c.b16 %v5464, %v5196
    %v5498 = vunpack.c.l.b16 %v5124
    %v5499 = vunpack.c.h.b16 %v5124
    %v5500 = vunpack.c.l.b16 %v5125
    %v5501 = vunpack.c.h.b16 %v5125
    %v5502 = vunpack.c.l.b16 %v5126
    %v5503 = vunpack.c.h.b16 %v5126
    %v5504 = vunpack.c.l.b16 %v5127
    %v5505 = vunpack.c.h.b16 %v5127
    %v5506 = vunpack.c.l.b16 %v5128
    %v5507 = vunpack.c.h.b16 %v5128
    %v5508 = vunpack.c.l.b16 %v5129
    %v5509 = vunpack.c.h.b16 %v5129
    %v5510 = vunpack.c.l.b16 %v5130
    %v5511 = vunpack.c.h.b16 %v5130
    %v5512 = vunpack.c.l.b16 %v5131
    %v5513 = vunpack.c.h.b16 %v5131
    %v5514 = vunpack.c.l.b16 %v5132
    %v5515 = vunpack.c.h.b16 %v5132
    %v5516 = vunpack.c.l.b16 %v5133
    %v5517 = vunpack.c.h.b16 %v5133
    %v5518 = vunpack.c.l.b16 %v5134
    %v5519 = vunpack.c.h.b16 %v5134
    %v5520 = vunpack.c.l.b16 %v5135
    %v5521 = vunpack.c.h.b16 %v5135
    %v5522 = vunpack.c.l.b16 %v5136
    %v5523 = vunpack.c.h.b16 %v5136
    %v5524 = vunpack.c.l.b16 %v5137
    %v5525 = vunpack.c.h.b16 %v5137
    %v5526 = vunpack.c.l.b16 %v5138
    %v5527 = vunpack.c.h.b16 %v5138
    %v5528 = vunpack.c.l.b16 %v5139
    %v5529 = vunpack.c.h.b16 %v5139
    %v5530 = vunpack.c.l.b16 %v5140
    %v5531 = vunpack.c.h.b16 %v5140
    %v5532 = vunpack.c.l.b16 %v5141
    %v5533 = vunpack.c.h.b16 %v5141
    %v5534 = vunpack.c.l.b16 %v5142
    %v5535 = vunpack.c.h.b16 %v5142
    %v5536 = vunpack.c.l.b16 %v5143
    %v5537 = vunpack.c.h.b16 %v5143
    %v5538 = vunpack.c.l.b16 %v5144
    %v5539 = vunpack.c.h.b16 %v5144
    %v5540 = vunpack.c.l.b16 %v5145
    %v5541 = vunpack.c.h.b16 %v5145
    %v5542 = vunpack.c.l.b16 %v5146
    %v5543 = vunpack.c.h.b16 %v5146
    %v5544 = vunpack.c.l.b16 %v5147
    %v5545 = vunpack.c.h.b16 %v5147
    %v5546 = vunpack.c.l.b16 %v5148
    %v5547 = vunpack.c.h.b16 %v5148
    %v5548 = vunpack.c.l.b16 %v5149
    %v5549 = vunpack.c.h.b16 %v5149
    %v5550 = vunpack.c.l.b16 %v5150
    %v5551 = vunpack.c.h.b16 %v5150
    %v5552 = vunpack.c.l.b16 %v5151
    %v5553 = vunpack.c.h.b16 %v5151
    %v5554 = vpack.c.b16 %v5500, %v5498
    %v5555 = vpack.c.b16 %v5501, %v5499
    %v5556 = vpack.c.b16 %v5504, %v5502
    %v5557 = vpack.c.b16 %v5505, %v5503
    %v5558 = vpack.c.b16 %v5508, %v5506
    %v5559 = vpack.c.b16 %v5509, %v5507
    %v5560 = vpack.c.b16 %v5512, %v5510
    %v5561 = vpack.c.b16 %v5513, %v5511
    %v5562 = vpack.c.b16 %v5516, %v5514
    %v5563 = vpack.c.b16 %v5517, %v5515
    %v5564 = vpack.c.b16 %v5520, %v5518
    %v5565 = vpack.c.b16 %v5521, %v5519
    %v5566 = vpack.c.b16 %v5524, %v5522
    %v5567 = vpack.c.b16 %v5525, %v5523
    %v5568 = vpack.c.b16 %v5528, %v5526
    %v5569 = vpack.c.b16 %v5529, %v5527
    %v5570 = vpack.c.b16 %v5532, %v5530
    %v5571 = vpack.c.b16 %v5533, %v5531
    %v5572 = vpack.c.b16 %v5536, %v5534
    %v5573 = vpack.c.b16 %v5537, %v5535
    %v5574 = vpack.c.b16 %v5540, %v5538
    %v5575 = vpack.c.b16 %v5541, %v5539
    %v5576 = vpack.c.b16 %v5544, %v5542
    %v5577 = vpack.c.b16 %v5545, %v5543
    %v5578 = vpack.c.b16 %v5548, %v5546
    %v5579 = vpack.c.b16 %v5549, %v5547
    %v5580 = vpack.c.b16 %v5552, %v5550
    %v5581 = vpack.c.b16 %v5553, %v5551
    %v5610 = vsel %vm2586, %v5200, 0
    %v5612 = vsel %vm2586, %v5202, 0
    %v5615 = vsel %vm2586, %v5466, 0
    %5617 = vmatprep.subr.bf16.mxu0 %v5569
    %5618 = vmatpush1.bf16.msra.mxu0 %v5568
    %5619 = vmatprep.subr.bf16.mxu0 %v5567
    %5620 = vmatpush1.bf16.msra.mxu0 %v5566
    %5621 = vmatprep.subr.bf16.mxu0 %v5565
    %5622 = vmatpush1.bf16.msra.mxu0 %v5564
    %5623 = vmatprep.subr.bf16.mxu0 %v5563
    %5624 = vmatpush1.bf16.msra.mxu0 %v5562
    %5625 = vmatprep.subr.bf16.mxu0 %v5561
    %5626 = vmatpush1.bf16.msra.mxu0 %v5560
    %5627 = vmatprep.subr.bf16.mxu0 %v5559
    %5628 = vmatpush1.bf16.msra.mxu0 %v5558
    %5629 = vmatprep.subr.bf16.mxu0 %v5557
    %5630 = vmatpush1.bf16.msra.mxu0 %v5556
    %5631 = vmatprep.subr.bf16.mxu0 %v5555
    %5632 = vmatpush1.bf16.msra.mxu0 %v5554
    %5633 = vmatprep.subr.bf16.mxu0 0
    %5634 = vmatpush2.bf16.msra.mxu0 0
    %5635 = vmatprep.subr.bf16.mxu0 0
    %5636 = vmatpush2.bf16.msra.mxu0 0
    %5637 = vmatprep.subr.bf16.mxu0 %v5581
    %5638 = vmatpush2.bf16.msra.mxu0 %v5580
    %5639 = vmatprep.subr.bf16.mxu0 %v5579
    %5640 = vmatpush2.bf16.msra.mxu0 %v5578
    %5641 = vmatprep.subr.bf16.mxu0 %v5577
    %5642 = vmatpush2.bf16.msra.mxu0 %v5576
    %5643 = vmatprep.subr.bf16.mxu0 %v5575
    %5644 = vmatpush2.bf16.msra.mxu0 %v5574
    %5645 = vmatprep.subr.bf16.mxu0 %v5573
    %5646 = vmatpush2.bf16.msra.mxu0 %v5572
    %5647 = vmatprep.subr.bf16.mxu0 %v5571
    %5648 = vmatpush2.bf16.msra.mxu0 %v5570
    %5649 = vmatprep.mubr.bf16.mxu0 %v5610
    %5650 = vmatmul.mubr.bf16.gmra.mxu0 %v5199
    %v5651 = vpop.f32.mrf.mxu0
    %v5652 = vadd.f32 %v5438, %v5651
    %v5653 = vpop.f32.mrf.mxu0
    %v5654 = vadd.f32 %v5440, %v5653
    %v5655 = vpop.f32.mrf.mxu0
    %v5656 = vadd.f32 %v5442, %v5655
    %v5657 = vpop.f32.mrf.mxu0
    %v5658 = vadd.f32 %v5444, %v5657
    %5659 = vmatprep.mubr.bf16.mxu0 %v5612
    %5660 = vmatmul.mubr.bf16.gmra.mxu0 %v5201
    %v5661 = vpop.f32.mrf.mxu0
    %v5662 = vpop.f32.mrf.mxu0
    %v5663 = vpop.f32.mrf.mxu0
    %v5664 = vpop.f32.mrf.mxu0
    %5665 = vmatprep.mubr.bf16.mxu0 %v5615
    %5666 = vmatmul.mubr.bf16.gmra.mxu0 %v5465
    %v5667 = vpop.f32.mrf.mxu0
    %v5668 = vadd.f32 %v5454, %v5667
    %v5669 = vpop.f32.mrf.mxu0
    %v5670 = vadd.f32 %v5456, %v5669
    %v5671 = vpop.f32.mrf.mxu0
    %v5672 = vadd.f32 %v5458, %v5671
    %v5673 = vpop.f32.mrf.mxu0
    %v5674 = vadd.f32 %v5460, %v5673
    %5675 = vdwg.mxu0
    %v5676 = vld [vmem:[#allocation7] sm:$0xee]
    %v5677 = vld [vmem:[#allocation11 + $0xf10] sm:$0xff]
    %v5678 = vld [vmem:[#allocation11 + $0xf18] sm:$0xff]
    %v5679 = vld [vmem:[#allocation11 + $0xf20] sm:$0xff]
    %v5680 = vld [vmem:[#allocation11 + $0xf28] sm:$0xff]
    %v5681 = vld [vmem:[#allocation11 + $0xf30] sm:$0xff]
    %v5682 = vld [vmem:[#allocation11 + $0xf38] sm:$0xff]
    %v5683 = vld [vmem:[#allocation11 + $0xf40] sm:$0xff]
    %v5684 = vld [vmem:[#allocation11 + $0xf48] sm:$0xff]
    %v5685 = vld [vmem:[#allocation11 + $0xf50] sm:$0xff]
    %v5686 = vld [vmem:[#allocation11 + $0xf58] sm:$0xff]
    %v5687 = vld [vmem:[#allocation11 + $0xf60] sm:$0xff]
    %v5688 = vld [vmem:[#allocation11 + $0xf68] sm:$0xff]
    %v5689 = vld [vmem:[#allocation11 + $0xf70] sm:$0xff]
    %v5690 = vld [vmem:[#allocation11 + $0xf78] sm:$0xff]
    %v5691 = vld [vmem:[#allocation11 + $0xf80] sm:$0xff]
    %v5692 = vld [vmem:[#allocation11 + $0xf88] sm:$0xff]
    %v5693 = vld [vmem:[#allocation11 + $0xf90] sm:$0xff]
    %v5694 = vld [vmem:[#allocation11 + $0xf98] sm:$0xff]
    %v5695 = vld [vmem:[#allocation11 + $0xfa0] sm:$0xff]
    %v5696 = vld [vmem:[#allocation11 + $0xfa8] sm:$0xff]
    %v5697 = vld [vmem:[#allocation11 + $0xfb0] sm:$0xff]
    %v5698 = vld [vmem:[#allocation11 + $0xfb8] sm:$0xff]
    %v5699 = vld [vmem:[#allocation11 + $0xfc0] sm:$0xff]
    %v5700 = vld [vmem:[#allocation11 + $0xfc8] sm:$0xff]
    %v5701 = vld [vmem:[#allocation11 + $0xfd0] sm:$0xff]
    %v5702 = vld [vmem:[#allocation11 + $0xfd8] sm:$0xff]
    %v5703 = vld [vmem:[#allocation11 + $0xfe0] sm:$0xff]
    %v5704 = vld [vmem:[#allocation11 + $0xfe8] sm:$0xff]
    %v5706 = vunpack.c.l.b16 %v5676
    %v5707 = vunpack.c.h.b16 %v5676
    %v5708 = vpack.c.b16 %v5189, %v5706
    %v5709 = vpack.c.b16 %v5190, %v5707
    %v5710 = vrot.slane %v5708, 1
    %v5711 = vrot.slane %v5201, 1
    %v5712 = vsel %vm259, %v5710, %v5711
    %v5713 = vrot.slane %v5709, 1
    %v5714 = vrot.slane %v5202, 1
    %v5715 = vsel %vm259, %v5713, %v5714
    %v5716 = vrot.slane %v5203, 1
    %v5717 = vsel %vm259, %v5711, %v5716
    %v5718 = vrot.slane %v5204, 1
    %v5719 = vsel %vm259, %v5714, %v5718
    %v5751 = vunpack.c.l.b16 %v5677
    %v5752 = vunpack.c.h.b16 %v5677
    %v5753 = vunpack.c.l.b16 %v5678
    %v5754 = vunpack.c.h.b16 %v5678
    %v5755 = vunpack.c.l.b16 %v5679
    %v5756 = vunpack.c.h.b16 %v5679
    %v5757 = vunpack.c.l.b16 %v5680
    %v5758 = vunpack.c.h.b16 %v5680
    %v5759 = vunpack.c.l.b16 %v5681
    %v5760 = vunpack.c.h.b16 %v5681
    %v5761 = vunpack.c.l.b16 %v5682
    %v5762 = vunpack.c.h.b16 %v5682
    %v5763 = vunpack.c.l.b16 %v5683
    %v5764 = vunpack.c.h.b16 %v5683
    %v5765 = vunpack.c.l.b16 %v5684
    %v5766 = vunpack.c.h.b16 %v5684
    %v5767 = vunpack.c.l.b16 %v5685
    %v5768 = vunpack.c.h.b16 %v5685
    %v5769 = vunpack.c.l.b16 %v5686
    %v5770 = vunpack.c.h.b16 %v5686
    %v5771 = vunpack.c.l.b16 %v5687
    %v5772 = vunpack.c.h.b16 %v5687
    %v5773 = vunpack.c.l.b16 %v5688
    %v5774 = vunpack.c.h.b16 %v5688
    %v5775 = vunpack.c.l.b16 %v5689
    %v5776 = vunpack.c.h.b16 %v5689
    %v5777 = vunpack.c.l.b16 %v5690
    %v5778 = vunpack.c.h.b16 %v5690
    %v5779 = vunpack.c.l.b16 %v5691
    %v5780 = vunpack.c.h.b16 %v5691
    %v5781 = vunpack.c.l.b16 %v5692
    %v5782 = vunpack.c.h.b16 %v5692
    %v5783 = vunpack.c.l.b16 %v5693
    %v5784 = vunpack.c.h.b16 %v5693
    %v5785 = vunpack.c.l.b16 %v5694
    %v5786 = vunpack.c.h.b16 %v5694
    %v5787 = vunpack.c.l.b16 %v5695
    %v5788 = vunpack.c.h.b16 %v5695
    %v5789 = vunpack.c.l.b16 %v5696
    %v5790 = vunpack.c.h.b16 %v5696
    %v5791 = vunpack.c.l.b16 %v5697
    %v5792 = vunpack.c.h.b16 %v5697
    %v5793 = vunpack.c.l.b16 %v5698
    %v5794 = vunpack.c.h.b16 %v5698
    %v5795 = vunpack.c.l.b16 %v5699
    %v5796 = vunpack.c.h.b16 %v5699
    %v5797 = vunpack.c.l.b16 %v5700
    %v5798 = vunpack.c.h.b16 %v5700
    %v5799 = vunpack.c.l.b16 %v5701
    %v5800 = vunpack.c.h.b16 %v5701
    %v5801 = vunpack.c.l.b16 %v5702
    %v5802 = vunpack.c.h.b16 %v5702
    %v5803 = vunpack.c.l.b16 %v5703
    %v5804 = vunpack.c.h.b16 %v5703
    %v5805 = vunpack.c.l.b16 %v5704
    %v5806 = vunpack.c.h.b16 %v5704
    %v5807 = vpack.c.b16 %v5753, %v5751
    %v5808 = vpack.c.b16 %v5754, %v5752
    %v5809 = vpack.c.b16 %v5757, %v5755
    %v5810 = vpack.c.b16 %v5758, %v5756
    %v5811 = vpack.c.b16 %v5761, %v5759
    %v5812 = vpack.c.b16 %v5762, %v5760
    %v5813 = vpack.c.b16 %v5765, %v5763
    %v5814 = vpack.c.b16 %v5766, %v5764
    %v5815 = vpack.c.b16 %v5769, %v5767
    %v5816 = vpack.c.b16 %v5770, %v5768
    %v5817 = vpack.c.b16 %v5773, %v5771
    %v5818 = vpack.c.b16 %v5774, %v5772
    %v5819 = vpack.c.b16 %v5777, %v5775
    %v5820 = vpack.c.b16 %v5778, %v5776
    %v5821 = vpack.c.b16 %v5781, %v5779
    %v5822 = vpack.c.b16 %v5782, %v5780
    %v5823 = vpack.c.b16 %v5785, %v5783
    %v5824 = vpack.c.b16 %v5786, %v5784
    %v5825 = vpack.c.b16 %v5789, %v5787
    %v5826 = vpack.c.b16 %v5790, %v5788
    %v5827 = vpack.c.b16 %v5793, %v5791
    %v5828 = vpack.c.b16 %v5794, %v5792
    %v5829 = vpack.c.b16 %v5797, %v5795
    %v5830 = vpack.c.b16 %v5798, %v5796
    %v5831 = vpack.c.b16 %v5801, %v5799
    %v5832 = vpack.c.b16 %v5802, %v5800
    %v5833 = vpack.c.b16 %v5805, %v5803
    %v5834 = vpack.c.b16 %v5806, %v5804
    %v5864 = vsel %vm2586, %v5715, 0
    %v5867 = vsel %vm2586, %v5719, 0
    %v5870 = vsel %vm2586, %v5718, 0
    %5872 = vmatprep.subr.bf16.mxu0 %v5822
    %5873 = vmatpush1.bf16.msra.mxu0 %v5821
    %5874 = vmatprep.subr.bf16.mxu0 %v5820
    %5875 = vmatpush1.bf16.msra.mxu0 %v5819
    %5876 = vmatprep.subr.bf16.mxu0 %v5818
    %5877 = vmatpush1.bf16.msra.mxu0 %v5817
    %5878 = vmatprep.subr.bf16.mxu0 %v5816
    %5879 = vmatpush1.bf16.msra.mxu0 %v5815
    %5880 = vmatprep.subr.bf16.mxu0 %v5814
    %5881 = vmatpush1.bf16.msra.mxu0 %v5813
    %5882 = vmatprep.subr.bf16.mxu0 %v5812
    %5883 = vmatpush1.bf16.msra.mxu0 %v5811
    %5884 = vmatprep.subr.bf16.mxu0 %v5810
    %5885 = vmatpush1.bf16.msra.mxu0 %v5809
    %5886 = vmatprep.subr.bf16.mxu0 %v5808
    %5887 = vmatpush1.bf16.msra.mxu0 %v5807
    %5888 = vmatprep.subr.bf16.mxu0 0
    %5889 = vmatpush2.bf16.msra.mxu0 0
    %5890 = vmatprep.subr.bf16.mxu0 0
    %5891 = vmatpush2.bf16.msra.mxu0 0
    %5892 = vmatprep.subr.bf16.mxu0 %v5834
    %5893 = vmatpush2.bf16.msra.mxu0 %v5833
    %5894 = vmatprep.subr.bf16.mxu0 %v5832
    %5895 = vmatpush2.bf16.msra.mxu0 %v5831
    %5896 = vmatprep.subr.bf16.mxu0 %v5830
    %5897 = vmatpush2.bf16.msra.mxu0 %v5829
    %5898 = vmatprep.subr.bf16.mxu0 %v5828
    %5899 = vmatpush2.bf16.msra.mxu0 %v5827
    %5900 = vmatprep.subr.bf16.mxu0 %v5826
    %5901 = vmatpush2.bf16.msra.mxu0 %v5825
    %5902 = vmatprep.subr.bf16.mxu0 %v5824
    %5903 = vmatpush2.bf16.msra.mxu0 %v5823
    %5904 = vmatprep.mubr.bf16.mxu0 %v5864
    %5905 = vmatmul.mubr.bf16.gmra.mxu0 %v5712
    %v5906 = vpop.f32.mrf.mxu0
    %v5907 = vadd.f32 0.0, %v5906
    %v5908 = vpop.f32.mrf.mxu0
    %v5909 = vadd.f32 0.0, %v5908
    %v5910 = vpop.f32.mrf.mxu0
    %v5911 = vadd.f32 0.0, %v5910
    %v5912 = vpop.f32.mrf.mxu0
    %v5913 = vadd.f32 0.0, %v5912
    %5914 = vmatprep.mubr.bf16.mxu0 %v5867
    %5915 = vmatmul.mubr.bf16.gmra.mxu0 %v5717
    %v5916 = vpop.f32.mrf.mxu0
    %v5917 = vpop.f32.mrf.mxu0
    %v5918 = vpop.f32.mrf.mxu0
    %v5919 = vpop.f32.mrf.mxu0
    %5920 = vmatprep.mubr.bf16.mxu0 %v5870
    %5921 = vmatmul.mubr.bf16.gmra.mxu0 %v5716
    %v5922 = vpop.f32.mrf.mxu0
    %v5923 = vadd.f32 0.0, %v5922
    %v5924 = vpop.f32.mrf.mxu0
    %v5925 = vadd.f32 0.0, %v5924
    %v5926 = vpop.f32.mrf.mxu0
    %v5927 = vadd.f32 0.0, %v5926
    %v5928 = vpop.f32.mrf.mxu0
    %v5929 = vadd.f32 0.0, %v5928
    %5930 = vdwg.mxu0
    %v5931 = vadd.f32 %v5652, %v5907
    %v5932 = vadd.f32 %v5654, %v5909
    %v5933 = vadd.f32 %v5656, %v5911
    %v5934 = vadd.f32 %v5658, %v5913
    %v5935 = vadd.f32 %v5668, %v5923
    %v5936 = vadd.f32 %v5670, %v5925
    %v5937 = vadd.f32 %v5672, %v5927
    %v5938 = vadd.f32 %v5674, %v5929
    %s5939 = scalar_lea.vmem [#allocation13], 6
    %v5940 = vld [vmem:[%s5939] ss:$8 sm:$0x3]
    %v5942 = vlaneseq
    %v5943 = vshrl.u32 %v5942, 7
    %v5944 = vsub.s32 0, %v5943
    %v5945 = vrot.slane %v5940, %v5944
    %v5946 = vlaneseq
    %v5947 = vshrl.u32 %v5946, 7
    %v5948 = vsub.s32 1, %v5947
    %v5949 = vrot.slane %v5940, %v5948
    %v5952 = vmul.f32 %v5931, %v5945
    %v5953 = vmul.f32 %v5932, %v5949
    %v5954 = vmul.f32 %v5933, %v5945
    %v5955 = vmul.f32 %v5934, %v5949
    %v5956 = vmul.f32 %v5935, %v5945
    %v5957 = vmul.f32 %v5936, %v5949
    %v5958 = vmul.f32 %v5937, %v5945
    %v5959 = vmul.f32 %v5938, %v5949
    %s5960 = scalar_lea.vmem [#allocation13], 32
    %v5961 = vld [vmem:[%s5960] ss:$8 sm:$0x3]
    %v5963 = vlaneseq
    %v5964 = vshrl.u32 %v5963, 7
    %v5965 = vsub.s32 0, %v5964
    %v5966 = vrot.slane %v5961, %v5965
    %v5967 = vlaneseq
    %v5968 = vshrl.u32 %v5967, 7
    %v5969 = vsub.s32 1, %v5968
    %v5970 = vrot.slane %v5961, %v5969
    %v5973 = vadd.f32 %v5952, %v5966
    %v5974 = vadd.f32 %v5953, %v5970
    %v5975 = vadd.f32 %v5954, %v5966
    %v5976 = vadd.f32 %v5955, %v5970
    %v5977 = vadd.f32 %v5956, %v5966
    %v5978 = vadd.f32 %v5957, %v5970
    %v5979 = vadd.f32 %v5958, %v5966
    %v5980 = vadd.f32 %v5959, %v5970
    %v5981 = vmax.f32 %v5973, 0.0
    %v5982 = vmax.f32 %v5974, 0.0
    %v5983 = vmax.f32 %v5975, 0.0
    %v5984 = vmax.f32 %v5976, 0.0
    %v5985 = vmax.f32 %v5977, 0.0
    %v5986 = vmax.f32 %v5978, 0.0
    %v5987 = vmax.f32 %v5979, 0.0
    %v5988 = vmax.f32 %v5980, 0.0
    %v5989 = vpack.c.bf16 %v5983, %v5981
    %v5990 = vpack.c.bf16 %v5984, %v5982
    %v5991 = vpack.c.bf16 %v5987, %v5985
    %v5992 = vpack.c.bf16 %v5988, %v5986
    %5993 = vst [vmem:[#allocation8] sm:$0x11] 0
    %5994 = vst [vmem:[#allocation8 + $0x8] sm:$0x88] 0
    %v5997 = vunpack.c.l.b16 %v5989
    %v5998 = vunpack.c.l.b16 %v5990
    %v5999 = vunpack.c.h.b16 %v5989
    %v6000 = vunpack.c.h.b16 %v5990
    %v6001 = vpack.c.b16 %v5998, %v5997
    %v6002 = vpack.c.b16 %v6000, %v5999
    %v6003 = vrot.slane %v6001, 7
    %v6004 = vrot.slane %v6003, 4
    %v6005 = vrot.slane %v6002, 7
    %v6006 = vsel %vm826, %v6004, %v6005
    %6009 = vst [vmem:[#allocation8] sm:$0xee] %v6003
    %6010 = vst [vmem:[#allocation8 + $0x8] sm:$0x77] %v6006
    %6011 = vst [vmem:[#allocation8 + $0x20] sm:$0x11] 0
    %6012 = vst [vmem:[#allocation8 + $0x28] sm:$0x88] 0
    %v6015 = vunpack.c.l.b16 %v5991
    %v6016 = vunpack.c.l.b16 %v5992
    %v6017 = vunpack.c.h.b16 %v5991
    %v6018 = vunpack.c.h.b16 %v5992
    %v6019 = vpack.c.b16 %v6016, %v6015
    %v6020 = vpack.c.b16 %v6018, %v6017
    %v6021 = vrot.slane %v6019, 7
    %v6022 = vrot.slane %v6021, 4
    %v6023 = vrot.slane %v6020, 7
    %v6024 = vsel %vm826, %v6022, %v6023
    %6027 = vst [vmem:[#allocation8 + $0x20] sm:$0xee] %v6021
    %6028 = vst [vmem:[#allocation8 + $0x28] sm:$0x77] %v6024
    %v6029 = vld [vmem:[#allocation3] sm:$0xf]
    %v6030 = vld [vmem:[#allocation3 + $0x4] sm:$0xf]
    %v6031 = vld [vmem:[#allocation3 + $0x8] sm:$0xf]
    %v6032 = vld [vmem:[#allocation3 + $0xc] sm:$0xf]
    %v6033 = vld [vmem:[#allocation3 + $0x10] sm:$0xf]
    %v6034 = vld [vmem:[#allocation3 + $0x14] sm:$0xf]
    %v6035 = vld [vmem:[#allocation11 + $0xff0] sm:$0xff]
    %v6036 = vld [vmem:[#allocation11 + $0xff8] sm:$0xff]
    %v6037 = vld [vmem:[#allocation11 + $0x1000] sm:$0xff]
    %v6038 = vld [vmem:[#allocation11 + $0x1008] sm:$0xff]
    %v6039 = vld [vmem:[#allocation11 + $0x1010] sm:$0xff]
    %v6040 = vld [vmem:[#allocation11 + $0x1018] sm:$0xff]
    %v6041 = vld [vmem:[#allocation11 + $0x1020] sm:$0xff]
    %v6042 = vld [vmem:[#allocation11 + $0x1028] sm:$0xff]
    %v6043 = vld [vmem:[#allocation11 + $0x1030] sm:$0xff]
    %v6044 = vld [vmem:[#allocation11 + $0x1038] sm:$0xff]
    %v6045 = vld [vmem:[#allocation11 + $0x1040] sm:$0xff]
    %v6046 = vld [vmem:[#allocation11 + $0x1048] sm:$0xff]
    %v6047 = vld [vmem:[#allocation11 + $0x1050] sm:$0xff]
    %v6048 = vld [vmem:[#allocation11 + $0x1058] sm:$0xff]
    %v6049 = vld [vmem:[#allocation11 + $0x1060] sm:$0xff]
    %v6050 = vld [vmem:[#allocation11 + $0x1068] sm:$0xff]
    %v6051 = vld [vmem:[#allocation8] sm:$0xff]
    %v6052 = vld [vmem:[#allocation8 + $0x8] sm:$0xff]
    %v6053 = vld [vmem:[#allocation8 + $0x10] sm:$0xff]
    %v6054 = vld [vmem:[#allocation8 + $0x18] sm:$0xff]
    %v6055 = vld [vmem:[#allocation8 + $0x20] sm:$0xff]
    %v6056 = vld [vmem:[#allocation8 + $0x28] sm:$0xff]
    %v6057 = vld [vmem:[#allocation11 + $0x1070] sm:$0xff]
    %v6058 = vld [vmem:[#allocation11 + $0x1078] sm:$0xff]
    %v6059 = vld [vmem:[#allocation11 + $0x1080] sm:$0xff]
    %v6060 = vld [vmem:[#allocation11 + $0x1088] sm:$0xff]
    %v6061 = vld [vmem:[#allocation11 + $0x1090] sm:$0xff]
    %v6062 = vld [vmem:[#allocation11 + $0x1098] sm:$0xff]
    %v6063 = vld [vmem:[#allocation11 + $0x10a0] sm:$0xff]
    %v6064 = vld [vmem:[#allocation11 + $0x10a8] sm:$0xff]
    %v6065 = vld [vmem:[#allocation11 + $0x10b0] sm:$0xff]
    %v6066 = vld [vmem:[#allocation11 + $0x10b8] sm:$0xff]
    %v6067 = vld [vmem:[#allocation11 + $0x10c0] sm:$0xff]
    %v6068 = vld [vmem:[#allocation11 + $0x10c8] sm:$0xff]
    %v6069 = vld [vmem:[#allocation11 + $0x10d0] sm:$0xff]
    %v6070 = vld [vmem:[#allocation11 + $0x10d8] sm:$0xff]
    %v6071 = vld [vmem:[#allocation11 + $0x10e0] sm:$0xff]
    %v6072 = vld [vmem:[#allocation11 + $0x10e8] sm:$0xff]
    %v6073 = vld [vmem:[#allocation11 + $0x10f0] sm:$0xff]
    %v6074 = vld [vmem:[#allocation11 + $0x10f8] sm:$0xff]
    %v6075 = vld [vmem:[#allocation11 + $0x1100] sm:$0xff]
    %v6076 = vld [vmem:[#allocation11 + $0x1108] sm:$0xff]
    %v6077 = vld [vmem:[#allocation11 + $0x1110] sm:$0xff]
    %v6078 = vld [vmem:[#allocation11 + $0x1118] sm:$0xff]
    %v6079 = vld [vmem:[#allocation11 + $0x1120] sm:$0xff]
    %v6080 = vld [vmem:[#allocation11 + $0x1128] sm:$0xff]
    %v6081 = vld [vmem:[#allocation11 + $0x1130] sm:$0xff]
    %v6082 = vld [vmem:[#allocation11 + $0x1138] sm:$0xff]
    %v6083 = vld [vmem:[#allocation11 + $0x1140] sm:$0xff]
    %v6084 = vld [vmem:[#allocation11 + $0x1148] sm:$0xff]
    %v6085 = vld [vmem:[#allocation11 + $0x1150] sm:$0xff]
    %v6086 = vld [vmem:[#allocation11 + $0x1158] sm:$0xff]
    %v6087 = vld [vmem:[#allocation11 + $0x1160] sm:$0xff]
    %v6088 = vld [vmem:[#allocation11 + $0x1168] sm:$0xff]
    %v6095 = vunpack.c.l.b16 %v6051
    %v6096 = vunpack.c.h.b16 %v6051
    %v6097 = vunpack.c.l.b16 %v6052
    %v6098 = vunpack.c.h.b16 %v6052
    %v6099 = vunpack.c.l.b16 %v6053
    %v6100 = vunpack.c.h.b16 %v6053
    %v6101 = vunpack.c.l.b16 %v6054
    %v6102 = vunpack.c.h.b16 %v6054
    %v6103 = vunpack.c.l.b16 %v6055
    %v6104 = vunpack.c.h.b16 %v6055
    %v6105 = vunpack.c.l.b16 %v6056
    %v6106 = vunpack.c.h.b16 %v6056
    %v6107 = vpack.c.b16 %v6097, %v6095
    %v6108 = vpack.c.b16 %v6098, %v6096
    %v6109 = vpack.c.b16 %v6101, %v6099
    %v6110 = vpack.c.b16 %v6102, %v6100
    %v6111 = vpack.c.b16 %v6105, %v6103
    %v6112 = vpack.c.b16 %v6106, %v6104
    %v6151 = vunpack.c.l.b16 %v6057
    %v6152 = vunpack.c.h.b16 %v6057
    %v6153 = vunpack.c.l.b16 %v6058
    %v6154 = vunpack.c.h.b16 %v6058
    %v6155 = vunpack.c.l.b16 %v6059
    %v6156 = vunpack.c.h.b16 %v6059
    %v6157 = vunpack.c.l.b16 %v6060
    %v6158 = vunpack.c.h.b16 %v6060
    %v6159 = vunpack.c.l.b16 %v6061
    %v6160 = vunpack.c.h.b16 %v6061
    %v6161 = vunpack.c.l.b16 %v6062
    %v6162 = vunpack.c.h.b16 %v6062
    %v6163 = vunpack.c.l.b16 %v6063
    %v6164 = vunpack.c.h.b16 %v6063
    %v6165 = vunpack.c.l.b16 %v6064
    %v6166 = vunpack.c.h.b16 %v6064
    %v6167 = vunpack.c.l.b16 %v6065
    %v6168 = vunpack.c.h.b16 %v6065
    %v6169 = vunpack.c.l.b16 %v6066
    %v6170 = vunpack.c.h.b16 %v6066
    %v6171 = vunpack.c.l.b16 %v6067
    %v6172 = vunpack.c.h.b16 %v6067
    %v6173 = vunpack.c.l.b16 %v6068
    %v6174 = vunpack.c.h.b16 %v6068
    %v6175 = vunpack.c.l.b16 %v6069
    %v6176 = vunpack.c.h.b16 %v6069
    %v6177 = vunpack.c.l.b16 %v6070
    %v6178 = vunpack.c.h.b16 %v6070
    %v6179 = vunpack.c.l.b16 %v6071
    %v6180 = vunpack.c.h.b16 %v6071
    %v6181 = vunpack.c.l.b16 %v6072
    %v6182 = vunpack.c.h.b16 %v6072
    %v6183 = vunpack.c.l.b16 %v6073
    %v6184 = vunpack.c.h.b16 %v6073
    %v6185 = vunpack.c.l.b16 %v6074
    %v6186 = vunpack.c.h.b16 %v6074
    %v6187 = vunpack.c.l.b16 %v6075
    %v6188 = vunpack.c.h.b16 %v6075
    %v6189 = vunpack.c.l.b16 %v6076
    %v6190 = vunpack.c.h.b16 %v6076
    %v6191 = vunpack.c.l.b16 %v6077
    %v6192 = vunpack.c.h.b16 %v6077
    %v6193 = vunpack.c.l.b16 %v6078
    %v6194 = vunpack.c.h.b16 %v6078
    %v6195 = vunpack.c.l.b16 %v6079
    %v6196 = vunpack.c.h.b16 %v6079
    %v6197 = vunpack.c.l.b16 %v6080
    %v6198 = vunpack.c.h.b16 %v6080
    %v6199 = vunpack.c.l.b16 %v6081
    %v6200 = vunpack.c.h.b16 %v6081
    %v6201 = vunpack.c.l.b16 %v6082
    %v6202 = vunpack.c.h.b16 %v6082
    %v6203 = vunpack.c.l.b16 %v6083
    %v6204 = vunpack.c.h.b16 %v6083
    %v6205 = vunpack.c.l.b16 %v6084
    %v6206 = vunpack.c.h.b16 %v6084
    %v6207 = vunpack.c.l.b16 %v6085
    %v6208 = vunpack.c.h.b16 %v6085
    %v6209 = vunpack.c.l.b16 %v6086
    %v6210 = vunpack.c.h.b16 %v6086
    %v6211 = vunpack.c.l.b16 %v6087
    %v6212 = vunpack.c.h.b16 %v6087
    %v6213 = vunpack.c.l.b16 %v6088
    %v6214 = vunpack.c.h.b16 %v6088
    %v6215 = vpack.c.b16 %v6153, %v6151
    %v6216 = vpack.c.b16 %v6154, %v6152
    %v6217 = vpack.c.b16 %v6157, %v6155
    %v6218 = vpack.c.b16 %v6158, %v6156
    %v6219 = vpack.c.b16 %v6161, %v6159
    %v6220 = vpack.c.b16 %v6162, %v6160
    %v6221 = vpack.c.b16 %v6165, %v6163
    %v6222 = vpack.c.b16 %v6166, %v6164
    %v6223 = vpack.c.b16 %v6169, %v6167
    %v6224 = vpack.c.b16 %v6170, %v6168
    %v6225 = vpack.c.b16 %v6173, %v6171
    %v6226 = vpack.c.b16 %v6174, %v6172
    %v6227 = vpack.c.b16 %v6177, %v6175
    %v6228 = vpack.c.b16 %v6178, %v6176
    %v6229 = vpack.c.b16 %v6181, %v6179
    %v6230 = vpack.c.b16 %v6182, %v6180
    %v6231 = vpack.c.b16 %v6185, %v6183
    %v6232 = vpack.c.b16 %v6186, %v6184
    %v6233 = vpack.c.b16 %v6189, %v6187
    %v6234 = vpack.c.b16 %v6190, %v6188
    %v6235 = vpack.c.b16 %v6193, %v6191
    %v6236 = vpack.c.b16 %v6194, %v6192
    %v6237 = vpack.c.b16 %v6197, %v6195
    %v6238 = vpack.c.b16 %v6198, %v6196
    %v6239 = vpack.c.b16 %v6201, %v6199
    %v6240 = vpack.c.b16 %v6202, %v6200
    %v6241 = vpack.c.b16 %v6205, %v6203
    %v6242 = vpack.c.b16 %v6206, %v6204
    %v6243 = vpack.c.b16 %v6209, %v6207
    %v6244 = vpack.c.b16 %v6210, %v6208
    %v6245 = vpack.c.b16 %v6213, %v6211
    %v6246 = vpack.c.b16 %v6214, %v6212
    %6279 = vmatprep.subr.bf16.mxu0 %v6230
    %6280 = vmatpush1.bf16.msra.mxu0 %v6229
    %6281 = vmatprep.subr.bf16.mxu0 %v6228
    %6282 = vmatpush1.bf16.msra.mxu0 %v6227
    %6283 = vmatprep.subr.bf16.mxu0 %v6226
    %6284 = vmatpush1.bf16.msra.mxu0 %v6225
    %6285 = vmatprep.subr.bf16.mxu0 %v6224
    %6286 = vmatpush1.bf16.msra.mxu0 %v6223
    %6287 = vmatprep.subr.bf16.mxu0 %v6222
    %6288 = vmatpush1.bf16.msra.mxu0 %v6221
    %6289 = vmatprep.subr.bf16.mxu0 %v6220
    %6290 = vmatpush1.bf16.msra.mxu0 %v6219
    %6291 = vmatprep.subr.bf16.mxu0 %v6218
    %6292 = vmatpush1.bf16.msra.mxu0 %v6217
    %6293 = vmatprep.subr.bf16.mxu0 %v6216
    %6294 = vmatpush1.bf16.msra.mxu0 %v6215
    %6295 = vmatprep.subr.bf16.mxu0 %v6246
    %6296 = vmatpush2.bf16.msra.mxu0 %v6245
    %6297 = vmatprep.subr.bf16.mxu0 %v6244
    %6298 = vmatpush2.bf16.msra.mxu0 %v6243
    %6299 = vmatprep.subr.bf16.mxu0 %v6242
    %6300 = vmatpush2.bf16.msra.mxu0 %v6241
    %6301 = vmatprep.subr.bf16.mxu0 %v6240
    %6302 = vmatpush2.bf16.msra.mxu0 %v6239
    %6303 = vmatprep.subr.bf16.mxu0 %v6238
    %6304 = vmatpush2.bf16.msra.mxu0 %v6237
    %6305 = vmatprep.subr.bf16.mxu0 %v6236
    %6306 = vmatpush2.bf16.msra.mxu0 %v6235
    %6307 = vmatprep.subr.bf16.mxu0 %v6234
    %6308 = vmatpush2.bf16.msra.mxu0 %v6233
    %6309 = vmatprep.subr.bf16.mxu0 %v6232
    %6310 = vmatpush2.bf16.msra.mxu0 %v6231
    %6311 = vmatprep.mubr.bf16.mxu0 %v6108
    %6312 = vmatmul.mubr.bf16.gmra.mxu0 %v6107
    %v6313 = vpop.f32.mrf.mxu0
    %v6314 = vadd.f32 0.0, %v6313
    %v6315 = vpop.f32.mrf.mxu0
    %v6316 = vadd.f32 0.0, %v6315
    %v6317 = vpop.f32.mrf.mxu0
    %v6318 = vadd.f32 0.0, %v6317
    %v6319 = vpop.f32.mrf.mxu0
    %v6320 = vadd.f32 0.0, %v6319
    %6321 = vmatprep.mubr.bf16.mxu0 %v6110
    %6322 = vmatmul.mubr.bf16.gmra.mxu0 %v6109
    %v6323 = vpop.f32.mrf.mxu0
    %v6324 = vpop.f32.mrf.mxu0
    %v6325 = vpop.f32.mrf.mxu0
    %v6326 = vpop.f32.mrf.mxu0
    %6327 = vmatprep.mubr.bf16.mxu0 %v6112
    %6328 = vmatmul.mubr.bf16.gmra.mxu0 %v6111
    %v6329 = vpop.f32.mrf.mxu0
    %v6330 = vadd.f32 0.0, %v6329
    %v6331 = vpop.f32.mrf.mxu0
    %v6332 = vadd.f32 0.0, %v6331
    %v6333 = vpop.f32.mrf.mxu0
    %v6334 = vadd.f32 0.0, %v6333
    %v6335 = vpop.f32.mrf.mxu0
    %v6336 = vadd.f32 0.0, %v6335
    %6337 = vdwg.mxu0
    %v6344 = vunpack.c.l.b16 %v6029
    %v6345 = vunpack.c.l.b16 %v6030
    %v6346 = vunpack.c.l.b16 %v6031
    %v6347 = vunpack.c.l.b16 %v6032
    %v6348 = vunpack.c.l.b16 %v6033
    %v6349 = vunpack.c.l.b16 %v6034
    %v6350 = vpack.c.b16 %v6345, %v6344
    %v6351 = vpack.c.b16 %v6347, %v6346
    %v6352 = vpack.c.b16 %v6349, %v6348
    %v6372 = vunpack.c.l.b16 %v6035
    %v6373 = vunpack.c.h.b16 %v6035
    %v6374 = vunpack.c.l.b16 %v6036
    %v6375 = vunpack.c.h.b16 %v6036
    %v6376 = vunpack.c.l.b16 %v6037
    %v6377 = vunpack.c.h.b16 %v6037
    %v6378 = vunpack.c.l.b16 %v6038
    %v6379 = vunpack.c.h.b16 %v6038
    %v6380 = vunpack.c.l.b16 %v6039
    %v6381 = vunpack.c.h.b16 %v6039
    %v6382 = vunpack.c.l.b16 %v6040
    %v6383 = vunpack.c.h.b16 %v6040
    %v6384 = vunpack.c.l.b16 %v6041
    %v6385 = vunpack.c.h.b16 %v6041
    %v6386 = vunpack.c.l.b16 %v6042
    %v6387 = vunpack.c.h.b16 %v6042
    %v6388 = vunpack.c.l.b16 %v6043
    %v6389 = vunpack.c.h.b16 %v6043
    %v6390 = vunpack.c.l.b16 %v6044
    %v6391 = vunpack.c.h.b16 %v6044
    %v6392 = vunpack.c.l.b16 %v6045
    %v6393 = vunpack.c.h.b16 %v6045
    %v6394 = vunpack.c.l.b16 %v6046
    %v6395 = vunpack.c.h.b16 %v6046
    %v6396 = vunpack.c.l.b16 %v6047
    %v6397 = vunpack.c.h.b16 %v6047
    %v6398 = vunpack.c.l.b16 %v6048
    %v6399 = vunpack.c.h.b16 %v6048
    %v6400 = vunpack.c.l.b16 %v6049
    %v6401 = vunpack.c.h.b16 %v6049
    %v6402 = vunpack.c.l.b16 %v6050
    %v6403 = vunpack.c.h.b16 %v6050
    %v6404 = vpack.c.b16 %v6374, %v6372
    %v6405 = vpack.c.b16 %v6375, %v6373
    %v6406 = vpack.c.b16 %v6378, %v6376
    %v6407 = vpack.c.b16 %v6379, %v6377
    %v6408 = vpack.c.b16 %v6382, %v6380
    %v6409 = vpack.c.b16 %v6383, %v6381
    %v6410 = vpack.c.b16 %v6386, %v6384
    %v6411 = vpack.c.b16 %v6387, %v6385
    %v6412 = vpack.c.b16 %v6390, %v6388
    %v6413 = vpack.c.b16 %v6391, %v6389
    %v6414 = vpack.c.b16 %v6394, %v6392
    %v6415 = vpack.c.b16 %v6395, %v6393
    %v6416 = vpack.c.b16 %v6398, %v6396
    %v6417 = vpack.c.b16 %v6399, %v6397
    %v6418 = vpack.c.b16 %v6402, %v6400
    %v6419 = vpack.c.b16 %v6403, %v6401
    %6436 = vmatprep.subr.bf16.mxu0 %v6419
    %6437 = vmatpush1.bf16.msra.mxu0 %v6418
    %6438 = vmatprep.subr.bf16.mxu0 %v6417
    %6439 = vmatpush1.bf16.msra.mxu0 %v6416
    %6440 = vmatprep.subr.bf16.mxu0 %v6415
    %6441 = vmatpush1.bf16.msra.mxu0 %v6414
    %6442 = vmatprep.subr.bf16.mxu0 %v6413
    %6443 = vmatpush1.bf16.msra.mxu0 %v6412
    %6444 = vmatprep.subr.bf16.mxu0 %v6411
    %6445 = vmatpush1.bf16.msra.mxu0 %v6410
    %6446 = vmatprep.subr.bf16.mxu0 %v6409
    %6447 = vmatpush1.bf16.msra.mxu0 %v6408
    %6448 = vmatprep.subr.bf16.mxu0 %v6407
    %6449 = vmatpush1.bf16.msra.mxu0 %v6406
    %6450 = vmatprep.subr.bf16.mxu0 %v6405
    %6451 = vmatpush1.bf16.msra.mxu0 %v6404
    %6452 = vmatprep.subr.bf16.mxu0 0
    %6453 = vmatpush2.bf16.msra.mxu0 0
    %6454 = vmatprep.subr.bf16.mxu0 0
    %6455 = vmatpush2.bf16.msra.mxu0 0
    %6456 = vmatprep.subr.bf16.mxu0 0
    %6457 = vmatpush2.bf16.msra.mxu0 0
    %6458 = vmatprep.subr.bf16.mxu0 0
    %6459 = vmatpush2.bf16.msra.mxu0 0
    %6460 = vmatprep.subr.bf16.mxu0 0
    %6461 = vmatpush2.bf16.msra.mxu0 0
    %6462 = vmatprep.subr.bf16.mxu0 0
    %6463 = vmatpush2.bf16.msra.mxu0 0
    %6464 = vmatprep.subr.bf16.mxu0 0
    %6465 = vmatpush2.bf16.msra.mxu0 0
    %6466 = vmatprep.subr.bf16.mxu0 0
    %6467 = vmatpush2.bf16.msra.mxu0 0
    %6468 = vmatprep.mubr.bf16.mxu0 0
    %6469 = vmatmul.mubr.bf16.gmra.mxu0 %v6350
    %v6470 = vpop.f32.mrf.mxu0
    %v6471 = vadd.f32 %v6314, %v6470
    %v6472 = vpop.f32.mrf.mxu0
    %v6473 = vadd.f32 %v6316, %v6472
    %v6474 = vpop.f32.mrf.mxu0
    %v6475 = vadd.f32 %v6318, %v6474
    %v6476 = vpop.f32.mrf.mxu0
    %v6477 = vadd.f32 %v6320, %v6476
    %6478 = vmatprep.mubr.bf16.mxu0 0
    %6479 = vmatmul.mubr.bf16.gmra.mxu0 %v6351
    %v6480 = vpop.f32.mrf.mxu0
    %v6481 = vpop.f32.mrf.mxu0
    %v6482 = vpop.f32.mrf.mxu0
    %v6483 = vpop.f32.mrf.mxu0
    %6484 = vmatprep.mubr.bf16.mxu0 0
    %6485 = vmatmul.mubr.bf16.gmra.mxu0 %v6352
    %v6486 = vpop.f32.mrf.mxu0
    %v6487 = vadd.f32 %v6330, %v6486
    %v6488 = vpop.f32.mrf.mxu0
    %v6489 = vadd.f32 %v6332, %v6488
    %v6490 = vpop.f32.mrf.mxu0
    %v6491 = vadd.f32 %v6334, %v6490
    %v6492 = vpop.f32.mrf.mxu0
    %v6493 = vadd.f32 %v6336, %v6492
    %6494 = vdwg.mxu0
    %s6495 = scalar_lea.vmem [#allocation13], 7
    %v6496 = vld [vmem:[%s6495] ss:$8 sm:$0x3]
    %v6498 = vlaneseq
    %v6499 = vshrl.u32 %v6498, 7
    %v6500 = vsub.s32 0, %v6499
    %v6501 = vrot.slane %v6496, %v6500
    %v6502 = vlaneseq
    %v6503 = vshrl.u32 %v6502, 7
    %v6504 = vsub.s32 1, %v6503
    %v6505 = vrot.slane %v6496, %v6504
    %v6508 = vmul.f32 %v6471, %v6501
    %v6509 = vmul.f32 %v6473, %v6505
    %v6510 = vmul.f32 %v6475, %v6501
    %v6511 = vmul.f32 %v6477, %v6505
    %v6512 = vmul.f32 %v6487, %v6501
    %v6513 = vmul.f32 %v6489, %v6505
    %v6514 = vmul.f32 %v6491, %v6501
    %v6515 = vmul.f32 %v6493, %v6505
    %s6516 = scalar_lea.vmem [#allocation13], 33
    %v6517 = vld [vmem:[%s6516] ss:$8 sm:$0x3]
    %v6519 = vlaneseq
    %v6520 = vshrl.u32 %v6519, 7
    %v6521 = vsub.s32 0, %v6520
    %v6522 = vrot.slane %v6517, %v6521
    %v6523 = vlaneseq
    %v6524 = vshrl.u32 %v6523, 7
    %v6525 = vsub.s32 1, %v6524
    %v6526 = vrot.slane %v6517, %v6525
    %v6529 = vadd.f32 %v6508, %v6522
    %v6530 = vadd.f32 %v6509, %v6526
    %v6531 = vadd.f32 %v6510, %v6522
    %v6532 = vadd.f32 %v6511, %v6526
    %v6533 = vadd.f32 %v6512, %v6522
    %v6534 = vadd.f32 %v6513, %v6526
    %v6535 = vadd.f32 %v6514, %v6522
    %v6536 = vadd.f32 %v6515, %v6526
    %v6537 = vmax.f32 %v6529, 0.0
    %v6538 = vmax.f32 %v6530, 0.0
    %v6539 = vmax.f32 %v6531, 0.0
    %v6540 = vmax.f32 %v6532, 0.0
    %v6541 = vmax.f32 %v6533, 0.0
    %v6542 = vmax.f32 %v6534, 0.0
    %v6543 = vmax.f32 %v6535, 0.0
    %v6544 = vmax.f32 %v6536, 0.0
    %v6545 = vpack.c.bf16 %v6539, %v6537
    %v6546 = vpack.c.bf16 %v6540, %v6538
    %v6547 = vpack.c.bf16 %v6543, %v6541
    %v6548 = vpack.c.bf16 %v6544, %v6542
    %vm6549 = vcmask 258052
    %vm6550 = vmor %vm6549, %vm2299
    %6551 = vst.msk [vmem:[#allocation9] sm:$0x11] %vm6550, 0
    %vm6552 = vcmask 1041409
    %vm6553 = vcmask 259077
    %vm6554 = vmor %vm6553, %vm6552
    %6555 = vst.msk [vmem:[#allocation9 + $0x10] sm:$0x22] %vm6554, 0
    %v6558 = vunpack.c.l.b16 %v6545
    %v6559 = vunpack.c.l.b16 %v6546
    %v6560 = vunpack.c.h.b16 %v6545
    %v6561 = vunpack.c.h.b16 %v6546
    %v6562 = vpack.c.b16 %v6559, %v6558
    %v6563 = vpack.c.b16 %v6561, %v6560
    %v6564 = vrot.slane %v6562, 7
    %v6565 = vrot.slane %v6564, 4
    %v6566 = vrot.slane %v6563, 7
    %v6567 = vsel %vm826, %v6565, %v6566
    %v6568 = vrot.slane %v6566, 4
    %vm6572 = vcmask 261125
    %vm6573 = vmor %vm6572, %vm2321
    %6574 = vst.msk [vmem:[#allocation9] sm:$0xee] %vm6573, %v6564
    %vm6575 = vcmask 261124
    %vm6576 = vmor %vm6575, %vm1475
    %6577 = vst.msk [vmem:[#allocation9 + $0x8] sm:$0xff] %vm6576, %v6567
    %6578 = vst.msk [vmem:[#allocation9 + $0x10] sm:$0x11] %vm6550, %v6568
    %6579 = vst.msk [vmem:[#allocation9 + $0x20] sm:$0x11] %vm6550, 0
    %6580 = vst.msk [vmem:[#allocation9 + $0x30] sm:$0x22] %vm6554, 0
    %v6583 = vunpack.c.l.b16 %v6547
    %v6584 = vunpack.c.l.b16 %v6548
    %v6585 = vunpack.c.h.b16 %v6547
    %v6586 = vunpack.c.h.b16 %v6548
    %v6587 = vpack.c.b16 %v6584, %v6583
    %v6588 = vpack.c.b16 %v6586, %v6585
    %v6589 = vrot.slane %v6587, 7
    %v6590 = vrot.slane %v6589, 4
    %v6591 = vrot.slane %v6588, 7
    %v6592 = vsel %vm826, %v6590, %v6591
    %v6593 = vrot.slane %v6591, 4
    %6597 = vst.msk [vmem:[#allocation9 + $0x20] sm:$0xee] %vm6573, %v6589
    %6598 = vst.msk [vmem:[#allocation9 + $0x28] sm:$0xff] %vm6576, %v6592
    %6599 = vst.msk [vmem:[#allocation9 + $0x30] sm:$0x11] %vm6550, %v6593
    %v6600 = vld [vmem:[#allocation9] sm:$0xff]
    %v6601 = vld [vmem:[#allocation9 + $0x8] sm:$0xff]
    %v6602 = vld [vmem:[#allocation9 + $0x10] sm:$0xff]
    %v6603 = vld [vmem:[#allocation9 + $0x18] sm:$0xff]
    %v6604 = vld [vmem:[#allocation9 + $0x20] sm:$0xff]
    %v6605 = vld [vmem:[#allocation9 + $0x28] sm:$0xff]
    %v6606 = vld [vmem:[#allocation9 + $0x30] sm:$0x11]
    %v6607 = vld [vmem:[#allocation11 + $0x1170] sm:$0xff]
    %v6608 = vld [vmem:[#allocation11 + $0x1178] sm:$0xff]
    %v6609 = vld [vmem:[#allocation11 + $0x1180] sm:$0xff]
    %v6610 = vld [vmem:[#allocation11 + $0x1188] sm:$0xff]
    %v6611 = vld [vmem:[#allocation11 + $0x1190] sm:$0xff]
    %v6612 = vld [vmem:[#allocation11 + $0x1198] sm:$0xff]
    %v6613 = vld [vmem:[#allocation11 + $0x11a0] sm:$0xff]
    %v6614 = vld [vmem:[#allocation11 + $0x11a8] sm:$0xff]
    %v6615 = vld [vmem:[#allocation11 + $0x11b0] sm:$0xff]
    %v6616 = vld [vmem:[#allocation11 + $0x11b8] sm:$0xff]
    %v6617 = vld [vmem:[#allocation11 + $0x11c0] sm:$0xff]
    %v6618 = vld [vmem:[#allocation11 + $0x11c8] sm:$0xff]
    %v6619 = vld [vmem:[#allocation11 + $0x11d0] sm:$0xff]
    %v6620 = vld [vmem:[#allocation11 + $0x11d8] sm:$0xff]
    %v6621 = vld [vmem:[#allocation11 + $0x11e0] sm:$0xff]
    %v6622 = vld [vmem:[#allocation11 + $0x11e8] sm:$0xff]
    %v6623 = vld [vmem:[#allocation11 + $0x11f0] sm:$0xff]
    %v6624 = vld [vmem:[#allocation11 + $0x11f8] sm:$0xff]
    %v6625 = vld [vmem:[#allocation11 + $0x1200] sm:$0xff]
    %v6626 = vld [vmem:[#allocation11 + $0x1208] sm:$0xff]
    %v6627 = vld [vmem:[#allocation9 + $0x30] sm:$0x33]
    %v6628 = vld [vmem:[#allocation11 + $0x1210] sm:$0xff]
    %v6629 = vld [vmem:[#allocation11 + $0x1218] sm:$0xff]
    %v6630 = vld [vmem:[#allocation11 + $0x1220] sm:$0xff]
    %v6631 = vld [vmem:[#allocation11 + $0x1228] sm:$0xff]
    %v6632 = vld [vmem:[#allocation11 + $0x1230] sm:$0xff]
    %v6633 = vld [vmem:[#allocation11 + $0x1238] sm:$0xff]
    %v6634 = vld [vmem:[#allocation11 + $0x1240] sm:$0xff]
    %v6635 = vld [vmem:[#allocation11 + $0x1248] sm:$0xff]
    %v6636 = vld [vmem:[#allocation11 + $0x1250] sm:$0xff]
    %v6637 = vld [vmem:[#allocation11 + $0x1258] sm:$0xff]
    %v6638 = vld [vmem:[#allocation11 + $0x1260] sm:$0xff]
    %v6639 = vld [vmem:[#allocation11 + $0x1268] sm:$0xff]
    %v6640 = vld [vmem:[#allocation11 + $0x1270] sm:$0xff]
    %v6641 = vld [vmem:[#allocation11 + $0x1278] sm:$0xff]
    %v6642 = vld [vmem:[#allocation11 + $0x1280] sm:$0xff]
    %v6643 = vld [vmem:[#allocation11 + $0x1288] sm:$0xff]
    %v6644 = vld [vmem:[#allocation11 + $0x1290] sm:$0xff]
    %v6645 = vld [vmem:[#allocation11 + $0x1298] sm:$0xff]
    %v6646 = vld [vmem:[#allocation11 + $0x12a0] sm:$0xff]
    %v6647 = vld [vmem:[#allocation11 + $0x12a8] sm:$0xff]
    %v6655 = vunpack.c.l.b16 %v6600
    %v6656 = vunpack.c.h.b16 %v6600
    %v6657 = vunpack.c.l.b16 %v6601
    %v6658 = vunpack.c.h.b16 %v6601
    %v6659 = vunpack.c.l.b16 %v6602
    %v6660 = vunpack.c.h.b16 %v6602
    %v6661 = vunpack.c.l.b16 %v6603
    %v6662 = vunpack.c.h.b16 %v6603
    %v6663 = vunpack.c.l.b16 %v6604
    %v6664 = vunpack.c.h.b16 %v6604
    %v6665 = vunpack.c.l.b16 %v6605
    %v6666 = vunpack.c.h.b16 %v6605
    %v6667 = vunpack.c.l.b16 %v6627
    %v6668 = vunpack.c.h.b16 %v6627
    %v6669 = vpack.c.b16 %v6657, %v6655
    %v6670 = vpack.c.b16 %v6658, %v6656
    %v6671 = vpack.c.b16 %v6661, %v6659
    %v6672 = vpack.c.b16 %v6662, %v6660
    %v6673 = vpack.c.b16 %v6665, %v6663
    %v6674 = vpack.c.b16 %v6666, %v6664
    %v6675 = vpack.c.b16 %v6667, %v6667
    %v6676 = vpack.c.b16 %v6668, %v6668
    %v6678 = vshrl.u32 %v6669, 16
    %v6680 = vshll.u32 %v6669, 16
    %v6682 = vrot.slane %v6680, 1
    %v6683 = vor.u32 %v6678, %v6682
    %v6685 = vshll.u32 %v6671, 16
    %v6687 = vrot.slane %v6685, 1
    %v6688 = vsel %vm73, %v6683, %v6687
    %v6690 = vshrl.u32 %v6670, 16
    %v6692 = vshll.u32 %v6670, 16
    %v6694 = vrot.slane %v6692, 1
    %v6695 = vor.u32 %v6690, %v6694
    %v6697 = vshll.u32 %v6672, 16
    %v6699 = vrot.slane %v6697, 1
    %v6700 = vsel %vm73, %v6695, %v6699
    %v6701 = vshrl.u32 %v6671, 16
    %v6703 = vor.u32 %v6701, %v6687
    %v6705 = vshll.u32 %v6673, 16
    %v6707 = vrot.slane %v6705, 1
    %v6708 = vsel %vm73, %v6703, %v6707
    %v6709 = vshrl.u32 %v6672, 16
    %v6711 = vor.u32 %v6709, %v6699
    %v6713 = vshll.u32 %v6674, 16
    %v6715 = vrot.slane %v6713, 1
    %v6716 = vsel %vm73, %v6711, %v6715
    %v6717 = vshrl.u32 %v6673, 16
    %v6719 = vor.u32 %v6717, %v6707
    %v6721 = vshll.u32 %v6675, 16
    %v6723 = vrot.slane %v6721, 1
    %v6724 = vsel %vm73, %v6719, %v6723
    %v6725 = vshrl.u32 %v6674, 16
    %v6727 = vor.u32 %v6725, %v6715
    %v6729 = vshll.u32 %v6676, 16
    %v6731 = vrot.slane %v6729, 1
    %v6732 = vsel %vm73, %v6727, %v6731
    %v6733 = vshrl.u32 %v6675, 16
    %v6735 = vor.u32 %v6733, %v6723
    %v6736 = vshrl.u32 %v6676, 16
    %v6738 = vor.u32 %v6736, %v6731
    %v6763 = vunpack.c.l.b16 %v6628
    %v6764 = vunpack.c.h.b16 %v6628
    %v6765 = vunpack.c.l.b16 %v6629
    %v6766 = vunpack.c.h.b16 %v6629
    %v6767 = vunpack.c.l.b16 %v6630
    %v6768 = vunpack.c.h.b16 %v6630
    %v6769 = vunpack.c.l.b16 %v6631
    %v6770 = vunpack.c.h.b16 %v6631
    %v6771 = vunpack.c.l.b16 %v6632
    %v6772 = vunpack.c.h.b16 %v6632
    %v6773 = vunpack.c.l.b16 %v6633
    %v6774 = vunpack.c.h.b16 %v6633
    %v6775 = vunpack.c.l.b16 %v6634
    %v6776 = vunpack.c.h.b16 %v6634
    %v6777 = vunpack.c.l.b16 %v6635
    %v6778 = vunpack.c.h.b16 %v6635
    %v6779 = vunpack.c.l.b16 %v6636
    %v6780 = vunpack.c.h.b16 %v6636
    %v6781 = vunpack.c.l.b16 %v6637
    %v6782 = vunpack.c.h.b16 %v6637
    %v6783 = vunpack.c.l.b16 %v6638
    %v6784 = vunpack.c.h.b16 %v6638
    %v6785 = vunpack.c.l.b16 %v6639
    %v6786 = vunpack.c.h.b16 %v6639
    %v6787 = vunpack.c.l.b16 %v6640
    %v6788 = vunpack.c.h.b16 %v6640
    %v6789 = vunpack.c.l.b16 %v6641
    %v6790 = vunpack.c.h.b16 %v6641
    %v6791 = vunpack.c.l.b16 %v6642
    %v6792 = vunpack.c.h.b16 %v6642
    %v6793 = vunpack.c.l.b16 %v6643
    %v6794 = vunpack.c.h.b16 %v6643
    %v6795 = vunpack.c.l.b16 %v6644
    %v6796 = vunpack.c.h.b16 %v6644
    %v6797 = vunpack.c.l.b16 %v6645
    %v6798 = vunpack.c.h.b16 %v6645
    %v6799 = vunpack.c.l.b16 %v6646
    %v6800 = vunpack.c.h.b16 %v6646
    %v6801 = vunpack.c.l.b16 %v6647
    %v6802 = vunpack.c.h.b16 %v6647
    %v6803 = vpack.c.b16 %v6765, %v6763
    %v6804 = vpack.c.b16 %v6766, %v6764
    %v6805 = vpack.c.b16 %v6769, %v6767
    %v6806 = vpack.c.b16 %v6770, %v6768
    %v6807 = vpack.c.b16 %v6773, %v6771
    %v6808 = vpack.c.b16 %v6774, %v6772
    %v6809 = vpack.c.b16 %v6777, %v6775
    %v6810 = vpack.c.b16 %v6778, %v6776
    %v6811 = vpack.c.b16 %v6781, %v6779
    %v6812 = vpack.c.b16 %v6782, %v6780
    %v6813 = vpack.c.b16 %v6785, %v6783
    %v6814 = vpack.c.b16 %v6786, %v6784
    %v6815 = vpack.c.b16 %v6789, %v6787
    %v6816 = vpack.c.b16 %v6790, %v6788
    %v6817 = vpack.c.b16 %v6793, %v6791
    %v6818 = vpack.c.b16 %v6794, %v6792
    %v6819 = vpack.c.b16 %v6797, %v6795
    %v6820 = vpack.c.b16 %v6798, %v6796
    %v6821 = vpack.c.b16 %v6801, %v6799
    %v6822 = vpack.c.b16 %v6802, %v6800
    %v6844 = vsel %vm109, %v6700, 0
    %v6847 = vsel %vm109, %v6716, 0
    %v6850 = vsel %vm109, %v6732, 0
    %v6853 = vsel %vm109, %v6738, 0
    %6855 = vmatprep.subr.bf16.mxu0 %v6818
    %6856 = vmatpush1.bf16.msra.mxu0 %v6817
    %6857 = vmatprep.subr.bf16.mxu0 %v6816
    %6858 = vmatpush1.bf16.msra.mxu0 %v6815
    %6859 = vmatprep.subr.bf16.mxu0 %v6814
    %6860 = vmatpush1.bf16.msra.mxu0 %v6813
    %6861 = vmatprep.subr.bf16.mxu0 %v6812
    %6862 = vmatpush1.bf16.msra.mxu0 %v6811
    %6863 = vmatprep.subr.bf16.mxu0 %v6810
    %6864 = vmatpush1.bf16.msra.mxu0 %v6809
    %6865 = vmatprep.subr.bf16.mxu0 %v6808
    %6866 = vmatpush1.bf16.msra.mxu0 %v6807
    %6867 = vmatprep.subr.bf16.mxu0 %v6806
    %6868 = vmatpush1.bf16.msra.mxu0 %v6805
    %6869 = vmatprep.subr.bf16.mxu0 %v6804
    %6870 = vmatpush1.bf16.msra.mxu0 %v6803
    %6871 = vmatprep.subr.bf16.mxu0 0
    %6872 = vmatpush2.bf16.msra.mxu0 0
    %6873 = vmatprep.subr.bf16.mxu0 0
    %6874 = vmatpush2.bf16.msra.mxu0 0
    %6875 = vmatprep.subr.bf16.mxu0 0
    %6876 = vmatpush2.bf16.msra.mxu0 0
    %6877 = vmatprep.subr.bf16.mxu0 0
    %6878 = vmatpush2.bf16.msra.mxu0 0
    %6879 = vmatprep.subr.bf16.mxu0 0
    %6880 = vmatpush2.bf16.msra.mxu0 0
    %6881 = vmatprep.subr.bf16.mxu0 0
    %6882 = vmatpush2.bf16.msra.mxu0 0
    %6883 = vmatprep.subr.bf16.mxu0 %v6822
    %6884 = vmatpush2.bf16.msra.mxu0 %v6821
    %6885 = vmatprep.subr.bf16.mxu0 %v6820
    %6886 = vmatpush2.bf16.msra.mxu0 %v6819
    %6887 = vmatprep.mubr.bf16.mxu0 %v6844
    %6888 = vmatmul.mubr.bf16.gmra.mxu0 %v6688
    %v6889 = vpop.f32.mrf.mxu0
    %v6890 = vadd.f32 0.0, %v6889
    %v6891 = vpop.f32.mrf.mxu0
    %v6892 = vadd.f32 0.0, %v6891
    %v6893 = vpop.f32.mrf.mxu0
    %v6894 = vadd.f32 0.0, %v6893
    %v6895 = vpop.f32.mrf.mxu0
    %v6896 = vadd.f32 0.0, %v6895
    %6897 = vmatprep.mubr.bf16.mxu0 %v6847
    %6898 = vmatmul.mubr.bf16.gmra.mxu0 %v6708
    %v6899 = vpop.f32.mrf.mxu0
    %v6900 = vadd.f32 0.0, %v6899
    %v6901 = vpop.f32.mrf.mxu0
    %v6902 = vadd.f32 0.0, %v6901
    %v6903 = vpop.f32.mrf.mxu0
    %v6904 = vadd.f32 0.0, %v6903
    %v6905 = vpop.f32.mrf.mxu0
    %v6906 = vadd.f32 0.0, %v6905
    %6907 = vmatprep.mubr.bf16.mxu0 %v6850
    %6908 = vmatmul.mubr.bf16.gmra.mxu0 %v6724
    %v6909 = vpop.f32.mrf.mxu0
    %v6910 = vadd.f32 0.0, %v6909
    %v6911 = vpop.f32.mrf.mxu0
    %v6912 = vadd.f32 0.0, %v6911
    %v6913 = vpop.f32.mrf.mxu0
    %v6914 = vadd.f32 0.0, %v6913
    %v6915 = vpop.f32.mrf.mxu0
    %v6916 = vadd.f32 0.0, %v6915
    %6917 = vmatprep.mubr.bf16.mxu0 %v6853
    %6918 = vmatmul.mubr.bf16.gmra.mxu0 %v6735
    %v6919 = vpop.f32.mrf.mxu0
    %v6920 = vadd.f32 0.0, %v6919
    %v6921 = vpop.f32.mrf.mxu0
    %v6922 = vadd.f32 0.0, %v6921
    %v6923 = vpop.f32.mrf.mxu0
    %v6924 = vpop.f32.mrf.mxu0
    %6925 = vdwg.mxu0
    %v6927 = vunpack.c.l.b16 %v6606
    %v6928 = vunpack.c.h.b16 %v6606
    %v6929 = vpack.c.b16 %v6927, %v6927
    %v6930 = vpack.c.b16 %v6928, %v6928
    %v6955 = vunpack.c.l.b16 %v6607
    %v6956 = vunpack.c.h.b16 %v6607
    %v6957 = vunpack.c.l.b16 %v6608
    %v6958 = vunpack.c.h.b16 %v6608
    %v6959 = vunpack.c.l.b16 %v6609
    %v6960 = vunpack.c.h.b16 %v6609
    %v6961 = vunpack.c.l.b16 %v6610
    %v6962 = vunpack.c.h.b16 %v6610
    %v6963 = vunpack.c.l.b16 %v6611
    %v6964 = vunpack.c.h.b16 %v6611
    %v6965 = vunpack.c.l.b16 %v6612
    %v6966 = vunpack.c.h.b16 %v6612
    %v6967 = vunpack.c.l.b16 %v6613
    %v6968 = vunpack.c.h.b16 %v6613
    %v6969 = vunpack.c.l.b16 %v6614
    %v6970 = vunpack.c.h.b16 %v6614
    %v6971 = vunpack.c.l.b16 %v6615
    %v6972 = vunpack.c.h.b16 %v6615
    %v6973 = vunpack.c.l.b16 %v6616
    %v6974 = vunpack.c.h.b16 %v6616
    %v6975 = vunpack.c.l.b16 %v6617
    %v6976 = vunpack.c.h.b16 %v6617
    %v6977 = vunpack.c.l.b16 %v6618
    %v6978 = vunpack.c.h.b16 %v6618
    %v6979 = vunpack.c.l.b16 %v6619
    %v6980 = vunpack.c.h.b16 %v6619
    %v6981 = vunpack.c.l.b16 %v6620
    %v6982 = vunpack.c.h.b16 %v6620
    %v6983 = vunpack.c.l.b16 %v6621
    %v6984 = vunpack.c.h.b16 %v6621
    %v6985 = vunpack.c.l.b16 %v6622
    %v6986 = vunpack.c.h.b16 %v6622
    %v6987 = vunpack.c.l.b16 %v6623
    %v6988 = vunpack.c.h.b16 %v6623
    %v6989 = vunpack.c.l.b16 %v6624
    %v6990 = vunpack.c.h.b16 %v6624
    %v6991 = vunpack.c.l.b16 %v6625
    %v6992 = vunpack.c.h.b16 %v6625
    %v6993 = vunpack.c.l.b16 %v6626
    %v6994 = vunpack.c.h.b16 %v6626
    %v6995 = vpack.c.b16 %v6957, %v6955
    %v6996 = vpack.c.b16 %v6958, %v6956
    %v6997 = vpack.c.b16 %v6961, %v6959
    %v6998 = vpack.c.b16 %v6962, %v6960
    %v6999 = vpack.c.b16 %v6965, %v6963
    %v7000 = vpack.c.b16 %v6966, %v6964
    %v7001 = vpack.c.b16 %v6969, %v6967
    %v7002 = vpack.c.b16 %v6970, %v6968
    %v7003 = vpack.c.b16 %v6973, %v6971
    %v7004 = vpack.c.b16 %v6974, %v6972
    %v7005 = vpack.c.b16 %v6977, %v6975
    %v7006 = vpack.c.b16 %v6978, %v6976
    %v7007 = vpack.c.b16 %v6981, %v6979
    %v7008 = vpack.c.b16 %v6982, %v6980
    %v7009 = vpack.c.b16 %v6985, %v6983
    %v7010 = vpack.c.b16 %v6986, %v6984
    %v7011 = vpack.c.b16 %v6989, %v6987
    %v7012 = vpack.c.b16 %v6990, %v6988
    %v7013 = vpack.c.b16 %v6993, %v6991
    %v7014 = vpack.c.b16 %v6994, %v6992
    %v7035 = vsel %vm109, %v6670, 0
    %v7037 = vsel %vm109, %v6672, 0
    %v7039 = vsel %vm109, %v6674, 0
    %v7042 = vsel %vm109, %v6930, 0
    %7044 = vmatprep.subr.bf16.mxu0 %v7010
    %7045 = vmatpush1.bf16.msra.mxu0 %v7009
    %7046 = vmatprep.subr.bf16.mxu0 %v7008
    %7047 = vmatpush1.bf16.msra.mxu0 %v7007
    %7048 = vmatprep.subr.bf16.mxu0 %v7006
    %7049 = vmatpush1.bf16.msra.mxu0 %v7005
    %7050 = vmatprep.subr.bf16.mxu0 %v7004
    %7051 = vmatpush1.bf16.msra.mxu0 %v7003
    %7052 = vmatprep.subr.bf16.mxu0 %v7002
    %7053 = vmatpush1.bf16.msra.mxu0 %v7001
    %7054 = vmatprep.subr.bf16.mxu0 %v7000
    %7055 = vmatpush1.bf16.msra.mxu0 %v6999
    %7056 = vmatprep.subr.bf16.mxu0 %v6998
    %7057 = vmatpush1.bf16.msra.mxu0 %v6997
    %7058 = vmatprep.subr.bf16.mxu0 %v6996
    %7059 = vmatpush1.bf16.msra.mxu0 %v6995
    %7060 = vmatprep.subr.bf16.mxu0 0
    %7061 = vmatpush2.bf16.msra.mxu0 0
    %7062 = vmatprep.subr.bf16.mxu0 0
    %7063 = vmatpush2.bf16.msra.mxu0 0
    %7064 = vmatprep.subr.bf16.mxu0 0
    %7065 = vmatpush2.bf16.msra.mxu0 0
    %7066 = vmatprep.subr.bf16.mxu0 0
    %7067 = vmatpush2.bf16.msra.mxu0 0
    %7068 = vmatprep.subr.bf16.mxu0 0
    %7069 = vmatpush2.bf16.msra.mxu0 0
    %7070 = vmatprep.subr.bf16.mxu0 0
    %7071 = vmatpush2.bf16.msra.mxu0 0
    %7072 = vmatprep.subr.bf16.mxu0 %v7014
    %7073 = vmatpush2.bf16.msra.mxu0 %v7013
    %7074 = vmatprep.subr.bf16.mxu0 %v7012
    %7075 = vmatpush2.bf16.msra.mxu0 %v7011
    %7076 = vmatprep.mubr.bf16.mxu0 %v7035
    %7077 = vmatmul.mubr.bf16.gmra.mxu0 %v6669
    %v7078 = vpop.f32.mrf.mxu0
    %v7079 = vadd.f32 %v6890, %v7078
    %v7080 = vpop.f32.mrf.mxu0
    %v7081 = vadd.f32 %v6892, %v7080
    %v7082 = vpop.f32.mrf.mxu0
    %v7083 = vadd.f32 %v6894, %v7082
    %v7084 = vpop.f32.mrf.mxu0
    %v7085 = vadd.f32 %v6896, %v7084
    %7086 = vmatprep.mubr.bf16.mxu0 %v7037
    %7087 = vmatmul.mubr.bf16.gmra.mxu0 %v6671
    %v7088 = vpop.f32.mrf.mxu0
    %v7089 = vadd.f32 %v6900, %v7088
    %v7090 = vpop.f32.mrf.mxu0
    %v7091 = vadd.f32 %v6902, %v7090
    %v7092 = vpop.f32.mrf.mxu0
    %v7093 = vadd.f32 %v6904, %v7092
    %v7094 = vpop.f32.mrf.mxu0
    %v7095 = vadd.f32 %v6906, %v7094
    %7096 = vmatprep.mubr.bf16.mxu0 %v7039
    %7097 = vmatmul.mubr.bf16.gmra.mxu0 %v6673
    %v7098 = vpop.f32.mrf.mxu0
    %v7099 = vadd.f32 %v6910, %v7098
    %v7100 = vpop.f32.mrf.mxu0
    %v7101 = vadd.f32 %v6912, %v7100
    %v7102 = vpop.f32.mrf.mxu0
    %v7103 = vadd.f32 %v6914, %v7102
    %v7104 = vpop.f32.mrf.mxu0
    %v7105 = vadd.f32 %v6916, %v7104
    %7106 = vmatprep.mubr.bf16.mxu0 %v7042
    %7107 = vmatmul.mubr.bf16.gmra.mxu0 %v6929
    %v7108 = vpop.f32.mrf.mxu0
    %v7109 = vadd.f32 %v6920, %v7108
    %v7110 = vpop.f32.mrf.mxu0
    %v7111 = vadd.f32 %v6922, %v7110
    %v7112 = vpop.f32.mrf.mxu0
    %v7113 = vpop.f32.mrf.mxu0
    %7114 = vdwg.mxu0
    %v7115 = vld [vmem:[#allocation9] sm:$0xee]
    %v7116 = vld [vmem:[#allocation11 + $0x12b0] sm:$0xff]
    %v7117 = vld [vmem:[#allocation11 + $0x12b8] sm:$0xff]
    %v7118 = vld [vmem:[#allocation11 + $0x12c0] sm:$0xff]
    %v7119 = vld [vmem:[#allocation11 + $0x12c8] sm:$0xff]
    %v7120 = vld [vmem:[#allocation11 + $0x12d0] sm:$0xff]
    %v7121 = vld [vmem:[#allocation11 + $0x12d8] sm:$0xff]
    %v7122 = vld [vmem:[#allocation11 + $0x12e0] sm:$0xff]
    %v7123 = vld [vmem:[#allocation11 + $0x12e8] sm:$0xff]
    %v7124 = vld [vmem:[#allocation11 + $0x12f0] sm:$0xff]
    %v7125 = vld [vmem:[#allocation11 + $0x12f8] sm:$0xff]
    %v7126 = vld [vmem:[#allocation11 + $0x1300] sm:$0xff]
    %v7127 = vld [vmem:[#allocation11 + $0x1308] sm:$0xff]
    %v7128 = vld [vmem:[#allocation11 + $0x1310] sm:$0xff]
    %v7129 = vld [vmem:[#allocation11 + $0x1318] sm:$0xff]
    %v7130 = vld [vmem:[#allocation11 + $0x1320] sm:$0xff]
    %v7131 = vld [vmem:[#allocation11 + $0x1328] sm:$0xff]
    %v7132 = vld [vmem:[#allocation11 + $0x1330] sm:$0xff]
    %v7133 = vld [vmem:[#allocation11 + $0x1338] sm:$0xff]
    %v7134 = vld [vmem:[#allocation11 + $0x1340] sm:$0xff]
    %v7135 = vld [vmem:[#allocation11 + $0x1348] sm:$0xff]
    %v7137 = vunpack.c.l.b16 %v7115
    %v7138 = vunpack.c.h.b16 %v7115
    %v7139 = vpack.c.b16 %v6657, %v7137
    %v7140 = vpack.c.b16 %v6658, %v7138
    %v7141 = vrot.slane %v7139, 1
    %v7142 = vrot.slane %v6671, 1
    %v7143 = vsel %vm259, %v7141, %v7142
    %v7144 = vrot.slane %v7140, 1
    %v7145 = vrot.slane %v6672, 1
    %v7146 = vsel %vm259, %v7144, %v7145
    %v7147 = vrot.slane %v6673, 1
    %v7148 = vsel %vm259, %v7142, %v7147
    %v7149 = vrot.slane %v6674, 1
    %v7150 = vsel %vm259, %v7145, %v7149
    %v7151 = vrot.slane %v6675, 1
    %v7152 = vsel %vm259, %v7147, %v7151
    %v7153 = vrot.slane %v6676, 1
    %v7154 = vsel %vm259, %v7149, %v7153
    %v7179 = vunpack.c.l.b16 %v7116
    %v7180 = vunpack.c.h.b16 %v7116
    %v7181 = vunpack.c.l.b16 %v7117
    %v7182 = vunpack.c.h.b16 %v7117
    %v7183 = vunpack.c.l.b16 %v7118
    %v7184 = vunpack.c.h.b16 %v7118
    %v7185 = vunpack.c.l.b16 %v7119
    %v7186 = vunpack.c.h.b16 %v7119
    %v7187 = vunpack.c.l.b16 %v7120
    %v7188 = vunpack.c.h.b16 %v7120
    %v7189 = vunpack.c.l.b16 %v7121
    %v7190 = vunpack.c.h.b16 %v7121
    %v7191 = vunpack.c.l.b16 %v7122
    %v7192 = vunpack.c.h.b16 %v7122
    %v7193 = vunpack.c.l.b16 %v7123
    %v7194 = vunpack.c.h.b16 %v7123
    %v7195 = vunpack.c.l.b16 %v7124
    %v7196 = vunpack.c.h.b16 %v7124
    %v7197 = vunpack.c.l.b16 %v7125
    %v7198 = vunpack.c.h.b16 %v7125
    %v7199 = vunpack.c.l.b16 %v7126
    %v7200 = vunpack.c.h.b16 %v7126
    %v7201 = vunpack.c.l.b16 %v7127
    %v7202 = vunpack.c.h.b16 %v7127
    %v7203 = vunpack.c.l.b16 %v7128
    %v7204 = vunpack.c.h.b16 %v7128
    %v7205 = vunpack.c.l.b16 %v7129
    %v7206 = vunpack.c.h.b16 %v7129
    %v7207 = vunpack.c.l.b16 %v7130
    %v7208 = vunpack.c.h.b16 %v7130
    %v7209 = vunpack.c.l.b16 %v7131
    %v7210 = vunpack.c.h.b16 %v7131
    %v7211 = vunpack.c.l.b16 %v7132
    %v7212 = vunpack.c.h.b16 %v7132
    %v7213 = vunpack.c.l.b16 %v7133
    %v7214 = vunpack.c.h.b16 %v7133
    %v7215 = vunpack.c.l.b16 %v7134
    %v7216 = vunpack.c.h.b16 %v7134
    %v7217 = vunpack.c.l.b16 %v7135
    %v7218 = vunpack.c.h.b16 %v7135
    %v7219 = vpack.c.b16 %v7181, %v7179
    %v7220 = vpack.c.b16 %v7182, %v7180
    %v7221 = vpack.c.b16 %v7185, %v7183
    %v7222 = vpack.c.b16 %v7186, %v7184
    %v7223 = vpack.c.b16 %v7189, %v7187
    %v7224 = vpack.c.b16 %v7190, %v7188
    %v7225 = vpack.c.b16 %v7193, %v7191
    %v7226 = vpack.c.b16 %v7194, %v7192
    %v7227 = vpack.c.b16 %v7197, %v7195
    %v7228 = vpack.c.b16 %v7198, %v7196
    %v7229 = vpack.c.b16 %v7201, %v7199
    %v7230 = vpack.c.b16 %v7202, %v7200
    %v7231 = vpack.c.b16 %v7205, %v7203
    %v7232 = vpack.c.b16 %v7206, %v7204
    %v7233 = vpack.c.b16 %v7209, %v7207
    %v7234 = vpack.c.b16 %v7210, %v7208
    %v7235 = vpack.c.b16 %v7213, %v7211
    %v7236 = vpack.c.b16 %v7214, %v7212
    %v7237 = vpack.c.b16 %v7217, %v7215
    %v7238 = vpack.c.b16 %v7218, %v7216
    %v7260 = vsel %vm109, %v7146, 0
    %v7263 = vsel %vm109, %v7150, 0
    %v7266 = vsel %vm109, %v7154, 0
    %v7269 = vsel %vm109, %v7153, 0
    %7271 = vmatprep.subr.bf16.mxu0 %v7234
    %7272 = vmatpush1.bf16.msra.mxu0 %v7233
    %7273 = vmatprep.subr.bf16.mxu0 %v7232
    %7274 = vmatpush1.bf16.msra.mxu0 %v7231
    %7275 = vmatprep.subr.bf16.mxu0 %v7230
    %7276 = vmatpush1.bf16.msra.mxu0 %v7229
    %7277 = vmatprep.subr.bf16.mxu0 %v7228
    %7278 = vmatpush1.bf16.msra.mxu0 %v7227
    %7279 = vmatprep.subr.bf16.mxu0 %v7226
    %7280 = vmatpush1.bf16.msra.mxu0 %v7225
    %7281 = vmatprep.subr.bf16.mxu0 %v7224
    %7282 = vmatpush1.bf16.msra.mxu0 %v7223
    %7283 = vmatprep.subr.bf16.mxu0 %v7222
    %7284 = vmatpush1.bf16.msra.mxu0 %v7221
    %7285 = vmatprep.subr.bf16.mxu0 %v7220
    %7286 = vmatpush1.bf16.msra.mxu0 %v7219
    %7287 = vmatprep.subr.bf16.mxu0 0
    %7288 = vmatpush2.bf16.msra.mxu0 0
    %7289 = vmatprep.subr.bf16.mxu0 0
    %7290 = vmatpush2.bf16.msra.mxu0 0
    %7291 = vmatprep.subr.bf16.mxu0 0
    %7292 = vmatpush2.bf16.msra.mxu0 0
    %7293 = vmatprep.subr.bf16.mxu0 0
    %7294 = vmatpush2.bf16.msra.mxu0 0
    %7295 = vmatprep.subr.bf16.mxu0 0
    %7296 = vmatpush2.bf16.msra.mxu0 0
    %7297 = vmatprep.subr.bf16.mxu0 0
    %7298 = vmatpush2.bf16.msra.mxu0 0
    %7299 = vmatprep.subr.bf16.mxu0 %v7238
    %7300 = vmatpush2.bf16.msra.mxu0 %v7237
    %7301 = vmatprep.subr.bf16.mxu0 %v7236
    %7302 = vmatpush2.bf16.msra.mxu0 %v7235
    %7303 = vmatprep.mubr.bf16.mxu0 %v7260
    %7304 = vmatmul.mubr.bf16.gmra.mxu0 %v7143
    %v7305 = vpop.f32.mrf.mxu0
    %v7306 = vadd.f32 0.0, %v7305
    %v7307 = vpop.f32.mrf.mxu0
    %v7308 = vadd.f32 0.0, %v7307
    %v7309 = vpop.f32.mrf.mxu0
    %v7310 = vadd.f32 0.0, %v7309
    %v7311 = vpop.f32.mrf.mxu0
    %v7312 = vadd.f32 0.0, %v7311
    %7313 = vmatprep.mubr.bf16.mxu0 %v7263
    %7314 = vmatmul.mubr.bf16.gmra.mxu0 %v7148
    %v7315 = vpop.f32.mrf.mxu0
    %v7316 = vadd.f32 0.0, %v7315
    %v7317 = vpop.f32.mrf.mxu0
    %v7318 = vadd.f32 0.0, %v7317
    %v7319 = vpop.f32.mrf.mxu0
    %v7320 = vadd.f32 0.0, %v7319
    %v7321 = vpop.f32.mrf.mxu0
    %v7322 = vadd.f32 0.0, %v7321
    %7323 = vmatprep.mubr.bf16.mxu0 %v7266
    %7324 = vmatmul.mubr.bf16.gmra.mxu0 %v7152
    %v7325 = vpop.f32.mrf.mxu0
    %v7326 = vadd.f32 0.0, %v7325
    %v7327 = vpop.f32.mrf.mxu0
    %v7328 = vadd.f32 0.0, %v7327
    %v7329 = vpop.f32.mrf.mxu0
    %v7330 = vadd.f32 0.0, %v7329
    %v7331 = vpop.f32.mrf.mxu0
    %v7332 = vadd.f32 0.0, %v7331
    %7333 = vmatprep.mubr.bf16.mxu0 %v7269
    %7334 = vmatmul.mubr.bf16.gmra.mxu0 %v7151
    %v7335 = vpop.f32.mrf.mxu0
    %v7336 = vadd.f32 0.0, %v7335
    %v7337 = vpop.f32.mrf.mxu0
    %v7338 = vadd.f32 0.0, %v7337
    %v7339 = vpop.f32.mrf.mxu0
    %v7340 = vpop.f32.mrf.mxu0
    %7341 = vdwg.mxu0
    %v7342 = vadd.f32 %v7079, %v7306
    %v7343 = vadd.f32 %v7081, %v7308
    %v7344 = vadd.f32 %v7083, %v7310
    %v7345 = vadd.f32 %v7085, %v7312
    %v7346 = vadd.f32 %v7089, %v7316
    %v7347 = vadd.f32 %v7091, %v7318
    %v7348 = vadd.f32 %v7093, %v7320
    %v7349 = vadd.f32 %v7095, %v7322
    %v7350 = vadd.f32 %v7099, %v7326
    %v7351 = vadd.f32 %v7101, %v7328
    %v7352 = vadd.f32 %v7103, %v7330
    %v7353 = vadd.f32 %v7105, %v7332
    %v7354 = vadd.f32 %v7109, %v7336
    %v7355 = vadd.f32 %v7111, %v7338
    %s7356 = scalar_lea.vmem [#allocation13], 16
    %v7357 = vld [vmem:[%s7356] ss:$8 sm:$0x3]
    %v7359 = vlaneseq
    %v7360 = vshrl.u32 %v7359, 7
    %v7361 = vsub.s32 0, %v7360
    %v7362 = vrot.slane %v7357, %v7361
    %v7363 = vlaneseq
    %v7364 = vshrl.u32 %v7363, 7
    %v7365 = vsub.s32 1, %v7364
    %v7366 = vrot.slane %v7357, %v7365
    %v7369 = vmul.f32 %v7342, %v7362
    %v7370 = vmul.f32 %v7343, %v7366
    %v7371 = vmul.f32 %v7344, %v7362
    %v7372 = vmul.f32 %v7345, %v7366
    %v7373 = vmul.f32 %v7346, %v7362
    %v7374 = vmul.f32 %v7347, %v7366
    %v7375 = vmul.f32 %v7348, %v7362
    %v7376 = vmul.f32 %v7349, %v7366
    %v7377 = vmul.f32 %v7350, %v7362
    %v7378 = vmul.f32 %v7351, %v7366
    %v7379 = vmul.f32 %v7352, %v7362
    %v7380 = vmul.f32 %v7353, %v7366
    %v7381 = vmul.f32 %v7354, %v7362
    %v7382 = vmul.f32 %v7355, %v7366
    %s7383 = scalar_lea.vmem [#allocation13], 34
    %v7384 = vld [vmem:[%s7383] ss:$8 sm:$0x3]
    %v7386 = vlaneseq
    %v7387 = vshrl.u32 %v7386, 7
    %v7388 = vsub.s32 0, %v7387
    %v7389 = vrot.slane %v7384, %v7388
    %v7390 = vlaneseq
    %v7391 = vshrl.u32 %v7390, 7
    %v7392 = vsub.s32 1, %v7391
    %v7393 = vrot.slane %v7384, %v7392
    %v7396 = vadd.f32 %v7369, %v7389
    %v7397 = vadd.f32 %v7370, %v7393
    %v7398 = vadd.f32 %v7371, %v7389
    %v7399 = vadd.f32 %v7372, %v7393
    %v7400 = vadd.f32 %v7373, %v7389
    %v7401 = vadd.f32 %v7374, %v7393
    %v7402 = vadd.f32 %v7375, %v7389
    %v7403 = vadd.f32 %v7376, %v7393
    %v7404 = vadd.f32 %v7377, %v7389
    %v7405 = vadd.f32 %v7378, %v7393
    %v7406 = vadd.f32 %v7379, %v7389
    %v7407 = vadd.f32 %v7380, %v7393
    %v7408 = vadd.f32 %v7381, %v7389
    %v7409 = vadd.f32 %v7382, %v7393
    %v7410 = vmax.f32 %v7396, 0.0
    %v7411 = vmax.f32 %v7397, 0.0
    %v7412 = vmax.f32 %v7398, 0.0
    %v7413 = vmax.f32 %v7399, 0.0
    %v7414 = vmax.f32 %v7400, 0.0
    %v7415 = vmax.f32 %v7401, 0.0
    %v7416 = vmax.f32 %v7402, 0.0
    %v7417 = vmax.f32 %v7403, 0.0
    %v7418 = vmax.f32 %v7404, 0.0
    %v7419 = vmax.f32 %v7405, 0.0
    %v7420 = vmax.f32 %v7406, 0.0
    %v7421 = vmax.f32 %v7407, 0.0
    %v7422 = vmax.f32 %v7408, 0.0
    %v7423 = vmax.f32 %v7409, 0.0
    %v7424 = vpack.c.bf16 %v7412, %v7410
    %v7425 = vpack.c.bf16 %v7413, %v7411
    %v7426 = vpack.c.bf16 %v7416, %v7414
    %v7427 = vpack.c.bf16 %v7417, %v7415
    %v7428 = vpack.c.bf16 %v7420, %v7418
    %v7429 = vpack.c.bf16 %v7421, %v7419
    %v7430 = vpack.c.bf16 %v7422, %v7422
    %v7431 = vpack.c.bf16 %v7423, %v7423
    %v7436 = vunpack.c.l.b16 %v7424
    %v7437 = vunpack.c.l.b16 %v7425
    %v7438 = vunpack.c.h.b16 %v7424
    %v7439 = vunpack.c.h.b16 %v7425
    %v7440 = vunpack.c.l.b16 %v7426
    %v7441 = vunpack.c.l.b16 %v7427
    %v7442 = vpack.c.b16 %v7437, %v7436
    %v7443 = vpack.c.b16 %v7439, %v7438
    %v7444 = vpack.c.b16 %v7441, %v7440
    %vm7448 = vcmask 130052
    %vm7449 = vmor %vm7448, %vm1475
    %7450 = vst.msk [vmem:[#allocation10] sm:$0xff] %vm7449, %v7442
    %7451 = vst.msk [vmem:[#allocation10 + $0x8] sm:$0xff] %vm7449, %v7443
    %vm7452 = vcmask 126980
    %vm7453 = vmor %vm7452, %vm2299
    %7454 = vst.msk [vmem:[#allocation10 + $0x10] sm:$0x11] %vm7453, %v7444
    %v7459 = vunpack.c.l.b16 %v7428
    %v7460 = vunpack.c.l.b16 %v7429
    %v7461 = vunpack.c.h.b16 %v7428
    %v7462 = vunpack.c.h.b16 %v7429
    %v7463 = vunpack.c.l.b16 %v7430
    %v7464 = vunpack.c.l.b16 %v7431
    %v7465 = vpack.c.b16 %v7460, %v7459
    %v7466 = vpack.c.b16 %v7462, %v7461
    %v7467 = vpack.c.b16 %v7464, %v7463
    %7471 = vst.msk [vmem:[#allocation10 + $0x20] sm:$0xff] %vm7449, %v7465
    %7472 = vst.msk [vmem:[#allocation10 + $0x28] sm:$0xff] %vm7449, %v7466
    %7473 = vst.msk [vmem:[#allocation10 + $0x30] sm:$0x11] %vm7453, %v7467
    %v7474 = vld [vmem:[#allocation10] sm:$0xff]
    %v7475 = vld [vmem:[#allocation10 + $0x8] sm:$0xff]
    %v7476 = vld [vmem:[#allocation10 + $0x10] sm:$0xff]
    %v7477 = vld [vmem:[#allocation10 + $0x18] sm:$0xff]
    %v7478 = vld [vmem:[#allocation10 + $0x20] sm:$0xff]
    %v7479 = vld [vmem:[#allocation10 + $0x28] sm:$0xff]
    %v7480 = vld [vmem:[#allocation11 + $0x1350] sm:$0xf]
    %v7481 = vld [vmem:[#allocation11 + $0x1358] sm:$0xf]
    %v7482 = vld [vmem:[#allocation11 + $0x1360] sm:$0xf]
    %v7483 = vld [vmem:[#allocation11 + $0x1368] sm:$0xf]
    %v7484 = vld [vmem:[#allocation11 + $0x1370] sm:$0xf]
    %v7485 = vld [vmem:[#allocation11 + $0x1378] sm:$0xf]
    %v7486 = vld [vmem:[#allocation11 + $0x1380] sm:$0xf]
    %v7487 = vld [vmem:[#allocation11 + $0x1388] sm:$0xf]
    %v7488 = vld [vmem:[#allocation11 + $0x1390] sm:$0xf]
    %v7489 = vld [vmem:[#allocation11 + $0x1398] sm:$0xf]
    %v7490 = vld [vmem:[#allocation11 + $0x13a0] sm:$0xf]
    %v7491 = vld [vmem:[#allocation11 + $0x13a8] sm:$0xf]
    %v7492 = vld [vmem:[#allocation11 + $0x13b0] sm:$0xf]
    %v7493 = vld [vmem:[#allocation11 + $0x13b8] sm:$0xf]
    %v7494 = vld [vmem:[#allocation11 + $0x13c0] sm:$0xf]
    %v7495 = vld [vmem:[#allocation11 + $0x13c8] sm:$0xf]
    %v7496 = vld [vmem:[#allocation11 + $0x13d0] sm:$0xf]
    %v7497 = vld [vmem:[#allocation11 + $0x13d8] sm:$0xf]
    %v7498 = vld [vmem:[#allocation10 + $0x30] sm:$0x11]
    %v7499 = vld [vmem:[#allocation11 + $0x13e0] sm:$0xf]
    %v7500 = vld [vmem:[#allocation11 + $0x13e8] sm:$0xf]
    %v7501 = vld [vmem:[#allocation11 + $0x13f0] sm:$0xf]
    %v7502 = vld [vmem:[#allocation11 + $0x13f8] sm:$0xf]
    %v7503 = vld [vmem:[#allocation11 + $0x1400] sm:$0xf]
    %v7504 = vld [vmem:[#allocation11 + $0x1408] sm:$0xf]
    %v7505 = vld [vmem:[#allocation11 + $0x1410] sm:$0xf]
    %v7506 = vld [vmem:[#allocation11 + $0x1418] sm:$0xf]
    %v7507 = vld [vmem:[#allocation11 + $0x1420] sm:$0xf]
    %v7508 = vld [vmem:[#allocation11 + $0x1428] sm:$0xf]
    %v7509 = vld [vmem:[#allocation11 + $0x1430] sm:$0xf]
    %v7510 = vld [vmem:[#allocation11 + $0x1438] sm:$0xf]
    %v7511 = vld [vmem:[#allocation11 + $0x1440] sm:$0xf]
    %v7512 = vld [vmem:[#allocation11 + $0x1448] sm:$0xf]
    %v7513 = vld [vmem:[#allocation11 + $0x1450] sm:$0xf]
    %v7514 = vld [vmem:[#allocation11 + $0x1458] sm:$0xf]
    %v7515 = vld [vmem:[#allocation11 + $0x1460] sm:$0xf]
    %v7516 = vld [vmem:[#allocation11 + $0x1468] sm:$0xf]
    %v7524 = vunpack.c.l.b16 %v7474
    %v7525 = vunpack.c.h.b16 %v7474
    %v7526 = vunpack.c.l.b16 %v7475
    %v7527 = vunpack.c.h.b16 %v7475
    %v7528 = vunpack.c.l.b16 %v7476
    %v7529 = vunpack.c.h.b16 %v7476
    %v7530 = vunpack.c.l.b16 %v7477
    %v7531 = vunpack.c.h.b16 %v7477
    %v7532 = vunpack.c.l.b16 %v7478
    %v7533 = vunpack.c.h.b16 %v7478
    %v7534 = vunpack.c.l.b16 %v7479
    %v7535 = vunpack.c.h.b16 %v7479
    %v7536 = vunpack.c.l.b16 %v7498
    %v7537 = vunpack.c.h.b16 %v7498
    %v7538 = vpack.c.b16 %v7526, %v7524
    %v7539 = vpack.c.b16 %v7527, %v7525
    %v7540 = vpack.c.b16 %v7530, %v7528
    %v7541 = vpack.c.b16 %v7531, %v7529
    %v7542 = vpack.c.b16 %v7534, %v7532
    %v7543 = vpack.c.b16 %v7535, %v7533
    %v7544 = vpack.c.b16 %v7536, %v7536
    %v7545 = vpack.c.b16 %v7537, %v7537
    %v7547 = vshrl.u32 %v7538, 16
    %v7549 = vshll.u32 %v7538, 16
    %v7551 = vrot.slane %v7549, 1
    %v7552 = vor.u32 %v7547, %v7551
    %v7554 = vshll.u32 %v7540, 16
    %v7556 = vrot.slane %v7554, 1
    %v7557 = vsel %vm73, %v7552, %v7556
    %v7559 = vshrl.u32 %v7539, 16
    %v7561 = vshll.u32 %v7539, 16
    %v7563 = vrot.slane %v7561, 1
    %v7564 = vor.u32 %v7559, %v7563
    %v7566 = vshll.u32 %v7541, 16
    %v7568 = vrot.slane %v7566, 1
    %v7569 = vsel %vm73, %v7564, %v7568
    %v7570 = vshrl.u32 %v7540, 16
    %v7572 = vor.u32 %v7570, %v7556
    %v7574 = vshll.u32 %v7542, 16
    %v7576 = vrot.slane %v7574, 1
    %v7577 = vsel %vm73, %v7572, %v7576
    %v7578 = vshrl.u32 %v7541, 16
    %v7580 = vor.u32 %v7578, %v7568
    %v7582 = vshll.u32 %v7543, 16
    %v7584 = vrot.slane %v7582, 1
    %v7585 = vsel %vm73, %v7580, %v7584
    %v7586 = vshrl.u32 %v7542, 16
    %v7588 = vor.u32 %v7586, %v7576
    %v7590 = vshll.u32 %v7544, 16
    %v7592 = vrot.slane %v7590, 1
    %v7593 = vsel %vm73, %v7588, %v7592
    %v7594 = vshrl.u32 %v7543, 16
    %v7596 = vor.u32 %v7594, %v7584
    %v7598 = vshll.u32 %v7545, 16
    %v7600 = vrot.slane %v7598, 1
    %v7601 = vsel %vm73, %v7596, %v7600
    %v7623 = vunpack.c.l.b16 %v7499
    %v7624 = vunpack.c.l.b16 %v7500
    %v7625 = vunpack.c.l.b16 %v7501
    %v7626 = vunpack.c.l.b16 %v7502
    %v7627 = vunpack.c.l.b16 %v7503
    %v7628 = vunpack.c.l.b16 %v7504
    %v7629 = vunpack.c.l.b16 %v7505
    %v7630 = vunpack.c.l.b16 %v7506
    %v7631 = vunpack.c.l.b16 %v7507
    %v7632 = vunpack.c.l.b16 %v7508
    %v7633 = vunpack.c.l.b16 %v7509
    %v7634 = vunpack.c.l.b16 %v7510
    %v7635 = vunpack.c.l.b16 %v7511
    %v7636 = vunpack.c.l.b16 %v7512
    %v7637 = vunpack.c.l.b16 %v7513
    %v7638 = vunpack.c.l.b16 %v7514
    %v7639 = vunpack.c.l.b16 %v7515
    %v7640 = vunpack.c.l.b16 %v7516
    %v7641 = vpack.c.b16 %v7624, %v7623
    %v7642 = vpack.c.b16 %v7626, %v7625
    %v7643 = vpack.c.b16 %v7628, %v7627
    %v7644 = vpack.c.b16 %v7630, %v7629
    %v7645 = vpack.c.b16 %v7632, %v7631
    %v7646 = vpack.c.b16 %v7634, %v7633
    %v7647 = vpack.c.b16 %v7636, %v7635
    %v7648 = vpack.c.b16 %v7638, %v7637
    %v7649 = vpack.c.b16 %v7640, %v7639
    %vm7659 = vcmask 130048
    %v7661 = vsel %vm7659, %v7569, 0
    %v7664 = vsel %vm7659, %v7585, 0
    %v7667 = vsel %vm7659, %v7601, 0
    %7669 = vmatprep.subr.bf16.mxu0 0
    %7670 = vmatpush1.bf16.msra.mxu0 %v7648
    %7671 = vmatprep.subr.bf16.mxu0 0
    %7672 = vmatpush1.bf16.msra.mxu0 %v7647
    %7673 = vmatprep.subr.bf16.mxu0 0
    %7674 = vmatpush1.bf16.msra.mxu0 %v7646
    %7675 = vmatprep.subr.bf16.mxu0 0
    %7676 = vmatpush1.bf16.msra.mxu0 %v7645
    %7677 = vmatprep.subr.bf16.mxu0 0
    %7678 = vmatpush1.bf16.msra.mxu0 %v7644
    %7679 = vmatprep.subr.bf16.mxu0 0
    %7680 = vmatpush1.bf16.msra.mxu0 %v7643
    %7681 = vmatprep.subr.bf16.mxu0 0
    %7682 = vmatpush1.bf16.msra.mxu0 %v7642
    %7683 = vmatprep.subr.bf16.mxu0 0
    %7684 = vmatpush1.bf16.msra.mxu0 %v7641
    %7685 = vmatprep.subr.bf16.mxu0 0
    %7686 = vmatpush2.bf16.msra.mxu0 0
    %7687 = vmatprep.subr.bf16.mxu0 0
    %7688 = vmatpush2.bf16.msra.mxu0 0
    %7689 = vmatprep.subr.bf16.mxu0 0
    %7690 = vmatpush2.bf16.msra.mxu0 0
    %7691 = vmatprep.subr.bf16.mxu0 0
    %7692 = vmatpush2.bf16.msra.mxu0 0
    %7693 = vmatprep.subr.bf16.mxu0 0
    %7694 = vmatpush2.bf16.msra.mxu0 0
    %7695 = vmatprep.subr.bf16.mxu0 0
    %7696 = vmatpush2.bf16.msra.mxu0 0
    %7697 = vmatprep.subr.bf16.mxu0 0
    %7698 = vmatpush2.bf16.msra.mxu0 0
    %7699 = vmatprep.subr.bf16.mxu0 0
    %7700 = vmatpush2.bf16.msra.mxu0 %v7649
    %7701 = vmatprep.mubr.bf16.mxu0 %v7661
    %7702 = vmatmul.mubr.bf16.gmra.mxu0 %v7557
    %v7703 = vpop.f32.mrf.mxu0
    %v7704 = vadd.f32 0.0, %v7703
    %v7705 = vpop.f32.mrf.mxu0
    %v7706 = vpop.f32.mrf.mxu0
    %v7707 = vadd.f32 0.0, %v7706
    %v7708 = vpop.f32.mrf.mxu0
    %7709 = vmatprep.mubr.bf16.mxu0 %v7664
    %7710 = vmatmul.mubr.bf16.gmra.mxu0 %v7577
    %v7711 = vpop.f32.mrf.mxu0
    %v7712 = vadd.f32 0.0, %v7711
    %v7713 = vpop.f32.mrf.mxu0
    %v7714 = vpop.f32.mrf.mxu0
    %v7715 = vadd.f32 0.0, %v7714
    %v7716 = vpop.f32.mrf.mxu0
    %7717 = vmatprep.mubr.bf16.mxu0 %v7667
    %7718 = vmatmul.mubr.bf16.gmra.mxu0 %v7593
    %v7719 = vpop.f32.mrf.mxu0
    %v7720 = vadd.f32 0.0, %v7719
    %v7721 = vpop.f32.mrf.mxu0
    %v7722 = vpop.f32.mrf.mxu0
    %v7723 = vadd.f32 0.0, %v7722
    %v7724 = vpop.f32.mrf.mxu0
    %7725 = vdwg.mxu0
    %v7747 = vunpack.c.l.b16 %v7480
    %v7748 = vunpack.c.l.b16 %v7481
    %v7749 = vunpack.c.l.b16 %v7482
    %v7750 = vunpack.c.l.b16 %v7483
    %v7751 = vunpack.c.l.b16 %v7484
    %v7752 = vunpack.c.l.b16 %v7485
    %v7753 = vunpack.c.l.b16 %v7486
    %v7754 = vunpack.c.l.b16 %v7487
    %v7755 = vunpack.c.l.b16 %v7488
    %v7756 = vunpack.c.l.b16 %v7489
    %v7757 = vunpack.c.l.b16 %v7490
    %v7758 = vunpack.c.l.b16 %v7491
    %v7759 = vunpack.c.l.b16 %v7492
    %v7760 = vunpack.c.l.b16 %v7493
    %v7761 = vunpack.c.l.b16 %v7494
    %v7762 = vunpack.c.l.b16 %v7495
    %v7763 = vunpack.c.l.b16 %v7496
    %v7764 = vunpack.c.l.b16 %v7497
    %v7765 = vpack.c.b16 %v7748, %v7747
    %v7766 = vpack.c.b16 %v7750, %v7749
    %v7767 = vpack.c.b16 %v7752, %v7751
    %v7768 = vpack.c.b16 %v7754, %v7753
    %v7769 = vpack.c.b16 %v7756, %v7755
    %v7770 = vpack.c.b16 %v7758, %v7757
    %v7771 = vpack.c.b16 %v7760, %v7759
    %v7772 = vpack.c.b16 %v7762, %v7761
    %v7773 = vpack.c.b16 %v7764, %v7763
    %v7783 = vsel %vm7659, %v7539, 0
    %v7785 = vsel %vm7659, %v7541, 0
    %v7787 = vsel %vm7659, %v7543, 0
    %7789 = vmatprep.subr.bf16.mxu0 0
    %7790 = vmatpush1.bf16.msra.mxu0 %v7772
    %7791 = vmatprep.subr.bf16.mxu0 0
    %7792 = vmatpush1.bf16.msra.mxu0 %v7771
    %7793 = vmatprep.subr.bf16.mxu0 0
    %7794 = vmatpush1.bf16.msra.mxu0 %v7770
    %7795 = vmatprep.subr.bf16.mxu0 0
    %7796 = vmatpush1.bf16.msra.mxu0 %v7769
    %7797 = vmatprep.subr.bf16.mxu0 0
    %7798 = vmatpush1.bf16.msra.mxu0 %v7768
    %7799 = vmatprep.subr.bf16.mxu0 0
    %7800 = vmatpush1.bf16.msra.mxu0 %v7767
    %7801 = vmatprep.subr.bf16.mxu0 0
    %7802 = vmatpush1.bf16.msra.mxu0 %v7766
    %7803 = vmatprep.subr.bf16.mxu0 0
    %7804 = vmatpush1.bf16.msra.mxu0 %v7765
    %7805 = vmatprep.subr.bf16.mxu0 0
    %7806 = vmatpush2.bf16.msra.mxu0 0
    %7807 = vmatprep.subr.bf16.mxu0 0
    %7808 = vmatpush2.bf16.msra.mxu0 0
    %7809 = vmatprep.subr.bf16.mxu0 0
    %7810 = vmatpush2.bf16.msra.mxu0 0
    %7811 = vmatprep.subr.bf16.mxu0 0
    %7812 = vmatpush2.bf16.msra.mxu0 0
    %7813 = vmatprep.subr.bf16.mxu0 0
    %7814 = vmatpush2.bf16.msra.mxu0 0
    %7815 = vmatprep.subr.bf16.mxu0 0
    %7816 = vmatpush2.bf16.msra.mxu0 0
    %7817 = vmatprep.subr.bf16.mxu0 0
    %7818 = vmatpush2.bf16.msra.mxu0 0
    %7819 = vmatprep.subr.bf16.mxu0 0
    %7820 = vmatpush2.bf16.msra.mxu0 %v7773
    %7821 = vmatprep.mubr.bf16.mxu0 %v7783
    %7822 = vmatmul.mubr.bf16.gmra.mxu0 %v7538
    %v7823 = vpop.f32.mrf.mxu0
    %v7824 = vadd.f32 %v7704, %v7823
    %v7825 = vpop.f32.mrf.mxu0
    %v7826 = vpop.f32.mrf.mxu0
    %v7827 = vadd.f32 %v7707, %v7826
    %v7828 = vpop.f32.mrf.mxu0
    %7829 = vmatprep.mubr.bf16.mxu0 %v7785
    %7830 = vmatmul.mubr.bf16.gmra.mxu0 %v7540
    %v7831 = vpop.f32.mrf.mxu0
    %v7832 = vadd.f32 %v7712, %v7831
    %v7833 = vpop.f32.mrf.mxu0
    %v7834 = vpop.f32.mrf.mxu0
    %v7835 = vadd.f32 %v7715, %v7834
    %v7836 = vpop.f32.mrf.mxu0
    %7837 = vmatprep.mubr.bf16.mxu0 %v7787
    %7838 = vmatmul.mubr.bf16.gmra.mxu0 %v7542
    %v7839 = vpop.f32.mrf.mxu0
    %v7840 = vadd.f32 %v7720, %v7839
    %v7841 = vpop.f32.mrf.mxu0
    %v7842 = vpop.f32.mrf.mxu0
    %v7843 = vadd.f32 %v7723, %v7842
    %v7844 = vpop.f32.mrf.mxu0
    %7845 = vdwg.mxu0
    %v7846 = vld [vmem:[#allocation10] sm:$0xee]
    %v7847 = vld [vmem:[#allocation11 + $0x1470] sm:$0xf]
    %v7848 = vld [vmem:[#allocation11 + $0x1478] sm:$0xf]
    %v7849 = vld [vmem:[#allocation11 + $0x1480] sm:$0xf]
    %v7850 = vld [vmem:[#allocation11 + $0x1488] sm:$0xf]
    %v7851 = vld [vmem:[#allocation11 + $0x1490] sm:$0xf]
    %v7852 = vld [vmem:[#allocation11 + $0x1498] sm:$0xf]
    %v7853 = vld [vmem:[#allocation11 + $0x14a0] sm:$0xf]
    %v7854 = vld [vmem:[#allocation11 + $0x14a8] sm:$0xf]
    %v7855 = vld [vmem:[#allocation11 + $0x14b0] sm:$0xf]
    %v7856 = vld [vmem:[#allocation11 + $0x14b8] sm:$0xf]
    %v7857 = vld [vmem:[#allocation11 + $0x14c0] sm:$0xf]
    %v7858 = vld [vmem:[#allocation11 + $0x14c8] sm:$0xf]
    %v7859 = vld [vmem:[#allocation11 + $0x14d0] sm:$0xf]
    %v7860 = vld [vmem:[#allocation11 + $0x14d8] sm:$0xf]
    %v7861 = vld [vmem:[#allocation11 + $0x14e0] sm:$0xf]
    %v7862 = vld [vmem:[#allocation11 + $0x14e8] sm:$0xf]
    %v7863 = vld [vmem:[#allocation11 + $0x14f0] sm:$0xf]
    %v7864 = vld [vmem:[#allocation11 + $0x14f8] sm:$0xf]
    %v7866 = vunpack.c.l.b16 %v7846
    %v7867 = vunpack.c.h.b16 %v7846
    %v7868 = vpack.c.b16 %v7526, %v7866
    %v7869 = vpack.c.b16 %v7527, %v7867
    %v7870 = vrot.slane %v7868, 1
    %v7871 = vrot.slane %v7540, 1
    %v7872 = vsel %vm259, %v7870, %v7871
    %v7873 = vrot.slane %v7869, 1
    %v7874 = vrot.slane %v7541, 1
    %v7875 = vsel %vm259, %v7873, %v7874
    %v7876 = vrot.slane %v7542, 1
    %v7877 = vsel %vm259, %v7871, %v7876
    %v7878 = vrot.slane %v7543, 1
    %v7879 = vsel %vm259, %v7874, %v7878
    %v7880 = vrot.slane %v7544, 1
    %v7881 = vsel %vm259, %v7876, %v7880
    %v7882 = vrot.slane %v7545, 1
    %v7883 = vsel %vm259, %v7878, %v7882
    %v7905 = vunpack.c.l.b16 %v7847
    %v7906 = vunpack.c.l.b16 %v7848
    %v7907 = vunpack.c.l.b16 %v7849
    %v7908 = vunpack.c.l.b16 %v7850
    %v7909 = vunpack.c.l.b16 %v7851
    %v7910 = vunpack.c.l.b16 %v7852
    %v7911 = vunpack.c.l.b16 %v7853
    %v7912 = vunpack.c.l.b16 %v7854
    %v7913 = vunpack.c.l.b16 %v7855
    %v7914 = vunpack.c.l.b16 %v7856
    %v7915 = vunpack.c.l.b16 %v7857
    %v7916 = vunpack.c.l.b16 %v7858
    %v7917 = vunpack.c.l.b16 %v7859
    %v7918 = vunpack.c.l.b16 %v7860
    %v7919 = vunpack.c.l.b16 %v7861
    %v7920 = vunpack.c.l.b16 %v7862
    %v7921 = vunpack.c.l.b16 %v7863
    %v7922 = vunpack.c.l.b16 %v7864
    %v7923 = vpack.c.b16 %v7906, %v7905
    %v7924 = vpack.c.b16 %v7908, %v7907
    %v7925 = vpack.c.b16 %v7910, %v7909
    %v7926 = vpack.c.b16 %v7912, %v7911
    %v7927 = vpack.c.b16 %v7914, %v7913
    %v7928 = vpack.c.b16 %v7916, %v7915
    %v7929 = vpack.c.b16 %v7918, %v7917
    %v7930 = vpack.c.b16 %v7920, %v7919
    %v7931 = vpack.c.b16 %v7922, %v7921
    %v7942 = vsel %vm7659, %v7875, 0
    %v7945 = vsel %vm7659, %v7879, 0
    %v7948 = vsel %vm7659, %v7883, 0
    %7950 = vmatprep.subr.bf16.mxu0 0
    %7951 = vmatpush1.bf16.msra.mxu0 %v7930
    %7952 = vmatprep.subr.bf16.mxu0 0
    %7953 = vmatpush1.bf16.msra.mxu0 %v7929
    %7954 = vmatprep.subr.bf16.mxu0 0
    %7955 = vmatpush1.bf16.msra.mxu0 %v7928
    %7956 = vmatprep.subr.bf16.mxu0 0
    %7957 = vmatpush1.bf16.msra.mxu0 %v7927
    %7958 = vmatprep.subr.bf16.mxu0 0
    %7959 = vmatpush1.bf16.msra.mxu0 %v7926
    %7960 = vmatprep.subr.bf16.mxu0 0
    %7961 = vmatpush1.bf16.msra.mxu0 %v7925
    %7962 = vmatprep.subr.bf16.mxu0 0
    %7963 = vmatpush1.bf16.msra.mxu0 %v7924
    %7964 = vmatprep.subr.bf16.mxu0 0
    %7965 = vmatpush1.bf16.msra.mxu0 %v7923
    %7966 = vmatprep.subr.bf16.mxu0 0
    %7967 = vmatpush2.bf16.msra.mxu0 0
    %7968 = vmatprep.subr.bf16.mxu0 0
    %7969 = vmatpush2.bf16.msra.mxu0 0
    %7970 = vmatprep.subr.bf16.mxu0 0
    %7971 = vmatpush2.bf16.msra.mxu0 0
    %7972 = vmatprep.subr.bf16.mxu0 0
    %7973 = vmatpush2.bf16.msra.mxu0 0
    %7974 = vmatprep.subr.bf16.mxu0 0
    %7975 = vmatpush2.bf16.msra.mxu0 0
    %7976 = vmatprep.subr.bf16.mxu0 0
    %7977 = vmatpush2.bf16.msra.mxu0 0
    %7978 = vmatprep.subr.bf16.mxu0 0
    %7979 = vmatpush2.bf16.msra.mxu0 0
    %7980 = vmatprep.subr.bf16.mxu0 0
    %7981 = vmatpush2.bf16.msra.mxu0 %v7931
    %7982 = vmatprep.mubr.bf16.mxu0 %v7942
    %7983 = vmatmul.mubr.bf16.gmra.mxu0 %v7872
    %v7984 = vpop.f32.mrf.mxu0
    %v7985 = vadd.f32 0.0, %v7984
    %v7986 = vpop.f32.mrf.mxu0
    %v7987 = vpop.f32.mrf.mxu0
    %v7988 = vadd.f32 0.0, %v7987
    %v7989 = vpop.f32.mrf.mxu0
    %7990 = vmatprep.mubr.bf16.mxu0 %v7945
    %7991 = vmatmul.mubr.bf16.gmra.mxu0 %v7877
    %v7992 = vpop.f32.mrf.mxu0
    %v7993 = vadd.f32 0.0, %v7992
    %v7994 = vpop.f32.mrf.mxu0
    %v7995 = vpop.f32.mrf.mxu0
    %v7996 = vadd.f32 0.0, %v7995
    %v7997 = vpop.f32.mrf.mxu0
    %7998 = vmatprep.mubr.bf16.mxu0 %v7948
    %7999 = vmatmul.mubr.bf16.gmra.mxu0 %v7881
    %v8000 = vpop.f32.mrf.mxu0
    %v8001 = vadd.f32 0.0, %v8000
    %v8002 = vpop.f32.mrf.mxu0
    %v8003 = vpop.f32.mrf.mxu0
    %v8004 = vadd.f32 0.0, %v8003
    %v8005 = vpop.f32.mrf.mxu0
    %8006 = vdwg.mxu0
    %v8007 = vadd.f32 %v7824, %v7985
    %v8008 = vadd.f32 %v7827, %v7988
    %v8009 = vadd.f32 %v7832, %v7993
    %v8010 = vadd.f32 %v7835, %v7996
    %v8011 = vadd.f32 %v7840, %v8001
    %v8012 = vadd.f32 %v7843, %v8004
    %v8013 = vld [vmem:[#allocation13 + $0x11] ss:$0 sm:$0xff]
    %v8014 = vmul.f32 %v8007, %v8013
    %v8015 = vmul.f32 %v8008, %v8013
    %v8016 = vmul.f32 %v8009, %v8013
    %v8017 = vmul.f32 %v8010, %v8013
    %v8018 = vmul.f32 %v8011, %v8013
    %v8019 = vmul.f32 %v8012, %v8013
    %v8020 = vld [vmem:[#allocation13 + $0x23] ss:$0 sm:$0xff]
    %v8021 = vadd.f32 %v8014, %v8020
    %v8022 = vadd.f32 %v8015, %v8020
    %v8023 = vadd.f32 %v8016, %v8020
    %v8024 = vadd.f32 %v8017, %v8020
    %v8025 = vadd.f32 %v8018, %v8020
    %v8026 = vadd.f32 %v8019, %v8020
    %8027 = vst.msk [vmem:[%s3] sm:$0xff] %vm7659, %v8021
    %8028 = vst.msk [vmem:[%s3 + $0x8] sm:$0xff] %vm7659, %v8022
    %8029 = vst.msk [vmem:[%s3 + $0x10] sm:$0xff] %vm7659, %v8023
    %8030 = vst.msk [vmem:[%s3 + $0x18] sm:$0xff] %vm7659, %v8024
    %8031 = vst.msk [vmem:[%s3 + $0x20] sm:$0xff] %vm7659, %v8025
    %8032 = vst.msk [vmem:[%s3 + $0x28] sm:$0xff] %vm7659, %v8026
    // Predicated region
    $region22: #{forward.1} parent=1 // pred_check
      _
    $region23: #{forward.1} parent=1 // pred_check_branch
      %8034 = sbr.rel (0) target = $region25
    $region24: #{forward.1} parent=1 // pred_region
      _
    $region25: #{forward.1} parent=1 // pred_fallthru
      _
    // Predicated region
    $region26: #{forward.1} parent=1 // pred_check
      _
    $region27: #{forward.1} parent=1 // pred_check_branch
      %8036 = sbr.rel (0) target = $region29
    $region28: #{forward.1} parent=1 // pred_region
      _
    $region29: #{forward.1} parent=1 // pred_fallthru
      _
    %8037 = vsyncpa [#allocation12], 1
    %8038 = vsyncpa [#allocation14], 1

</llo_original>
